<compile_context>
chip_gen: v5e
topology: v5e:2x2
jax: 0.10.0
libtpu: 0.0.40
codegen_flags: <defaults>
</compile_context>

<pallas_src>
import functools

import jax
import jax.numpy as jnp
from jax.experimental import pallas as pl
from jax.experimental.pallas import tpu as pltpu

# ----------------------------- cfg constants --------------------------------
JOINT_NUM = 18            # fixed: log_var_head.fc has 18 outputs == joint_num
DEPTH_DIM = 8             # cfg.depth_dim (small synthetic value)
OUT_H, OUT_W = 8, 8       # cfg.output_shape (small synthetic value)
S_MAX, S_MIN = 10.0, 1.0  # forward() defaults
BN_EPS = 1e-5
FM_H, FM_W, FM_C = 4, 4, 2048   # backbone fm[-1] spatial / channels
SP = FM_H * FM_W                # 16 spatial positions of fm[-1]
JD = JOINT_NUM * DEPTH_DIM      # 144 head output channels


# ----------------------------- fused Pallas kernel ---------------------------
def _fused_kernel(x_ref, bbw_ref, bbb_ref,
                  w1_ref, s1_ref, t1_ref, w2_ref, s2_ref, t2_ref,
                  w3_ref, b3_ref, hw_ref, hb_ref,
                  rep8_ref, srow_ref, lred_ref, red_ref, out_ref,
                  *, b_blk, s_max, s_min):
    """One block of B batch elements per grid step.

    x_ref   : (B*16, 3)    pooled input, rows = (batch, spatial), cols = RGB
    bbw_ref : (3, 2048)    backbone 1x1 conv weight        bbb_ref : (1, 2048)
    w1/w2   : (2048,256)/(256,64) bottleneck weights (bf16)
    s*/t*   : folded BatchNorm1d(eval) scale/shift rows
    w3/b3   : (64,18)/(1,18) fc
    hw/hb   : (2048,144)/(1,144) head 1x1 conv (bf16 weight)
    rep8    : (18, 144)  one-hot(joint).T     (scale lane broadcast)
    srow    : (B*16, B)  one-hot(batch)       (scale row broadcast)
    lred    : (3B, B*16) [ones | x-index | y-index] spatial reduction rows
    red     : (144, 36)  [one-hot(joint) | one-hot(joint)*depth_idx]
    out_ref : (4, B, 18) rows 0..2 = coord x/y/z, row 3 = scale
    """
    B = b_blk
    x = x_ref[...]                                    # (B*16, 3)
    bbw = bbw_ref[...]                                # (3, 2048)

    # --- backbone stand-in: 1x1 conv with K=3 as 3 VPU broadcast-FMAs (f32) ---
    fm = (x[:, 0:1] * bbw[0:1, :]
          + x[:, 1:2] * bbw[1:2, :]
          + x[:, 2:3] * bbw[2:3, :]
          + bbb_ref[...])                             # (B*16, 2048) == fm[-1]

    lred = lred_ref[...]                              # (3B, B*16)

    # --- log_var_head (batched over the B elements of the block) -------------
    # GAP (AdaptiveAvgPool2d((1,1))) as a tiny f32 matmul with the per-element
    # averaging rows of lred (keeps the GAP accumulation in f32).
    gap = jnp.dot(lred[0:B, :], fm,
                  preferred_element_type=jnp.float32) * (1.0 / SP)   # (B, 2048)
    h1 = jnp.dot(gap.astype(jnp.bfloat16), w1_ref[...],
                 preferred_element_type=jnp.float32)                 # (B, 256)
    h1 = jnp.maximum(h1 * s1_ref[...] + t1_ref[...], 0.0)            # BN + ReLU
    h2 = jnp.dot(h1.astype(jnp.bfloat16), w2_ref[...],
                 preferred_element_type=jnp.float32)                 # (B, 64)
    h2 = jnp.maximum(h2 * s2_ref[...] + t2_ref[...], 0.0)            # BN + ReLU
    logits = jnp.dot(h2, w3_ref[...],
                     preferred_element_type=jnp.float32) + b3_ref[...]   # (B,18)
    scale = (s_max - s_min) / (1.0 + jnp.exp(-logits)) + s_min       # (B, 18)

    # --- head stand-in (1x1 conv); 2x nearest upsample folded into weights ----
    hm = jnp.dot(fm.astype(jnp.bfloat16), hw_ref[...],
                 preferred_element_type=jnp.float32) + hb_ref[...]   # (B*16,144)

    # --- soft_argmax -----------------------------------------------------------
    # broadcast scale[b, j] to every (row=b*16+s, col=j*8+d) with two tiny f32
    # matmuls (no sublane<->lane relayouts).
    scale_big = jnp.dot(jnp.dot(srow_ref[...], scale,
                                preferred_element_type=jnp.float32),
                        rep8_ref[...],
                        preferred_element_type=jnp.float32)          # (B*16,144)
    sv = (hm * scale_big).reshape(B, SP, JD)                         # (B,16,144)

    # per-batch-element stabilizer: exact (softmax is shift-invariant per group
    # and the same exp values feed the numerators and the denominator below).
    # TODO(synk): a per-(b,joint) max would be fully underflow-proof, but needs a
    # lane-group segmented max (lane-splitting relayout); unnecessary here.
    m_b = jnp.max(jnp.max(sv, axis=2, keepdims=True), axis=1, keepdims=True)
    p = jnp.exp(sv - m_b).reshape(B * SP, JD)                        # (B*16,144)

    # rows of lred: [0:B] ones -> denominator, [B:2B] wx(s) -> x numerator,
    #               [2B:3B] wy(s) -> y numerator     (spatial sums, one matmul)
    parts = jnp.dot(lred, p, preferred_element_type=jnp.float32)     # (3B, 144)
    # red folds the depth-group sums, the z-index weights and the softmax
    # denominator into one more f32 matmul.
    sums = jnp.dot(parts, red_ref[...],
                   preferred_element_type=jnp.float32)               # (3B, 36)

    den = sums[0:B, 0:JOINT_NUM]                                     # (B, 18)
    inv = 1.0 / den                                                  # exact
    out_ref[0] = sums[B:2 * B, 0:JOINT_NUM] * inv                    # coord x
    out_ref[1] = sums[2 * B:3 * B, 0:JOINT_NUM] * inv                # coord y
    out_ref[2] = sums[0:B, JOINT_NUM:2 * JOINT_NUM] * inv            # coord z
    out_ref[3] = scale                                               # scale


# ----------------------------- parameters ------------------------------------
def init_params(key):
    ks = jax.random.split(key, 14)
    p = {}
    # backbone stand-in: 1x1 conv 3 -> 2048
    p["bb_w"] = 0.05 * jax.random.normal(ks[0], (3, FM_C), jnp.float32)
    p["bb_b"] = 0.01 * jax.random.normal(ks[1], (FM_C,), jnp.float32)
    # head stand-in: 1x1 conv 2048 -> joint_num*depth_dim (bf16 weight)
    p["head_w"] = (0.02 * jax.random.normal(ks[2], (FM_C, JD), jnp.float32)
                   ).astype(jnp.bfloat16)
    p["head_b"] = 0.01 * jax.random.normal(ks[3], (JD,), jnp.float32)
    # log_var_head.bottle_neck: Linear(2048,256,bias=False), BN(256), ReLU,
    #                           Linear(256,64,bias=False), BN(64), ReLU
    p["w1"] = (0.02 * jax.random.normal(ks[4], (FM_C, 256), jnp.float32)
               ).astype(jnp.bfloat16)
    p["bn1_gamma"] = 1.0 + 0.1 * jax.random.normal(ks[5], (256,), jnp.float32)
    p["bn1_beta"] = 0.1 * jax.random.normal(ks[6], (256,), jnp.float32)
    p["bn1_mean"] = 0.01 * jax.random.normal(ks[7], (256,), jnp.float32)
    p["bn1_var"] = 0.5 + jnp.abs(0.5 * jax.random.normal(ks[8], (256,), jnp.float32))
    p["w2"] = (0.05 * jax.random.normal(ks[9], (256, 64), jnp.float32)
               ).astype(jnp.bfloat16)
    p["bn2_gamma"] = 1.0 + 0.1 * jax.random.normal(ks[10], (64,), jnp.float32)
    p["bn2_beta"] = 0.1 * jax.random.normal(ks[11], (64,), jnp.float32)
    p["bn2_mean"] = 0.01 * jax.random.normal(ks[12], (64,), jnp.float32)
    p["bn2_var"] = 0.5 + jnp.abs(0.5 * jax.random.normal(ks[13], (64,), jnp.float32))
    # log_var_head.fc : nn.init.constant_(weight, 0), constant_(bias, 0)
    p["w3"] = jnp.zeros((64, JOINT_NUM), jnp.float32)
    p["b3"] = jnp.zeros((JOINT_NUM,), jnp.float32)
    return p


# ----------------------------- forward wrapper --------------------------------
def respose_net_forward(params, input_img, block_b=8, s_max=S_MAX, s_min=S_MIN):
    """Inference path of ResPoseNet.forward (target=None, USE_GCN=False).

    block_b = batch elements per grid step (multiple of 8).  8 fills the v5e MXU
    width; use 16 on v6e/v7x when N allows >= 2 grid steps.
    """
    assert block_b % 8 == 0, "block_b must be a multiple of 8"
    N = input_img.shape[0]
    n_pad = (-N) % block_b
    if n_pad:
        input_img = jnp.concatenate(
            [input_img,
             jnp.zeros((n_pad,) + input_img.shape[1:], input_img.dtype)], axis=0)
    nt = N + n_pad
    B = block_b
    BS = B * SP
    ph = input_img.shape[2] // FM_H
    pw = input_img.shape[3] // FM_W

    # backbone stand-in front half (tiny XLA glue): NCHW -> NHWC, avg-pool to
    # 4x4, flatten to (batch*spatial, channel) rows for the kernel.
    x = jnp.transpose(input_img, (0, 2, 3, 1))
    x = x.reshape(nt, FM_H, ph, FM_W, pw, 3).mean(axis=(2, 4))       # (nt,4,4,3)
    x2 = x.reshape(nt * SP, 3)

    # fold BatchNorm1d (eval mode) into per-feature scale/shift rows
    s1 = params["bn1_gamma"] / jnp.sqrt(params["bn1_var"] + BN_EPS)
    t1 = params["bn1_beta"] - params["bn1_mean"] * s1
    s2 = params["bn2_gamma"] / jnp.sqrt(params["bn2_var"] + BN_EPS)
    t2 = params["bn2_beta"] - params["bn2_mean"] * s2

    # soft-argmax constants (0-based; 2x nearest upsample folded in: exact)
    uw, uh = OUT_W // FM_W, OUT_H // FM_H
    sidx = jnp.arange(SP)
    wx = uw * (sidx % FM_W).astype(jnp.float32) + (uw - 1) / 2.0     # (16,)
    wy = uh * (sidx // FM_W).astype(jnp.float32) + (uh - 1) / 2.0

    rid = jnp.arange(BS)
    srow = (rid[:, None] // SP == jnp.arange(B)[None, :]).astype(jnp.float32)
    ones_rows = srow.T                                               # (B, BS)
    wx_full = wx[rid % SP]                                           # (BS,)
    wy_full = wy[rid % SP]
    lred = jnp.concatenate([ones_rows,
                            ones_rows * wx_full[None, :],
                            ones_rows * wy_full[None, :]], axis=0)   # (3B, BS)

    cidx = jnp.arange(JD)
    onehot_j = (cidx[:, None] // DEPTH_DIM
                == jnp.arange(JOINT_NUM)[None, :]).astype(jnp.float32)   # (144,18)
    red = jnp.concatenate(
        [onehot_j, onehot_j * (cidx % DEPTH_DIM).astype(jnp.float32)[:, None]],
        axis=1)                                                      # (144, 36)
    rep8 = onehot_j.T                                                # (18, 144)

    const = lambda n: (0, 0)
    out = pl.pallas_call(
        functools.partial(_fused_kernel, b_blk=B, s_max=s_max, s_min=s_min),
        out_shape=jax.ShapeDtypeStruct((4, nt, JOINT_NUM), jnp.float32),
        grid=(nt // B,),
        in_specs=[
            pl.BlockSpec((BS, 3), lambda n: (n, 0)),                 # pooled img
            pl.BlockSpec((3, FM_C), const),                          # bb_w
            pl.BlockSpec((1, FM_C), const),                          # bb_b
            pl.BlockSpec((FM_C, 256), const),                        # w1
            pl.BlockSpec((1, 256), const),                           # bn1 scale
            pl.BlockSpec((1, 256), const),                           # bn1 shift
            pl.BlockSpec((256, 64), const),                          # w2
            pl.BlockSpec((1, 64), const),                            # bn2 scale
            pl.BlockSpec((1, 64), const),                            # bn2 shift
            pl.BlockSpec((64, JOINT_NUM), const),                    # w3 (fc)
            pl.BlockSpec((1, JOINT_NUM), const),                     # b3
            pl.BlockSpec((FM_C, JD), const),                         # head_w
            pl.BlockSpec((1, JD), const),                            # head_b
            pl.BlockSpec((JOINT_NUM, JD), const),                    # rep8
            pl.BlockSpec((BS, B), const),                            # srow
            pl.BlockSpec((3 * B, BS), const),                        # lred
            pl.BlockSpec((JD, 2 * JOINT_NUM), const),                # red
        ],
        out_specs=pl.BlockSpec((4, B, JOINT_NUM), lambda n: (0, n, 0)),
        compiler_params=pltpu.CompilerParams(
            dimension_semantics=("parallel",)),      # v7x: blocks across 2 TCs
    )(
        x2,
        params["bb_w"], params["bb_b"].reshape(1, FM_C),
        params["w1"], s1.reshape(1, -1), t1.reshape(1, -1),
        params["w2"], s2.reshape(1, -1), t2.reshape(1, -1),
        params["w3"], params["b3"].reshape(1, -1),
        params["head_w"], params["head_b"].reshape(1, -1),
        rep8, srow, lred, red,
    )
    coord = jnp.stack([out[0], out[1], out[2]], axis=-1)[:N]          # (N,18,3)
    scale = out[3][:N]                                                # (N,18)
    return coord, scale

    # TODO(synk): USE_GCN branch (SemGCN + grid_sample feature gather) and the
    # training-loss branch (target != None) are not implemented here.


# ----------------------------- pure-JAX reference ----------------------------
def _ref_soft_argmax(hm, scale):
    n = hm.shape[0]
    h = hm.reshape(n, JOINT_NUM, DEPTH_DIM * OUT_H * OUT_W)
    p = jax.nn.softmax(h * scale[..., None], axis=2)
    p = p.reshape(n, JOINT_NUM, DEPTH_DIM, OUT_H, OUT_W)
    ax = (p.sum(axis=(2, 3)) * jnp.arange(1, OUT_W + 1)).sum(-1, keepdims=True) - 1
    ay = (p.sum(axis=(2, 4)) * jnp.arange(1, OUT_H + 1)).sum(-1, keepdims=True) - 1
    az = (p.sum(axis=(3, 4)) * jnp.arange(1, DEPTH_DIM + 1)).sum(-1, keepdims=True) - 1
    return jnp.concatenate([ax, ay, az], axis=2)


def _ref_forward(params, input_img, s_max=S_MAX, s_min=S_MIN):
    """Un-commuted, f32 reference: pool, 1x1 conv, log_var_head, UPSAMPLE then
    1x1 head conv (original stand-in order), NCHW hm, original soft_argmax."""
    n = input_img.shape[0]
    ph = input_img.shape[2] // FM_H
    pw = input_img.shape[3] // FM_W
    x = jnp.transpose(input_img, (0, 2, 3, 1))
    x = x.reshape(n, FM_H, ph, FM_W, pw, 3).mean(axis=(2, 4))        # (n,4,4,3)
    fm = x.reshape(n, SP, 3) @ params["bb_w"] + params["bb_b"]       # (n,16,2048)

    gap = fm.mean(axis=1)                                            # (n,2048)
    s1 = params["bn1_gamma"] / jnp.sqrt(params["bn1_var"] + BN_EPS)
    t1 = params["bn1_beta"] - params["bn1_mean"] * s1
    s2 = params["bn2_gamma"] / jnp.sqrt(params["bn2_var"] + BN_EPS)
    t2 = params["bn2_beta"] - params["bn2_mean"] * s2
    h1 = jnp.maximum((gap @ params["w1"].astype(jnp.float32)) * s1 + t1, 0.0)
    h2 = jnp.maximum((h1 @ params["w2"].astype(jnp.float32)) * s2 + t2, 0.0)
    logits = h2 @ params["w3"] + params["b3"]
    scale = (s_max - s_min) * jax.nn.sigmoid(logits) + s_min         # (n,18)

    up = fm.reshape(n, FM_H, FM_W, FM_C)
    up = jnp.repeat(jnp.repeat(up, OUT_H // FM_H, axis=1), OUT_W // FM_W, axis=2)
    hm = (up.reshape(n, OUT_H * OUT_W, FM_C)
          @ params["head_w"].astype(jnp.float32) + params["head_b"])
    hm = jnp.transpose(hm.reshape(n, OUT_H, OUT_W, JD), (0, 3, 1, 2))   # NCHW
    coord = _ref_soft_argmax(hm, scale)
    return coord, scale


# ----------------------------- main ------------------------------------------
if __name__ == "__main__":
    key = jax.random.PRNGKey(0)
    k_img, k_par = jax.random.split(key)
    N = 16
    input_img = jax.random.normal(k_img, (N, 3, 32, 32), jnp.float32)   # NCHW
    params = init_params(k_par)

    fwd = jax.jit(respose_net_forward)
    coord, scale = fwd(params, input_img)
    coord = jax.block_until_ready(coord)
    scale = jax.block_until_ready(scale)

    assert coord.shape == (N, JOINT_NUM, 3), coord.shape
    assert scale.shape == (N, JOINT_NUM), scale.shape
    assert bool(jnp.all(jnp.isfinite(coord)))

    # cross-check against the un-commuted pure-JAX (f32) reference
    ref_coord, ref_scale = _ref_forward(params, input_img)
    assert bool(jnp.allclose(scale, ref_scale, rtol=1e-3, atol=1e-3))
    assert bool(jnp.allclose(coord, ref_coord, rtol=2e-2, atol=2e-2))

    print("KERNEL_OK")
</pallas_src>

<mosaic_0001>
module attributes {stable_mosaic.version = 11 : i64} {
  func.func @_fused_kernel(%arg0: i32, %arg1: memref<128x3xf32, #tpu.memory_space<vmem>>, %arg2: memref<3x2048xf32, #tpu.memory_space<vmem>>, %arg3: memref<1x2048xf32, #tpu.memory_space<vmem>>, %arg4: memref<2048x256xbf16, #tpu.memory_space<vmem>>, %arg5: memref<1x256xf32, #tpu.memory_space<vmem>>, %arg6: memref<1x256xf32, #tpu.memory_space<vmem>>, %arg7: memref<256x64xbf16, #tpu.memory_space<vmem>>, %arg8: memref<1x64xf32, #tpu.memory_space<vmem>>, %arg9: memref<1x64xf32, #tpu.memory_space<vmem>>, %arg10: memref<64x18xf32, #tpu.memory_space<vmem>>, %arg11: memref<1x18xf32, #tpu.memory_space<vmem>>, %arg12: memref<2048x144xbf16, #tpu.memory_space<vmem>>, %arg13: memref<1x144xf32, #tpu.memory_space<vmem>>, %arg14: memref<18x144xf32, #tpu.memory_space<vmem>>, %arg15: memref<128x8xf32, #tpu.memory_space<vmem>>, %arg16: memref<24x128xf32, #tpu.memory_space<vmem>>, %arg17: memref<144x36xf32, #tpu.memory_space<vmem>>, %arg18: memref<4x8x18xf32, #tpu.memory_space<vmem>>) attributes {dimension_semantics = [#tpu.dimension_semantics<parallel>], iteration_bounds = array<i64: 2>, scalar_prefetch = 0 : i64, scratch_operands = 0 : i64, tpu.core_type = #tpu.core_type<tc>, window_params = [{transform_indices = @transform_0, window_bounds = array<i64: 128, 3>}, {pipeline_mode = #tpu.pipeline_mode<synchronous>, transform_indices = @transform_1, window_bounds = array<i64: 3, 2048>}, {pipeline_mode = #tpu.pipeline_mode<synchronous>, transform_indices = @transform_2, window_bounds = array<i64: 1, 2048>}, {pipeline_mode = #tpu.pipeline_mode<synchronous>, transform_indices = @transform_3, window_bounds = array<i64: 2048, 256>}, {pipeline_mode = #tpu.pipeline_mode<synchronous>, transform_indices = @transform_4, window_bounds = array<i64: 1, 256>}, {pipeline_mode = #tpu.pipeline_mode<synchronous>, transform_indices = @transform_5, window_bounds = array<i64: 1, 256>}, {pipeline_mode = #tpu.pipeline_mode<synchronous>, transform_indices = @transform_6, window_bounds = array<i64: 256, 64>}, {pipeline_mode = #tpu.pipeline_mode<synchronous>, transform_indices = @transform_7, window_bounds = array<i64: 1, 64>}, {pipeline_mode = #tpu.pipeline_mode<synchronous>, transform_indices = @transform_8, window_bounds = array<i64: 1, 64>}, {pipeline_mode = #tpu.pipeline_mode<synchronous>, transform_indices = @transform_9, window_bounds = array<i64: 64, 18>}, {pipeline_mode = #tpu.pipeline_mode<synchronous>, transform_indices = @transform_10, window_bounds = array<i64: 1, 18>}, {pipeline_mode = #tpu.pipeline_mode<synchronous>, transform_indices = @transform_11, window_bounds = array<i64: 2048, 144>}, {pipeline_mode = #tpu.pipeline_mode<synchronous>, transform_indices = @transform_12, window_bounds = array<i64: 1, 144>}, {pipeline_mode = #tpu.pipeline_mode<synchronous>, transform_indices = @transform_13, window_bounds = array<i64: 18, 144>}, {pipeline_mode = #tpu.pipeline_mode<synchronous>, transform_indices = @transform_14, window_bounds = array<i64: 128, 8>}, {pipeline_mode = #tpu.pipeline_mode<synchronous>, transform_indices = @transform_15, window_bounds = array<i64: 24, 128>}, {pipeline_mode = #tpu.pipeline_mode<synchronous>, transform_indices = @transform_16, window_bounds = array<i64: 144, 36>}, {transform_indices = @transform_17, window_bounds = array<i64: 4, 8, 18>}]} {
    %c0 = arith.constant 0 : index
    %c0_0 = arith.constant 0 : index
    %0 = vector.load %arg1[%c0, %c0_0] : memref<128x3xf32, #tpu.memory_space<vmem>>, vector<128x3xf32>
    %c0_1 = arith.constant 0 : index
    %c0_2 = arith.constant 0 : index
    %1 = vector.load %arg2[%c0_1, %c0_2] : memref<3x2048xf32, #tpu.memory_space<vmem>>, vector<3x2048xf32>
    %2 = vector.extract_strided_slice %0 {offsets = [0, 0], sizes = [128, 1], strides = [1, 1]} : vector<128x3xf32> to vector<128x1xf32>
    %3 = vector.extract_strided_slice %1 {offsets = [0, 0], sizes = [1, 2048], strides = [1, 1]} : vector<3x2048xf32> to vector<1x2048xf32>
    %4 = vector.broadcast %2 : vector<128x1xf32> to vector<128x2048xf32>
    %5 = vector.broadcast %3 : vector<1x2048xf32> to vector<128x2048xf32>
    %6 = arith.mulf %4, %5 : vector<128x2048xf32>
    %7 = vector.extract_strided_slice %0 {offsets = [0, 1], sizes = [128, 1], strides = [1, 1]} : vector<128x3xf32> to vector<128x1xf32>
    %8 = vector.extract_strided_slice %1 {offsets = [1, 0], sizes = [1, 2048], strides = [1, 1]} : vector<3x2048xf32> to vector<1x2048xf32>
    %9 = vector.broadcast %7 : vector<128x1xf32> to vector<128x2048xf32>
    %10 = vector.broadcast %8 : vector<1x2048xf32> to vector<128x2048xf32>
    %11 = arith.mulf %9, %10 : vector<128x2048xf32>
    %12 = arith.addf %6, %11 : vector<128x2048xf32>
    %13 = vector.extract_strided_slice %0 {offsets = [0, 2], sizes = [128, 1], strides = [1, 1]} : vector<128x3xf32> to vector<128x1xf32>
    %14 = vector.extract_strided_slice %1 {offsets = [2, 0], sizes = [1, 2048], strides = [1, 1]} : vector<3x2048xf32> to vector<1x2048xf32>
    %15 = vector.broadcast %13 : vector<128x1xf32> to vector<128x2048xf32>
    %16 = vector.broadcast %14 : vector<1x2048xf32> to vector<128x2048xf32>
    %17 = arith.mulf %15, %16 : vector<128x2048xf32>
    %18 = arith.addf %12, %17 : vector<128x2048xf32>
    %c0_3 = arith.constant 0 : index
    %c0_4 = arith.constant 0 : index
    %19 = vector.load %arg3[%c0_3, %c0_4] : memref<1x2048xf32, #tpu.memory_space<vmem>>, vector<1x2048xf32>
    %20 = vector.broadcast %19 : vector<1x2048xf32> to vector<128x2048xf32>
    %21 = arith.addf %18, %20 : vector<128x2048xf32>
    %c0_5 = arith.constant 0 : index
    %c0_6 = arith.constant 0 : index
    %22 = vector.load %arg16[%c0_5, %c0_6] : memref<24x128xf32, #tpu.memory_space<vmem>>, vector<24x128xf32>
    %23 = vector.extract_strided_slice %22 {offsets = [0, 0], sizes = [8, 128], strides = [1, 1]} : vector<24x128xf32> to vector<8x128xf32>
    %cst = arith.constant dense<0.000000e+00> : vector<8x2048xf32>
    %24 = tpu.matmul %23, %21, %cst {dimension_numbers = #tpu.dot_dimension_numbers<[1], [0], [0], [1], [0, 0, 1, 1], [], []>} : vector<8x128xf32>, vector<128x2048xf32>, vector<8x2048xf32> -> vector<8x2048xf32>
    %cst_7 = arith.constant 6.250000e-02 : f32
    %25 = vector.broadcast %cst_7 : f32 to vector<8x2048xf32>
    %26 = arith.mulf %24, %25 : vector<8x2048xf32>
    %27 = arith.truncf %26 : vector<8x2048xf32> to vector<8x2048xbf16>
    %c0_8 = arith.constant 0 : index
    %c0_9 = arith.constant 0 : index
    %28 = vector.load %arg4[%c0_8, %c0_9] : memref<2048x256xbf16, #tpu.memory_space<vmem>>, vector<2048x256xbf16>
    %cst_10 = arith.constant dense<0.000000e+00> : vector<8x256xf32>
    %29 = tpu.matmul %27, %28, %cst_10 {dimension_numbers = #tpu.dot_dimension_numbers<[1], [0], [0], [1], [0, 0, 1, 1], [], []>} : vector<8x2048xbf16>, vector<2048x256xbf16>, vector<8x256xf32> -> vector<8x256xf32>
    %c0_11 = arith.constant 0 : index
    %c0_12 = arith.constant 0 : index
    %30 = vector.load %arg5[%c0_11, %c0_12] : memref<1x256xf32, #tpu.memory_space<vmem>>, vector<1x256xf32>
    %31 = vector.broadcast %30 : vector<1x256xf32> to vector<8x256xf32>
    %32 = arith.mulf %29, %31 : vector<8x256xf32>
    %c0_13 = arith.constant 0 : index
    %c0_14 = arith.constant 0 : index
    %33 = vector.load %arg6[%c0_13, %c0_14] : memref<1x256xf32, #tpu.memory_space<vmem>>, vector<1x256xf32>
    %34 = vector.broadcast %33 : vector<1x256xf32> to vector<8x256xf32>
    %35 = arith.addf %32, %34 : vector<8x256xf32>
    %cst_15 = arith.constant 0.000000e+00 : f32
    %36 = vector.broadcast %cst_15 : f32 to vector<8x256xf32>
    %37 = arith.maximumf %35, %36 : vector<8x256xf32>
    %38 = arith.truncf %37 : vector<8x256xf32> to vector<8x256xbf16>
    %c0_16 = arith.constant 0 : index
    %c0_17 = arith.constant 0 : index
    %39 = vector.load %arg7[%c0_16, %c0_17] : memref<256x64xbf16, #tpu.memory_space<vmem>>, vector<256x64xbf16>
    %cst_18 = arith.constant dense<0.000000e+00> : vector<8x64xf32>
    %40 = tpu.matmul %38, %39, %cst_18 {dimension_numbers = #tpu.dot_dimension_numbers<[1], [0], [0], [1], [0, 0, 1, 1], [], []>} : vector<8x256xbf16>, vector<256x64xbf16>, vector<8x64xf32> -> vector<8x64xf32>
    %c0_19 = arith.constant 0 : index
    %c0_20 = arith.constant 0 : index
    %41 = vector.load %arg8[%c0_19, %c0_20] : memref<1x64xf32, #tpu.memory_space<vmem>>, vector<1x64xf32>
    %42 = vector.broadcast %41 : vector<1x64xf32> to vector<8x64xf32>
    %43 = arith.mulf %40, %42 : vector<8x64xf32>
    %c0_21 = arith.constant 0 : index
    %c0_22 = arith.constant 0 : index
    %44 = vector.load %arg9[%c0_21, %c0_22] : memref<1x64xf32, #tpu.memory_space<vmem>>, vector<1x64xf32>
    %45 = vector.broadcast %44 : vector<1x64xf32> to vector<8x64xf32>
    %46 = arith.addf %43, %45 : vector<8x64xf32>
    %cst_23 = arith.constant 0.000000e+00 : f32
    %47 = vector.broadcast %cst_23 : f32 to vector<8x64xf32>
    %48 = arith.maximumf %46, %47 : vector<8x64xf32>
    %c0_24 = arith.constant 0 : index
    %c0_25 = arith.constant 0 : index
    %49 = vector.load %arg10[%c0_24, %c0_25] : memref<64x18xf32, #tpu.memory_space<vmem>>, vector<64x18xf32>
    %cst_26 = arith.constant dense<0.000000e+00> : vector<8x18xf32>
    %50 = tpu.matmul %48, %49, %cst_26 {dimension_numbers = #tpu.dot_dimension_numbers<[1], [0], [0], [1], [0, 0, 1, 1], [], []>} : vector<8x64xf32>, vector<64x18xf32>, vector<8x18xf32> -> vector<8x18xf32>
    %c0_27 = arith.constant 0 : index
    %c0_28 = arith.constant 0 : index
    %51 = vector.load %arg11[%c0_27, %c0_28] : memref<1x18xf32, #tpu.memory_space<vmem>>, vector<1x18xf32>
    %52 = vector.broadcast %51 : vector<1x18xf32> to vector<8x18xf32>
    %53 = arith.addf %50, %52 : vector<8x18xf32>
    %cst_29 = arith.constant 0.000000e+00 : f32
    %54 = vector.broadcast %cst_29 : f32 to vector<8x18xf32>
    %55 = arith.subf %54, %53 : vector<8x18xf32>
    %56 = math.exp %55 : vector<8x18xf32>
    %cst_30 = arith.constant 1.000000e+00 : f32
    %57 = vector.broadcast %cst_30 : f32 to vector<8x18xf32>
    %58 = arith.addf %57, %56 : vector<8x18xf32>
    %cst_31 = arith.constant 9.000000e+00 : f32
    %59 = vector.broadcast %cst_31 : f32 to vector<8x18xf32>
    %60 = arith.divf %59, %58 : vector<8x18xf32>
    %cst_32 = arith.constant 1.000000e+00 : f32
    %61 = vector.broadcast %cst_32 : f32 to vector<8x18xf32>
    %62 = arith.addf %60, %61 : vector<8x18xf32>
    %63 = arith.truncf %21 : vector<128x2048xf32> to vector<128x2048xbf16>
    %c0_33 = arith.constant 0 : index
    %c0_34 = arith.constant 0 : index
    %64 = vector.load %arg12[%c0_33, %c0_34] : memref<2048x144xbf16, #tpu.memory_space<vmem>>, vector<2048x144xbf16>
    %cst_35 = arith.constant dense<0.000000e+00> : vector<128x144xf32>
    %65 = tpu.matmul %63, %64, %cst_35 {dimension_numbers = #tpu.dot_dimension_numbers<[1], [0], [0], [1], [0, 0, 1, 1], [], []>} : vector<128x2048xbf16>, vector<2048x144xbf16>, vector<128x144xf32> -> vector<128x144xf32>
    %c0_36 = arith.constant 0 : index
    %c0_37 = arith.constant 0 : index
    %66 = vector.load %arg13[%c0_36, %c0_37] : memref<1x144xf32, #tpu.memory_space<vmem>>, vector<1x144xf32>
    %67 = vector.broadcast %66 : vector<1x144xf32> to vector<128x144xf32>
    %68 = arith.addf %65, %67 : vector<128x144xf32>
    %c0_38 = arith.constant 0 : index
    %c0_39 = arith.constant 0 : index
    %69 = vector.load %arg15[%c0_38, %c0_39] : memref<128x8xf32, #tpu.memory_space<vmem>>, vector<128x8xf32>
    %cst_40 = arith.constant dense<0.000000e+00> : vector<128x18xf32>
    %70 = tpu.matmul %69, %62, %cst_40 {dimension_numbers = #tpu.dot_dimension_numbers<[1], [0], [0], [1], [0, 0, 1, 1], [], []>} : vector<128x8xf32>, vector<8x18xf32>, vector<128x18xf32> -> vector<128x18xf32>
    %c0_41 = arith.constant 0 : index
    %c0_42 = arith.constant 0 : index
    %71 = vector.load %arg14[%c0_41, %c0_42] : memref<18x144xf32, #tpu.memory_space<vmem>>, vector<18x144xf32>
    %cst_43 = arith.constant dense<0.000000e+00> : vector<128x144xf32>
    %72 = tpu.matmul %70, %71, %cst_43 {dimension_numbers = #tpu.dot_dimension_numbers<[1], [0], [0], [1], [0, 0, 1, 1], [], []>} : vector<128x18xf32>, vector<18x144xf32>, vector<128x144xf32> -> vector<128x144xf32>
    %73 = arith.mulf %68, %72 : vector<128x144xf32>
    %74 = vector.shape_cast %73 : vector<128x144xf32> to vector<8x16x144xf32>
    %cst_44 = arith.constant dense<0xFF800000> : vector<8x16xf32>
    %75 = vector.multi_reduction <maximumf>, %74, %cst_44 [2] : vector<8x16x144xf32> to vector<8x16xf32>
    %76 = vector.shape_cast %75 : vector<8x16xf32> to vector<8x16x1xf32>
    %cst_45 = arith.constant dense<0xFF800000> : vector<8x1xf32>
    %77 = vector.multi_reduction <maximumf>, %76, %cst_45 [1] : vector<8x16x1xf32> to vector<8x1xf32>
    %78 = vector.shape_cast %77 : vector<8x1xf32> to vector<8x1x1xf32>
    %79 = vector.broadcast %78 : vector<8x1x1xf32> to vector<8x16x144xf32>
    %80 = arith.subf %74, %79 : vector<8x16x144xf32>
    %81 = math.exp %80 : vector<8x16x144xf32>
    %82 = vector.shape_cast %81 : vector<8x16x144xf32> to vector<128x144xf32>
    %cst_46 = arith.constant dense<0.000000e+00> : vector<24x144xf32>
    %83 = tpu.matmul %22, %82, %cst_46 {dimension_numbers = #tpu.dot_dimension_numbers<[1], [0], [0], [1], [0, 0, 1, 1], [], []>} : vector<24x128xf32>, vector<128x144xf32>, vector<24x144xf32> -> vector<24x144xf32>
    %c0_47 = arith.constant 0 : index
    %c0_48 = arith.constant 0 : index
    %84 = vector.load %arg17[%c0_47, %c0_48] : memref<144x36xf32, #tpu.memory_space<vmem>>, vector<144x36xf32>
    %cst_49 = arith.constant dense<0.000000e+00> : vector<24x36xf32>
    %85 = tpu.matmul %83, %84, %cst_49 {dimension_numbers = #tpu.dot_dimension_numbers<[1], [0], [0], [1], [0, 0, 1, 1], [], []>} : vector<24x144xf32>, vector<144x36xf32>, vector<24x36xf32> -> vector<24x36xf32>
    %86 = vector.extract_strided_slice %85 {offsets = [0, 0], sizes = [8, 18], strides = [1, 1]} : vector<24x36xf32> to vector<8x18xf32>
    %cst_50 = arith.constant 1.000000e+00 : f32
    %87 = vector.broadcast %cst_50 : f32 to vector<8x18xf32>
    %88 = arith.divf %87, %86 : vector<8x18xf32>
    %89 = vector.extract_strided_slice %85 {offsets = [8, 0], sizes = [8, 18], strides = [1, 1]} : vector<24x36xf32> to vector<8x18xf32>
    %90 = arith.mulf %89, %88 : vector<8x18xf32>
    %c0_51 = arith.constant 0 : index
    %c0_52 = arith.constant 0 : index
    %c0_53 = arith.constant 0 : index
    %91 = vector.load %arg18[%c0_51, %c0_52, %c0_53] : memref<4x8x18xf32, #tpu.memory_space<vmem>>, vector<1x8x18xf32>
    %92 = vector.shape_cast %91 : vector<1x8x18xf32> to vector<8x18xf32>
    %93 = vector.shape_cast %90 : vector<8x18xf32> to vector<1x8x18xf32>
    tpu.vector_store %arg18[%c0_51, %c0_52, %c0_53], %93 {strides = array<i32>} : memref<4x8x18xf32, #tpu.memory_space<vmem>>, vector<1x8x18xf32>,
    %94 = vector.extract_strided_slice %85 {offsets = [16, 0], sizes = [8, 18], strides = [1, 1]} : vector<24x36xf32> to vector<8x18xf32>
    %95 = arith.mulf %94, %88 : vector<8x18xf32>
    %c1 = arith.constant 1 : index
    %c0_54 = arith.constant 0 : index
    %c0_55 = arith.constant 0 : index
    %96 = vector.load %arg18[%c1, %c0_54, %c0_55] : memref<4x8x18xf32, #tpu.memory_space<vmem>>, vector<1x8x18xf32>
    %97 = vector.shape_cast %96 : vector<1x8x18xf32> to vector<8x18xf32>
    %98 = vector.shape_cast %95 : vector<8x18xf32> to vector<1x8x18xf32>
    tpu.vector_store %arg18[%c1, %c0_54, %c0_55], %98 {strides = array<i32>} : memref<4x8x18xf32, #tpu.memory_space<vmem>>, vector<1x8x18xf32>,
    %99 = vector.extract_strided_slice %85 {offsets = [0, 18], sizes = [8, 18], strides = [1, 1]} : vector<24x36xf32> to vector<8x18xf32>
    %100 = arith.mulf %99, %88 : vector<8x18xf32>
    %c2 = arith.constant 2 : index
    %c0_56 = arith.constant 0 : index
    %c0_57 = arith.constant 0 : index
    %101 = vector.load %arg18[%c2, %c0_56, %c0_57] : memref<4x8x18xf32, #tpu.memory_space<vmem>>, vector<1x8x18xf32>
    %102 = vector.shape_cast %101 : vector<1x8x18xf32> to vector<8x18xf32>
    %103 = vector.shape_cast %100 : vector<8x18xf32> to vector<1x8x18xf32>
    tpu.vector_store %arg18[%c2, %c0_56, %c0_57], %103 {strides = array<i32>} : memref<4x8x18xf32, #tpu.memory_space<vmem>>, vector<1x8x18xf32>,
    %c3 = arith.constant 3 : index
    %c0_58 = arith.constant 0 : index
    %c0_59 = arith.constant 0 : index
    %104 = vector.load %arg18[%c3, %c0_58, %c0_59] : memref<4x8x18xf32, #tpu.memory_space<vmem>>, vector<1x8x18xf32>
    %105 = vector.shape_cast %104 : vector<1x8x18xf32> to vector<8x18xf32>
    %106 = vector.shape_cast %62 : vector<8x18xf32> to vector<1x8x18xf32>
    tpu.vector_store %arg18[%c3, %c0_58, %c0_59], %106 {strides = array<i32>} : memref<4x8x18xf32, #tpu.memory_space<vmem>>, vector<1x8x18xf32>,
    return
  }
  func.func @transform_0(%arg0: i32) -> (i32, i32) {
    %c0_i32 = arith.constant 0 : i32
    %c0_i32_0 = arith.constant 0 : i32
    return %arg0, %c0_i32 : i32, i32
  }
  func.func @transform_1(%arg0: i32) -> (i32, i32) {
    %c0_i32 = arith.constant 0 : i32
    %c0_i32_0 = arith.constant 0 : i32
    %c0_i32_1 = arith.constant 0 : i32
    return %c0_i32, %c0_i32_0 : i32, i32
  }
  func.func @transform_2(%arg0: i32) -> (i32, i32) {
    %c0_i32 = arith.constant 0 : i32
    %c0_i32_0 = arith.constant 0 : i32
    %c0_i32_1 = arith.constant 0 : i32
    return %c0_i32, %c0_i32_0 : i32, i32
  }
  func.func @transform_3(%arg0: i32) -> (i32, i32) {
    %c0_i32 = arith.constant 0 : i32
    %c0_i32_0 = arith.constant 0 : i32
    %c0_i32_1 = arith.constant 0 : i32
    return %c0_i32, %c0_i32_0 : i32, i32
  }
  func.func @transform_4(%arg0: i32) -> (i32, i32) {
    %c0_i32 = arith.constant 0 : i32
    %c0_i32_0 = arith.constant 0 : i32
    %c0_i32_1 = arith.constant 0 : i32
    return %c0_i32, %c0_i32_0 : i32, i32
  }
  func.func @transform_5(%arg0: i32) -> (i32, i32) {
    %c0_i32 = arith.constant 0 : i32
    %c0_i32_0 = arith.constant 0 : i32
    %c0_i32_1 = arith.constant 0 : i32
    return %c0_i32, %c0_i32_0 : i32, i32
  }
  func.func @transform_6(%arg0: i32) -> (i32, i32) {
    %c0_i32 = arith.constant 0 : i32
    %c0_i32_0 = arith.constant 0 : i32
    %c0_i32_1 = arith.constant 0 : i32
    return %c0_i32, %c0_i32_0 : i32, i32
  }
  func.func @transform_7(%arg0: i32) -> (i32, i32) {
    %c0_i32 = arith.constant 0 : i32
    %c0_i32_0 = arith.constant 0 : i32
    %c0_i32_1 = arith.constant 0 : i32
    return %c0_i32, %c0_i32_0 : i32, i32
  }
  func.func @transform_8(%arg0: i32) -> (i32, i32) {
    %c0_i32 = arith.constant 0 : i32
    %c0_i32_0 = arith.constant 0 : i32
    %c0_i32_1 = arith.constant 0 : i32
    return %c0_i32, %c0_i32_0 : i32, i32
  }
  func.func @transform_9(%arg0: i32) -> (i32, i32) {
    %c0_i32 = arith.constant 0 : i32
    %c0_i32_0 = arith.constant 0 : i32
    %c0_i32_1 = arith.constant 0 : i32
    return %c0_i32, %c0_i32_0 : i32, i32
  }
  func.func @transform_10(%arg0: i32) -> (i32, i32) {
    %c0_i32 = arith.constant 0 : i32
    %c0_i32_0 = arith.constant 0 : i32
    %c0_i32_1 = arith.constant 0 : i32
    return %c0_i32, %c0_i32_0 : i32, i32
  }
  func.func @transform_11(%arg0: i32) -> (i32, i32) {
    %c0_i32 = arith.constant 0 : i32
    %c0_i32_0 = arith.constant 0 : i32
    %c0_i32_1 = arith.constant 0 : i32
    return %c0_i32, %c0_i32_0 : i32, i32
  }
  func.func @transform_12(%arg0: i32) -> (i32, i32) {
    %c0_i32 = arith.constant 0 : i32
    %c0_i32_0 = arith.constant 0 : i32
    %c0_i32_1 = arith.constant 0 : i32
    return %c0_i32, %c0_i32_0 : i32, i32
  }
  func.func @transform_13(%arg0: i32) -> (i32, i32) {
    %c0_i32 = arith.constant 0 : i32
    %c0_i32_0 = arith.constant 0 : i32
    %c0_i32_1 = arith.constant 0 : i32
    return %c0_i32, %c0_i32_0 : i32, i32
  }
  func.func @transform_14(%arg0: i32) -> (i32, i32) {
    %c0_i32 = arith.constant 0 : i32
    %c0_i32_0 = arith.constant 0 : i32
    %c0_i32_1 = arith.constant 0 : i32
    return %c0_i32, %c0_i32_0 : i32, i32
  }
  func.func @transform_15(%arg0: i32) -> (i32, i32) {
    %c0_i32 = arith.constant 0 : i32
    %c0_i32_0 = arith.constant 0 : i32
    %c0_i32_1 = arith.constant 0 : i32
    return %c0_i32, %c0_i32_0 : i32, i32
  }
  func.func @transform_16(%arg0: i32) -> (i32, i32) {
    %c0_i32 = arith.constant 0 : i32
    %c0_i32_0 = arith.constant 0 : i32
    %c0_i32_1 = arith.constant 0 : i32
    return %c0_i32, %c0_i32_0 : i32, i32
  }
  func.func @transform_17(%arg0: i32) -> (i32, i32, i32) {
    %c0_i32 = arith.constant 0 : i32
    %c0_i32_0 = arith.constant 0 : i32
    %c0_i32_1 = arith.constant 0 : i32
    return %c0_i32, %arg0, %c0_i32_0 : i32, i32, i32
  }
}

</mosaic_0001>

<llo_original>
// kernel: respose_net_forward.1
$region0: #{respose_net_forward.1}
  #allocation0 [shape = 'u32[]', space=smem, size = 0x4, offset = 0x4, fixed_abs, tag = 'smem constant byte address 0x4 - core index']
  #allocation1 [shape = 'u32[72,128]{1,0:T(1,128)}', space=vmem, size = 0x9000, scoped, tag = 'internal scratch']
  %s0 = inlined_call_operand.vmem [shape: f32[256,3], index: 0, kind: input, shape index: {}]
  %s1 = inlined_call_operand.vmem [shape: f32[3,2048], index: 1, kind: input, shape index: {}]
  %s2 = inlined_call_operand.vmem [shape: f32[1,2048], index: 2, kind: input, shape index: {}]
  %s3 = inlined_call_operand.vmem [shape: bf16[2048,256], index: 3, kind: input, shape index: {}]
  %s4 = inlined_call_operand.vmem [shape: f32[1,256], index: 4, kind: input, shape index: {}]
  %s5 = inlined_call_operand.vmem [shape: f32[1,256], index: 5, kind: input, shape index: {}]
  %s6 = inlined_call_operand.vmem [shape: bf16[256,64], index: 6, kind: input, shape index: {}]
  %s7 = inlined_call_operand.vmem [shape: f32[1,64], index: 7, kind: input, shape index: {}]
  %s8 = inlined_call_operand.vmem [shape: f32[1,64], index: 8, kind: input, shape index: {}]
  %s9 = inlined_call_operand.vmem [shape: f32[64,18], index: 9, kind: input, shape index: {}]
  %s10 = inlined_call_operand.vmem [shape: f32[1,18], index: 10, kind: input, shape index: {}]
  %s11 = inlined_call_operand.vmem [shape: bf16[2048,144], index: 11, kind: input, shape index: {}]
  %s12 = inlined_call_operand.vmem [shape: f32[1,144], index: 12, kind: input, shape index: {}]
  %s13 = inlined_call_operand.vmem [shape: f32[18,144], index: 13, kind: input, shape index: {}]
  %s14 = inlined_call_operand.vmem [shape: f32[128,8], index: 14, kind: input, shape index: {}]
  %s15 = inlined_call_operand.vmem [shape: f32[24,128], index: 15, kind: input, shape index: {}]
  %s16 = inlined_call_operand.vmem [shape: f32[144,36], index: 16, kind: input, shape index: {}]
  %s17 = inlined_call_operand.vmem [shape: f32[4,16,18], index: 17, kind: output, shape index: {}]
  %s18 = sld [smem:[#allocation0]]
  $region135: #{respose_net_forward.1} parent=0
    _
  %s20 = ssub.s32 1, %s18
  %s21 = scalar_select 0, %s20, %s18
  $region1: #{respose_net_forward.1} parent=0
    #allocation2 [shape = 'u8[32768]{0}', space=vmem, size = 0x8000, scoped, tag = 'output window, operand 0']
    loop: start=0, step=1, limit=4
    $region2: #{respose_net_forward.1} parent=1 // loop_pre_header
      _
    $region3: #{respose_net_forward.1} parent=1 // loop_header
      %s23 = sphi 0, %s27
      %p24 = scmp.ge.s32.totalorder %s23, 4
      %s33 = sphi 0, %s35
      %s36 = sphi 0, %s33
      %s37 = sphi 0, %s36
      %s53 = sphi 0, %s37
      %s57 = sphi 0, %s57
      %s59 = sphi 0, %s57
      %s60 = sphi 0, %s59
      %s74 = sphi 0, %s60
      %s78 = sphi 0, %s78
      %s80 = sphi 0, %s78
      %s81 = sphi 0, %s80
      %s95 = sphi 0, %s81
      %s99 = sphi 0, %s99
      %s101 = sphi 0, %s99
      %s102 = sphi 0, %s101
      %s116 = sphi 0, %s102
      %s120 = sphi 0, %s120
      %s122 = sphi 0, %s120
      %s123 = sphi 0, %s122
      %s137 = sphi 0, %s123
      %s141 = sphi 0, %s141
      %s143 = sphi 0, %s141
      %s144 = sphi 0, %s143
      %s158 = sphi 0, %s144
      %s162 = sphi 0, %s162
      %s164 = sphi 0, %s162
      %s165 = sphi 0, %s164
      %s179 = sphi 0, %s165
      %s183 = sphi 0, %s183
      %s185 = sphi 0, %s183
      %s186 = sphi 0, %s185
      %s200 = sphi 0, %s186
      %s204 = sphi 0, %s204
      %s206 = sphi 0, %s204
      %s207 = sphi 0, %s206
      %s221 = sphi 0, %s207
      %s225 = sphi 0, %s225
      %s227 = sphi 0, %s225
      %s228 = sphi 0, %s227
      %s242 = sphi 0, %s228
      %s246 = sphi 0, %s246
      %s248 = sphi 0, %s246
      %s249 = sphi 0, %s248
      %s263 = sphi 0, %s249
      %s267 = sphi 0, %s267
      %s269 = sphi 0, %s267
      %s270 = sphi 0, %s269
      %s284 = sphi 0, %s270
      %s288 = sphi 0, %s288
      %s290 = sphi 0, %s288
      %s291 = sphi 0, %s290
      %s305 = sphi 0, %s291
      %s309 = sphi 0, %s309
      %s311 = sphi 0, %s309
      %s312 = sphi 0, %s311
      %s326 = sphi 0, %s312
      %s330 = sphi 0, %s330
      %s332 = sphi 0, %s330
      %s333 = sphi 0, %s332
      %s347 = sphi 0, %s333
      %s351 = sphi 0, %s351
      %s353 = sphi 0, %s351
      %s354 = sphi 0, %s353
      %s368 = sphi 0, %s354
      %s372 = sphi 0, %s372
      %s374 = sphi 0, %s372
      %s375 = sphi 0, %s374
      %s389 = sphi 0, %s375
      %s395 = sphi 0, %s397
      %s398 = sphi 0, %s395
      %s399 = sphi 0, %s398
      %s415 = sphi 0, %s399
    $region4: #{respose_net_forward.1} parent=1 // loop_header_branch
      %26 = sbr.rel (%p24) target = $region8
    $region5: #{respose_net_forward.1} parent=1 // loop_body
      %s28 = ssub.s32 %s23, 1
      %s29 = ssub.s32 %s23, 2
      %s30 = sadd.s32 %s23, 1
      %s31 = ssub.s32 %s23, %s30
      %p32 = scmp.eq.s32.totalorder %s31, 0
      %s34 = sadd.s32 %s33, 1
      %s35 = scalar_select %p32, %s33, %s34
      %p38 = pneg %p32
      %p39 = scmp.eq.s32.totalorder %s23, 1
      %p40 = por %p38, %p39
      %p41 = scmp.ne.s32.totalorder %s33, %s36
      %p42 = scmp.eq.s32.totalorder %s23, 0
      %p43 = por %p41, %p42
      %p44 = scmp.ne.s32.totalorder %s33, %s36
      %p45 = scmp.eq.s32.totalorder %s28, 1
      %p46 = por %p44, %p45
      %p47 = scmp.ne.s32.totalorder %s36, %s37
      %p48 = scmp.eq.s32.totalorder %s28, 0
      %p49 = por %p47, %p48
      %p50 = scmp.ne.s32.totalorder %s36, %s37
      %p51 = scmp.eq.s32.totalorder %s29, 1
      %p52 = por %p50, %p51
      %p54 = scmp.ne.s32.totalorder %s37, %s53
      %p55 = scmp.eq.s32.totalorder %s29, 0
      %p56 = por %p54, %p55
      %s58 = sadd.s32 %s57, 1
      %p61 = scmp.eq.s32.totalorder %s23, 1
      %p62 = scmp.ne.s32.totalorder %s57, %s59
      %p63 = scmp.eq.s32.totalorder %s23, 0
      %p64 = por %p62, %p63
      %p65 = scmp.ne.s32.totalorder %s57, %s59
      %p66 = scmp.eq.s32.totalorder %s28, 1
      %p67 = por %p65, %p66
      %p68 = scmp.ne.s32.totalorder %s59, %s60
      %p69 = scmp.eq.s32.totalorder %s28, 0
      %p70 = por %p68, %p69
      %p71 = scmp.ne.s32.totalorder %s59, %s60
      %p72 = scmp.eq.s32.totalorder %s29, 1
      %p73 = por %p71, %p72
      %p75 = scmp.ne.s32.totalorder %s60, %s74
      %p76 = scmp.eq.s32.totalorder %s29, 0
      %p77 = por %p75, %p76
      %s79 = sadd.s32 %s78, 1
      %p82 = scmp.eq.s32.totalorder %s23, 1
      %p83 = scmp.ne.s32.totalorder %s78, %s80
      %p84 = scmp.eq.s32.totalorder %s23, 0
      %p85 = por %p83, %p84
      %p86 = scmp.ne.s32.totalorder %s78, %s80
      %p87 = scmp.eq.s32.totalorder %s28, 1
      %p88 = por %p86, %p87
      %p89 = scmp.ne.s32.totalorder %s80, %s81
      %p90 = scmp.eq.s32.totalorder %s28, 0
      %p91 = por %p89, %p90
      %p92 = scmp.ne.s32.totalorder %s80, %s81
      %p93 = scmp.eq.s32.totalorder %s29, 1
      %p94 = por %p92, %p93
      %p96 = scmp.ne.s32.totalorder %s81, %s95
      %p97 = scmp.eq.s32.totalorder %s29, 0
      %p98 = por %p96, %p97
      %s100 = sadd.s32 %s99, 1
      %p103 = scmp.eq.s32.totalorder %s23, 1
      %p104 = scmp.ne.s32.totalorder %s99, %s101
      %p105 = scmp.eq.s32.totalorder %s23, 0
      %p106 = por %p104, %p105
      %p107 = scmp.ne.s32.totalorder %s99, %s101
      %p108 = scmp.eq.s32.totalorder %s28, 1
      %p109 = por %p107, %p108
      %p110 = scmp.ne.s32.totalorder %s101, %s102
      %p111 = scmp.eq.s32.totalorder %s28, 0
      %p112 = por %p110, %p111
      %p113 = scmp.ne.s32.totalorder %s101, %s102
      %p114 = scmp.eq.s32.totalorder %s29, 1
      %p115 = por %p113, %p114
      %p117 = scmp.ne.s32.totalorder %s102, %s116
      %p118 = scmp.eq.s32.totalorder %s29, 0
      %p119 = por %p117, %p118
      %s121 = sadd.s32 %s120, 1
      %p124 = scmp.eq.s32.totalorder %s23, 1
      %p125 = scmp.ne.s32.totalorder %s120, %s122
      %p126 = scmp.eq.s32.totalorder %s23, 0
      %p127 = por %p125, %p126
      %p128 = scmp.ne.s32.totalorder %s120, %s122
      %p129 = scmp.eq.s32.totalorder %s28, 1
      %p130 = por %p128, %p129
      %p131 = scmp.ne.s32.totalorder %s122, %s123
      %p132 = scmp.eq.s32.totalorder %s28, 0
      %p133 = por %p131, %p132
      %p134 = scmp.ne.s32.totalorder %s122, %s123
      %p135 = scmp.eq.s32.totalorder %s29, 1
      %p136 = por %p134, %p135
      %p138 = scmp.ne.s32.totalorder %s123, %s137
      %p139 = scmp.eq.s32.totalorder %s29, 0
      %p140 = por %p138, %p139
      %s142 = sadd.s32 %s141, 1
      %p145 = scmp.eq.s32.totalorder %s23, 1
      %p146 = scmp.ne.s32.totalorder %s141, %s143
      %p147 = scmp.eq.s32.totalorder %s23, 0
      %p148 = por %p146, %p147
      %p149 = scmp.ne.s32.totalorder %s141, %s143
      %p150 = scmp.eq.s32.totalorder %s28, 1
      %p151 = por %p149, %p150
      %p152 = scmp.ne.s32.totalorder %s143, %s144
      %p153 = scmp.eq.s32.totalorder %s28, 0
      %p154 = por %p152, %p153
      %p155 = scmp.ne.s32.totalorder %s143, %s144
      %p156 = scmp.eq.s32.totalorder %s29, 1
      %p157 = por %p155, %p156
      %p159 = scmp.ne.s32.totalorder %s144, %s158
      %p160 = scmp.eq.s32.totalorder %s29, 0
      %p161 = por %p159, %p160
      %s163 = sadd.s32 %s162, 1
      %p166 = scmp.eq.s32.totalorder %s23, 1
      %p167 = scmp.ne.s32.totalorder %s162, %s164
      %p168 = scmp.eq.s32.totalorder %s23, 0
      %p169 = por %p167, %p168
      %p170 = scmp.ne.s32.totalorder %s162, %s164
      %p171 = scmp.eq.s32.totalorder %s28, 1
      %p172 = por %p170, %p171
      %p173 = scmp.ne.s32.totalorder %s164, %s165
      %p174 = scmp.eq.s32.totalorder %s28, 0
      %p175 = por %p173, %p174
      %p176 = scmp.ne.s32.totalorder %s164, %s165
      %p177 = scmp.eq.s32.totalorder %s29, 1
      %p178 = por %p176, %p177
      %p180 = scmp.ne.s32.totalorder %s165, %s179
      %p181 = scmp.eq.s32.totalorder %s29, 0
      %p182 = por %p180, %p181
      %s184 = sadd.s32 %s183, 1
      %p187 = scmp.eq.s32.totalorder %s23, 1
      %p188 = scmp.ne.s32.totalorder %s183, %s185
      %p189 = scmp.eq.s32.totalorder %s23, 0
      %p190 = por %p188, %p189
      %p191 = scmp.ne.s32.totalorder %s183, %s185
      %p192 = scmp.eq.s32.totalorder %s28, 1
      %p193 = por %p191, %p192
      %p194 = scmp.ne.s32.totalorder %s185, %s186
      %p195 = scmp.eq.s32.totalorder %s28, 0
      %p196 = por %p194, %p195
      %p197 = scmp.ne.s32.totalorder %s185, %s186
      %p198 = scmp.eq.s32.totalorder %s29, 1
      %p199 = por %p197, %p198
      %p201 = scmp.ne.s32.totalorder %s186, %s200
      %p202 = scmp.eq.s32.totalorder %s29, 0
      %p203 = por %p201, %p202
      %s205 = sadd.s32 %s204, 1
      %p208 = scmp.eq.s32.totalorder %s23, 1
      %p209 = scmp.ne.s32.totalorder %s204, %s206
      %p210 = scmp.eq.s32.totalorder %s23, 0
      %p211 = por %p209, %p210
      %p212 = scmp.ne.s32.totalorder %s204, %s206
      %p213 = scmp.eq.s32.totalorder %s28, 1
      %p214 = por %p212, %p213
      %p215 = scmp.ne.s32.totalorder %s206, %s207
      %p216 = scmp.eq.s32.totalorder %s28, 0
      %p217 = por %p215, %p216
      %p218 = scmp.ne.s32.totalorder %s206, %s207
      %p219 = scmp.eq.s32.totalorder %s29, 1
      %p220 = por %p218, %p219
      %p222 = scmp.ne.s32.totalorder %s207, %s221
      %p223 = scmp.eq.s32.totalorder %s29, 0
      %p224 = por %p222, %p223
      %s226 = sadd.s32 %s225, 1
      %p229 = scmp.eq.s32.totalorder %s23, 1
      %p230 = scmp.ne.s32.totalorder %s225, %s227
      %p231 = scmp.eq.s32.totalorder %s23, 0
      %p232 = por %p230, %p231
      %p233 = scmp.ne.s32.totalorder %s225, %s227
      %p234 = scmp.eq.s32.totalorder %s28, 1
      %p235 = por %p233, %p234
      %p236 = scmp.ne.s32.totalorder %s227, %s228
      %p237 = scmp.eq.s32.totalorder %s28, 0
      %p238 = por %p236, %p237
      %p239 = scmp.ne.s32.totalorder %s227, %s228
      %p240 = scmp.eq.s32.totalorder %s29, 1
      %p241 = por %p239, %p240
      %p243 = scmp.ne.s32.totalorder %s228, %s242
      %p244 = scmp.eq.s32.totalorder %s29, 0
      %p245 = por %p243, %p244
      %s247 = sadd.s32 %s246, 1
      %p250 = scmp.eq.s32.totalorder %s23, 1
      %p251 = scmp.ne.s32.totalorder %s246, %s248
      %p252 = scmp.eq.s32.totalorder %s23, 0
      %p253 = por %p251, %p252
      %p254 = scmp.ne.s32.totalorder %s246, %s248
      %p255 = scmp.eq.s32.totalorder %s28, 1
      %p256 = por %p254, %p255
      %p257 = scmp.ne.s32.totalorder %s248, %s249
      %p258 = scmp.eq.s32.totalorder %s28, 0
      %p259 = por %p257, %p258
      %p260 = scmp.ne.s32.totalorder %s248, %s249
      %p261 = scmp.eq.s32.totalorder %s29, 1
      %p262 = por %p260, %p261
      %p264 = scmp.ne.s32.totalorder %s249, %s263
      %p265 = scmp.eq.s32.totalorder %s29, 0
      %p266 = por %p264, %p265
      %s268 = sadd.s32 %s267, 1
      %p271 = scmp.eq.s32.totalorder %s23, 1
      %p272 = scmp.ne.s32.totalorder %s267, %s269
      %p273 = scmp.eq.s32.totalorder %s23, 0
      %p274 = por %p272, %p273
      %p275 = scmp.ne.s32.totalorder %s267, %s269
      %p276 = scmp.eq.s32.totalorder %s28, 1
      %p277 = por %p275, %p276
      %p278 = scmp.ne.s32.totalorder %s269, %s270
      %p279 = scmp.eq.s32.totalorder %s28, 0
      %p280 = por %p278, %p279
      %p281 = scmp.ne.s32.totalorder %s269, %s270
      %p282 = scmp.eq.s32.totalorder %s29, 1
      %p283 = por %p281, %p282
      %p285 = scmp.ne.s32.totalorder %s270, %s284
      %p286 = scmp.eq.s32.totalorder %s29, 0
      %p287 = por %p285, %p286
      %s289 = sadd.s32 %s288, 1
      %p292 = scmp.eq.s32.totalorder %s23, 1
      %p293 = scmp.ne.s32.totalorder %s288, %s290
      %p294 = scmp.eq.s32.totalorder %s23, 0
      %p295 = por %p293, %p294
      %p296 = scmp.ne.s32.totalorder %s288, %s290
      %p297 = scmp.eq.s32.totalorder %s28, 1
      %p298 = por %p296, %p297
      %p299 = scmp.ne.s32.totalorder %s290, %s291
      %p300 = scmp.eq.s32.totalorder %s28, 0
      %p301 = por %p299, %p300
      %p302 = scmp.ne.s32.totalorder %s290, %s291
      %p303 = scmp.eq.s32.totalorder %s29, 1
      %p304 = por %p302, %p303
      %p306 = scmp.ne.s32.totalorder %s291, %s305
      %p307 = scmp.eq.s32.totalorder %s29, 0
      %p308 = por %p306, %p307
      %s310 = sadd.s32 %s309, 1
      %p313 = scmp.eq.s32.totalorder %s23, 1
      %p314 = scmp.ne.s32.totalorder %s309, %s311
      %p315 = scmp.eq.s32.totalorder %s23, 0
      %p316 = por %p314, %p315
      %p317 = scmp.ne.s32.totalorder %s309, %s311
      %p318 = scmp.eq.s32.totalorder %s28, 1
      %p319 = por %p317, %p318
      %p320 = scmp.ne.s32.totalorder %s311, %s312
      %p321 = scmp.eq.s32.totalorder %s28, 0
      %p322 = por %p320, %p321
      %p323 = scmp.ne.s32.totalorder %s311, %s312
      %p324 = scmp.eq.s32.totalorder %s29, 1
      %p325 = por %p323, %p324
      %p327 = scmp.ne.s32.totalorder %s312, %s326
      %p328 = scmp.eq.s32.totalorder %s29, 0
      %p329 = por %p327, %p328
      %s331 = sadd.s32 %s330, 1
      %p334 = scmp.eq.s32.totalorder %s23, 1
      %p335 = scmp.ne.s32.totalorder %s330, %s332
      %p336 = scmp.eq.s32.totalorder %s23, 0
      %p337 = por %p335, %p336
      %p338 = scmp.ne.s32.totalorder %s330, %s332
      %p339 = scmp.eq.s32.totalorder %s28, 1
      %p340 = por %p338, %p339
      %p341 = scmp.ne.s32.totalorder %s332, %s333
      %p342 = scmp.eq.s32.totalorder %s28, 0
      %p343 = por %p341, %p342
      %p344 = scmp.ne.s32.totalorder %s332, %s333
      %p345 = scmp.eq.s32.totalorder %s29, 1
      %p346 = por %p344, %p345
      %p348 = scmp.ne.s32.totalorder %s333, %s347
      %p349 = scmp.eq.s32.totalorder %s29, 0
      %p350 = por %p348, %p349
      %s352 = sadd.s32 %s351, 1
      %p355 = scmp.eq.s32.totalorder %s23, 1
      %p356 = scmp.ne.s32.totalorder %s351, %s353
      %p357 = scmp.eq.s32.totalorder %s23, 0
      %p358 = por %p356, %p357
      %p359 = scmp.ne.s32.totalorder %s351, %s353
      %p360 = scmp.eq.s32.totalorder %s28, 1
      %p361 = por %p359, %p360
      %p362 = scmp.ne.s32.totalorder %s353, %s354
      %p363 = scmp.eq.s32.totalorder %s28, 0
      %p364 = por %p362, %p363
      %p365 = scmp.ne.s32.totalorder %s353, %s354
      %p366 = scmp.eq.s32.totalorder %s29, 1
      %p367 = por %p365, %p366
      %p369 = scmp.ne.s32.totalorder %s354, %s368
      %p370 = scmp.eq.s32.totalorder %s29, 0
      %p371 = por %p369, %p370
      %s373 = sadd.s32 %s372, 1
      %p376 = scmp.eq.s32.totalorder %s23, 1
      %p377 = scmp.ne.s32.totalorder %s372, %s374
      %p378 = scmp.eq.s32.totalorder %s23, 0
      %p379 = por %p377, %p378
      %p380 = scmp.ne.s32.totalorder %s372, %s374
      %p381 = scmp.eq.s32.totalorder %s28, 1
      %p382 = por %p380, %p381
      %p383 = scmp.ne.s32.totalorder %s374, %s375
      %p384 = scmp.eq.s32.totalorder %s28, 0
      %p385 = por %p383, %p384
      %p386 = scmp.ne.s32.totalorder %s374, %s375
      %p387 = scmp.eq.s32.totalorder %s29, 1
      %p388 = por %p386, %p387
      %p390 = scmp.ne.s32.totalorder %s375, %s389
      %p391 = scmp.eq.s32.totalorder %s29, 0
      %p392 = por %p390, %p391
      %s393 = ssub.s32 %s23, %s30
      %p394 = scmp.eq.s32.totalorder %s393, 0
      %s396 = sadd.s32 %s395, 1
      %s397 = scalar_select %p394, %s395, %s396
      %p400 = pneg %p394
      %p401 = scmp.eq.s32.totalorder %s23, 1
      %p402 = por %p400, %p401
      %p403 = scmp.ne.s32.totalorder %s395, %s398
      %p404 = scmp.eq.s32.totalorder %s23, 0
      %p405 = por %p403, %p404
      %p406 = scmp.ne.s32.totalorder %s395, %s398
      %p407 = scmp.eq.s32.totalorder %s28, 1
      %p408 = por %p406, %p407
      %p409 = scmp.ne.s32.totalorder %s398, %s399
      %p410 = scmp.eq.s32.totalorder %s28, 0
      %p411 = por %p409, %p410
      %p412 = scmp.ne.s32.totalorder %s398, %s399
      %p413 = scmp.eq.s32.totalorder %s29, 1
      %p414 = por %p412, %p413
      %p416 = scmp.ne.s32.totalorder %s399, %s415
      %p417 = scmp.eq.s32.totalorder %s29, 0
      %p418 = por %p416, %p417
      %p419 = scmp.le.s32.totalorder 1, %s23
      %p420 = scmp.lt.s32.totalorder %s23, 3
      %p421 = pnand %p419, %p420
      %p422 = pneg %p421
      // Predicated region
      $region9: #{respose_net_forward.1} parent=5 // pred_check
        _
      $region10: #{respose_net_forward.1} parent=5 // pred_check_branch
        %424 = sbr.rel (%p421) target = $region12
      $region11: #{respose_net_forward.1} parent=5 // pred_region
        %s425 = ssub.s32 %s23, 1
        // Predicated region
        $region13: #{respose_net_forward.1} parent=11 // pred_check
          %p426 = pneg %p70
        $region14: #{respose_net_forward.1} parent=11 // pred_check_branch
          %428 = sbr.rel (%p426) target = $region16
        $region15: #{respose_net_forward.1} parent=11 // pred_region
          _
        $region16: #{respose_net_forward.1} parent=11 // pred_fallthru
          _
        // Predicated region
        $region17: #{respose_net_forward.1} parent=11 // pred_check
          %p429 = pneg %p91
        $region18: #{respose_net_forward.1} parent=11 // pred_check_branch
          %431 = sbr.rel (%p429) target = $region20
        $region19: #{respose_net_forward.1} parent=11 // pred_region
          _
        $region20: #{respose_net_forward.1} parent=11 // pred_fallthru
          _
        // Predicated region
        $region21: #{respose_net_forward.1} parent=11 // pred_check
          %p432 = pneg %p112
        $region22: #{respose_net_forward.1} parent=11 // pred_check_branch
          %434 = sbr.rel (%p432) target = $region24
        $region23: #{respose_net_forward.1} parent=11 // pred_region
          _
        $region24: #{respose_net_forward.1} parent=11 // pred_fallthru
          _
        // Predicated region
        $region25: #{respose_net_forward.1} parent=11 // pred_check
          %p435 = pneg %p133
        $region26: #{respose_net_forward.1} parent=11 // pred_check_branch
          %437 = sbr.rel (%p435) target = $region28
        $region27: #{respose_net_forward.1} parent=11 // pred_region
          _
        $region28: #{respose_net_forward.1} parent=11 // pred_fallthru
          _
        // Predicated region
        $region29: #{respose_net_forward.1} parent=11 // pred_check
          %p438 = pneg %p154
        $region30: #{respose_net_forward.1} parent=11 // pred_check_branch
          %440 = sbr.rel (%p438) target = $region32
        $region31: #{respose_net_forward.1} parent=11 // pred_region
          _
        $region32: #{respose_net_forward.1} parent=11 // pred_fallthru
          _
        // Predicated region
        $region33: #{respose_net_forward.1} parent=11 // pred_check
          %p441 = pneg %p175
        $region34: #{respose_net_forward.1} parent=11 // pred_check_branch
          %443 = sbr.rel (%p441) target = $region36
        $region35: #{respose_net_forward.1} parent=11 // pred_region
          _
        $region36: #{respose_net_forward.1} parent=11 // pred_fallthru
          _
        // Predicated region
        $region37: #{respose_net_forward.1} parent=11 // pred_check
          %p444 = pneg %p196
        $region38: #{respose_net_forward.1} parent=11 // pred_check_branch
          %446 = sbr.rel (%p444) target = $region40
        $region39: #{respose_net_forward.1} parent=11 // pred_region
          _
        $region40: #{respose_net_forward.1} parent=11 // pred_fallthru
          _
        // Predicated region
        $region41: #{respose_net_forward.1} parent=11 // pred_check
          %p447 = pneg %p217
        $region42: #{respose_net_forward.1} parent=11 // pred_check_branch
          %449 = sbr.rel (%p447) target = $region44
        $region43: #{respose_net_forward.1} parent=11 // pred_region
          _
        $region44: #{respose_net_forward.1} parent=11 // pred_fallthru
          _
        // Predicated region
        $region45: #{respose_net_forward.1} parent=11 // pred_check
          %p450 = pneg %p238
        $region46: #{respose_net_forward.1} parent=11 // pred_check_branch
          %452 = sbr.rel (%p450) target = $region48
        $region47: #{respose_net_forward.1} parent=11 // pred_region
          _
        $region48: #{respose_net_forward.1} parent=11 // pred_fallthru
          _
        // Predicated region
        $region49: #{respose_net_forward.1} parent=11 // pred_check
          %p453 = pneg %p259
        $region50: #{respose_net_forward.1} parent=11 // pred_check_branch
          %455 = sbr.rel (%p453) target = $region52
        $region51: #{respose_net_forward.1} parent=11 // pred_region
          _
        $region52: #{respose_net_forward.1} parent=11 // pred_fallthru
          _
        // Predicated region
        $region53: #{respose_net_forward.1} parent=11 // pred_check
          %p456 = pneg %p280
        $region54: #{respose_net_forward.1} parent=11 // pred_check_branch
          %458 = sbr.rel (%p456) target = $region56
        $region55: #{respose_net_forward.1} parent=11 // pred_region
          _
        $region56: #{respose_net_forward.1} parent=11 // pred_fallthru
          _
        // Predicated region
        $region57: #{respose_net_forward.1} parent=11 // pred_check
          %p459 = pneg %p301
        $region58: #{respose_net_forward.1} parent=11 // pred_check_branch
          %461 = sbr.rel (%p459) target = $region60
        $region59: #{respose_net_forward.1} parent=11 // pred_region
          _
        $region60: #{respose_net_forward.1} parent=11 // pred_fallthru
          _
        // Predicated region
        $region61: #{respose_net_forward.1} parent=11 // pred_check
          %p462 = pneg %p322
        $region62: #{respose_net_forward.1} parent=11 // pred_check_branch
          %464 = sbr.rel (%p462) target = $region64
        $region63: #{respose_net_forward.1} parent=11 // pred_region
          _
        $region64: #{respose_net_forward.1} parent=11 // pred_fallthru
          _
        // Predicated region
        $region65: #{respose_net_forward.1} parent=11 // pred_check
          %p465 = pneg %p343
        $region66: #{respose_net_forward.1} parent=11 // pred_check_branch
          %467 = sbr.rel (%p465) target = $region68
        $region67: #{respose_net_forward.1} parent=11 // pred_region
          _
        $region68: #{respose_net_forward.1} parent=11 // pred_fallthru
          _
        // Predicated region
        $region69: #{respose_net_forward.1} parent=11 // pred_check
          %p468 = pneg %p364
        $region70: #{respose_net_forward.1} parent=11 // pred_check_branch
          %470 = sbr.rel (%p468) target = $region72
        $region71: #{respose_net_forward.1} parent=11 // pred_region
          _
        $region72: #{respose_net_forward.1} parent=11 // pred_fallthru
          _
        // Predicated region
        $region73: #{respose_net_forward.1} parent=11 // pred_check
          %p471 = pneg %p385
        $region74: #{respose_net_forward.1} parent=11 // pred_check_branch
          %473 = sbr.rel (%p471) target = $region76
        $region75: #{respose_net_forward.1} parent=11 // pred_region
          _
        $region76: #{respose_net_forward.1} parent=11 // pred_fallthru
          _
      $region12: #{respose_net_forward.1} parent=5 // pred_fallthru
        _
      %p474 = scmp.lt.s32.totalorder %s23, 2
      // Predicated region
      $region77: #{respose_net_forward.1} parent=5 // pred_check
        %p475 = pneg %p474
      $region78: #{respose_net_forward.1} parent=5 // pred_check_branch
        %477 = sbr.rel (%p475) target = $region80
      $region79: #{respose_net_forward.1} parent=5 // pred_region
        // Predicated region
        $region81: #{respose_net_forward.1} parent=79 // pred_check
          %p478 = pneg %p43
        $region82: #{respose_net_forward.1} parent=79 // pred_check_branch
          %480 = sbr.rel (%p478) target = $region84
        $region83: #{respose_net_forward.1} parent=79 // pred_region
          %s481 = smul.u32 16, %s23
          %p482 = scmp.lt.s32.totalorder %s481, 31
          %s483 = scalar_select %p482, %s481, 31
          %s484 = smul.addr %s483, 8
          %s485 = scalar_lea.vmem %s0, %s484
          %s486 = smul.u32 16, %s23
        $region84: #{respose_net_forward.1} parent=79 // pred_fallthru
          _
      $region80: #{respose_net_forward.1} parent=5 // pred_fallthru
        _
      %p487 = scmp.le.s32.totalorder 1, %s23
      %p488 = scmp.lt.s32.totalorder %s23, 3
      %p489 = pnand %p487, %p488
      %p490 = pneg %p489
      // Predicated region
      $region85: #{respose_net_forward.1} parent=5 // pred_check
        _
      $region86: #{respose_net_forward.1} parent=5 // pred_check_branch
        %492 = sbr.rel (%p489) target = $region88
      $region87: #{respose_net_forward.1} parent=5 // pred_region
        %s493 = ssub.s32 %s23, 1
        %s494 = smul.u32 16, %s28
        %p495 = scmp.lt.s32.totalorder %s494, 31
        %s496 = scalar_select %p495, %s494, 31
        %s497 = smul.addr %s496, 8
        %s498 = scalar_lea.vmem %s0, %s497
        %p499 = pneg %p49
        %p500 = pneg %p46
        %p501 = pneg %p70
        %p502 = pneg %p67
        %p503 = pneg %p91
        %p504 = pneg %p88
        %p505 = pneg %p112
        %p506 = pneg %p109
        %p507 = pneg %p133
        %p508 = pneg %p130
        %p509 = pneg %p154
        %p510 = pneg %p151
        %p511 = pneg %p175
        %p512 = pneg %p172
        %p513 = pneg %p196
        %p514 = pneg %p193
        %p515 = pneg %p217
        %p516 = pneg %p214
        %p517 = pneg %p238
        %p518 = pneg %p235
        %p519 = pneg %p259
        %p520 = pneg %p256
        %p521 = pneg %p280
        %p522 = pneg %p277
        %p523 = pneg %p301
        %p524 = pneg %p298
        %p525 = pneg %p322
        %p526 = pneg %p319
        %p527 = pneg %p343
        %p528 = pneg %p340
        %p529 = pneg %p364
        %p530 = pneg %p361
        %p531 = pneg %p385
        %p532 = pneg %p382
        %p533 = pneg %p411
        %p534 = pneg %p408
        %s535 = sand.u32 %s398, 1
        %s536 = sand.u32 %s398, 1
        %s537 = smul.addr %s536, 32
        %s538 = scalar_lea.vmem [#allocation2], %s537
        %s539 = smul.u32 16, %s28
        %p540 = scmp.lt.s32.totalorder %s539, 31
        %s541 = scalar_select %p540, %s539, 31
        %s542 = smul.addr %s541, 8
        %s543 = scalar_lea.vmem %s0, %s542
        %s544 = smul.u32 16, %s28
        %v545 = vld [vmem:[%s543] sm:$0xff]
        %v546 = vld [vmem:[%s543 + $0x8] sm:$0xff]
        %v547 = vld [vmem:[%s543 + $0x10] sm:$0xff]
        %v548 = vld [vmem:[%s543 + $0x18] sm:$0xff]
        %v549 = vld [vmem:[%s543 + $0x20] sm:$0xff]
        %v550 = vld [vmem:[%s543 + $0x28] sm:$0xff]
        %v551 = vld [vmem:[%s543 + $0x30] sm:$0xff]
        %v552 = vld [vmem:[%s543 + $0x38] sm:$0xff]
        %v553 = vld [vmem:[%s543 + $0x40] sm:$0xff]
        %v554 = vld [vmem:[%s543 + $0x48] sm:$0xff]
        %v555 = vld [vmem:[%s543 + $0x50] sm:$0xff]
        %v556 = vld [vmem:[%s543 + $0x58] sm:$0xff]
        %v557 = vld [vmem:[%s543 + $0x60] sm:$0xff]
        %v558 = vld [vmem:[%s543 + $0x68] sm:$0xff]
        %v559 = vld [vmem:[%s543 + $0x70] sm:$0xff]
        %v560 = vld [vmem:[%s543 + $0x78] sm:$0xff]
        %v561 = vld [vmem:[%s1] sm:$0x77]
        %v562 = vld [vmem:[%s1 + $0x8] sm:$0x77]
        %v563 = vld [vmem:[%s1 + $0x10] sm:$0x77]
        %v564 = vld [vmem:[%s1 + $0x18] sm:$0x77]
        %v565 = vld [vmem:[%s1 + $0x20] sm:$0x77]
        %v566 = vld [vmem:[%s1 + $0x28] sm:$0x77]
        %v567 = vld [vmem:[%s1 + $0x30] sm:$0x77]
        %v568 = vld [vmem:[%s1 + $0x38] sm:$0x77]
        %570 = vset.pattern.permute.xlu0 0
        %571 = vperm.xlu0 %570, %v545
        %v572 = vpop.permute.xlu0 %571
        %575 = vset.pattern.permute.xlu0 0
        %576 = vperm.xlu0 %575, %v546
        %v577 = vpop.permute.xlu0 %576
        %580 = vset.pattern.permute.xlu0 0
        %581 = vperm.xlu0 %580, %v547
        %v582 = vpop.permute.xlu0 %581
        %585 = vset.pattern.permute.xlu0 0
        %586 = vperm.xlu0 %585, %v548
        %v587 = vpop.permute.xlu0 %586
        %590 = vset.pattern.permute.xlu0 0
        %591 = vperm.xlu0 %590, %v549
        %v592 = vpop.permute.xlu0 %591
        %595 = vset.pattern.permute.xlu0 0
        %596 = vperm.xlu0 %595, %v550
        %v597 = vpop.permute.xlu0 %596
        %600 = vset.pattern.permute.xlu0 0
        %601 = vperm.xlu0 %600, %v551
        %v602 = vpop.permute.xlu0 %601
        %605 = vset.pattern.permute.xlu0 0
        %606 = vperm.xlu0 %605, %v552
        %v607 = vpop.permute.xlu0 %606
        %610 = vset.pattern.permute.xlu0 0
        %611 = vperm.xlu0 %610, %v553
        %v612 = vpop.permute.xlu0 %611
        %615 = vset.pattern.permute.xlu0 0
        %616 = vperm.xlu0 %615, %v554
        %v617 = vpop.permute.xlu0 %616
        %620 = vset.pattern.permute.xlu0 0
        %621 = vperm.xlu0 %620, %v555
        %v622 = vpop.permute.xlu0 %621
        %625 = vset.pattern.permute.xlu0 0
        %626 = vperm.xlu0 %625, %v556
        %v627 = vpop.permute.xlu0 %626
        %630 = vset.pattern.permute.xlu0 0
        %631 = vperm.xlu0 %630, %v557
        %v632 = vpop.permute.xlu0 %631
        %635 = vset.pattern.permute.xlu0 0
        %636 = vperm.xlu0 %635, %v558
        %v637 = vpop.permute.xlu0 %636
        %640 = vset.pattern.permute.xlu0 0
        %641 = vperm.xlu0 %640, %v559
        %v642 = vpop.permute.xlu0 %641
        %645 = vset.pattern.permute.xlu0 0
        %646 = vperm.xlu0 %645, %v560
        %v647 = vpop.permute.xlu0 %646
        %v657 = vperm.slane %v561, 0
        %v658 = vperm.slane %v561, 4
        %v659 = vperm.slane %v562, 0
        %v660 = vperm.slane %v562, 4
        %v661 = vperm.slane %v563, 0
        %v662 = vperm.slane %v563, 4
        %v663 = vperm.slane %v564, 0
        %v664 = vperm.slane %v564, 4
        %v665 = vperm.slane %v565, 0
        %v666 = vperm.slane %v565, 4
        %v667 = vperm.slane %v566, 0
        %v668 = vperm.slane %v566, 4
        %v669 = vperm.slane %v567, 0
        %v670 = vperm.slane %v567, 4
        %v671 = vperm.slane %v568, 0
        %v672 = vperm.slane %v568, 4
        %v689 = vperm.slane %v657, 0
        %v690 = vperm.slane %v658, 0
        %v691 = vperm.slane %v659, 0
        %v692 = vperm.slane %v660, 0
        %v693 = vperm.slane %v661, 0
        %v694 = vperm.slane %v662, 0
        %v695 = vperm.slane %v663, 0
        %v696 = vperm.slane %v664, 0
        %v697 = vperm.slane %v665, 0
        %v698 = vperm.slane %v666, 0
        %v699 = vperm.slane %v667, 0
        %v700 = vperm.slane %v668, 0
        %v701 = vperm.slane %v669, 0
        %v702 = vperm.slane %v670, 0
        %v703 = vperm.slane %v671, 0
        %v704 = vperm.slane %v672, 0
        %v705 = vmul.f32 %v572, %v689
        %v706 = vmul.f32 %v572, %v690
        %v707 = vmul.f32 %v572, %v691
        %v708 = vmul.f32 %v572, %v692
        %v709 = vmul.f32 %v572, %v693
        %v710 = vmul.f32 %v572, %v694
        %v711 = vmul.f32 %v572, %v695
        %v712 = vmul.f32 %v572, %v696
        %v713 = vmul.f32 %v572, %v697
        %v714 = vmul.f32 %v572, %v698
        %v715 = vmul.f32 %v572, %v699
        %v716 = vmul.f32 %v572, %v700
        %v717 = vmul.f32 %v572, %v701
        %v718 = vmul.f32 %v572, %v702
        %v719 = vmul.f32 %v572, %v703
        %v720 = vmul.f32 %v572, %v704
        %v721 = vmul.f32 %v577, %v689
        %v722 = vmul.f32 %v577, %v690
        %v723 = vmul.f32 %v577, %v691
        %v724 = vmul.f32 %v577, %v692
        %v725 = vmul.f32 %v577, %v693
        %v726 = vmul.f32 %v577, %v694
        %v727 = vmul.f32 %v577, %v695
        %v728 = vmul.f32 %v577, %v696
        %v729 = vmul.f32 %v577, %v697
        %v730 = vmul.f32 %v577, %v698
        %v731 = vmul.f32 %v577, %v699
        %v732 = vmul.f32 %v577, %v700
        %v733 = vmul.f32 %v577, %v701
        %v734 = vmul.f32 %v577, %v702
        %v735 = vmul.f32 %v577, %v703
        %v736 = vmul.f32 %v577, %v704
        %v737 = vmul.f32 %v582, %v689
        %v738 = vmul.f32 %v582, %v690
        %v739 = vmul.f32 %v582, %v691
        %v740 = vmul.f32 %v582, %v692
        %v741 = vmul.f32 %v582, %v693
        %v742 = vmul.f32 %v582, %v694
        %v743 = vmul.f32 %v582, %v695
        %v744 = vmul.f32 %v582, %v696
        %v745 = vmul.f32 %v582, %v697
        %v746 = vmul.f32 %v582, %v698
        %v747 = vmul.f32 %v582, %v699
        %v748 = vmul.f32 %v582, %v700
        %v749 = vmul.f32 %v582, %v701
        %v750 = vmul.f32 %v582, %v702
        %v751 = vmul.f32 %v582, %v703
        %v752 = vmul.f32 %v582, %v704
        %v753 = vmul.f32 %v587, %v689
        %v754 = vmul.f32 %v587, %v690
        %v755 = vmul.f32 %v587, %v691
        %v756 = vmul.f32 %v587, %v692
        %v757 = vmul.f32 %v587, %v693
        %v758 = vmul.f32 %v587, %v694
        %v759 = vmul.f32 %v587, %v695
        %v760 = vmul.f32 %v587, %v696
        %v761 = vmul.f32 %v587, %v697
        %v762 = vmul.f32 %v587, %v698
        %v763 = vmul.f32 %v587, %v699
        %v764 = vmul.f32 %v587, %v700
        %v765 = vmul.f32 %v587, %v701
        %v766 = vmul.f32 %v587, %v702
        %v767 = vmul.f32 %v587, %v703
        %v768 = vmul.f32 %v587, %v704
        %v769 = vmul.f32 %v592, %v689
        %v770 = vmul.f32 %v592, %v690
        %v771 = vmul.f32 %v592, %v691
        %v772 = vmul.f32 %v592, %v692
        %v773 = vmul.f32 %v592, %v693
        %v774 = vmul.f32 %v592, %v694
        %v775 = vmul.f32 %v592, %v695
        %v776 = vmul.f32 %v592, %v696
        %v777 = vmul.f32 %v592, %v697
        %v778 = vmul.f32 %v592, %v698
        %v779 = vmul.f32 %v592, %v699
        %v780 = vmul.f32 %v592, %v700
        %v781 = vmul.f32 %v592, %v701
        %v782 = vmul.f32 %v592, %v702
        %v783 = vmul.f32 %v592, %v703
        %v784 = vmul.f32 %v592, %v704
        %v785 = vmul.f32 %v597, %v689
        %v786 = vmul.f32 %v597, %v690
        %v787 = vmul.f32 %v597, %v691
        %v788 = vmul.f32 %v597, %v692
        %v789 = vmul.f32 %v597, %v693
        %v790 = vmul.f32 %v597, %v694
        %v791 = vmul.f32 %v597, %v695
        %v792 = vmul.f32 %v597, %v696
        %v793 = vmul.f32 %v597, %v697
        %v794 = vmul.f32 %v597, %v698
        %v795 = vmul.f32 %v597, %v699
        %v796 = vmul.f32 %v597, %v700
        %v797 = vmul.f32 %v597, %v701
        %v798 = vmul.f32 %v597, %v702
        %v799 = vmul.f32 %v597, %v703
        %v800 = vmul.f32 %v597, %v704
        %v801 = vmul.f32 %v602, %v689
        %v802 = vmul.f32 %v602, %v690
        %v803 = vmul.f32 %v602, %v691
        %v804 = vmul.f32 %v602, %v692
        %v805 = vmul.f32 %v602, %v693
        %v806 = vmul.f32 %v602, %v694
        %v807 = vmul.f32 %v602, %v695
        %v808 = vmul.f32 %v602, %v696
        %v809 = vmul.f32 %v602, %v697
        %v810 = vmul.f32 %v602, %v698
        %v811 = vmul.f32 %v602, %v699
        %v812 = vmul.f32 %v602, %v700
        %v813 = vmul.f32 %v602, %v701
        %v814 = vmul.f32 %v602, %v702
        %v815 = vmul.f32 %v602, %v703
        %v816 = vmul.f32 %v602, %v704
        %v817 = vmul.f32 %v607, %v689
        %v818 = vmul.f32 %v607, %v690
        %v819 = vmul.f32 %v607, %v691
        %v820 = vmul.f32 %v607, %v692
        %v821 = vmul.f32 %v607, %v693
        %v822 = vmul.f32 %v607, %v694
        %v823 = vmul.f32 %v607, %v695
        %v824 = vmul.f32 %v607, %v696
        %v825 = vmul.f32 %v607, %v697
        %v826 = vmul.f32 %v607, %v698
        %v827 = vmul.f32 %v607, %v699
        %v828 = vmul.f32 %v607, %v700
        %v829 = vmul.f32 %v607, %v701
        %v830 = vmul.f32 %v607, %v702
        %v831 = vmul.f32 %v607, %v703
        %v832 = vmul.f32 %v607, %v704
        %v833 = vmul.f32 %v612, %v689
        %v834 = vmul.f32 %v612, %v690
        %v835 = vmul.f32 %v612, %v691
        %v836 = vmul.f32 %v612, %v692
        %v837 = vmul.f32 %v612, %v693
        %v838 = vmul.f32 %v612, %v694
        %v839 = vmul.f32 %v612, %v695
        %v840 = vmul.f32 %v612, %v696
        %v841 = vmul.f32 %v612, %v697
        %v842 = vmul.f32 %v612, %v698
        %v843 = vmul.f32 %v612, %v699
        %v844 = vmul.f32 %v612, %v700
        %v845 = vmul.f32 %v612, %v701
        %v846 = vmul.f32 %v612, %v702
        %v847 = vmul.f32 %v612, %v703
        %v848 = vmul.f32 %v612, %v704
        %v849 = vmul.f32 %v617, %v689
        %v850 = vmul.f32 %v617, %v690
        %v851 = vmul.f32 %v617, %v691
        %v852 = vmul.f32 %v617, %v692
        %v853 = vmul.f32 %v617, %v693
        %v854 = vmul.f32 %v617, %v694
        %v855 = vmul.f32 %v617, %v695
        %v856 = vmul.f32 %v617, %v696
        %v857 = vmul.f32 %v617, %v697
        %v858 = vmul.f32 %v617, %v698
        %v859 = vmul.f32 %v617, %v699
        %v860 = vmul.f32 %v617, %v700
        %v861 = vmul.f32 %v617, %v701
        %v862 = vmul.f32 %v617, %v702
        %v863 = vmul.f32 %v617, %v703
        %v864 = vmul.f32 %v617, %v704
        %v865 = vmul.f32 %v622, %v689
        %v866 = vmul.f32 %v622, %v690
        %v867 = vmul.f32 %v622, %v691
        %v868 = vmul.f32 %v622, %v692
        %v869 = vmul.f32 %v622, %v693
        %v870 = vmul.f32 %v622, %v694
        %v871 = vmul.f32 %v622, %v695
        %v872 = vmul.f32 %v622, %v696
        %v873 = vmul.f32 %v622, %v697
        %v874 = vmul.f32 %v622, %v698
        %v875 = vmul.f32 %v622, %v699
        %v876 = vmul.f32 %v622, %v700
        %v877 = vmul.f32 %v622, %v701
        %v878 = vmul.f32 %v622, %v702
        %v879 = vmul.f32 %v622, %v703
        %v880 = vmul.f32 %v622, %v704
        %v881 = vmul.f32 %v627, %v689
        %v882 = vmul.f32 %v627, %v690
        %v883 = vmul.f32 %v627, %v691
        %v884 = vmul.f32 %v627, %v692
        %v885 = vmul.f32 %v627, %v693
        %v886 = vmul.f32 %v627, %v694
        %v887 = vmul.f32 %v627, %v695
        %v888 = vmul.f32 %v627, %v696
        %v889 = vmul.f32 %v627, %v697
        %v890 = vmul.f32 %v627, %v698
        %v891 = vmul.f32 %v627, %v699
        %v892 = vmul.f32 %v627, %v700
        %v893 = vmul.f32 %v627, %v701
        %v894 = vmul.f32 %v627, %v702
        %v895 = vmul.f32 %v627, %v703
        %v896 = vmul.f32 %v627, %v704
        %v897 = vmul.f32 %v632, %v689
        %v898 = vmul.f32 %v632, %v690
        %v899 = vmul.f32 %v632, %v691
        %v900 = vmul.f32 %v632, %v692
        %v901 = vmul.f32 %v632, %v693
        %v902 = vmul.f32 %v632, %v694
        %v903 = vmul.f32 %v632, %v695
        %v904 = vmul.f32 %v632, %v696
        %v905 = vmul.f32 %v632, %v697
        %v906 = vmul.f32 %v632, %v698
        %v907 = vmul.f32 %v632, %v699
        %v908 = vmul.f32 %v632, %v700
        %v909 = vmul.f32 %v632, %v701
        %v910 = vmul.f32 %v632, %v702
        %v911 = vmul.f32 %v632, %v703
        %v912 = vmul.f32 %v632, %v704
        %v913 = vmul.f32 %v637, %v689
        %v914 = vmul.f32 %v637, %v690
        %v915 = vmul.f32 %v637, %v691
        %v916 = vmul.f32 %v637, %v692
        %v917 = vmul.f32 %v637, %v693
        %v918 = vmul.f32 %v637, %v694
        %v919 = vmul.f32 %v637, %v695
        %v920 = vmul.f32 %v637, %v696
        %v921 = vmul.f32 %v637, %v697
        %v922 = vmul.f32 %v637, %v698
        %v923 = vmul.f32 %v637, %v699
        %v924 = vmul.f32 %v637, %v700
        %v925 = vmul.f32 %v637, %v701
        %v926 = vmul.f32 %v637, %v702
        %v927 = vmul.f32 %v637, %v703
        %v928 = vmul.f32 %v637, %v704
        %v929 = vmul.f32 %v642, %v689
        %v930 = vmul.f32 %v642, %v690
        %v931 = vmul.f32 %v642, %v691
        %v932 = vmul.f32 %v642, %v692
        %v933 = vmul.f32 %v642, %v693
        %v934 = vmul.f32 %v642, %v694
        %v935 = vmul.f32 %v642, %v695
        %v936 = vmul.f32 %v642, %v696
        %v937 = vmul.f32 %v642, %v697
        %v938 = vmul.f32 %v642, %v698
        %v939 = vmul.f32 %v642, %v699
        %v940 = vmul.f32 %v642, %v700
        %v941 = vmul.f32 %v642, %v701
        %v942 = vmul.f32 %v642, %v702
        %v943 = vmul.f32 %v642, %v703
        %v944 = vmul.f32 %v642, %v704
        %v945 = vmul.f32 %v647, %v689
        %v946 = vmul.f32 %v647, %v690
        %v947 = vmul.f32 %v647, %v691
        %v948 = vmul.f32 %v647, %v692
        %v949 = vmul.f32 %v647, %v693
        %v950 = vmul.f32 %v647, %v694
        %v951 = vmul.f32 %v647, %v695
        %v952 = vmul.f32 %v647, %v696
        %v953 = vmul.f32 %v647, %v697
        %v954 = vmul.f32 %v647, %v698
        %v955 = vmul.f32 %v647, %v699
        %v956 = vmul.f32 %v647, %v700
        %v957 = vmul.f32 %v647, %v701
        %v958 = vmul.f32 %v647, %v702
        %v959 = vmul.f32 %v647, %v703
        %v960 = vmul.f32 %v647, %v704
        %961 = vset.pattern.permute.xlu0 1
        %962 = vperm.xlu0 %961, %v545
        %v963 = vpop.permute.xlu0 %962
        %965 = vset.pattern.permute.xlu0 1
        %966 = vperm.xlu0 %965, %v546
        %v967 = vpop.permute.xlu0 %966
        %969 = vset.pattern.permute.xlu0 1
        %970 = vperm.xlu0 %969, %v547
        %v971 = vpop.permute.xlu0 %970
        %973 = vset.pattern.permute.xlu0 1
        %974 = vperm.xlu0 %973, %v548
        %v975 = vpop.permute.xlu0 %974
        %977 = vset.pattern.permute.xlu0 1
        %978 = vperm.xlu0 %977, %v549
        %v979 = vpop.permute.xlu0 %978
        %981 = vset.pattern.permute.xlu0 1
        %982 = vperm.xlu0 %981, %v550
        %v983 = vpop.permute.xlu0 %982
        %985 = vset.pattern.permute.xlu0 1
        %986 = vperm.xlu0 %985, %v551
        %v987 = vpop.permute.xlu0 %986
        %989 = vset.pattern.permute.xlu0 1
        %990 = vperm.xlu0 %989, %v552
        %v991 = vpop.permute.xlu0 %990
        %993 = vset.pattern.permute.xlu0 1
        %994 = vperm.xlu0 %993, %v553
        %v995 = vpop.permute.xlu0 %994
        %997 = vset.pattern.permute.xlu0 1
        %998 = vperm.xlu0 %997, %v554
        %v999 = vpop.permute.xlu0 %998
        %1001 = vset.pattern.permute.xlu0 1
        %1002 = vperm.xlu0 %1001, %v555
        %v1003 = vpop.permute.xlu0 %1002
        %1005 = vset.pattern.permute.xlu0 1
        %1006 = vperm.xlu0 %1005, %v556
        %v1007 = vpop.permute.xlu0 %1006
        %1009 = vset.pattern.permute.xlu0 1
        %1010 = vperm.xlu0 %1009, %v557
        %v1011 = vpop.permute.xlu0 %1010
        %1013 = vset.pattern.permute.xlu0 1
        %1014 = vperm.xlu0 %1013, %v558
        %v1015 = vpop.permute.xlu0 %1014
        %1017 = vset.pattern.permute.xlu0 1
        %1018 = vperm.xlu0 %1017, %v559
        %v1019 = vpop.permute.xlu0 %1018
        %1021 = vset.pattern.permute.xlu0 1
        %1022 = vperm.xlu0 %1021, %v560
        %v1023 = vpop.permute.xlu0 %1022
        %v1025 = vperm.slane %v561, 1
        %v1026 = vperm.slane %v561, 5
        %v1027 = vperm.slane %v562, 1
        %v1028 = vperm.slane %v562, 5
        %v1029 = vperm.slane %v563, 1
        %v1030 = vperm.slane %v563, 5
        %v1031 = vperm.slane %v564, 1
        %v1032 = vperm.slane %v564, 5
        %v1033 = vperm.slane %v565, 1
        %v1034 = vperm.slane %v565, 5
        %v1035 = vperm.slane %v566, 1
        %v1036 = vperm.slane %v566, 5
        %v1037 = vperm.slane %v567, 1
        %v1038 = vperm.slane %v567, 5
        %v1039 = vperm.slane %v568, 1
        %v1040 = vperm.slane %v568, 5
        %v1057 = vperm.slane %v1025, 1
        %v1058 = vperm.slane %v1026, 1
        %v1059 = vperm.slane %v1027, 1
        %v1060 = vperm.slane %v1028, 1
        %v1061 = vperm.slane %v1029, 1
        %v1062 = vperm.slane %v1030, 1
        %v1063 = vperm.slane %v1031, 1
        %v1064 = vperm.slane %v1032, 1
        %v1065 = vperm.slane %v1033, 1
        %v1066 = vperm.slane %v1034, 1
        %v1067 = vperm.slane %v1035, 1
        %v1068 = vperm.slane %v1036, 1
        %v1069 = vperm.slane %v1037, 1
        %v1070 = vperm.slane %v1038, 1
        %v1071 = vperm.slane %v1039, 1
        %v1072 = vperm.slane %v1040, 1
        %v1073 = vmul.f32 %v963, %v1057
        %v1074 = vmul.f32 %v963, %v1058
        %v1075 = vmul.f32 %v963, %v1059
        %v1076 = vmul.f32 %v963, %v1060
        %v1077 = vmul.f32 %v963, %v1061
        %v1078 = vmul.f32 %v963, %v1062
        %v1079 = vmul.f32 %v963, %v1063
        %v1080 = vmul.f32 %v963, %v1064
        %v1081 = vmul.f32 %v963, %v1065
        %v1082 = vmul.f32 %v963, %v1066
        %v1083 = vmul.f32 %v963, %v1067
        %v1084 = vmul.f32 %v963, %v1068
        %v1085 = vmul.f32 %v963, %v1069
        %v1086 = vmul.f32 %v963, %v1070
        %v1087 = vmul.f32 %v963, %v1071
        %v1088 = vmul.f32 %v963, %v1072
        %v1089 = vmul.f32 %v967, %v1057
        %v1090 = vmul.f32 %v967, %v1058
        %v1091 = vmul.f32 %v967, %v1059
        %v1092 = vmul.f32 %v967, %v1060
        %v1093 = vmul.f32 %v967, %v1061
        %v1094 = vmul.f32 %v967, %v1062
        %v1095 = vmul.f32 %v967, %v1063
        %v1096 = vmul.f32 %v967, %v1064
        %v1097 = vmul.f32 %v967, %v1065
        %v1098 = vmul.f32 %v967, %v1066
        %v1099 = vmul.f32 %v967, %v1067
        %v1100 = vmul.f32 %v967, %v1068
        %v1101 = vmul.f32 %v967, %v1069
        %v1102 = vmul.f32 %v967, %v1070
        %v1103 = vmul.f32 %v967, %v1071
        %v1104 = vmul.f32 %v967, %v1072
        %v1105 = vmul.f32 %v971, %v1057
        %v1106 = vmul.f32 %v971, %v1058
        %v1107 = vmul.f32 %v971, %v1059
        %v1108 = vmul.f32 %v971, %v1060
        %v1109 = vmul.f32 %v971, %v1061
        %v1110 = vmul.f32 %v971, %v1062
        %v1111 = vmul.f32 %v971, %v1063
        %v1112 = vmul.f32 %v971, %v1064
        %v1113 = vmul.f32 %v971, %v1065
        %v1114 = vmul.f32 %v971, %v1066
        %v1115 = vmul.f32 %v971, %v1067
        %v1116 = vmul.f32 %v971, %v1068
        %v1117 = vmul.f32 %v971, %v1069
        %v1118 = vmul.f32 %v971, %v1070
        %v1119 = vmul.f32 %v971, %v1071
        %v1120 = vmul.f32 %v971, %v1072
        %v1121 = vmul.f32 %v975, %v1057
        %v1122 = vmul.f32 %v975, %v1058
        %v1123 = vmul.f32 %v975, %v1059
        %v1124 = vmul.f32 %v975, %v1060
        %v1125 = vmul.f32 %v975, %v1061
        %v1126 = vmul.f32 %v975, %v1062
        %v1127 = vmul.f32 %v975, %v1063
        %v1128 = vmul.f32 %v975, %v1064
        %v1129 = vmul.f32 %v975, %v1065
        %v1130 = vmul.f32 %v975, %v1066
        %v1131 = vmul.f32 %v975, %v1067
        %v1132 = vmul.f32 %v975, %v1068
        %v1133 = vmul.f32 %v975, %v1069
        %v1134 = vmul.f32 %v975, %v1070
        %v1135 = vmul.f32 %v975, %v1071
        %v1136 = vmul.f32 %v975, %v1072
        %v1137 = vmul.f32 %v979, %v1057
        %v1138 = vmul.f32 %v979, %v1058
        %v1139 = vmul.f32 %v979, %v1059
        %v1140 = vmul.f32 %v979, %v1060
        %v1141 = vmul.f32 %v979, %v1061
        %v1142 = vmul.f32 %v979, %v1062
        %v1143 = vmul.f32 %v979, %v1063
        %v1144 = vmul.f32 %v979, %v1064
        %v1145 = vmul.f32 %v979, %v1065
        %v1146 = vmul.f32 %v979, %v1066
        %v1147 = vmul.f32 %v979, %v1067
        %v1148 = vmul.f32 %v979, %v1068
        %v1149 = vmul.f32 %v979, %v1069
        %v1150 = vmul.f32 %v979, %v1070
        %v1151 = vmul.f32 %v979, %v1071
        %v1152 = vmul.f32 %v979, %v1072
        %v1153 = vmul.f32 %v983, %v1057
        %v1154 = vmul.f32 %v983, %v1058
        %v1155 = vmul.f32 %v983, %v1059
        %v1156 = vmul.f32 %v983, %v1060
        %v1157 = vmul.f32 %v983, %v1061
        %v1158 = vmul.f32 %v983, %v1062
        %v1159 = vmul.f32 %v983, %v1063
        %v1160 = vmul.f32 %v983, %v1064
        %v1161 = vmul.f32 %v983, %v1065
        %v1162 = vmul.f32 %v983, %v1066
        %v1163 = vmul.f32 %v983, %v1067
        %v1164 = vmul.f32 %v983, %v1068
        %v1165 = vmul.f32 %v983, %v1069
        %v1166 = vmul.f32 %v983, %v1070
        %v1167 = vmul.f32 %v983, %v1071
        %v1168 = vmul.f32 %v983, %v1072
        %v1169 = vmul.f32 %v987, %v1057
        %v1170 = vmul.f32 %v987, %v1058
        %v1171 = vmul.f32 %v987, %v1059
        %v1172 = vmul.f32 %v987, %v1060
        %v1173 = vmul.f32 %v987, %v1061
        %v1174 = vmul.f32 %v987, %v1062
        %v1175 = vmul.f32 %v987, %v1063
        %v1176 = vmul.f32 %v987, %v1064
        %v1177 = vmul.f32 %v987, %v1065
        %v1178 = vmul.f32 %v987, %v1066
        %v1179 = vmul.f32 %v987, %v1067
        %v1180 = vmul.f32 %v987, %v1068
        %v1181 = vmul.f32 %v987, %v1069
        %v1182 = vmul.f32 %v987, %v1070
        %v1183 = vmul.f32 %v987, %v1071
        %v1184 = vmul.f32 %v987, %v1072
        %v1185 = vmul.f32 %v991, %v1057
        %v1186 = vmul.f32 %v991, %v1058
        %v1187 = vmul.f32 %v991, %v1059
        %v1188 = vmul.f32 %v991, %v1060
        %v1189 = vmul.f32 %v991, %v1061
        %v1190 = vmul.f32 %v991, %v1062
        %v1191 = vmul.f32 %v991, %v1063
        %v1192 = vmul.f32 %v991, %v1064
        %v1193 = vmul.f32 %v991, %v1065
        %v1194 = vmul.f32 %v991, %v1066
        %v1195 = vmul.f32 %v991, %v1067
        %v1196 = vmul.f32 %v991, %v1068
        %v1197 = vmul.f32 %v991, %v1069
        %v1198 = vmul.f32 %v991, %v1070
        %v1199 = vmul.f32 %v991, %v1071
        %v1200 = vmul.f32 %v991, %v1072
        %v1201 = vmul.f32 %v995, %v1057
        %v1202 = vmul.f32 %v995, %v1058
        %v1203 = vmul.f32 %v995, %v1059
        %v1204 = vmul.f32 %v995, %v1060
        %v1205 = vmul.f32 %v995, %v1061
        %v1206 = vmul.f32 %v995, %v1062
        %v1207 = vmul.f32 %v995, %v1063
        %v1208 = vmul.f32 %v995, %v1064
        %v1209 = vmul.f32 %v995, %v1065
        %v1210 = vmul.f32 %v995, %v1066
        %v1211 = vmul.f32 %v995, %v1067
        %v1212 = vmul.f32 %v995, %v1068
        %v1213 = vmul.f32 %v995, %v1069
        %v1214 = vmul.f32 %v995, %v1070
        %v1215 = vmul.f32 %v995, %v1071
        %v1216 = vmul.f32 %v995, %v1072
        %v1217 = vmul.f32 %v999, %v1057
        %v1218 = vmul.f32 %v999, %v1058
        %v1219 = vmul.f32 %v999, %v1059
        %v1220 = vmul.f32 %v999, %v1060
        %v1221 = vmul.f32 %v999, %v1061
        %v1222 = vmul.f32 %v999, %v1062
        %v1223 = vmul.f32 %v999, %v1063
        %v1224 = vmul.f32 %v999, %v1064
        %v1225 = vmul.f32 %v999, %v1065
        %v1226 = vmul.f32 %v999, %v1066
        %v1227 = vmul.f32 %v999, %v1067
        %v1228 = vmul.f32 %v999, %v1068
        %v1229 = vmul.f32 %v999, %v1069
        %v1230 = vmul.f32 %v999, %v1070
        %v1231 = vmul.f32 %v999, %v1071
        %v1232 = vmul.f32 %v999, %v1072
        %v1233 = vmul.f32 %v1003, %v1057
        %v1234 = vmul.f32 %v1003, %v1058
        %v1235 = vmul.f32 %v1003, %v1059
        %v1236 = vmul.f32 %v1003, %v1060
        %v1237 = vmul.f32 %v1003, %v1061
        %v1238 = vmul.f32 %v1003, %v1062
        %v1239 = vmul.f32 %v1003, %v1063
        %v1240 = vmul.f32 %v1003, %v1064
        %v1241 = vmul.f32 %v1003, %v1065
        %v1242 = vmul.f32 %v1003, %v1066
        %v1243 = vmul.f32 %v1003, %v1067
        %v1244 = vmul.f32 %v1003, %v1068
        %v1245 = vmul.f32 %v1003, %v1069
        %v1246 = vmul.f32 %v1003, %v1070
        %v1247 = vmul.f32 %v1003, %v1071
        %v1248 = vmul.f32 %v1003, %v1072
        %v1249 = vmul.f32 %v1007, %v1057
        %v1250 = vmul.f32 %v1007, %v1058
        %v1251 = vmul.f32 %v1007, %v1059
        %v1252 = vmul.f32 %v1007, %v1060
        %v1253 = vmul.f32 %v1007, %v1061
        %v1254 = vmul.f32 %v1007, %v1062
        %v1255 = vmul.f32 %v1007, %v1063
        %v1256 = vmul.f32 %v1007, %v1064
        %v1257 = vmul.f32 %v1007, %v1065
        %v1258 = vmul.f32 %v1007, %v1066
        %v1259 = vmul.f32 %v1007, %v1067
        %v1260 = vmul.f32 %v1007, %v1068
        %v1261 = vmul.f32 %v1007, %v1069
        %v1262 = vmul.f32 %v1007, %v1070
        %v1263 = vmul.f32 %v1007, %v1071
        %v1264 = vmul.f32 %v1007, %v1072
        %v1265 = vmul.f32 %v1011, %v1057
        %v1266 = vmul.f32 %v1011, %v1058
        %v1267 = vmul.f32 %v1011, %v1059
        %v1268 = vmul.f32 %v1011, %v1060
        %v1269 = vmul.f32 %v1011, %v1061
        %v1270 = vmul.f32 %v1011, %v1062
        %v1271 = vmul.f32 %v1011, %v1063
        %v1272 = vmul.f32 %v1011, %v1064
        %v1273 = vmul.f32 %v1011, %v1065
        %v1274 = vmul.f32 %v1011, %v1066
        %v1275 = vmul.f32 %v1011, %v1067
        %v1276 = vmul.f32 %v1011, %v1068
        %v1277 = vmul.f32 %v1011, %v1069
        %v1278 = vmul.f32 %v1011, %v1070
        %v1279 = vmul.f32 %v1011, %v1071
        %v1280 = vmul.f32 %v1011, %v1072
        %v1281 = vmul.f32 %v1015, %v1057
        %v1282 = vmul.f32 %v1015, %v1058
        %v1283 = vmul.f32 %v1015, %v1059
        %v1284 = vmul.f32 %v1015, %v1060
        %v1285 = vmul.f32 %v1015, %v1061
        %v1286 = vmul.f32 %v1015, %v1062
        %v1287 = vmul.f32 %v1015, %v1063
        %v1288 = vmul.f32 %v1015, %v1064
        %v1289 = vmul.f32 %v1015, %v1065
        %v1290 = vmul.f32 %v1015, %v1066
        %v1291 = vmul.f32 %v1015, %v1067
        %v1292 = vmul.f32 %v1015, %v1068
        %v1293 = vmul.f32 %v1015, %v1069
        %v1294 = vmul.f32 %v1015, %v1070
        %v1295 = vmul.f32 %v1015, %v1071
        %v1296 = vmul.f32 %v1015, %v1072
        %v1297 = vmul.f32 %v1019, %v1057
        %v1298 = vmul.f32 %v1019, %v1058
        %v1299 = vmul.f32 %v1019, %v1059
        %v1300 = vmul.f32 %v1019, %v1060
        %v1301 = vmul.f32 %v1019, %v1061
        %v1302 = vmul.f32 %v1019, %v1062
        %v1303 = vmul.f32 %v1019, %v1063
        %v1304 = vmul.f32 %v1019, %v1064
        %v1305 = vmul.f32 %v1019, %v1065
        %v1306 = vmul.f32 %v1019, %v1066
        %v1307 = vmul.f32 %v1019, %v1067
        %v1308 = vmul.f32 %v1019, %v1068
        %v1309 = vmul.f32 %v1019, %v1069
        %v1310 = vmul.f32 %v1019, %v1070
        %v1311 = vmul.f32 %v1019, %v1071
        %v1312 = vmul.f32 %v1019, %v1072
        %v1313 = vmul.f32 %v1023, %v1057
        %v1314 = vmul.f32 %v1023, %v1058
        %v1315 = vmul.f32 %v1023, %v1059
        %v1316 = vmul.f32 %v1023, %v1060
        %v1317 = vmul.f32 %v1023, %v1061
        %v1318 = vmul.f32 %v1023, %v1062
        %v1319 = vmul.f32 %v1023, %v1063
        %v1320 = vmul.f32 %v1023, %v1064
        %v1321 = vmul.f32 %v1023, %v1065
        %v1322 = vmul.f32 %v1023, %v1066
        %v1323 = vmul.f32 %v1023, %v1067
        %v1324 = vmul.f32 %v1023, %v1068
        %v1325 = vmul.f32 %v1023, %v1069
        %v1326 = vmul.f32 %v1023, %v1070
        %v1327 = vmul.f32 %v1023, %v1071
        %v1328 = vmul.f32 %v1023, %v1072
        %v1329 = vadd.f32 %v705, %v1073
        %v1330 = vadd.f32 %v706, %v1074
        %v1331 = vadd.f32 %v707, %v1075
        %v1332 = vadd.f32 %v708, %v1076
        %v1333 = vadd.f32 %v709, %v1077
        %v1334 = vadd.f32 %v710, %v1078
        %v1335 = vadd.f32 %v711, %v1079
        %v1336 = vadd.f32 %v712, %v1080
        %v1337 = vadd.f32 %v713, %v1081
        %v1338 = vadd.f32 %v714, %v1082
        %v1339 = vadd.f32 %v715, %v1083
        %v1340 = vadd.f32 %v716, %v1084
        %v1341 = vadd.f32 %v717, %v1085
        %v1342 = vadd.f32 %v718, %v1086
        %v1343 = vadd.f32 %v719, %v1087
        %v1344 = vadd.f32 %v720, %v1088
        %v1345 = vadd.f32 %v721, %v1089
        %v1346 = vadd.f32 %v722, %v1090
        %v1347 = vadd.f32 %v723, %v1091
        %v1348 = vadd.f32 %v724, %v1092
        %v1349 = vadd.f32 %v725, %v1093
        %v1350 = vadd.f32 %v726, %v1094
        %v1351 = vadd.f32 %v727, %v1095
        %v1352 = vadd.f32 %v728, %v1096
        %v1353 = vadd.f32 %v729, %v1097
        %v1354 = vadd.f32 %v730, %v1098
        %v1355 = vadd.f32 %v731, %v1099
        %v1356 = vadd.f32 %v732, %v1100
        %v1357 = vadd.f32 %v733, %v1101
        %v1358 = vadd.f32 %v734, %v1102
        %v1359 = vadd.f32 %v735, %v1103
        %v1360 = vadd.f32 %v736, %v1104
        %v1361 = vadd.f32 %v737, %v1105
        %v1362 = vadd.f32 %v738, %v1106
        %v1363 = vadd.f32 %v739, %v1107
        %v1364 = vadd.f32 %v740, %v1108
        %v1365 = vadd.f32 %v741, %v1109
        %v1366 = vadd.f32 %v742, %v1110
        %v1367 = vadd.f32 %v743, %v1111
        %v1368 = vadd.f32 %v744, %v1112
        %v1369 = vadd.f32 %v745, %v1113
        %v1370 = vadd.f32 %v746, %v1114
        %v1371 = vadd.f32 %v747, %v1115
        %v1372 = vadd.f32 %v748, %v1116
        %v1373 = vadd.f32 %v749, %v1117
        %v1374 = vadd.f32 %v750, %v1118
        %v1375 = vadd.f32 %v751, %v1119
        %v1376 = vadd.f32 %v752, %v1120
        %v1377 = vadd.f32 %v753, %v1121
        %v1378 = vadd.f32 %v754, %v1122
        %v1379 = vadd.f32 %v755, %v1123
        %v1380 = vadd.f32 %v756, %v1124
        %v1381 = vadd.f32 %v757, %v1125
        %v1382 = vadd.f32 %v758, %v1126
        %v1383 = vadd.f32 %v759, %v1127
        %v1384 = vadd.f32 %v760, %v1128
        %v1385 = vadd.f32 %v761, %v1129
        %v1386 = vadd.f32 %v762, %v1130
        %v1387 = vadd.f32 %v763, %v1131
        %v1388 = vadd.f32 %v764, %v1132
        %v1389 = vadd.f32 %v765, %v1133
        %v1390 = vadd.f32 %v766, %v1134
        %v1391 = vadd.f32 %v767, %v1135
        %v1392 = vadd.f32 %v768, %v1136
        %v1393 = vadd.f32 %v769, %v1137
        %v1394 = vadd.f32 %v770, %v1138
        %v1395 = vadd.f32 %v771, %v1139
        %v1396 = vadd.f32 %v772, %v1140
        %v1397 = vadd.f32 %v773, %v1141
        %v1398 = vadd.f32 %v774, %v1142
        %v1399 = vadd.f32 %v775, %v1143
        %v1400 = vadd.f32 %v776, %v1144
        %v1401 = vadd.f32 %v777, %v1145
        %v1402 = vadd.f32 %v778, %v1146
        %v1403 = vadd.f32 %v779, %v1147
        %v1404 = vadd.f32 %v780, %v1148
        %v1405 = vadd.f32 %v781, %v1149
        %v1406 = vadd.f32 %v782, %v1150
        %v1407 = vadd.f32 %v783, %v1151
        %v1408 = vadd.f32 %v784, %v1152
        %v1409 = vadd.f32 %v785, %v1153
        %v1410 = vadd.f32 %v786, %v1154
        %v1411 = vadd.f32 %v787, %v1155
        %v1412 = vadd.f32 %v788, %v1156
        %v1413 = vadd.f32 %v789, %v1157
        %v1414 = vadd.f32 %v790, %v1158
        %v1415 = vadd.f32 %v791, %v1159
        %v1416 = vadd.f32 %v792, %v1160
        %v1417 = vadd.f32 %v793, %v1161
        %v1418 = vadd.f32 %v794, %v1162
        %v1419 = vadd.f32 %v795, %v1163
        %v1420 = vadd.f32 %v796, %v1164
        %v1421 = vadd.f32 %v797, %v1165
        %v1422 = vadd.f32 %v798, %v1166
        %v1423 = vadd.f32 %v799, %v1167
        %v1424 = vadd.f32 %v800, %v1168
        %v1425 = vadd.f32 %v801, %v1169
        %v1426 = vadd.f32 %v802, %v1170
        %v1427 = vadd.f32 %v803, %v1171
        %v1428 = vadd.f32 %v804, %v1172
        %v1429 = vadd.f32 %v805, %v1173
        %v1430 = vadd.f32 %v806, %v1174
        %v1431 = vadd.f32 %v807, %v1175
        %v1432 = vadd.f32 %v808, %v1176
        %v1433 = vadd.f32 %v809, %v1177
        %v1434 = vadd.f32 %v810, %v1178
        %v1435 = vadd.f32 %v811, %v1179
        %v1436 = vadd.f32 %v812, %v1180
        %v1437 = vadd.f32 %v813, %v1181
        %v1438 = vadd.f32 %v814, %v1182
        %v1439 = vadd.f32 %v815, %v1183
        %v1440 = vadd.f32 %v816, %v1184
        %v1441 = vadd.f32 %v817, %v1185
        %v1442 = vadd.f32 %v818, %v1186
        %v1443 = vadd.f32 %v819, %v1187
        %v1444 = vadd.f32 %v820, %v1188
        %v1445 = vadd.f32 %v821, %v1189
        %v1446 = vadd.f32 %v822, %v1190
        %v1447 = vadd.f32 %v823, %v1191
        %v1448 = vadd.f32 %v824, %v1192
        %v1449 = vadd.f32 %v825, %v1193
        %v1450 = vadd.f32 %v826, %v1194
        %v1451 = vadd.f32 %v827, %v1195
        %v1452 = vadd.f32 %v828, %v1196
        %v1453 = vadd.f32 %v829, %v1197
        %v1454 = vadd.f32 %v830, %v1198
        %v1455 = vadd.f32 %v831, %v1199
        %v1456 = vadd.f32 %v832, %v1200
        %v1457 = vadd.f32 %v833, %v1201
        %v1458 = vadd.f32 %v834, %v1202
        %v1459 = vadd.f32 %v835, %v1203
        %v1460 = vadd.f32 %v836, %v1204
        %v1461 = vadd.f32 %v837, %v1205
        %v1462 = vadd.f32 %v838, %v1206
        %v1463 = vadd.f32 %v839, %v1207
        %v1464 = vadd.f32 %v840, %v1208
        %v1465 = vadd.f32 %v841, %v1209
        %v1466 = vadd.f32 %v842, %v1210
        %v1467 = vadd.f32 %v843, %v1211
        %v1468 = vadd.f32 %v844, %v1212
        %v1469 = vadd.f32 %v845, %v1213
        %v1470 = vadd.f32 %v846, %v1214
        %v1471 = vadd.f32 %v847, %v1215
        %v1472 = vadd.f32 %v848, %v1216
        %v1473 = vadd.f32 %v849, %v1217
        %v1474 = vadd.f32 %v850, %v1218
        %v1475 = vadd.f32 %v851, %v1219
        %v1476 = vadd.f32 %v852, %v1220
        %v1477 = vadd.f32 %v853, %v1221
        %v1478 = vadd.f32 %v854, %v1222
        %v1479 = vadd.f32 %v855, %v1223
        %v1480 = vadd.f32 %v856, %v1224
        %v1481 = vadd.f32 %v857, %v1225
        %v1482 = vadd.f32 %v858, %v1226
        %v1483 = vadd.f32 %v859, %v1227
        %v1484 = vadd.f32 %v860, %v1228
        %v1485 = vadd.f32 %v861, %v1229
        %v1486 = vadd.f32 %v862, %v1230
        %v1487 = vadd.f32 %v863, %v1231
        %v1488 = vadd.f32 %v864, %v1232
        %v1489 = vadd.f32 %v865, %v1233
        %v1490 = vadd.f32 %v866, %v1234
        %v1491 = vadd.f32 %v867, %v1235
        %v1492 = vadd.f32 %v868, %v1236
        %v1493 = vadd.f32 %v869, %v1237
        %v1494 = vadd.f32 %v870, %v1238
        %v1495 = vadd.f32 %v871, %v1239
        %v1496 = vadd.f32 %v872, %v1240
        %v1497 = vadd.f32 %v873, %v1241
        %v1498 = vadd.f32 %v874, %v1242
        %v1499 = vadd.f32 %v875, %v1243
        %v1500 = vadd.f32 %v876, %v1244
        %v1501 = vadd.f32 %v877, %v1245
        %v1502 = vadd.f32 %v878, %v1246
        %v1503 = vadd.f32 %v879, %v1247
        %v1504 = vadd.f32 %v880, %v1248
        %v1505 = vadd.f32 %v881, %v1249
        %v1506 = vadd.f32 %v882, %v1250
        %v1507 = vadd.f32 %v883, %v1251
        %v1508 = vadd.f32 %v884, %v1252
        %v1509 = vadd.f32 %v885, %v1253
        %v1510 = vadd.f32 %v886, %v1254
        %v1511 = vadd.f32 %v887, %v1255
        %v1512 = vadd.f32 %v888, %v1256
        %v1513 = vadd.f32 %v889, %v1257
        %v1514 = vadd.f32 %v890, %v1258
        %v1515 = vadd.f32 %v891, %v1259
        %v1516 = vadd.f32 %v892, %v1260
        %v1517 = vadd.f32 %v893, %v1261
        %v1518 = vadd.f32 %v894, %v1262
        %v1519 = vadd.f32 %v895, %v1263
        %v1520 = vadd.f32 %v896, %v1264
        %v1521 = vadd.f32 %v897, %v1265
        %v1522 = vadd.f32 %v898, %v1266
        %v1523 = vadd.f32 %v899, %v1267
        %v1524 = vadd.f32 %v900, %v1268
        %v1525 = vadd.f32 %v901, %v1269
        %v1526 = vadd.f32 %v902, %v1270
        %v1527 = vadd.f32 %v903, %v1271
        %v1528 = vadd.f32 %v904, %v1272
        %v1529 = vadd.f32 %v905, %v1273
        %v1530 = vadd.f32 %v906, %v1274
        %v1531 = vadd.f32 %v907, %v1275
        %v1532 = vadd.f32 %v908, %v1276
        %v1533 = vadd.f32 %v909, %v1277
        %v1534 = vadd.f32 %v910, %v1278
        %v1535 = vadd.f32 %v911, %v1279
        %v1536 = vadd.f32 %v912, %v1280
        %v1537 = vadd.f32 %v913, %v1281
        %v1538 = vadd.f32 %v914, %v1282
        %v1539 = vadd.f32 %v915, %v1283
        %v1540 = vadd.f32 %v916, %v1284
        %v1541 = vadd.f32 %v917, %v1285
        %v1542 = vadd.f32 %v918, %v1286
        %v1543 = vadd.f32 %v919, %v1287
        %v1544 = vadd.f32 %v920, %v1288
        %v1545 = vadd.f32 %v921, %v1289
        %v1546 = vadd.f32 %v922, %v1290
        %v1547 = vadd.f32 %v923, %v1291
        %v1548 = vadd.f32 %v924, %v1292
        %v1549 = vadd.f32 %v925, %v1293
        %v1550 = vadd.f32 %v926, %v1294
        %v1551 = vadd.f32 %v927, %v1295
        %v1552 = vadd.f32 %v928, %v1296
        %v1553 = vadd.f32 %v929, %v1297
        %v1554 = vadd.f32 %v930, %v1298
        %v1555 = vadd.f32 %v931, %v1299
        %v1556 = vadd.f32 %v932, %v1300
        %v1557 = vadd.f32 %v933, %v1301
        %v1558 = vadd.f32 %v934, %v1302
        %v1559 = vadd.f32 %v935, %v1303
        %v1560 = vadd.f32 %v936, %v1304
        %v1561 = vadd.f32 %v937, %v1305
        %v1562 = vadd.f32 %v938, %v1306
        %v1563 = vadd.f32 %v939, %v1307
        %v1564 = vadd.f32 %v940, %v1308
        %v1565 = vadd.f32 %v941, %v1309
        %v1566 = vadd.f32 %v942, %v1310
        %v1567 = vadd.f32 %v943, %v1311
        %v1568 = vadd.f32 %v944, %v1312
        %v1569 = vadd.f32 %v945, %v1313
        %v1570 = vadd.f32 %v946, %v1314
        %v1571 = vadd.f32 %v947, %v1315
        %v1572 = vadd.f32 %v948, %v1316
        %v1573 = vadd.f32 %v949, %v1317
        %v1574 = vadd.f32 %v950, %v1318
        %v1575 = vadd.f32 %v951, %v1319
        %v1576 = vadd.f32 %v952, %v1320
        %v1577 = vadd.f32 %v953, %v1321
        %v1578 = vadd.f32 %v954, %v1322
        %v1579 = vadd.f32 %v955, %v1323
        %v1580 = vadd.f32 %v956, %v1324
        %v1581 = vadd.f32 %v957, %v1325
        %v1582 = vadd.f32 %v958, %v1326
        %v1583 = vadd.f32 %v959, %v1327
        %v1584 = vadd.f32 %v960, %v1328
        %1585 = vset.pattern.permute.xlu0 2
        %1586 = vperm.xlu0 %1585, %v545
        %v1587 = vpop.permute.xlu0 %1586
        %1589 = vset.pattern.permute.xlu0 2
        %1590 = vperm.xlu0 %1589, %v546
        %v1591 = vpop.permute.xlu0 %1590
        %1593 = vset.pattern.permute.xlu0 2
        %1594 = vperm.xlu0 %1593, %v547
        %v1595 = vpop.permute.xlu0 %1594
        %1597 = vset.pattern.permute.xlu0 2
        %1598 = vperm.xlu0 %1597, %v548
        %v1599 = vpop.permute.xlu0 %1598
        %1601 = vset.pattern.permute.xlu0 2
        %1602 = vperm.xlu0 %1601, %v549
        %v1603 = vpop.permute.xlu0 %1602
        %1605 = vset.pattern.permute.xlu0 2
        %1606 = vperm.xlu0 %1605, %v550
        %v1607 = vpop.permute.xlu0 %1606
        %1609 = vset.pattern.permute.xlu0 2
        %1610 = vperm.xlu0 %1609, %v551
        %v1611 = vpop.permute.xlu0 %1610
        %1613 = vset.pattern.permute.xlu0 2
        %1614 = vperm.xlu0 %1613, %v552
        %v1615 = vpop.permute.xlu0 %1614
        %1617 = vset.pattern.permute.xlu0 2
        %1618 = vperm.xlu0 %1617, %v553
        %v1619 = vpop.permute.xlu0 %1618
        %1621 = vset.pattern.permute.xlu0 2
        %1622 = vperm.xlu0 %1621, %v554
        %v1623 = vpop.permute.xlu0 %1622
        %1625 = vset.pattern.permute.xlu0 2
        %1626 = vperm.xlu0 %1625, %v555
        %v1627 = vpop.permute.xlu0 %1626
        %1629 = vset.pattern.permute.xlu0 2
        %1630 = vperm.xlu0 %1629, %v556
        %v1631 = vpop.permute.xlu0 %1630
        %1633 = vset.pattern.permute.xlu0 2
        %1634 = vperm.xlu0 %1633, %v557
        %v1635 = vpop.permute.xlu0 %1634
        %1637 = vset.pattern.permute.xlu0 2
        %1638 = vperm.xlu0 %1637, %v558
        %v1639 = vpop.permute.xlu0 %1638
        %1641 = vset.pattern.permute.xlu0 2
        %1642 = vperm.xlu0 %1641, %v559
        %v1643 = vpop.permute.xlu0 %1642
        %1645 = vset.pattern.permute.xlu0 2
        %1646 = vperm.xlu0 %1645, %v560
        %v1647 = vpop.permute.xlu0 %1646
        %v1649 = vperm.slane %v561, 2
        %v1650 = vperm.slane %v561, 6
        %v1651 = vperm.slane %v562, 2
        %v1652 = vperm.slane %v562, 6
        %v1653 = vperm.slane %v563, 2
        %v1654 = vperm.slane %v563, 6
        %v1655 = vperm.slane %v564, 2
        %v1656 = vperm.slane %v564, 6
        %v1657 = vperm.slane %v565, 2
        %v1658 = vperm.slane %v565, 6
        %v1659 = vperm.slane %v566, 2
        %v1660 = vperm.slane %v566, 6
        %v1661 = vperm.slane %v567, 2
        %v1662 = vperm.slane %v567, 6
        %v1663 = vperm.slane %v568, 2
        %v1664 = vperm.slane %v568, 6
        %v1681 = vperm.slane %v1649, 2
        %v1682 = vperm.slane %v1650, 2
        %v1683 = vperm.slane %v1651, 2
        %v1684 = vperm.slane %v1652, 2
        %v1685 = vperm.slane %v1653, 2
        %v1686 = vperm.slane %v1654, 2
        %v1687 = vperm.slane %v1655, 2
        %v1688 = vperm.slane %v1656, 2
        %v1689 = vperm.slane %v1657, 2
        %v1690 = vperm.slane %v1658, 2
        %v1691 = vperm.slane %v1659, 2
        %v1692 = vperm.slane %v1660, 2
        %v1693 = vperm.slane %v1661, 2
        %v1694 = vperm.slane %v1662, 2
        %v1695 = vperm.slane %v1663, 2
        %v1696 = vperm.slane %v1664, 2
        %v1697 = vmul.f32 %v1587, %v1681
        %v1698 = vmul.f32 %v1587, %v1682
        %v1699 = vmul.f32 %v1587, %v1683
        %v1700 = vmul.f32 %v1587, %v1684
        %v1701 = vmul.f32 %v1587, %v1685
        %v1702 = vmul.f32 %v1587, %v1686
        %v1703 = vmul.f32 %v1587, %v1687
        %v1704 = vmul.f32 %v1587, %v1688
        %v1705 = vmul.f32 %v1587, %v1689
        %v1706 = vmul.f32 %v1587, %v1690
        %v1707 = vmul.f32 %v1587, %v1691
        %v1708 = vmul.f32 %v1587, %v1692
        %v1709 = vmul.f32 %v1587, %v1693
        %v1710 = vmul.f32 %v1587, %v1694
        %v1711 = vmul.f32 %v1587, %v1695
        %v1712 = vmul.f32 %v1587, %v1696
        %v1713 = vmul.f32 %v1591, %v1681
        %v1714 = vmul.f32 %v1591, %v1682
        %v1715 = vmul.f32 %v1591, %v1683
        %v1716 = vmul.f32 %v1591, %v1684
        %v1717 = vmul.f32 %v1591, %v1685
        %v1718 = vmul.f32 %v1591, %v1686
        %v1719 = vmul.f32 %v1591, %v1687
        %v1720 = vmul.f32 %v1591, %v1688
        %v1721 = vmul.f32 %v1591, %v1689
        %v1722 = vmul.f32 %v1591, %v1690
        %v1723 = vmul.f32 %v1591, %v1691
        %v1724 = vmul.f32 %v1591, %v1692
        %v1725 = vmul.f32 %v1591, %v1693
        %v1726 = vmul.f32 %v1591, %v1694
        %v1727 = vmul.f32 %v1591, %v1695
        %v1728 = vmul.f32 %v1591, %v1696
        %v1729 = vmul.f32 %v1595, %v1681
        %v1730 = vmul.f32 %v1595, %v1682
        %v1731 = vmul.f32 %v1595, %v1683
        %v1732 = vmul.f32 %v1595, %v1684
        %v1733 = vmul.f32 %v1595, %v1685
        %v1734 = vmul.f32 %v1595, %v1686
        %v1735 = vmul.f32 %v1595, %v1687
        %v1736 = vmul.f32 %v1595, %v1688
        %v1737 = vmul.f32 %v1595, %v1689
        %v1738 = vmul.f32 %v1595, %v1690
        %v1739 = vmul.f32 %v1595, %v1691
        %v1740 = vmul.f32 %v1595, %v1692
        %v1741 = vmul.f32 %v1595, %v1693
        %v1742 = vmul.f32 %v1595, %v1694
        %v1743 = vmul.f32 %v1595, %v1695
        %v1744 = vmul.f32 %v1595, %v1696
        %v1745 = vmul.f32 %v1599, %v1681
        %v1746 = vmul.f32 %v1599, %v1682
        %v1747 = vmul.f32 %v1599, %v1683
        %v1748 = vmul.f32 %v1599, %v1684
        %v1749 = vmul.f32 %v1599, %v1685
        %v1750 = vmul.f32 %v1599, %v1686
        %v1751 = vmul.f32 %v1599, %v1687
        %v1752 = vmul.f32 %v1599, %v1688
        %v1753 = vmul.f32 %v1599, %v1689
        %v1754 = vmul.f32 %v1599, %v1690
        %v1755 = vmul.f32 %v1599, %v1691
        %v1756 = vmul.f32 %v1599, %v1692
        %v1757 = vmul.f32 %v1599, %v1693
        %v1758 = vmul.f32 %v1599, %v1694
        %v1759 = vmul.f32 %v1599, %v1695
        %v1760 = vmul.f32 %v1599, %v1696
        %v1761 = vmul.f32 %v1603, %v1681
        %v1762 = vmul.f32 %v1603, %v1682
        %v1763 = vmul.f32 %v1603, %v1683
        %v1764 = vmul.f32 %v1603, %v1684
        %v1765 = vmul.f32 %v1603, %v1685
        %v1766 = vmul.f32 %v1603, %v1686
        %v1767 = vmul.f32 %v1603, %v1687
        %v1768 = vmul.f32 %v1603, %v1688
        %v1769 = vmul.f32 %v1603, %v1689
        %v1770 = vmul.f32 %v1603, %v1690
        %v1771 = vmul.f32 %v1603, %v1691
        %v1772 = vmul.f32 %v1603, %v1692
        %v1773 = vmul.f32 %v1603, %v1693
        %v1774 = vmul.f32 %v1603, %v1694
        %v1775 = vmul.f32 %v1603, %v1695
        %v1776 = vmul.f32 %v1603, %v1696
        %v1777 = vmul.f32 %v1607, %v1681
        %v1778 = vmul.f32 %v1607, %v1682
        %v1779 = vmul.f32 %v1607, %v1683
        %v1780 = vmul.f32 %v1607, %v1684
        %v1781 = vmul.f32 %v1607, %v1685
        %v1782 = vmul.f32 %v1607, %v1686
        %v1783 = vmul.f32 %v1607, %v1687
        %v1784 = vmul.f32 %v1607, %v1688
        %v1785 = vmul.f32 %v1607, %v1689
        %v1786 = vmul.f32 %v1607, %v1690
        %v1787 = vmul.f32 %v1607, %v1691
        %v1788 = vmul.f32 %v1607, %v1692
        %v1789 = vmul.f32 %v1607, %v1693
        %v1790 = vmul.f32 %v1607, %v1694
        %v1791 = vmul.f32 %v1607, %v1695
        %v1792 = vmul.f32 %v1607, %v1696
        %v1793 = vmul.f32 %v1611, %v1681
        %v1794 = vmul.f32 %v1611, %v1682
        %v1795 = vmul.f32 %v1611, %v1683
        %v1796 = vmul.f32 %v1611, %v1684
        %v1797 = vmul.f32 %v1611, %v1685
        %v1798 = vmul.f32 %v1611, %v1686
        %v1799 = vmul.f32 %v1611, %v1687
        %v1800 = vmul.f32 %v1611, %v1688
        %v1801 = vmul.f32 %v1611, %v1689
        %v1802 = vmul.f32 %v1611, %v1690
        %v1803 = vmul.f32 %v1611, %v1691
        %v1804 = vmul.f32 %v1611, %v1692
        %v1805 = vmul.f32 %v1611, %v1693
        %v1806 = vmul.f32 %v1611, %v1694
        %v1807 = vmul.f32 %v1611, %v1695
        %v1808 = vmul.f32 %v1611, %v1696
        %v1809 = vmul.f32 %v1615, %v1681
        %v1810 = vmul.f32 %v1615, %v1682
        %v1811 = vmul.f32 %v1615, %v1683
        %v1812 = vmul.f32 %v1615, %v1684
        %v1813 = vmul.f32 %v1615, %v1685
        %v1814 = vmul.f32 %v1615, %v1686
        %v1815 = vmul.f32 %v1615, %v1687
        %v1816 = vmul.f32 %v1615, %v1688
        %v1817 = vmul.f32 %v1615, %v1689
        %v1818 = vmul.f32 %v1615, %v1690
        %v1819 = vmul.f32 %v1615, %v1691
        %v1820 = vmul.f32 %v1615, %v1692
        %v1821 = vmul.f32 %v1615, %v1693
        %v1822 = vmul.f32 %v1615, %v1694
        %v1823 = vmul.f32 %v1615, %v1695
        %v1824 = vmul.f32 %v1615, %v1696
        %v1825 = vmul.f32 %v1619, %v1681
        %v1826 = vmul.f32 %v1619, %v1682
        %v1827 = vmul.f32 %v1619, %v1683
        %v1828 = vmul.f32 %v1619, %v1684
        %v1829 = vmul.f32 %v1619, %v1685
        %v1830 = vmul.f32 %v1619, %v1686
        %v1831 = vmul.f32 %v1619, %v1687
        %v1832 = vmul.f32 %v1619, %v1688
        %v1833 = vmul.f32 %v1619, %v1689
        %v1834 = vmul.f32 %v1619, %v1690
        %v1835 = vmul.f32 %v1619, %v1691
        %v1836 = vmul.f32 %v1619, %v1692
        %v1837 = vmul.f32 %v1619, %v1693
        %v1838 = vmul.f32 %v1619, %v1694
        %v1839 = vmul.f32 %v1619, %v1695
        %v1840 = vmul.f32 %v1619, %v1696
        %v1841 = vmul.f32 %v1623, %v1681
        %v1842 = vmul.f32 %v1623, %v1682
        %v1843 = vmul.f32 %v1623, %v1683
        %v1844 = vmul.f32 %v1623, %v1684
        %v1845 = vmul.f32 %v1623, %v1685
        %v1846 = vmul.f32 %v1623, %v1686
        %v1847 = vmul.f32 %v1623, %v1687
        %v1848 = vmul.f32 %v1623, %v1688
        %v1849 = vmul.f32 %v1623, %v1689
        %v1850 = vmul.f32 %v1623, %v1690
        %v1851 = vmul.f32 %v1623, %v1691
        %v1852 = vmul.f32 %v1623, %v1692
        %v1853 = vmul.f32 %v1623, %v1693
        %v1854 = vmul.f32 %v1623, %v1694
        %v1855 = vmul.f32 %v1623, %v1695
        %v1856 = vmul.f32 %v1623, %v1696
        %v1857 = vmul.f32 %v1627, %v1681
        %v1858 = vmul.f32 %v1627, %v1682
        %v1859 = vmul.f32 %v1627, %v1683
        %v1860 = vmul.f32 %v1627, %v1684
        %v1861 = vmul.f32 %v1627, %v1685
        %v1862 = vmul.f32 %v1627, %v1686
        %v1863 = vmul.f32 %v1627, %v1687
        %v1864 = vmul.f32 %v1627, %v1688
        %v1865 = vmul.f32 %v1627, %v1689
        %v1866 = vmul.f32 %v1627, %v1690
        %v1867 = vmul.f32 %v1627, %v1691
        %v1868 = vmul.f32 %v1627, %v1692
        %v1869 = vmul.f32 %v1627, %v1693
        %v1870 = vmul.f32 %v1627, %v1694
        %v1871 = vmul.f32 %v1627, %v1695
        %v1872 = vmul.f32 %v1627, %v1696
        %v1873 = vmul.f32 %v1631, %v1681
        %v1874 = vmul.f32 %v1631, %v1682
        %v1875 = vmul.f32 %v1631, %v1683
        %v1876 = vmul.f32 %v1631, %v1684
        %v1877 = vmul.f32 %v1631, %v1685
        %v1878 = vmul.f32 %v1631, %v1686
        %v1879 = vmul.f32 %v1631, %v1687
        %v1880 = vmul.f32 %v1631, %v1688
        %v1881 = vmul.f32 %v1631, %v1689
        %v1882 = vmul.f32 %v1631, %v1690
        %v1883 = vmul.f32 %v1631, %v1691
        %v1884 = vmul.f32 %v1631, %v1692
        %v1885 = vmul.f32 %v1631, %v1693
        %v1886 = vmul.f32 %v1631, %v1694
        %v1887 = vmul.f32 %v1631, %v1695
        %v1888 = vmul.f32 %v1631, %v1696
        %v1889 = vmul.f32 %v1635, %v1681
        %v1890 = vmul.f32 %v1635, %v1682
        %v1891 = vmul.f32 %v1635, %v1683
        %v1892 = vmul.f32 %v1635, %v1684
        %v1893 = vmul.f32 %v1635, %v1685
        %v1894 = vmul.f32 %v1635, %v1686
        %v1895 = vmul.f32 %v1635, %v1687
        %v1896 = vmul.f32 %v1635, %v1688
        %v1897 = vmul.f32 %v1635, %v1689
        %v1898 = vmul.f32 %v1635, %v1690
        %v1899 = vmul.f32 %v1635, %v1691
        %v1900 = vmul.f32 %v1635, %v1692
        %v1901 = vmul.f32 %v1635, %v1693
        %v1902 = vmul.f32 %v1635, %v1694
        %v1903 = vmul.f32 %v1635, %v1695
        %v1904 = vmul.f32 %v1635, %v1696
        %v1905 = vmul.f32 %v1639, %v1681
        %v1906 = vmul.f32 %v1639, %v1682
        %v1907 = vmul.f32 %v1639, %v1683
        %v1908 = vmul.f32 %v1639, %v1684
        %v1909 = vmul.f32 %v1639, %v1685
        %v1910 = vmul.f32 %v1639, %v1686
        %v1911 = vmul.f32 %v1639, %v1687
        %v1912 = vmul.f32 %v1639, %v1688
        %v1913 = vmul.f32 %v1639, %v1689
        %v1914 = vmul.f32 %v1639, %v1690
        %v1915 = vmul.f32 %v1639, %v1691
        %v1916 = vmul.f32 %v1639, %v1692
        %v1917 = vmul.f32 %v1639, %v1693
        %v1918 = vmul.f32 %v1639, %v1694
        %v1919 = vmul.f32 %v1639, %v1695
        %v1920 = vmul.f32 %v1639, %v1696
        %v1921 = vmul.f32 %v1643, %v1681
        %v1922 = vmul.f32 %v1643, %v1682
        %v1923 = vmul.f32 %v1643, %v1683
        %v1924 = vmul.f32 %v1643, %v1684
        %v1925 = vmul.f32 %v1643, %v1685
        %v1926 = vmul.f32 %v1643, %v1686
        %v1927 = vmul.f32 %v1643, %v1687
        %v1928 = vmul.f32 %v1643, %v1688
        %v1929 = vmul.f32 %v1643, %v1689
        %v1930 = vmul.f32 %v1643, %v1690
        %v1931 = vmul.f32 %v1643, %v1691
        %v1932 = vmul.f32 %v1643, %v1692
        %v1933 = vmul.f32 %v1643, %v1693
        %v1934 = vmul.f32 %v1643, %v1694
        %v1935 = vmul.f32 %v1643, %v1695
        %v1936 = vmul.f32 %v1643, %v1696
        %v1937 = vmul.f32 %v1647, %v1681
        %v1938 = vmul.f32 %v1647, %v1682
        %v1939 = vmul.f32 %v1647, %v1683
        %v1940 = vmul.f32 %v1647, %v1684
        %v1941 = vmul.f32 %v1647, %v1685
        %v1942 = vmul.f32 %v1647, %v1686
        %v1943 = vmul.f32 %v1647, %v1687
        %v1944 = vmul.f32 %v1647, %v1688
        %v1945 = vmul.f32 %v1647, %v1689
        %v1946 = vmul.f32 %v1647, %v1690
        %v1947 = vmul.f32 %v1647, %v1691
        %v1948 = vmul.f32 %v1647, %v1692
        %v1949 = vmul.f32 %v1647, %v1693
        %v1950 = vmul.f32 %v1647, %v1694
        %v1951 = vmul.f32 %v1647, %v1695
        %v1952 = vmul.f32 %v1647, %v1696
        %v1953 = vadd.f32 %v1329, %v1697
        %v1954 = vadd.f32 %v1330, %v1698
        %v1955 = vadd.f32 %v1331, %v1699
        %v1956 = vadd.f32 %v1332, %v1700
        %v1957 = vadd.f32 %v1333, %v1701
        %v1958 = vadd.f32 %v1334, %v1702
        %v1959 = vadd.f32 %v1335, %v1703
        %v1960 = vadd.f32 %v1336, %v1704
        %v1961 = vadd.f32 %v1337, %v1705
        %v1962 = vadd.f32 %v1338, %v1706
        %v1963 = vadd.f32 %v1339, %v1707
        %v1964 = vadd.f32 %v1340, %v1708
        %v1965 = vadd.f32 %v1341, %v1709
        %v1966 = vadd.f32 %v1342, %v1710
        %v1967 = vadd.f32 %v1343, %v1711
        %v1968 = vadd.f32 %v1344, %v1712
        %v1969 = vadd.f32 %v1345, %v1713
        %v1970 = vadd.f32 %v1346, %v1714
        %v1971 = vadd.f32 %v1347, %v1715
        %v1972 = vadd.f32 %v1348, %v1716
        %v1973 = vadd.f32 %v1349, %v1717
        %v1974 = vadd.f32 %v1350, %v1718
        %v1975 = vadd.f32 %v1351, %v1719
        %v1976 = vadd.f32 %v1352, %v1720
        %v1977 = vadd.f32 %v1353, %v1721
        %v1978 = vadd.f32 %v1354, %v1722
        %v1979 = vadd.f32 %v1355, %v1723
        %v1980 = vadd.f32 %v1356, %v1724
        %v1981 = vadd.f32 %v1357, %v1725
        %v1982 = vadd.f32 %v1358, %v1726
        %v1983 = vadd.f32 %v1359, %v1727
        %v1984 = vadd.f32 %v1360, %v1728
        %v1985 = vadd.f32 %v1361, %v1729
        %v1986 = vadd.f32 %v1362, %v1730
        %v1987 = vadd.f32 %v1363, %v1731
        %v1988 = vadd.f32 %v1364, %v1732
        %v1989 = vadd.f32 %v1365, %v1733
        %v1990 = vadd.f32 %v1366, %v1734
        %v1991 = vadd.f32 %v1367, %v1735
        %v1992 = vadd.f32 %v1368, %v1736
        %v1993 = vadd.f32 %v1369, %v1737
        %v1994 = vadd.f32 %v1370, %v1738
        %v1995 = vadd.f32 %v1371, %v1739
        %v1996 = vadd.f32 %v1372, %v1740
        %v1997 = vadd.f32 %v1373, %v1741
        %v1998 = vadd.f32 %v1374, %v1742
        %v1999 = vadd.f32 %v1375, %v1743
        %v2000 = vadd.f32 %v1376, %v1744
        %v2001 = vadd.f32 %v1377, %v1745
        %v2002 = vadd.f32 %v1378, %v1746
        %v2003 = vadd.f32 %v1379, %v1747
        %v2004 = vadd.f32 %v1380, %v1748
        %v2005 = vadd.f32 %v1381, %v1749
        %v2006 = vadd.f32 %v1382, %v1750
        %v2007 = vadd.f32 %v1383, %v1751
        %v2008 = vadd.f32 %v1384, %v1752
        %v2009 = vadd.f32 %v1385, %v1753
        %v2010 = vadd.f32 %v1386, %v1754
        %v2011 = vadd.f32 %v1387, %v1755
        %v2012 = vadd.f32 %v1388, %v1756
        %v2013 = vadd.f32 %v1389, %v1757
        %v2014 = vadd.f32 %v1390, %v1758
        %v2015 = vadd.f32 %v1391, %v1759
        %v2016 = vadd.f32 %v1392, %v1760
        %v2017 = vadd.f32 %v1393, %v1761
        %v2018 = vadd.f32 %v1394, %v1762
        %v2019 = vadd.f32 %v1395, %v1763
        %v2020 = vadd.f32 %v1396, %v1764
        %v2021 = vadd.f32 %v1397, %v1765
        %v2022 = vadd.f32 %v1398, %v1766
        %v2023 = vadd.f32 %v1399, %v1767
        %v2024 = vadd.f32 %v1400, %v1768
        %v2025 = vadd.f32 %v1401, %v1769
        %v2026 = vadd.f32 %v1402, %v1770
        %v2027 = vadd.f32 %v1403, %v1771
        %v2028 = vadd.f32 %v1404, %v1772
        %v2029 = vadd.f32 %v1405, %v1773
        %v2030 = vadd.f32 %v1406, %v1774
        %v2031 = vadd.f32 %v1407, %v1775
        %v2032 = vadd.f32 %v1408, %v1776
        %v2033 = vadd.f32 %v1409, %v1777
        %v2034 = vadd.f32 %v1410, %v1778
        %v2035 = vadd.f32 %v1411, %v1779
        %v2036 = vadd.f32 %v1412, %v1780
        %v2037 = vadd.f32 %v1413, %v1781
        %v2038 = vadd.f32 %v1414, %v1782
        %v2039 = vadd.f32 %v1415, %v1783
        %v2040 = vadd.f32 %v1416, %v1784
        %v2041 = vadd.f32 %v1417, %v1785
        %v2042 = vadd.f32 %v1418, %v1786
        %v2043 = vadd.f32 %v1419, %v1787
        %v2044 = vadd.f32 %v1420, %v1788
        %v2045 = vadd.f32 %v1421, %v1789
        %v2046 = vadd.f32 %v1422, %v1790
        %v2047 = vadd.f32 %v1423, %v1791
        %v2048 = vadd.f32 %v1424, %v1792
        %v2049 = vadd.f32 %v1425, %v1793
        %v2050 = vadd.f32 %v1426, %v1794
        %v2051 = vadd.f32 %v1427, %v1795
        %v2052 = vadd.f32 %v1428, %v1796
        %v2053 = vadd.f32 %v1429, %v1797
        %v2054 = vadd.f32 %v1430, %v1798
        %v2055 = vadd.f32 %v1431, %v1799
        %v2056 = vadd.f32 %v1432, %v1800
        %v2057 = vadd.f32 %v1433, %v1801
        %v2058 = vadd.f32 %v1434, %v1802
        %v2059 = vadd.f32 %v1435, %v1803
        %v2060 = vadd.f32 %v1436, %v1804
        %v2061 = vadd.f32 %v1437, %v1805
        %v2062 = vadd.f32 %v1438, %v1806
        %v2063 = vadd.f32 %v1439, %v1807
        %v2064 = vadd.f32 %v1440, %v1808
        %v2065 = vadd.f32 %v1441, %v1809
        %v2066 = vadd.f32 %v1442, %v1810
        %v2067 = vadd.f32 %v1443, %v1811
        %v2068 = vadd.f32 %v1444, %v1812
        %v2069 = vadd.f32 %v1445, %v1813
        %v2070 = vadd.f32 %v1446, %v1814
        %v2071 = vadd.f32 %v1447, %v1815
        %v2072 = vadd.f32 %v1448, %v1816
        %v2073 = vadd.f32 %v1449, %v1817
        %v2074 = vadd.f32 %v1450, %v1818
        %v2075 = vadd.f32 %v1451, %v1819
        %v2076 = vadd.f32 %v1452, %v1820
        %v2077 = vadd.f32 %v1453, %v1821
        %v2078 = vadd.f32 %v1454, %v1822
        %v2079 = vadd.f32 %v1455, %v1823
        %v2080 = vadd.f32 %v1456, %v1824
        %v2081 = vadd.f32 %v1457, %v1825
        %v2082 = vadd.f32 %v1458, %v1826
        %v2083 = vadd.f32 %v1459, %v1827
        %v2084 = vadd.f32 %v1460, %v1828
        %v2085 = vadd.f32 %v1461, %v1829
        %v2086 = vadd.f32 %v1462, %v1830
        %v2087 = vadd.f32 %v1463, %v1831
        %v2088 = vadd.f32 %v1464, %v1832
        %v2089 = vadd.f32 %v1465, %v1833
        %v2090 = vadd.f32 %v1466, %v1834
        %v2091 = vadd.f32 %v1467, %v1835
        %v2092 = vadd.f32 %v1468, %v1836
        %v2093 = vadd.f32 %v1469, %v1837
        %v2094 = vadd.f32 %v1470, %v1838
        %v2095 = vadd.f32 %v1471, %v1839
        %v2096 = vadd.f32 %v1472, %v1840
        %v2097 = vadd.f32 %v1473, %v1841
        %v2098 = vadd.f32 %v1474, %v1842
        %v2099 = vadd.f32 %v1475, %v1843
        %v2100 = vadd.f32 %v1476, %v1844
        %v2101 = vadd.f32 %v1477, %v1845
        %v2102 = vadd.f32 %v1478, %v1846
        %v2103 = vadd.f32 %v1479, %v1847
        %v2104 = vadd.f32 %v1480, %v1848
        %v2105 = vadd.f32 %v1481, %v1849
        %v2106 = vadd.f32 %v1482, %v1850
        %v2107 = vadd.f32 %v1483, %v1851
        %v2108 = vadd.f32 %v1484, %v1852
        %v2109 = vadd.f32 %v1485, %v1853
        %v2110 = vadd.f32 %v1486, %v1854
        %v2111 = vadd.f32 %v1487, %v1855
        %v2112 = vadd.f32 %v1488, %v1856
        %v2113 = vadd.f32 %v1489, %v1857
        %v2114 = vadd.f32 %v1490, %v1858
        %v2115 = vadd.f32 %v1491, %v1859
        %v2116 = vadd.f32 %v1492, %v1860
        %v2117 = vadd.f32 %v1493, %v1861
        %v2118 = vadd.f32 %v1494, %v1862
        %v2119 = vadd.f32 %v1495, %v1863
        %v2120 = vadd.f32 %v1496, %v1864
        %v2121 = vadd.f32 %v1497, %v1865
        %v2122 = vadd.f32 %v1498, %v1866
        %v2123 = vadd.f32 %v1499, %v1867
        %v2124 = vadd.f32 %v1500, %v1868
        %v2125 = vadd.f32 %v1501, %v1869
        %v2126 = vadd.f32 %v1502, %v1870
        %v2127 = vadd.f32 %v1503, %v1871
        %v2128 = vadd.f32 %v1504, %v1872
        %v2129 = vadd.f32 %v1505, %v1873
        %v2130 = vadd.f32 %v1506, %v1874
        %v2131 = vadd.f32 %v1507, %v1875
        %v2132 = vadd.f32 %v1508, %v1876
        %v2133 = vadd.f32 %v1509, %v1877
        %v2134 = vadd.f32 %v1510, %v1878
        %v2135 = vadd.f32 %v1511, %v1879
        %v2136 = vadd.f32 %v1512, %v1880
        %v2137 = vadd.f32 %v1513, %v1881
        %v2138 = vadd.f32 %v1514, %v1882
        %v2139 = vadd.f32 %v1515, %v1883
        %v2140 = vadd.f32 %v1516, %v1884
        %v2141 = vadd.f32 %v1517, %v1885
        %v2142 = vadd.f32 %v1518, %v1886
        %v2143 = vadd.f32 %v1519, %v1887
        %v2144 = vadd.f32 %v1520, %v1888
        %v2145 = vadd.f32 %v1521, %v1889
        %v2146 = vadd.f32 %v1522, %v1890
        %v2147 = vadd.f32 %v1523, %v1891
        %v2148 = vadd.f32 %v1524, %v1892
        %v2149 = vadd.f32 %v1525, %v1893
        %v2150 = vadd.f32 %v1526, %v1894
        %v2151 = vadd.f32 %v1527, %v1895
        %v2152 = vadd.f32 %v1528, %v1896
        %v2153 = vadd.f32 %v1529, %v1897
        %v2154 = vadd.f32 %v1530, %v1898
        %v2155 = vadd.f32 %v1531, %v1899
        %v2156 = vadd.f32 %v1532, %v1900
        %v2157 = vadd.f32 %v1533, %v1901
        %v2158 = vadd.f32 %v1534, %v1902
        %v2159 = vadd.f32 %v1535, %v1903
        %v2160 = vadd.f32 %v1536, %v1904
        %v2161 = vadd.f32 %v1537, %v1905
        %v2162 = vadd.f32 %v1538, %v1906
        %v2163 = vadd.f32 %v1539, %v1907
        %v2164 = vadd.f32 %v1540, %v1908
        %v2165 = vadd.f32 %v1541, %v1909
        %v2166 = vadd.f32 %v1542, %v1910
        %v2167 = vadd.f32 %v1543, %v1911
        %v2168 = vadd.f32 %v1544, %v1912
        %v2169 = vadd.f32 %v1545, %v1913
        %v2170 = vadd.f32 %v1546, %v1914
        %v2171 = vadd.f32 %v1547, %v1915
        %v2172 = vadd.f32 %v1548, %v1916
        %v2173 = vadd.f32 %v1549, %v1917
        %v2174 = vadd.f32 %v1550, %v1918
        %v2175 = vadd.f32 %v1551, %v1919
        %v2176 = vadd.f32 %v1552, %v1920
        %v2177 = vadd.f32 %v1553, %v1921
        %v2178 = vadd.f32 %v1554, %v1922
        %v2179 = vadd.f32 %v1555, %v1923
        %v2180 = vadd.f32 %v1556, %v1924
        %v2181 = vadd.f32 %v1557, %v1925
        %v2182 = vadd.f32 %v1558, %v1926
        %v2183 = vadd.f32 %v1559, %v1927
        %v2184 = vadd.f32 %v1560, %v1928
        %v2185 = vadd.f32 %v1561, %v1929
        %v2186 = vadd.f32 %v1562, %v1930
        %v2187 = vadd.f32 %v1563, %v1931
        %v2188 = vadd.f32 %v1564, %v1932
        %v2189 = vadd.f32 %v1565, %v1933
        %v2190 = vadd.f32 %v1566, %v1934
        %v2191 = vadd.f32 %v1567, %v1935
        %v2192 = vadd.f32 %v1568, %v1936
        %v2193 = vadd.f32 %v1569, %v1937
        %v2194 = vadd.f32 %v1570, %v1938
        %v2195 = vadd.f32 %v1571, %v1939
        %v2196 = vadd.f32 %v1572, %v1940
        %v2197 = vadd.f32 %v1573, %v1941
        %v2198 = vadd.f32 %v1574, %v1942
        %v2199 = vadd.f32 %v1575, %v1943
        %v2200 = vadd.f32 %v1576, %v1944
        %v2201 = vadd.f32 %v1577, %v1945
        %v2202 = vadd.f32 %v1578, %v1946
        %v2203 = vadd.f32 %v1579, %v1947
        %v2204 = vadd.f32 %v1580, %v1948
        %v2205 = vadd.f32 %v1581, %v1949
        %v2206 = vadd.f32 %v1582, %v1950
        %v2207 = vadd.f32 %v1583, %v1951
        %v2208 = vadd.f32 %v1584, %v1952
        %v2209 = vld [vmem:[%s2] sm:$0xff]
        %v2210 = vld [vmem:[%s2 + $0x8] sm:$0xff]
        %v2213 = vperm.slane %v2209, 0
        %v2214 = vperm.slane %v2209, 1
        %v2215 = vperm.slane %v2209, 2
        %v2216 = vperm.slane %v2209, 3
        %v2217 = vperm.slane %v2209, 4
        %v2218 = vperm.slane %v2209, 5
        %v2219 = vperm.slane %v2209, 6
        %v2220 = vperm.slane %v2209, 7
        %v2221 = vperm.slane %v2210, 0
        %v2222 = vperm.slane %v2210, 1
        %v2223 = vperm.slane %v2210, 2
        %v2224 = vperm.slane %v2210, 3
        %v2225 = vperm.slane %v2210, 4
        %v2226 = vperm.slane %v2210, 5
        %v2227 = vperm.slane %v2210, 6
        %v2228 = vperm.slane %v2210, 7
        %v2245 = vadd.f32 %v1953, %v2213
        %v2246 = vadd.f32 %v1954, %v2214
        %v2247 = vadd.f32 %v1955, %v2215
        %v2248 = vadd.f32 %v1956, %v2216
        %v2249 = vadd.f32 %v1957, %v2217
        %v2250 = vadd.f32 %v1958, %v2218
        %v2251 = vadd.f32 %v1959, %v2219
        %v2252 = vadd.f32 %v1960, %v2220
        %v2253 = vadd.f32 %v1961, %v2221
        %v2254 = vadd.f32 %v1962, %v2222
        %v2255 = vadd.f32 %v1963, %v2223
        %v2256 = vadd.f32 %v1964, %v2224
        %v2257 = vadd.f32 %v1965, %v2225
        %v2258 = vadd.f32 %v1966, %v2226
        %v2259 = vadd.f32 %v1967, %v2227
        %v2260 = vadd.f32 %v1968, %v2228
        %v2261 = vadd.f32 %v1969, %v2213
        %v2262 = vadd.f32 %v1970, %v2214
        %v2263 = vadd.f32 %v1971, %v2215
        %v2264 = vadd.f32 %v1972, %v2216
        %v2265 = vadd.f32 %v1973, %v2217
        %v2266 = vadd.f32 %v1974, %v2218
        %v2267 = vadd.f32 %v1975, %v2219
        %v2268 = vadd.f32 %v1976, %v2220
        %v2269 = vadd.f32 %v1977, %v2221
        %v2270 = vadd.f32 %v1978, %v2222
        %v2271 = vadd.f32 %v1979, %v2223
        %v2272 = vadd.f32 %v1980, %v2224
        %v2273 = vadd.f32 %v1981, %v2225
        %v2274 = vadd.f32 %v1982, %v2226
        %v2275 = vadd.f32 %v1983, %v2227
        %v2276 = vadd.f32 %v1984, %v2228
        %v2277 = vadd.f32 %v1985, %v2213
        %v2278 = vadd.f32 %v1986, %v2214
        %v2279 = vadd.f32 %v1987, %v2215
        %v2280 = vadd.f32 %v1988, %v2216
        %v2281 = vadd.f32 %v1989, %v2217
        %v2282 = vadd.f32 %v1990, %v2218
        %v2283 = vadd.f32 %v1991, %v2219
        %v2284 = vadd.f32 %v1992, %v2220
        %v2285 = vadd.f32 %v1993, %v2221
        %v2286 = vadd.f32 %v1994, %v2222
        %v2287 = vadd.f32 %v1995, %v2223
        %v2288 = vadd.f32 %v1996, %v2224
        %v2289 = vadd.f32 %v1997, %v2225
        %v2290 = vadd.f32 %v1998, %v2226
        %v2291 = vadd.f32 %v1999, %v2227
        %v2292 = vadd.f32 %v2000, %v2228
        %v2293 = vadd.f32 %v2001, %v2213
        %v2294 = vadd.f32 %v2002, %v2214
        %v2295 = vadd.f32 %v2003, %v2215
        %v2296 = vadd.f32 %v2004, %v2216
        %v2297 = vadd.f32 %v2005, %v2217
        %v2298 = vadd.f32 %v2006, %v2218
        %v2299 = vadd.f32 %v2007, %v2219
        %v2300 = vadd.f32 %v2008, %v2220
        %v2301 = vadd.f32 %v2009, %v2221
        %v2302 = vadd.f32 %v2010, %v2222
        %v2303 = vadd.f32 %v2011, %v2223
        %v2304 = vadd.f32 %v2012, %v2224
        %v2305 = vadd.f32 %v2013, %v2225
        %v2306 = vadd.f32 %v2014, %v2226
        %v2307 = vadd.f32 %v2015, %v2227
        %v2308 = vadd.f32 %v2016, %v2228
        %v2309 = vadd.f32 %v2017, %v2213
        %v2310 = vadd.f32 %v2018, %v2214
        %v2311 = vadd.f32 %v2019, %v2215
        %v2312 = vadd.f32 %v2020, %v2216
        %v2313 = vadd.f32 %v2021, %v2217
        %v2314 = vadd.f32 %v2022, %v2218
        %v2315 = vadd.f32 %v2023, %v2219
        %v2316 = vadd.f32 %v2024, %v2220
        %v2317 = vadd.f32 %v2025, %v2221
        %v2318 = vadd.f32 %v2026, %v2222
        %v2319 = vadd.f32 %v2027, %v2223
        %v2320 = vadd.f32 %v2028, %v2224
        %v2321 = vadd.f32 %v2029, %v2225
        %v2322 = vadd.f32 %v2030, %v2226
        %v2323 = vadd.f32 %v2031, %v2227
        %v2324 = vadd.f32 %v2032, %v2228
        %v2325 = vadd.f32 %v2033, %v2213
        %v2326 = vadd.f32 %v2034, %v2214
        %v2327 = vadd.f32 %v2035, %v2215
        %v2328 = vadd.f32 %v2036, %v2216
        %v2329 = vadd.f32 %v2037, %v2217
        %v2330 = vadd.f32 %v2038, %v2218
        %v2331 = vadd.f32 %v2039, %v2219
        %v2332 = vadd.f32 %v2040, %v2220
        %v2333 = vadd.f32 %v2041, %v2221
        %v2334 = vadd.f32 %v2042, %v2222
        %v2335 = vadd.f32 %v2043, %v2223
        %v2336 = vadd.f32 %v2044, %v2224
        %v2337 = vadd.f32 %v2045, %v2225
        %v2338 = vadd.f32 %v2046, %v2226
        %v2339 = vadd.f32 %v2047, %v2227
        %v2340 = vadd.f32 %v2048, %v2228
        %v2341 = vadd.f32 %v2049, %v2213
        %v2342 = vadd.f32 %v2050, %v2214
        %v2343 = vadd.f32 %v2051, %v2215
        %v2344 = vadd.f32 %v2052, %v2216
        %v2345 = vadd.f32 %v2053, %v2217
        %v2346 = vadd.f32 %v2054, %v2218
        %v2347 = vadd.f32 %v2055, %v2219
        %v2348 = vadd.f32 %v2056, %v2220
        %v2349 = vadd.f32 %v2057, %v2221
        %v2350 = vadd.f32 %v2058, %v2222
        %v2351 = vadd.f32 %v2059, %v2223
        %v2352 = vadd.f32 %v2060, %v2224
        %v2353 = vadd.f32 %v2061, %v2225
        %v2354 = vadd.f32 %v2062, %v2226
        %v2355 = vadd.f32 %v2063, %v2227
        %v2356 = vadd.f32 %v2064, %v2228
        %v2357 = vadd.f32 %v2065, %v2213
        %v2358 = vadd.f32 %v2066, %v2214
        %v2359 = vadd.f32 %v2067, %v2215
        %v2360 = vadd.f32 %v2068, %v2216
        %v2361 = vadd.f32 %v2069, %v2217
        %v2362 = vadd.f32 %v2070, %v2218
        %v2363 = vadd.f32 %v2071, %v2219
        %v2364 = vadd.f32 %v2072, %v2220
        %v2365 = vadd.f32 %v2073, %v2221
        %v2366 = vadd.f32 %v2074, %v2222
        %v2367 = vadd.f32 %v2075, %v2223
        %v2368 = vadd.f32 %v2076, %v2224
        %v2369 = vadd.f32 %v2077, %v2225
        %v2370 = vadd.f32 %v2078, %v2226
        %v2371 = vadd.f32 %v2079, %v2227
        %v2372 = vadd.f32 %v2080, %v2228
        %v2373 = vadd.f32 %v2081, %v2213
        %v2374 = vadd.f32 %v2082, %v2214
        %v2375 = vadd.f32 %v2083, %v2215
        %v2376 = vadd.f32 %v2084, %v2216
        %v2377 = vadd.f32 %v2085, %v2217
        %v2378 = vadd.f32 %v2086, %v2218
        %v2379 = vadd.f32 %v2087, %v2219
        %v2380 = vadd.f32 %v2088, %v2220
        %v2381 = vadd.f32 %v2089, %v2221
        %v2382 = vadd.f32 %v2090, %v2222
        %v2383 = vadd.f32 %v2091, %v2223
        %v2384 = vadd.f32 %v2092, %v2224
        %v2385 = vadd.f32 %v2093, %v2225
        %v2386 = vadd.f32 %v2094, %v2226
        %v2387 = vadd.f32 %v2095, %v2227
        %v2388 = vadd.f32 %v2096, %v2228
        %v2389 = vadd.f32 %v2097, %v2213
        %v2390 = vadd.f32 %v2098, %v2214
        %v2391 = vadd.f32 %v2099, %v2215
        %v2392 = vadd.f32 %v2100, %v2216
        %v2393 = vadd.f32 %v2101, %v2217
        %v2394 = vadd.f32 %v2102, %v2218
        %v2395 = vadd.f32 %v2103, %v2219
        %v2396 = vadd.f32 %v2104, %v2220
        %v2397 = vadd.f32 %v2105, %v2221
        %v2398 = vadd.f32 %v2106, %v2222
        %v2399 = vadd.f32 %v2107, %v2223
        %v2400 = vadd.f32 %v2108, %v2224
        %v2401 = vadd.f32 %v2109, %v2225
        %v2402 = vadd.f32 %v2110, %v2226
        %v2403 = vadd.f32 %v2111, %v2227
        %v2404 = vadd.f32 %v2112, %v2228
        %v2405 = vadd.f32 %v2113, %v2213
        %v2406 = vadd.f32 %v2114, %v2214
        %v2407 = vadd.f32 %v2115, %v2215
        %v2408 = vadd.f32 %v2116, %v2216
        %v2409 = vadd.f32 %v2117, %v2217
        %v2410 = vadd.f32 %v2118, %v2218
        %v2411 = vadd.f32 %v2119, %v2219
        %v2412 = vadd.f32 %v2120, %v2220
        %v2413 = vadd.f32 %v2121, %v2221
        %v2414 = vadd.f32 %v2122, %v2222
        %v2415 = vadd.f32 %v2123, %v2223
        %v2416 = vadd.f32 %v2124, %v2224
        %v2417 = vadd.f32 %v2125, %v2225
        %v2418 = vadd.f32 %v2126, %v2226
        %v2419 = vadd.f32 %v2127, %v2227
        %v2420 = vadd.f32 %v2128, %v2228
        %v2421 = vadd.f32 %v2129, %v2213
        %v2422 = vadd.f32 %v2130, %v2214
        %v2423 = vadd.f32 %v2131, %v2215
        %v2424 = vadd.f32 %v2132, %v2216
        %v2425 = vadd.f32 %v2133, %v2217
        %v2426 = vadd.f32 %v2134, %v2218
        %v2427 = vadd.f32 %v2135, %v2219
        %v2428 = vadd.f32 %v2136, %v2220
        %v2429 = vadd.f32 %v2137, %v2221
        %v2430 = vadd.f32 %v2138, %v2222
        %v2431 = vadd.f32 %v2139, %v2223
        %v2432 = vadd.f32 %v2140, %v2224
        %v2433 = vadd.f32 %v2141, %v2225
        %v2434 = vadd.f32 %v2142, %v2226
        %v2435 = vadd.f32 %v2143, %v2227
        %v2436 = vadd.f32 %v2144, %v2228
        %v2437 = vadd.f32 %v2145, %v2213
        %v2438 = vadd.f32 %v2146, %v2214
        %v2439 = vadd.f32 %v2147, %v2215
        %v2440 = vadd.f32 %v2148, %v2216
        %v2441 = vadd.f32 %v2149, %v2217
        %v2442 = vadd.f32 %v2150, %v2218
        %v2443 = vadd.f32 %v2151, %v2219
        %v2444 = vadd.f32 %v2152, %v2220
        %v2445 = vadd.f32 %v2153, %v2221
        %v2446 = vadd.f32 %v2154, %v2222
        %v2447 = vadd.f32 %v2155, %v2223
        %v2448 = vadd.f32 %v2156, %v2224
        %v2449 = vadd.f32 %v2157, %v2225
        %v2450 = vadd.f32 %v2158, %v2226
        %v2451 = vadd.f32 %v2159, %v2227
        %v2452 = vadd.f32 %v2160, %v2228
        %v2453 = vadd.f32 %v2161, %v2213
        %v2454 = vadd.f32 %v2162, %v2214
        %v2455 = vadd.f32 %v2163, %v2215
        %v2456 = vadd.f32 %v2164, %v2216
        %v2457 = vadd.f32 %v2165, %v2217
        %v2458 = vadd.f32 %v2166, %v2218
        %v2459 = vadd.f32 %v2167, %v2219
        %v2460 = vadd.f32 %v2168, %v2220
        %v2461 = vadd.f32 %v2169, %v2221
        %v2462 = vadd.f32 %v2170, %v2222
        %v2463 = vadd.f32 %v2171, %v2223
        %v2464 = vadd.f32 %v2172, %v2224
        %v2465 = vadd.f32 %v2173, %v2225
        %v2466 = vadd.f32 %v2174, %v2226
        %v2467 = vadd.f32 %v2175, %v2227
        %v2468 = vadd.f32 %v2176, %v2228
        %v2469 = vadd.f32 %v2177, %v2213
        %v2470 = vadd.f32 %v2178, %v2214
        %v2471 = vadd.f32 %v2179, %v2215
        %v2472 = vadd.f32 %v2180, %v2216
        %v2473 = vadd.f32 %v2181, %v2217
        %v2474 = vadd.f32 %v2182, %v2218
        %v2475 = vadd.f32 %v2183, %v2219
        %v2476 = vadd.f32 %v2184, %v2220
        %v2477 = vadd.f32 %v2185, %v2221
        %v2478 = vadd.f32 %v2186, %v2222
        %v2479 = vadd.f32 %v2187, %v2223
        %v2480 = vadd.f32 %v2188, %v2224
        %v2481 = vadd.f32 %v2189, %v2225
        %v2482 = vadd.f32 %v2190, %v2226
        %v2483 = vadd.f32 %v2191, %v2227
        %v2484 = vadd.f32 %v2192, %v2228
        %v2485 = vadd.f32 %v2193, %v2213
        %v2486 = vadd.f32 %v2194, %v2214
        %v2487 = vadd.f32 %v2195, %v2215
        %v2488 = vadd.f32 %v2196, %v2216
        %v2489 = vadd.f32 %v2197, %v2217
        %v2490 = vadd.f32 %v2198, %v2218
        %v2491 = vadd.f32 %v2199, %v2219
        %v2492 = vadd.f32 %v2200, %v2220
        %v2493 = vadd.f32 %v2201, %v2221
        %v2494 = vadd.f32 %v2202, %v2222
        %v2495 = vadd.f32 %v2203, %v2223
        %v2496 = vadd.f32 %v2204, %v2224
        %v2497 = vadd.f32 %v2205, %v2225
        %v2498 = vadd.f32 %v2206, %v2226
        %v2499 = vadd.f32 %v2207, %v2227
        %v2500 = vadd.f32 %v2208, %v2228
        %v2501 = vld [vmem:[%s15] sm:$0xff]
        %v2502 = vld [vmem:[%s15 + $0x8] sm:$0xff]
        %v2503 = vld [vmem:[%s15 + $0x10] sm:$0xff]
        %2504 = vmatpush.msra.mxu0 %v2485
        %2505 = vmatpush.msra.mxu0 %v2469
        %2506 = vmatpush.msra.mxu0 %v2453
        %2507 = vmatpush.msra.mxu0 %v2437
        %2508 = vmatpush.msra.mxu0 %v2421
        %2509 = vmatpush.msra.mxu0 %v2405
        %2510 = vmatpush.msra.mxu0 %v2389
        %2511 = vmatpush.msra.mxu0 %v2373
        %2512 = vmatpush.msra.mxu0 %v2357
        %2513 = vmatpush.msra.mxu0 %v2341
        %2514 = vmatpush.msra.mxu0 %v2325
        %2515 = vmatpush.msra.mxu0 %v2309
        %2516 = vmatpush.msra.mxu0 %v2293
        %2517 = vmatpush.msra.mxu0 %v2277
        %2518 = vmatpush.msra.mxu0 %v2261
        %2519 = vmatpush.msra.mxu0 %v2245
        %2520 = vmatmul.f32.gmra.mxu0 %v2501
        %v2521 = vpop.f32.mrf.mxu0
        %v2522 = vadd.f32 0.0, %v2521
        %2523 = vdwg.mxu0
        %2524 = vmatpush.msra.mxu0 %v2486
        %2525 = vmatpush.msra.mxu0 %v2470
        %2526 = vmatpush.msra.mxu0 %v2454
        %2527 = vmatpush.msra.mxu0 %v2438
        %2528 = vmatpush.msra.mxu0 %v2422
        %2529 = vmatpush.msra.mxu0 %v2406
        %2530 = vmatpush.msra.mxu0 %v2390
        %2531 = vmatpush.msra.mxu0 %v2374
        %2532 = vmatpush.msra.mxu0 %v2358
        %2533 = vmatpush.msra.mxu0 %v2342
        %2534 = vmatpush.msra.mxu0 %v2326
        %2535 = vmatpush.msra.mxu0 %v2310
        %2536 = vmatpush.msra.mxu0 %v2294
        %2537 = vmatpush.msra.mxu0 %v2278
        %2538 = vmatpush.msra.mxu0 %v2262
        %2539 = vmatpush.msra.mxu0 %v2246
        %2540 = vmatmul.f32.gmra.mxu0 %v2501
        %v2541 = vpop.f32.mrf.mxu0
        %v2542 = vadd.f32 0.0, %v2541
        %2543 = vdwg.mxu0
        %2544 = vmatpush.msra.mxu0 %v2487
        %2545 = vmatpush.msra.mxu0 %v2471
        %2546 = vmatpush.msra.mxu0 %v2455
        %2547 = vmatpush.msra.mxu0 %v2439
        %2548 = vmatpush.msra.mxu0 %v2423
        %2549 = vmatpush.msra.mxu0 %v2407
        %2550 = vmatpush.msra.mxu0 %v2391
        %2551 = vmatpush.msra.mxu0 %v2375
        %2552 = vmatpush.msra.mxu0 %v2359
        %2553 = vmatpush.msra.mxu0 %v2343
        %2554 = vmatpush.msra.mxu0 %v2327
        %2555 = vmatpush.msra.mxu0 %v2311
        %2556 = vmatpush.msra.mxu0 %v2295
        %2557 = vmatpush.msra.mxu0 %v2279
        %2558 = vmatpush.msra.mxu0 %v2263
        %2559 = vmatpush.msra.mxu0 %v2247
        %2560 = vmatmul.f32.gmra.mxu0 %v2501
        %v2561 = vpop.f32.mrf.mxu0
        %v2562 = vadd.f32 0.0, %v2561
        %2563 = vdwg.mxu0
        %2564 = vmatpush.msra.mxu0 %v2488
        %2565 = vmatpush.msra.mxu0 %v2472
        %2566 = vmatpush.msra.mxu0 %v2456
        %2567 = vmatpush.msra.mxu0 %v2440
        %2568 = vmatpush.msra.mxu0 %v2424
        %2569 = vmatpush.msra.mxu0 %v2408
        %2570 = vmatpush.msra.mxu0 %v2392
        %2571 = vmatpush.msra.mxu0 %v2376
        %2572 = vmatpush.msra.mxu0 %v2360
        %2573 = vmatpush.msra.mxu0 %v2344
        %2574 = vmatpush.msra.mxu0 %v2328
        %2575 = vmatpush.msra.mxu0 %v2312
        %2576 = vmatpush.msra.mxu0 %v2296
        %2577 = vmatpush.msra.mxu0 %v2280
        %2578 = vmatpush.msra.mxu0 %v2264
        %2579 = vmatpush.msra.mxu0 %v2248
        %2580 = vmatmul.f32.gmra.mxu0 %v2501
        %v2581 = vpop.f32.mrf.mxu0
        %v2582 = vadd.f32 0.0, %v2581
        %2583 = vdwg.mxu0
        %2584 = vmatpush.msra.mxu0 %v2489
        %2585 = vmatpush.msra.mxu0 %v2473
        %2586 = vmatpush.msra.mxu0 %v2457
        %2587 = vmatpush.msra.mxu0 %v2441
        %2588 = vmatpush.msra.mxu0 %v2425
        %2589 = vmatpush.msra.mxu0 %v2409
        %2590 = vmatpush.msra.mxu0 %v2393
        %2591 = vmatpush.msra.mxu0 %v2377
        %2592 = vmatpush.msra.mxu0 %v2361
        %2593 = vmatpush.msra.mxu0 %v2345
        %2594 = vmatpush.msra.mxu0 %v2329
        %2595 = vmatpush.msra.mxu0 %v2313
        %2596 = vmatpush.msra.mxu0 %v2297
        %2597 = vmatpush.msra.mxu0 %v2281
        %2598 = vmatpush.msra.mxu0 %v2265
        %2599 = vmatpush.msra.mxu0 %v2249
        %2600 = vmatmul.f32.gmra.mxu0 %v2501
        %v2601 = vpop.f32.mrf.mxu0
        %v2602 = vadd.f32 0.0, %v2601
        %2603 = vdwg.mxu0
        %2604 = vmatpush.msra.mxu0 %v2490
        %2605 = vmatpush.msra.mxu0 %v2474
        %2606 = vmatpush.msra.mxu0 %v2458
        %2607 = vmatpush.msra.mxu0 %v2442
        %2608 = vmatpush.msra.mxu0 %v2426
        %2609 = vmatpush.msra.mxu0 %v2410
        %2610 = vmatpush.msra.mxu0 %v2394
        %2611 = vmatpush.msra.mxu0 %v2378
        %2612 = vmatpush.msra.mxu0 %v2362
        %2613 = vmatpush.msra.mxu0 %v2346
        %2614 = vmatpush.msra.mxu0 %v2330
        %2615 = vmatpush.msra.mxu0 %v2314
        %2616 = vmatpush.msra.mxu0 %v2298
        %2617 = vmatpush.msra.mxu0 %v2282
        %2618 = vmatpush.msra.mxu0 %v2266
        %2619 = vmatpush.msra.mxu0 %v2250
        %2620 = vmatmul.f32.gmra.mxu0 %v2501
        %v2621 = vpop.f32.mrf.mxu0
        %v2622 = vadd.f32 0.0, %v2621
        %2623 = vdwg.mxu0
        %2624 = vmatpush.msra.mxu0 %v2491
        %2625 = vmatpush.msra.mxu0 %v2475
        %2626 = vmatpush.msra.mxu0 %v2459
        %2627 = vmatpush.msra.mxu0 %v2443
        %2628 = vmatpush.msra.mxu0 %v2427
        %2629 = vmatpush.msra.mxu0 %v2411
        %2630 = vmatpush.msra.mxu0 %v2395
        %2631 = vmatpush.msra.mxu0 %v2379
        %2632 = vmatpush.msra.mxu0 %v2363
        %2633 = vmatpush.msra.mxu0 %v2347
        %2634 = vmatpush.msra.mxu0 %v2331
        %2635 = vmatpush.msra.mxu0 %v2315
        %2636 = vmatpush.msra.mxu0 %v2299
        %2637 = vmatpush.msra.mxu0 %v2283
        %2638 = vmatpush.msra.mxu0 %v2267
        %2639 = vmatpush.msra.mxu0 %v2251
        %2640 = vmatmul.f32.gmra.mxu0 %v2501
        %v2641 = vpop.f32.mrf.mxu0
        %v2642 = vadd.f32 0.0, %v2641
        %2643 = vdwg.mxu0
        %2644 = vmatpush.msra.mxu0 %v2492
        %2645 = vmatpush.msra.mxu0 %v2476
        %2646 = vmatpush.msra.mxu0 %v2460
        %2647 = vmatpush.msra.mxu0 %v2444
        %2648 = vmatpush.msra.mxu0 %v2428
        %2649 = vmatpush.msra.mxu0 %v2412
        %2650 = vmatpush.msra.mxu0 %v2396
        %2651 = vmatpush.msra.mxu0 %v2380
        %2652 = vmatpush.msra.mxu0 %v2364
        %2653 = vmatpush.msra.mxu0 %v2348
        %2654 = vmatpush.msra.mxu0 %v2332
        %2655 = vmatpush.msra.mxu0 %v2316
        %2656 = vmatpush.msra.mxu0 %v2300
        %2657 = vmatpush.msra.mxu0 %v2284
        %2658 = vmatpush.msra.mxu0 %v2268
        %2659 = vmatpush.msra.mxu0 %v2252
        %2660 = vmatmul.f32.gmra.mxu0 %v2501
        %v2661 = vpop.f32.mrf.mxu0
        %v2662 = vadd.f32 0.0, %v2661
        %2663 = vdwg.mxu0
        %2664 = vmatpush.msra.mxu0 %v2493
        %2665 = vmatpush.msra.mxu0 %v2477
        %2666 = vmatpush.msra.mxu0 %v2461
        %2667 = vmatpush.msra.mxu0 %v2445
        %2668 = vmatpush.msra.mxu0 %v2429
        %2669 = vmatpush.msra.mxu0 %v2413
        %2670 = vmatpush.msra.mxu0 %v2397
        %2671 = vmatpush.msra.mxu0 %v2381
        %2672 = vmatpush.msra.mxu0 %v2365
        %2673 = vmatpush.msra.mxu0 %v2349
        %2674 = vmatpush.msra.mxu0 %v2333
        %2675 = vmatpush.msra.mxu0 %v2317
        %2676 = vmatpush.msra.mxu0 %v2301
        %2677 = vmatpush.msra.mxu0 %v2285
        %2678 = vmatpush.msra.mxu0 %v2269
        %2679 = vmatpush.msra.mxu0 %v2253
        %2680 = vmatmul.f32.gmra.mxu0 %v2501
        %v2681 = vpop.f32.mrf.mxu0
        %v2682 = vadd.f32 0.0, %v2681
        %2683 = vdwg.mxu0
        %2684 = vmatpush.msra.mxu0 %v2494
        %2685 = vmatpush.msra.mxu0 %v2478
        %2686 = vmatpush.msra.mxu0 %v2462
        %2687 = vmatpush.msra.mxu0 %v2446
        %2688 = vmatpush.msra.mxu0 %v2430
        %2689 = vmatpush.msra.mxu0 %v2414
        %2690 = vmatpush.msra.mxu0 %v2398
        %2691 = vmatpush.msra.mxu0 %v2382
        %2692 = vmatpush.msra.mxu0 %v2366
        %2693 = vmatpush.msra.mxu0 %v2350
        %2694 = vmatpush.msra.mxu0 %v2334
        %2695 = vmatpush.msra.mxu0 %v2318
        %2696 = vmatpush.msra.mxu0 %v2302
        %2697 = vmatpush.msra.mxu0 %v2286
        %2698 = vmatpush.msra.mxu0 %v2270
        %2699 = vmatpush.msra.mxu0 %v2254
        %2700 = vmatmul.f32.gmra.mxu0 %v2501
        %v2701 = vpop.f32.mrf.mxu0
        %v2702 = vadd.f32 0.0, %v2701
        %2703 = vdwg.mxu0
        %2704 = vmatpush.msra.mxu0 %v2495
        %2705 = vmatpush.msra.mxu0 %v2479
        %2706 = vmatpush.msra.mxu0 %v2463
        %2707 = vmatpush.msra.mxu0 %v2447
        %2708 = vmatpush.msra.mxu0 %v2431
        %2709 = vmatpush.msra.mxu0 %v2415
        %2710 = vmatpush.msra.mxu0 %v2399
        %2711 = vmatpush.msra.mxu0 %v2383
        %2712 = vmatpush.msra.mxu0 %v2367
        %2713 = vmatpush.msra.mxu0 %v2351
        %2714 = vmatpush.msra.mxu0 %v2335
        %2715 = vmatpush.msra.mxu0 %v2319
        %2716 = vmatpush.msra.mxu0 %v2303
        %2717 = vmatpush.msra.mxu0 %v2287
        %2718 = vmatpush.msra.mxu0 %v2271
        %2719 = vmatpush.msra.mxu0 %v2255
        %2720 = vmatmul.f32.gmra.mxu0 %v2501
        %v2721 = vpop.f32.mrf.mxu0
        %v2722 = vadd.f32 0.0, %v2721
        %2723 = vdwg.mxu0
        %2724 = vmatpush.msra.mxu0 %v2496
        %2725 = vmatpush.msra.mxu0 %v2480
        %2726 = vmatpush.msra.mxu0 %v2464
        %2727 = vmatpush.msra.mxu0 %v2448
        %2728 = vmatpush.msra.mxu0 %v2432
        %2729 = vmatpush.msra.mxu0 %v2416
        %2730 = vmatpush.msra.mxu0 %v2400
        %2731 = vmatpush.msra.mxu0 %v2384
        %2732 = vmatpush.msra.mxu0 %v2368
        %2733 = vmatpush.msra.mxu0 %v2352
        %2734 = vmatpush.msra.mxu0 %v2336
        %2735 = vmatpush.msra.mxu0 %v2320
        %2736 = vmatpush.msra.mxu0 %v2304
        %2737 = vmatpush.msra.mxu0 %v2288
        %2738 = vmatpush.msra.mxu0 %v2272
        %2739 = vmatpush.msra.mxu0 %v2256
        %2740 = vmatmul.f32.gmra.mxu0 %v2501
        %v2741 = vpop.f32.mrf.mxu0
        %v2742 = vadd.f32 0.0, %v2741
        %2743 = vdwg.mxu0
        %2744 = vmatpush.msra.mxu0 %v2497
        %2745 = vmatpush.msra.mxu0 %v2481
        %2746 = vmatpush.msra.mxu0 %v2465
        %2747 = vmatpush.msra.mxu0 %v2449
        %2748 = vmatpush.msra.mxu0 %v2433
        %2749 = vmatpush.msra.mxu0 %v2417
        %2750 = vmatpush.msra.mxu0 %v2401
        %2751 = vmatpush.msra.mxu0 %v2385
        %2752 = vmatpush.msra.mxu0 %v2369
        %2753 = vmatpush.msra.mxu0 %v2353
        %2754 = vmatpush.msra.mxu0 %v2337
        %2755 = vmatpush.msra.mxu0 %v2321
        %2756 = vmatpush.msra.mxu0 %v2305
        %2757 = vmatpush.msra.mxu0 %v2289
        %2758 = vmatpush.msra.mxu0 %v2273
        %2759 = vmatpush.msra.mxu0 %v2257
        %2760 = vmatmul.f32.gmra.mxu0 %v2501
        %v2761 = vpop.f32.mrf.mxu0
        %v2762 = vadd.f32 0.0, %v2761
        %2763 = vdwg.mxu0
        %2764 = vmatpush.msra.mxu0 %v2498
        %2765 = vmatpush.msra.mxu0 %v2482
        %2766 = vmatpush.msra.mxu0 %v2466
        %2767 = vmatpush.msra.mxu0 %v2450
        %2768 = vmatpush.msra.mxu0 %v2434
        %2769 = vmatpush.msra.mxu0 %v2418
        %2770 = vmatpush.msra.mxu0 %v2402
        %2771 = vmatpush.msra.mxu0 %v2386
        %2772 = vmatpush.msra.mxu0 %v2370
        %2773 = vmatpush.msra.mxu0 %v2354
        %2774 = vmatpush.msra.mxu0 %v2338
        %2775 = vmatpush.msra.mxu0 %v2322
        %2776 = vmatpush.msra.mxu0 %v2306
        %2777 = vmatpush.msra.mxu0 %v2290
        %2778 = vmatpush.msra.mxu0 %v2274
        %2779 = vmatpush.msra.mxu0 %v2258
        %2780 = vmatmul.f32.gmra.mxu0 %v2501
        %v2781 = vpop.f32.mrf.mxu0
        %v2782 = vadd.f32 0.0, %v2781
        %2783 = vdwg.mxu0
        %2784 = vmatpush.msra.mxu0 %v2499
        %2785 = vmatpush.msra.mxu0 %v2483
        %2786 = vmatpush.msra.mxu0 %v2467
        %2787 = vmatpush.msra.mxu0 %v2451
        %2788 = vmatpush.msra.mxu0 %v2435
        %2789 = vmatpush.msra.mxu0 %v2419
        %2790 = vmatpush.msra.mxu0 %v2403
        %2791 = vmatpush.msra.mxu0 %v2387
        %2792 = vmatpush.msra.mxu0 %v2371
        %2793 = vmatpush.msra.mxu0 %v2355
        %2794 = vmatpush.msra.mxu0 %v2339
        %2795 = vmatpush.msra.mxu0 %v2323
        %2796 = vmatpush.msra.mxu0 %v2307
        %2797 = vmatpush.msra.mxu0 %v2291
        %2798 = vmatpush.msra.mxu0 %v2275
        %2799 = vmatpush.msra.mxu0 %v2259
        %2800 = vmatmul.f32.gmra.mxu0 %v2501
        %v2801 = vpop.f32.mrf.mxu0
        %v2802 = vadd.f32 0.0, %v2801
        %2803 = vdwg.mxu0
        %2804 = vmatpush.msra.mxu0 %v2500
        %2805 = vmatpush.msra.mxu0 %v2484
        %2806 = vmatpush.msra.mxu0 %v2468
        %2807 = vmatpush.msra.mxu0 %v2452
        %2808 = vmatpush.msra.mxu0 %v2436
        %2809 = vmatpush.msra.mxu0 %v2420
        %2810 = vmatpush.msra.mxu0 %v2404
        %2811 = vmatpush.msra.mxu0 %v2388
        %2812 = vmatpush.msra.mxu0 %v2372
        %2813 = vmatpush.msra.mxu0 %v2356
        %2814 = vmatpush.msra.mxu0 %v2340
        %2815 = vmatpush.msra.mxu0 %v2324
        %2816 = vmatpush.msra.mxu0 %v2308
        %2817 = vmatpush.msra.mxu0 %v2292
        %2818 = vmatpush.msra.mxu0 %v2276
        %2819 = vmatpush.msra.mxu0 %v2260
        %2820 = vmatmul.f32.gmra.mxu0 %v2501
        %v2821 = vpop.f32.mrf.mxu0
        %v2822 = vadd.f32 0.0, %v2821
        %2823 = vdwg.mxu0
        %v2824 = vmul.f32 %v2522, 0.0625
        %v2825 = vmul.f32 %v2542, 0.0625
        %v2826 = vmul.f32 %v2562, 0.0625
        %v2827 = vmul.f32 %v2582, 0.0625
        %v2828 = vmul.f32 %v2602, 0.0625
        %v2829 = vmul.f32 %v2622, 0.0625
        %v2830 = vmul.f32 %v2642, 0.0625
        %v2831 = vmul.f32 %v2662, 0.0625
        %v2832 = vmul.f32 %v2682, 0.0625
        %v2833 = vmul.f32 %v2702, 0.0625
        %v2834 = vmul.f32 %v2722, 0.0625
        %v2835 = vmul.f32 %v2742, 0.0625
        %v2836 = vmul.f32 %v2762, 0.0625
        %v2837 = vmul.f32 %v2782, 0.0625
        %v2838 = vmul.f32 %v2802, 0.0625
        %v2839 = vmul.f32 %v2822, 0.0625
        %v2840 = vpack.c.bf16 %v2824, %v2824
        %v2841 = vpack.c.bf16 %v2825, %v2825
        %v2842 = vpack.c.bf16 %v2826, %v2826
        %v2843 = vpack.c.bf16 %v2827, %v2827
        %v2844 = vpack.c.bf16 %v2828, %v2828
        %v2845 = vpack.c.bf16 %v2829, %v2829
        %v2846 = vpack.c.bf16 %v2830, %v2830
        %v2847 = vpack.c.bf16 %v2831, %v2831
        %v2848 = vpack.c.bf16 %v2832, %v2832
        %v2849 = vpack.c.bf16 %v2833, %v2833
        %v2850 = vpack.c.bf16 %v2834, %v2834
        %v2851 = vpack.c.bf16 %v2835, %v2835
        %v2852 = vpack.c.bf16 %v2836, %v2836
        %v2853 = vpack.c.bf16 %v2837, %v2837
        %v2854 = vpack.c.bf16 %v2838, %v2838
        %v2855 = vpack.c.bf16 %v2839, %v2839
        %v2856 = vld [vmem:[%s3] sm:$0xff]
        %v2857 = vld [vmem:[%s3 + $0x8] sm:$0xff]
        %v2858 = vld [vmem:[%s3 + $0x10] sm:$0xff]
        %v2859 = vld [vmem:[%s3 + $0x18] sm:$0xff]
        %v2860 = vld [vmem:[%s3 + $0x20] sm:$0xff]
        %v2861 = vld [vmem:[%s3 + $0x28] sm:$0xff]
        %v2862 = vld [vmem:[%s3 + $0x30] sm:$0xff]
        %v2863 = vld [vmem:[%s3 + $0x38] sm:$0xff]
        %v2864 = vld [vmem:[%s3 + $0x40] sm:$0xff]
        %v2865 = vld [vmem:[%s3 + $0x48] sm:$0xff]
        %v2866 = vld [vmem:[%s3 + $0x50] sm:$0xff]
        %v2867 = vld [vmem:[%s3 + $0x58] sm:$0xff]
        %v2868 = vld [vmem:[%s3 + $0x60] sm:$0xff]
        %v2869 = vld [vmem:[%s3 + $0x68] sm:$0xff]
        %v2870 = vld [vmem:[%s3 + $0x70] sm:$0xff]
        %v2871 = vld [vmem:[%s3 + $0x78] sm:$0xff]
        %v2872 = vld [vmem:[%s3 + $0x80] sm:$0xff]
        %v2873 = vld [vmem:[%s3 + $0x88] sm:$0xff]
        %v2874 = vld [vmem:[%s3 + $0x90] sm:$0xff]
        %v2875 = vld [vmem:[%s3 + $0x98] sm:$0xff]
        %v2876 = vld [vmem:[%s3 + $0xa0] sm:$0xff]
        %v2877 = vld [vmem:[%s3 + $0xa8] sm:$0xff]
        %v2878 = vld [vmem:[%s3 + $0xb0] sm:$0xff]
        %v2879 = vld [vmem:[%s3 + $0xb8] sm:$0xff]
        %v2880 = vld [vmem:[%s3 + $0xc0] sm:$0xff]
        %v2881 = vld [vmem:[%s3 + $0xc8] sm:$0xff]
        %v2882 = vld [vmem:[%s3 + $0xd0] sm:$0xff]
        %v2883 = vld [vmem:[%s3 + $0xd8] sm:$0xff]
        %v2884 = vld [vmem:[%s3 + $0xe0] sm:$0xff]
        %v2885 = vld [vmem:[%s3 + $0xe8] sm:$0xff]
        %v2886 = vld [vmem:[%s3 + $0xf0] sm:$0xff]
        %v2887 = vld [vmem:[%s3 + $0xf8] sm:$0xff]
        %v2888 = vld [vmem:[%s3 + $0x100] sm:$0xff]
        %v2889 = vld [vmem:[%s3 + $0x108] sm:$0xff]
        %v2890 = vld [vmem:[%s3 + $0x110] sm:$0xff]
        %v2891 = vld [vmem:[%s3 + $0x118] sm:$0xff]
        %v2892 = vld [vmem:[%s3 + $0x120] sm:$0xff]
        %v2893 = vld [vmem:[%s3 + $0x128] sm:$0xff]
        %v2894 = vld [vmem:[%s3 + $0x130] sm:$0xff]
        %v2895 = vld [vmem:[%s3 + $0x138] sm:$0xff]
        %v2896 = vld [vmem:[%s3 + $0x140] sm:$0xff]
        %v2897 = vld [vmem:[%s3 + $0x148] sm:$0xff]
        %v2898 = vld [vmem:[%s3 + $0x150] sm:$0xff]
        %v2899 = vld [vmem:[%s3 + $0x158] sm:$0xff]
        %v2900 = vld [vmem:[%s3 + $0x160] sm:$0xff]
        %v2901 = vld [vmem:[%s3 + $0x168] sm:$0xff]
        %v2902 = vld [vmem:[%s3 + $0x170] sm:$0xff]
        %v2903 = vld [vmem:[%s3 + $0x178] sm:$0xff]
        %v2904 = vld [vmem:[%s3 + $0x180] sm:$0xff]
        %v2905 = vld [vmem:[%s3 + $0x188] sm:$0xff]
        %v2906 = vld [vmem:[%s3 + $0x190] sm:$0xff]
        %v2907 = vld [vmem:[%s3 + $0x198] sm:$0xff]
        %v2908 = vld [vmem:[%s3 + $0x1a0] sm:$0xff]
        %v2909 = vld [vmem:[%s3 + $0x1a8] sm:$0xff]
        %v2910 = vld [vmem:[%s3 + $0x1b0] sm:$0xff]
        %v2911 = vld [vmem:[%s3 + $0x1b8] sm:$0xff]
        %v2912 = vld [vmem:[%s3 + $0x1c0] sm:$0xff]
        %v2913 = vld [vmem:[%s3 + $0x1c8] sm:$0xff]
        %v2914 = vld [vmem:[%s3 + $0x1d0] sm:$0xff]
        %v2915 = vld [vmem:[%s3 + $0x1d8] sm:$0xff]
        %v2916 = vld [vmem:[%s3 + $0x1e0] sm:$0xff]
        %v2917 = vld [vmem:[%s3 + $0x1e8] sm:$0xff]
        %v2918 = vld [vmem:[%s3 + $0x1f0] sm:$0xff]
        %v2919 = vld [vmem:[%s3 + $0x1f8] sm:$0xff]
        %v2920 = vld [vmem:[%s3 + $0x200] sm:$0xff]
        %v2921 = vld [vmem:[%s3 + $0x208] sm:$0xff]
        %v2922 = vld [vmem:[%s3 + $0x210] sm:$0xff]
        %v2923 = vld [vmem:[%s3 + $0x218] sm:$0xff]
        %v2924 = vld [vmem:[%s3 + $0x220] sm:$0xff]
        %v2925 = vld [vmem:[%s3 + $0x228] sm:$0xff]
        %v2926 = vld [vmem:[%s3 + $0x230] sm:$0xff]
        %v2927 = vld [vmem:[%s3 + $0x238] sm:$0xff]
        %v2928 = vld [vmem:[%s3 + $0x240] sm:$0xff]
        %v2929 = vld [vmem:[%s3 + $0x248] sm:$0xff]
        %v2930 = vld [vmem:[%s3 + $0x250] sm:$0xff]
        %v2931 = vld [vmem:[%s3 + $0x258] sm:$0xff]
        %v2932 = vld [vmem:[%s3 + $0x260] sm:$0xff]
        %v2933 = vld [vmem:[%s3 + $0x268] sm:$0xff]
        %v2934 = vld [vmem:[%s3 + $0x270] sm:$0xff]
        %v2935 = vld [vmem:[%s3 + $0x278] sm:$0xff]
        %v2936 = vld [vmem:[%s3 + $0x280] sm:$0xff]
        %v2937 = vld [vmem:[%s3 + $0x288] sm:$0xff]
        %v2938 = vld [vmem:[%s3 + $0x290] sm:$0xff]
        %v2939 = vld [vmem:[%s3 + $0x298] sm:$0xff]
        %v2940 = vld [vmem:[%s3 + $0x2a0] sm:$0xff]
        %v2941 = vld [vmem:[%s3 + $0x2a8] sm:$0xff]
        %v2942 = vld [vmem:[%s3 + $0x2b0] sm:$0xff]
        %v2943 = vld [vmem:[%s3 + $0x2b8] sm:$0xff]
        %v2944 = vld [vmem:[%s3 + $0x2c0] sm:$0xff]
        %v2945 = vld [vmem:[%s3 + $0x2c8] sm:$0xff]
        %v2946 = vld [vmem:[%s3 + $0x2d0] sm:$0xff]
        %v2947 = vld [vmem:[%s3 + $0x2d8] sm:$0xff]
        %v2948 = vld [vmem:[%s3 + $0x2e0] sm:$0xff]
        %v2949 = vld [vmem:[%s3 + $0x2e8] sm:$0xff]
        %v2950 = vld [vmem:[%s3 + $0x2f0] sm:$0xff]
        %v2951 = vld [vmem:[%s3 + $0x2f8] sm:$0xff]
        %v2952 = vld [vmem:[%s3 + $0x300] sm:$0xff]
        %v2953 = vld [vmem:[%s3 + $0x308] sm:$0xff]
        %v2954 = vld [vmem:[%s3 + $0x310] sm:$0xff]
        %v2955 = vld [vmem:[%s3 + $0x318] sm:$0xff]
        %v2956 = vld [vmem:[%s3 + $0x320] sm:$0xff]
        %v2957 = vld [vmem:[%s3 + $0x328] sm:$0xff]
        %v2958 = vld [vmem:[%s3 + $0x330] sm:$0xff]
        %v2959 = vld [vmem:[%s3 + $0x338] sm:$0xff]
        %v2960 = vld [vmem:[%s3 + $0x340] sm:$0xff]
        %v2961 = vld [vmem:[%s3 + $0x348] sm:$0xff]
        %v2962 = vld [vmem:[%s3 + $0x350] sm:$0xff]
        %v2963 = vld [vmem:[%s3 + $0x358] sm:$0xff]
        %v2964 = vld [vmem:[%s3 + $0x360] sm:$0xff]
        %v2965 = vld [vmem:[%s3 + $0x368] sm:$0xff]
        %v2966 = vld [vmem:[%s3 + $0x370] sm:$0xff]
        %v2967 = vld [vmem:[%s3 + $0x378] sm:$0xff]
        %v2968 = vld [vmem:[%s3 + $0x380] sm:$0xff]
        %v2969 = vld [vmem:[%s3 + $0x388] sm:$0xff]
        %v2970 = vld [vmem:[%s3 + $0x390] sm:$0xff]
        %v2971 = vld [vmem:[%s3 + $0x398] sm:$0xff]
        %v2972 = vld [vmem:[%s3 + $0x3a0] sm:$0xff]
        %v2973 = vld [vmem:[%s3 + $0x3a8] sm:$0xff]
        %v2974 = vld [vmem:[%s3 + $0x3b0] sm:$0xff]
        %v2975 = vld [vmem:[%s3 + $0x3b8] sm:$0xff]
        %v2976 = vld [vmem:[%s3 + $0x3c0] sm:$0xff]
        %v2977 = vld [vmem:[%s3 + $0x3c8] sm:$0xff]
        %v2978 = vld [vmem:[%s3 + $0x3d0] sm:$0xff]
        %v2979 = vld [vmem:[%s3 + $0x3d8] sm:$0xff]
        %v2980 = vld [vmem:[%s3 + $0x3e0] sm:$0xff]
        %v2981 = vld [vmem:[%s3 + $0x3e8] sm:$0xff]
        %v2982 = vld [vmem:[%s3 + $0x3f0] sm:$0xff]
        %v2983 = vld [vmem:[%s3 + $0x3f8] sm:$0xff]
        %v2984 = vld [vmem:[%s3 + $0x400] sm:$0xff]
        %v2985 = vld [vmem:[%s3 + $0x408] sm:$0xff]
        %v2986 = vld [vmem:[%s3 + $0x410] sm:$0xff]
        %v2987 = vld [vmem:[%s3 + $0x418] sm:$0xff]
        %v2988 = vld [vmem:[%s3 + $0x420] sm:$0xff]
        %v2989 = vld [vmem:[%s3 + $0x428] sm:$0xff]
        %v2990 = vld [vmem:[%s3 + $0x430] sm:$0xff]
        %v2991 = vld [vmem:[%s3 + $0x438] sm:$0xff]
        %v2992 = vld [vmem:[%s3 + $0x440] sm:$0xff]
        %v2993 = vld [vmem:[%s3 + $0x448] sm:$0xff]
        %v2994 = vld [vmem:[%s3 + $0x450] sm:$0xff]
        %v2995 = vld [vmem:[%s3 + $0x458] sm:$0xff]
        %v2996 = vld [vmem:[%s3 + $0x460] sm:$0xff]
        %v2997 = vld [vmem:[%s3 + $0x468] sm:$0xff]
        %v2998 = vld [vmem:[%s3 + $0x470] sm:$0xff]
        %v2999 = vld [vmem:[%s3 + $0x478] sm:$0xff]
        %v3000 = vld [vmem:[%s3 + $0x480] sm:$0xff]
        %v3001 = vld [vmem:[%s3 + $0x488] sm:$0xff]
        %v3002 = vld [vmem:[%s3 + $0x490] sm:$0xff]
        %v3003 = vld [vmem:[%s3 + $0x498] sm:$0xff]
        %v3004 = vld [vmem:[%s3 + $0x4a0] sm:$0xff]
        %v3005 = vld [vmem:[%s3 + $0x4a8] sm:$0xff]
        %v3006 = vld [vmem:[%s3 + $0x4b0] sm:$0xff]
        %v3007 = vld [vmem:[%s3 + $0x4b8] sm:$0xff]
        %v3008 = vld [vmem:[%s3 + $0x4c0] sm:$0xff]
        %v3009 = vld [vmem:[%s3 + $0x4c8] sm:$0xff]
        %v3010 = vld [vmem:[%s3 + $0x4d0] sm:$0xff]
        %v3011 = vld [vmem:[%s3 + $0x4d8] sm:$0xff]
        %v3012 = vld [vmem:[%s3 + $0x4e0] sm:$0xff]
        %v3013 = vld [vmem:[%s3 + $0x4e8] sm:$0xff]
        %v3014 = vld [vmem:[%s3 + $0x4f0] sm:$0xff]
        %v3015 = vld [vmem:[%s3 + $0x4f8] sm:$0xff]
        %v3016 = vld [vmem:[%s3 + $0x500] sm:$0xff]
        %v3017 = vld [vmem:[%s3 + $0x508] sm:$0xff]
        %v3018 = vld [vmem:[%s3 + $0x510] sm:$0xff]
        %v3019 = vld [vmem:[%s3 + $0x518] sm:$0xff]
        %v3020 = vld [vmem:[%s3 + $0x520] sm:$0xff]
        %v3021 = vld [vmem:[%s3 + $0x528] sm:$0xff]
        %v3022 = vld [vmem:[%s3 + $0x530] sm:$0xff]
        %v3023 = vld [vmem:[%s3 + $0x538] sm:$0xff]
        %v3024 = vld [vmem:[%s3 + $0x540] sm:$0xff]
        %v3025 = vld [vmem:[%s3 + $0x548] sm:$0xff]
        %v3026 = vld [vmem:[%s3 + $0x550] sm:$0xff]
        %v3027 = vld [vmem:[%s3 + $0x558] sm:$0xff]
        %v3028 = vld [vmem:[%s3 + $0x560] sm:$0xff]
        %v3029 = vld [vmem:[%s3 + $0x568] sm:$0xff]
        %v3030 = vld [vmem:[%s3 + $0x570] sm:$0xff]
        %v3031 = vld [vmem:[%s3 + $0x578] sm:$0xff]
        %v3032 = vld [vmem:[%s3 + $0x580] sm:$0xff]
        %v3033 = vld [vmem:[%s3 + $0x588] sm:$0xff]
        %v3034 = vld [vmem:[%s3 + $0x590] sm:$0xff]
        %v3035 = vld [vmem:[%s3 + $0x598] sm:$0xff]
        %v3036 = vld [vmem:[%s3 + $0x5a0] sm:$0xff]
        %v3037 = vld [vmem:[%s3 + $0x5a8] sm:$0xff]
        %v3038 = vld [vmem:[%s3 + $0x5b0] sm:$0xff]
        %v3039 = vld [vmem:[%s3 + $0x5b8] sm:$0xff]
        %v3040 = vld [vmem:[%s3 + $0x5c0] sm:$0xff]
        %v3041 = vld [vmem:[%s3 + $0x5c8] sm:$0xff]
        %v3042 = vld [vmem:[%s3 + $0x5d0] sm:$0xff]
        %v3043 = vld [vmem:[%s3 + $0x5d8] sm:$0xff]
        %v3044 = vld [vmem:[%s3 + $0x5e0] sm:$0xff]
        %v3045 = vld [vmem:[%s3 + $0x5e8] sm:$0xff]
        %v3046 = vld [vmem:[%s3 + $0x5f0] sm:$0xff]
        %v3047 = vld [vmem:[%s3 + $0x5f8] sm:$0xff]
        %v3048 = vld [vmem:[%s3 + $0x600] sm:$0xff]
        %v3049 = vld [vmem:[%s3 + $0x608] sm:$0xff]
        %v3050 = vld [vmem:[%s3 + $0x610] sm:$0xff]
        %v3051 = vld [vmem:[%s3 + $0x618] sm:$0xff]
        %v3052 = vld [vmem:[%s3 + $0x620] sm:$0xff]
        %v3053 = vld [vmem:[%s3 + $0x628] sm:$0xff]
        %v3054 = vld [vmem:[%s3 + $0x630] sm:$0xff]
        %v3055 = vld [vmem:[%s3 + $0x638] sm:$0xff]
        %v3056 = vld [vmem:[%s3 + $0x640] sm:$0xff]
        %v3057 = vld [vmem:[%s3 + $0x648] sm:$0xff]
        %v3058 = vld [vmem:[%s3 + $0x650] sm:$0xff]
        %v3059 = vld [vmem:[%s3 + $0x658] sm:$0xff]
        %v3060 = vld [vmem:[%s3 + $0x660] sm:$0xff]
        %v3061 = vld [vmem:[%s3 + $0x668] sm:$0xff]
        %v3062 = vld [vmem:[%s3 + $0x670] sm:$0xff]
        %v3063 = vld [vmem:[%s3 + $0x678] sm:$0xff]
        %v3064 = vld [vmem:[%s3 + $0x680] sm:$0xff]
        %v3065 = vld [vmem:[%s3 + $0x688] sm:$0xff]
        %v3066 = vld [vmem:[%s3 + $0x690] sm:$0xff]
        %v3067 = vld [vmem:[%s3 + $0x698] sm:$0xff]
        %v3068 = vld [vmem:[%s3 + $0x6a0] sm:$0xff]
        %v3069 = vld [vmem:[%s3 + $0x6a8] sm:$0xff]
        %v3070 = vld [vmem:[%s3 + $0x6b0] sm:$0xff]
        %v3071 = vld [vmem:[%s3 + $0x6b8] sm:$0xff]
        %v3072 = vld [vmem:[%s3 + $0x6c0] sm:$0xff]
        %v3073 = vld [vmem:[%s3 + $0x6c8] sm:$0xff]
        %v3074 = vld [vmem:[%s3 + $0x6d0] sm:$0xff]
        %v3075 = vld [vmem:[%s3 + $0x6d8] sm:$0xff]
        %v3076 = vld [vmem:[%s3 + $0x6e0] sm:$0xff]
        %v3077 = vld [vmem:[%s3 + $0x6e8] sm:$0xff]
        %v3078 = vld [vmem:[%s3 + $0x6f0] sm:$0xff]
        %v3079 = vld [vmem:[%s3 + $0x6f8] sm:$0xff]
        %v3080 = vld [vmem:[%s3 + $0x700] sm:$0xff]
        %v3081 = vld [vmem:[%s3 + $0x708] sm:$0xff]
        %v3082 = vld [vmem:[%s3 + $0x710] sm:$0xff]
        %v3083 = vld [vmem:[%s3 + $0x718] sm:$0xff]
        %v3084 = vld [vmem:[%s3 + $0x720] sm:$0xff]
        %v3085 = vld [vmem:[%s3 + $0x728] sm:$0xff]
        %v3086 = vld [vmem:[%s3 + $0x730] sm:$0xff]
        %v3087 = vld [vmem:[%s3 + $0x738] sm:$0xff]
        %v3088 = vld [vmem:[%s3 + $0x740] sm:$0xff]
        %v3089 = vld [vmem:[%s3 + $0x748] sm:$0xff]
        %v3090 = vld [vmem:[%s3 + $0x750] sm:$0xff]
        %v3091 = vld [vmem:[%s3 + $0x758] sm:$0xff]
        %v3092 = vld [vmem:[%s3 + $0x760] sm:$0xff]
        %v3093 = vld [vmem:[%s3 + $0x768] sm:$0xff]
        %v3094 = vld [vmem:[%s3 + $0x770] sm:$0xff]
        %v3095 = vld [vmem:[%s3 + $0x778] sm:$0xff]
        %v3096 = vld [vmem:[%s3 + $0x780] sm:$0xff]
        %v3097 = vld [vmem:[%s3 + $0x788] sm:$0xff]
        %v3098 = vld [vmem:[%s3 + $0x790] sm:$0xff]
        %v3099 = vld [vmem:[%s3 + $0x798] sm:$0xff]
        %v3100 = vld [vmem:[%s3 + $0x7a0] sm:$0xff]
        %v3101 = vld [vmem:[%s3 + $0x7a8] sm:$0xff]
        %v3102 = vld [vmem:[%s3 + $0x7b0] sm:$0xff]
        %v3103 = vld [vmem:[%s3 + $0x7b8] sm:$0xff]
        %v3104 = vld [vmem:[%s3 + $0x7c0] sm:$0xff]
        %v3105 = vld [vmem:[%s3 + $0x7c8] sm:$0xff]
        %v3106 = vld [vmem:[%s3 + $0x7d0] sm:$0xff]
        %v3107 = vld [vmem:[%s3 + $0x7d8] sm:$0xff]
        %v3108 = vld [vmem:[%s3 + $0x7e0] sm:$0xff]
        %v3109 = vld [vmem:[%s3 + $0x7e8] sm:$0xff]
        %v3110 = vld [vmem:[%s3 + $0x7f0] sm:$0xff]
        %v3111 = vld [vmem:[%s3 + $0x7f8] sm:$0xff]
        %v3368 = vunpack.c.l.b16 %v2856
        %v3369 = vunpack.c.h.b16 %v2856
        %v3370 = vunpack.c.l.b16 %v2857
        %v3371 = vunpack.c.h.b16 %v2857
        %v3372 = vunpack.c.l.b16 %v2858
        %v3373 = vunpack.c.h.b16 %v2858
        %v3374 = vunpack.c.l.b16 %v2859
        %v3375 = vunpack.c.h.b16 %v2859
        %v3376 = vunpack.c.l.b16 %v2860
        %v3377 = vunpack.c.h.b16 %v2860
        %v3378 = vunpack.c.l.b16 %v2861
        %v3379 = vunpack.c.h.b16 %v2861
        %v3380 = vunpack.c.l.b16 %v2862
        %v3381 = vunpack.c.h.b16 %v2862
        %v3382 = vunpack.c.l.b16 %v2863
        %v3383 = vunpack.c.h.b16 %v2863
        %v3384 = vunpack.c.l.b16 %v2864
        %v3385 = vunpack.c.h.b16 %v2864
        %v3386 = vunpack.c.l.b16 %v2865
        %v3387 = vunpack.c.h.b16 %v2865
        %v3388 = vunpack.c.l.b16 %v2866
        %v3389 = vunpack.c.h.b16 %v2866
        %v3390 = vunpack.c.l.b16 %v2867
        %v3391 = vunpack.c.h.b16 %v2867
        %v3392 = vunpack.c.l.b16 %v2868
        %v3393 = vunpack.c.h.b16 %v2868
        %v3394 = vunpack.c.l.b16 %v2869
        %v3395 = vunpack.c.h.b16 %v2869
        %v3396 = vunpack.c.l.b16 %v2870
        %v3397 = vunpack.c.h.b16 %v2870
        %v3398 = vunpack.c.l.b16 %v2871
        %v3399 = vunpack.c.h.b16 %v2871
        %v3400 = vunpack.c.l.b16 %v2872
        %v3401 = vunpack.c.h.b16 %v2872
        %v3402 = vunpack.c.l.b16 %v2873
        %v3403 = vunpack.c.h.b16 %v2873
        %v3404 = vunpack.c.l.b16 %v2874
        %v3405 = vunpack.c.h.b16 %v2874
        %v3406 = vunpack.c.l.b16 %v2875
        %v3407 = vunpack.c.h.b16 %v2875
        %v3408 = vunpack.c.l.b16 %v2876
        %v3409 = vunpack.c.h.b16 %v2876
        %v3410 = vunpack.c.l.b16 %v2877
        %v3411 = vunpack.c.h.b16 %v2877
        %v3412 = vunpack.c.l.b16 %v2878
        %v3413 = vunpack.c.h.b16 %v2878
        %v3414 = vunpack.c.l.b16 %v2879
        %v3415 = vunpack.c.h.b16 %v2879
        %v3416 = vunpack.c.l.b16 %v2880
        %v3417 = vunpack.c.h.b16 %v2880
        %v3418 = vunpack.c.l.b16 %v2881
        %v3419 = vunpack.c.h.b16 %v2881
        %v3420 = vunpack.c.l.b16 %v2882
        %v3421 = vunpack.c.h.b16 %v2882
        %v3422 = vunpack.c.l.b16 %v2883
        %v3423 = vunpack.c.h.b16 %v2883
        %v3424 = vunpack.c.l.b16 %v2884
        %v3425 = vunpack.c.h.b16 %v2884
        %v3426 = vunpack.c.l.b16 %v2885
        %v3427 = vunpack.c.h.b16 %v2885
        %v3428 = vunpack.c.l.b16 %v2886
        %v3429 = vunpack.c.h.b16 %v2886
        %v3430 = vunpack.c.l.b16 %v2887
        %v3431 = vunpack.c.h.b16 %v2887
        %v3432 = vunpack.c.l.b16 %v2888
        %v3433 = vunpack.c.h.b16 %v2888
        %v3434 = vunpack.c.l.b16 %v2889
        %v3435 = vunpack.c.h.b16 %v2889
        %v3436 = vunpack.c.l.b16 %v2890
        %v3437 = vunpack.c.h.b16 %v2890
        %v3438 = vunpack.c.l.b16 %v2891
        %v3439 = vunpack.c.h.b16 %v2891
        %v3440 = vunpack.c.l.b16 %v2892
        %v3441 = vunpack.c.h.b16 %v2892
        %v3442 = vunpack.c.l.b16 %v2893
        %v3443 = vunpack.c.h.b16 %v2893
        %v3444 = vunpack.c.l.b16 %v2894
        %v3445 = vunpack.c.h.b16 %v2894
        %v3446 = vunpack.c.l.b16 %v2895
        %v3447 = vunpack.c.h.b16 %v2895
        %v3448 = vunpack.c.l.b16 %v2896
        %v3449 = vunpack.c.h.b16 %v2896
        %v3450 = vunpack.c.l.b16 %v2897
        %v3451 = vunpack.c.h.b16 %v2897
        %v3452 = vunpack.c.l.b16 %v2898
        %v3453 = vunpack.c.h.b16 %v2898
        %v3454 = vunpack.c.l.b16 %v2899
        %v3455 = vunpack.c.h.b16 %v2899
        %v3456 = vunpack.c.l.b16 %v2900
        %v3457 = vunpack.c.h.b16 %v2900
        %v3458 = vunpack.c.l.b16 %v2901
        %v3459 = vunpack.c.h.b16 %v2901
        %v3460 = vunpack.c.l.b16 %v2902
        %v3461 = vunpack.c.h.b16 %v2902
        %v3462 = vunpack.c.l.b16 %v2903
        %v3463 = vunpack.c.h.b16 %v2903
        %v3464 = vunpack.c.l.b16 %v2904
        %v3465 = vunpack.c.h.b16 %v2904
        %v3466 = vunpack.c.l.b16 %v2905
        %v3467 = vunpack.c.h.b16 %v2905
        %v3468 = vunpack.c.l.b16 %v2906
        %v3469 = vunpack.c.h.b16 %v2906
        %v3470 = vunpack.c.l.b16 %v2907
        %v3471 = vunpack.c.h.b16 %v2907
        %v3472 = vunpack.c.l.b16 %v2908
        %v3473 = vunpack.c.h.b16 %v2908
        %v3474 = vunpack.c.l.b16 %v2909
        %v3475 = vunpack.c.h.b16 %v2909
        %v3476 = vunpack.c.l.b16 %v2910
        %v3477 = vunpack.c.h.b16 %v2910
        %v3478 = vunpack.c.l.b16 %v2911
        %v3479 = vunpack.c.h.b16 %v2911
        %v3480 = vunpack.c.l.b16 %v2912
        %v3481 = vunpack.c.h.b16 %v2912
        %v3482 = vunpack.c.l.b16 %v2913
        %v3483 = vunpack.c.h.b16 %v2913
        %v3484 = vunpack.c.l.b16 %v2914
        %v3485 = vunpack.c.h.b16 %v2914
        %v3486 = vunpack.c.l.b16 %v2915
        %v3487 = vunpack.c.h.b16 %v2915
        %v3488 = vunpack.c.l.b16 %v2916
        %v3489 = vunpack.c.h.b16 %v2916
        %v3490 = vunpack.c.l.b16 %v2917
        %v3491 = vunpack.c.h.b16 %v2917
        %v3492 = vunpack.c.l.b16 %v2918
        %v3493 = vunpack.c.h.b16 %v2918
        %v3494 = vunpack.c.l.b16 %v2919
        %v3495 = vunpack.c.h.b16 %v2919
        %v3496 = vunpack.c.l.b16 %v2920
        %v3497 = vunpack.c.h.b16 %v2920
        %v3498 = vunpack.c.l.b16 %v2921
        %v3499 = vunpack.c.h.b16 %v2921
        %v3500 = vunpack.c.l.b16 %v2922
        %v3501 = vunpack.c.h.b16 %v2922
        %v3502 = vunpack.c.l.b16 %v2923
        %v3503 = vunpack.c.h.b16 %v2923
        %v3504 = vunpack.c.l.b16 %v2924
        %v3505 = vunpack.c.h.b16 %v2924
        %v3506 = vunpack.c.l.b16 %v2925
        %v3507 = vunpack.c.h.b16 %v2925
        %v3508 = vunpack.c.l.b16 %v2926
        %v3509 = vunpack.c.h.b16 %v2926
        %v3510 = vunpack.c.l.b16 %v2927
        %v3511 = vunpack.c.h.b16 %v2927
        %v3512 = vunpack.c.l.b16 %v2928
        %v3513 = vunpack.c.h.b16 %v2928
        %v3514 = vunpack.c.l.b16 %v2929
        %v3515 = vunpack.c.h.b16 %v2929
        %v3516 = vunpack.c.l.b16 %v2930
        %v3517 = vunpack.c.h.b16 %v2930
        %v3518 = vunpack.c.l.b16 %v2931
        %v3519 = vunpack.c.h.b16 %v2931
        %v3520 = vunpack.c.l.b16 %v2932
        %v3521 = vunpack.c.h.b16 %v2932
        %v3522 = vunpack.c.l.b16 %v2933
        %v3523 = vunpack.c.h.b16 %v2933
        %v3524 = vunpack.c.l.b16 %v2934
        %v3525 = vunpack.c.h.b16 %v2934
        %v3526 = vunpack.c.l.b16 %v2935
        %v3527 = vunpack.c.h.b16 %v2935
        %v3528 = vunpack.c.l.b16 %v2936
        %v3529 = vunpack.c.h.b16 %v2936
        %v3530 = vunpack.c.l.b16 %v2937
        %v3531 = vunpack.c.h.b16 %v2937
        %v3532 = vunpack.c.l.b16 %v2938
        %v3533 = vunpack.c.h.b16 %v2938
        %v3534 = vunpack.c.l.b16 %v2939
        %v3535 = vunpack.c.h.b16 %v2939
        %v3536 = vunpack.c.l.b16 %v2940
        %v3537 = vunpack.c.h.b16 %v2940
        %v3538 = vunpack.c.l.b16 %v2941
        %v3539 = vunpack.c.h.b16 %v2941
        %v3540 = vunpack.c.l.b16 %v2942
        %v3541 = vunpack.c.h.b16 %v2942
        %v3542 = vunpack.c.l.b16 %v2943
        %v3543 = vunpack.c.h.b16 %v2943
        %v3544 = vunpack.c.l.b16 %v2944
        %v3545 = vunpack.c.h.b16 %v2944
        %v3546 = vunpack.c.l.b16 %v2945
        %v3547 = vunpack.c.h.b16 %v2945
        %v3548 = vunpack.c.l.b16 %v2946
        %v3549 = vunpack.c.h.b16 %v2946
        %v3550 = vunpack.c.l.b16 %v2947
        %v3551 = vunpack.c.h.b16 %v2947
        %v3552 = vunpack.c.l.b16 %v2948
        %v3553 = vunpack.c.h.b16 %v2948
        %v3554 = vunpack.c.l.b16 %v2949
        %v3555 = vunpack.c.h.b16 %v2949
        %v3556 = vunpack.c.l.b16 %v2950
        %v3557 = vunpack.c.h.b16 %v2950
        %v3558 = vunpack.c.l.b16 %v2951
        %v3559 = vunpack.c.h.b16 %v2951
        %v3560 = vunpack.c.l.b16 %v2952
        %v3561 = vunpack.c.h.b16 %v2952
        %v3562 = vunpack.c.l.b16 %v2953
        %v3563 = vunpack.c.h.b16 %v2953
        %v3564 = vunpack.c.l.b16 %v2954
        %v3565 = vunpack.c.h.b16 %v2954
        %v3566 = vunpack.c.l.b16 %v2955
        %v3567 = vunpack.c.h.b16 %v2955
        %v3568 = vunpack.c.l.b16 %v2956
        %v3569 = vunpack.c.h.b16 %v2956
        %v3570 = vunpack.c.l.b16 %v2957
        %v3571 = vunpack.c.h.b16 %v2957
        %v3572 = vunpack.c.l.b16 %v2958
        %v3573 = vunpack.c.h.b16 %v2958
        %v3574 = vunpack.c.l.b16 %v2959
        %v3575 = vunpack.c.h.b16 %v2959
        %v3576 = vunpack.c.l.b16 %v2960
        %v3577 = vunpack.c.h.b16 %v2960
        %v3578 = vunpack.c.l.b16 %v2961
        %v3579 = vunpack.c.h.b16 %v2961
        %v3580 = vunpack.c.l.b16 %v2962
        %v3581 = vunpack.c.h.b16 %v2962
        %v3582 = vunpack.c.l.b16 %v2963
        %v3583 = vunpack.c.h.b16 %v2963
        %v3584 = vunpack.c.l.b16 %v2964
        %v3585 = vunpack.c.h.b16 %v2964
        %v3586 = vunpack.c.l.b16 %v2965
        %v3587 = vunpack.c.h.b16 %v2965
        %v3588 = vunpack.c.l.b16 %v2966
        %v3589 = vunpack.c.h.b16 %v2966
        %v3590 = vunpack.c.l.b16 %v2967
        %v3591 = vunpack.c.h.b16 %v2967
        %v3592 = vunpack.c.l.b16 %v2968
        %v3593 = vunpack.c.h.b16 %v2968
        %v3594 = vunpack.c.l.b16 %v2969
        %v3595 = vunpack.c.h.b16 %v2969
        %v3596 = vunpack.c.l.b16 %v2970
        %v3597 = vunpack.c.h.b16 %v2970
        %v3598 = vunpack.c.l.b16 %v2971
        %v3599 = vunpack.c.h.b16 %v2971
        %v3600 = vunpack.c.l.b16 %v2972
        %v3601 = vunpack.c.h.b16 %v2972
        %v3602 = vunpack.c.l.b16 %v2973
        %v3603 = vunpack.c.h.b16 %v2973
        %v3604 = vunpack.c.l.b16 %v2974
        %v3605 = vunpack.c.h.b16 %v2974
        %v3606 = vunpack.c.l.b16 %v2975
        %v3607 = vunpack.c.h.b16 %v2975
        %v3608 = vunpack.c.l.b16 %v2976
        %v3609 = vunpack.c.h.b16 %v2976
        %v3610 = vunpack.c.l.b16 %v2977
        %v3611 = vunpack.c.h.b16 %v2977
        %v3612 = vunpack.c.l.b16 %v2978
        %v3613 = vunpack.c.h.b16 %v2978
        %v3614 = vunpack.c.l.b16 %v2979
        %v3615 = vunpack.c.h.b16 %v2979
        %v3616 = vunpack.c.l.b16 %v2980
        %v3617 = vunpack.c.h.b16 %v2980
        %v3618 = vunpack.c.l.b16 %v2981
        %v3619 = vunpack.c.h.b16 %v2981
        %v3620 = vunpack.c.l.b16 %v2982
        %v3621 = vunpack.c.h.b16 %v2982
        %v3622 = vunpack.c.l.b16 %v2983
        %v3623 = vunpack.c.h.b16 %v2983
        %v3624 = vunpack.c.l.b16 %v2984
        %v3625 = vunpack.c.h.b16 %v2984
        %v3626 = vunpack.c.l.b16 %v2985
        %v3627 = vunpack.c.h.b16 %v2985
        %v3628 = vunpack.c.l.b16 %v2986
        %v3629 = vunpack.c.h.b16 %v2986
        %v3630 = vunpack.c.l.b16 %v2987
        %v3631 = vunpack.c.h.b16 %v2987
        %v3632 = vunpack.c.l.b16 %v2988
        %v3633 = vunpack.c.h.b16 %v2988
        %v3634 = vunpack.c.l.b16 %v2989
        %v3635 = vunpack.c.h.b16 %v2989
        %v3636 = vunpack.c.l.b16 %v2990
        %v3637 = vunpack.c.h.b16 %v2990
        %v3638 = vunpack.c.l.b16 %v2991
        %v3639 = vunpack.c.h.b16 %v2991
        %v3640 = vunpack.c.l.b16 %v2992
        %v3641 = vunpack.c.h.b16 %v2992
        %v3642 = vunpack.c.l.b16 %v2993
        %v3643 = vunpack.c.h.b16 %v2993
        %v3644 = vunpack.c.l.b16 %v2994
        %v3645 = vunpack.c.h.b16 %v2994
        %v3646 = vunpack.c.l.b16 %v2995
        %v3647 = vunpack.c.h.b16 %v2995
        %v3648 = vunpack.c.l.b16 %v2996
        %v3649 = vunpack.c.h.b16 %v2996
        %v3650 = vunpack.c.l.b16 %v2997
        %v3651 = vunpack.c.h.b16 %v2997
        %v3652 = vunpack.c.l.b16 %v2998
        %v3653 = vunpack.c.h.b16 %v2998
        %v3654 = vunpack.c.l.b16 %v2999
        %v3655 = vunpack.c.h.b16 %v2999
        %v3656 = vunpack.c.l.b16 %v3000
        %v3657 = vunpack.c.h.b16 %v3000
        %v3658 = vunpack.c.l.b16 %v3001
        %v3659 = vunpack.c.h.b16 %v3001
        %v3660 = vunpack.c.l.b16 %v3002
        %v3661 = vunpack.c.h.b16 %v3002
        %v3662 = vunpack.c.l.b16 %v3003
        %v3663 = vunpack.c.h.b16 %v3003
        %v3664 = vunpack.c.l.b16 %v3004
        %v3665 = vunpack.c.h.b16 %v3004
        %v3666 = vunpack.c.l.b16 %v3005
        %v3667 = vunpack.c.h.b16 %v3005
        %v3668 = vunpack.c.l.b16 %v3006
        %v3669 = vunpack.c.h.b16 %v3006
        %v3670 = vunpack.c.l.b16 %v3007
        %v3671 = vunpack.c.h.b16 %v3007
        %v3672 = vunpack.c.l.b16 %v3008
        %v3673 = vunpack.c.h.b16 %v3008
        %v3674 = vunpack.c.l.b16 %v3009
        %v3675 = vunpack.c.h.b16 %v3009
        %v3676 = vunpack.c.l.b16 %v3010
        %v3677 = vunpack.c.h.b16 %v3010
        %v3678 = vunpack.c.l.b16 %v3011
        %v3679 = vunpack.c.h.b16 %v3011
        %v3680 = vunpack.c.l.b16 %v3012
        %v3681 = vunpack.c.h.b16 %v3012
        %v3682 = vunpack.c.l.b16 %v3013
        %v3683 = vunpack.c.h.b16 %v3013
        %v3684 = vunpack.c.l.b16 %v3014
        %v3685 = vunpack.c.h.b16 %v3014
        %v3686 = vunpack.c.l.b16 %v3015
        %v3687 = vunpack.c.h.b16 %v3015
        %v3688 = vunpack.c.l.b16 %v3016
        %v3689 = vunpack.c.h.b16 %v3016
        %v3690 = vunpack.c.l.b16 %v3017
        %v3691 = vunpack.c.h.b16 %v3017
        %v3692 = vunpack.c.l.b16 %v3018
        %v3693 = vunpack.c.h.b16 %v3018
        %v3694 = vunpack.c.l.b16 %v3019
        %v3695 = vunpack.c.h.b16 %v3019
        %v3696 = vunpack.c.l.b16 %v3020
        %v3697 = vunpack.c.h.b16 %v3020
        %v3698 = vunpack.c.l.b16 %v3021
        %v3699 = vunpack.c.h.b16 %v3021
        %v3700 = vunpack.c.l.b16 %v3022
        %v3701 = vunpack.c.h.b16 %v3022
        %v3702 = vunpack.c.l.b16 %v3023
        %v3703 = vunpack.c.h.b16 %v3023
        %v3704 = vunpack.c.l.b16 %v3024
        %v3705 = vunpack.c.h.b16 %v3024
        %v3706 = vunpack.c.l.b16 %v3025
        %v3707 = vunpack.c.h.b16 %v3025
        %v3708 = vunpack.c.l.b16 %v3026
        %v3709 = vunpack.c.h.b16 %v3026
        %v3710 = vunpack.c.l.b16 %v3027
        %v3711 = vunpack.c.h.b16 %v3027
        %v3712 = vunpack.c.l.b16 %v3028
        %v3713 = vunpack.c.h.b16 %v3028
        %v3714 = vunpack.c.l.b16 %v3029
        %v3715 = vunpack.c.h.b16 %v3029
        %v3716 = vunpack.c.l.b16 %v3030
        %v3717 = vunpack.c.h.b16 %v3030
        %v3718 = vunpack.c.l.b16 %v3031
        %v3719 = vunpack.c.h.b16 %v3031
        %v3720 = vunpack.c.l.b16 %v3032
        %v3721 = vunpack.c.h.b16 %v3032
        %v3722 = vunpack.c.l.b16 %v3033
        %v3723 = vunpack.c.h.b16 %v3033
        %v3724 = vunpack.c.l.b16 %v3034
        %v3725 = vunpack.c.h.b16 %v3034
        %v3726 = vunpack.c.l.b16 %v3035
        %v3727 = vunpack.c.h.b16 %v3035
        %v3728 = vunpack.c.l.b16 %v3036
        %v3729 = vunpack.c.h.b16 %v3036
        %v3730 = vunpack.c.l.b16 %v3037
        %v3731 = vunpack.c.h.b16 %v3037
        %v3732 = vunpack.c.l.b16 %v3038
        %v3733 = vunpack.c.h.b16 %v3038
        %v3734 = vunpack.c.l.b16 %v3039
        %v3735 = vunpack.c.h.b16 %v3039
        %v3736 = vunpack.c.l.b16 %v3040
        %v3737 = vunpack.c.h.b16 %v3040
        %v3738 = vunpack.c.l.b16 %v3041
        %v3739 = vunpack.c.h.b16 %v3041
        %v3740 = vunpack.c.l.b16 %v3042
        %v3741 = vunpack.c.h.b16 %v3042
        %v3742 = vunpack.c.l.b16 %v3043
        %v3743 = vunpack.c.h.b16 %v3043
        %v3744 = vunpack.c.l.b16 %v3044
        %v3745 = vunpack.c.h.b16 %v3044
        %v3746 = vunpack.c.l.b16 %v3045
        %v3747 = vunpack.c.h.b16 %v3045
        %v3748 = vunpack.c.l.b16 %v3046
        %v3749 = vunpack.c.h.b16 %v3046
        %v3750 = vunpack.c.l.b16 %v3047
        %v3751 = vunpack.c.h.b16 %v3047
        %v3752 = vunpack.c.l.b16 %v3048
        %v3753 = vunpack.c.h.b16 %v3048
        %v3754 = vunpack.c.l.b16 %v3049
        %v3755 = vunpack.c.h.b16 %v3049
        %v3756 = vunpack.c.l.b16 %v3050
        %v3757 = vunpack.c.h.b16 %v3050
        %v3758 = vunpack.c.l.b16 %v3051
        %v3759 = vunpack.c.h.b16 %v3051
        %v3760 = vunpack.c.l.b16 %v3052
        %v3761 = vunpack.c.h.b16 %v3052
        %v3762 = vunpack.c.l.b16 %v3053
        %v3763 = vunpack.c.h.b16 %v3053
        %v3764 = vunpack.c.l.b16 %v3054
        %v3765 = vunpack.c.h.b16 %v3054
        %v3766 = vunpack.c.l.b16 %v3055
        %v3767 = vunpack.c.h.b16 %v3055
        %v3768 = vunpack.c.l.b16 %v3056
        %v3769 = vunpack.c.h.b16 %v3056
        %v3770 = vunpack.c.l.b16 %v3057
        %v3771 = vunpack.c.h.b16 %v3057
        %v3772 = vunpack.c.l.b16 %v3058
        %v3773 = vunpack.c.h.b16 %v3058
        %v3774 = vunpack.c.l.b16 %v3059
        %v3775 = vunpack.c.h.b16 %v3059
        %v3776 = vunpack.c.l.b16 %v3060
        %v3777 = vunpack.c.h.b16 %v3060
        %v3778 = vunpack.c.l.b16 %v3061
        %v3779 = vunpack.c.h.b16 %v3061
        %v3780 = vunpack.c.l.b16 %v3062
        %v3781 = vunpack.c.h.b16 %v3062
        %v3782 = vunpack.c.l.b16 %v3063
        %v3783 = vunpack.c.h.b16 %v3063
        %v3784 = vunpack.c.l.b16 %v3064
        %v3785 = vunpack.c.h.b16 %v3064
        %v3786 = vunpack.c.l.b16 %v3065
        %v3787 = vunpack.c.h.b16 %v3065
        %v3788 = vunpack.c.l.b16 %v3066
        %v3789 = vunpack.c.h.b16 %v3066
        %v3790 = vunpack.c.l.b16 %v3067
        %v3791 = vunpack.c.h.b16 %v3067
        %v3792 = vunpack.c.l.b16 %v3068
        %v3793 = vunpack.c.h.b16 %v3068
        %v3794 = vunpack.c.l.b16 %v3069
        %v3795 = vunpack.c.h.b16 %v3069
        %v3796 = vunpack.c.l.b16 %v3070
        %v3797 = vunpack.c.h.b16 %v3070
        %v3798 = vunpack.c.l.b16 %v3071
        %v3799 = vunpack.c.h.b16 %v3071
        %v3800 = vunpack.c.l.b16 %v3072
        %v3801 = vunpack.c.h.b16 %v3072
        %v3802 = vunpack.c.l.b16 %v3073
        %v3803 = vunpack.c.h.b16 %v3073
        %v3804 = vunpack.c.l.b16 %v3074
        %v3805 = vunpack.c.h.b16 %v3074
        %v3806 = vunpack.c.l.b16 %v3075
        %v3807 = vunpack.c.h.b16 %v3075
        %v3808 = vunpack.c.l.b16 %v3076
        %v3809 = vunpack.c.h.b16 %v3076
        %v3810 = vunpack.c.l.b16 %v3077
        %v3811 = vunpack.c.h.b16 %v3077
        %v3812 = vunpack.c.l.b16 %v3078
        %v3813 = vunpack.c.h.b16 %v3078
        %v3814 = vunpack.c.l.b16 %v3079
        %v3815 = vunpack.c.h.b16 %v3079
        %v3816 = vunpack.c.l.b16 %v3080
        %v3817 = vunpack.c.h.b16 %v3080
        %v3818 = vunpack.c.l.b16 %v3081
        %v3819 = vunpack.c.h.b16 %v3081
        %v3820 = vunpack.c.l.b16 %v3082
        %v3821 = vunpack.c.h.b16 %v3082
        %v3822 = vunpack.c.l.b16 %v3083
        %v3823 = vunpack.c.h.b16 %v3083
        %v3824 = vunpack.c.l.b16 %v3084
        %v3825 = vunpack.c.h.b16 %v3084
        %v3826 = vunpack.c.l.b16 %v3085
        %v3827 = vunpack.c.h.b16 %v3085
        %v3828 = vunpack.c.l.b16 %v3086
        %v3829 = vunpack.c.h.b16 %v3086
        %v3830 = vunpack.c.l.b16 %v3087
        %v3831 = vunpack.c.h.b16 %v3087
        %v3832 = vunpack.c.l.b16 %v3088
        %v3833 = vunpack.c.h.b16 %v3088
        %v3834 = vunpack.c.l.b16 %v3089
        %v3835 = vunpack.c.h.b16 %v3089
        %v3836 = vunpack.c.l.b16 %v3090
        %v3837 = vunpack.c.h.b16 %v3090
        %v3838 = vunpack.c.l.b16 %v3091
        %v3839 = vunpack.c.h.b16 %v3091
        %v3840 = vunpack.c.l.b16 %v3092
        %v3841 = vunpack.c.h.b16 %v3092
        %v3842 = vunpack.c.l.b16 %v3093
        %v3843 = vunpack.c.h.b16 %v3093
        %v3844 = vunpack.c.l.b16 %v3094
        %v3845 = vunpack.c.h.b16 %v3094
        %v3846 = vunpack.c.l.b16 %v3095
        %v3847 = vunpack.c.h.b16 %v3095
        %v3848 = vunpack.c.l.b16 %v3096
        %v3849 = vunpack.c.h.b16 %v3096
        %v3850 = vunpack.c.l.b16 %v3097
        %v3851 = vunpack.c.h.b16 %v3097
        %v3852 = vunpack.c.l.b16 %v3098
        %v3853 = vunpack.c.h.b16 %v3098
        %v3854 = vunpack.c.l.b16 %v3099
        %v3855 = vunpack.c.h.b16 %v3099
        %v3856 = vunpack.c.l.b16 %v3100
        %v3857 = vunpack.c.h.b16 %v3100
        %v3858 = vunpack.c.l.b16 %v3101
        %v3859 = vunpack.c.h.b16 %v3101
        %v3860 = vunpack.c.l.b16 %v3102
        %v3861 = vunpack.c.h.b16 %v3102
        %v3862 = vunpack.c.l.b16 %v3103
        %v3863 = vunpack.c.h.b16 %v3103
        %v3864 = vunpack.c.l.b16 %v3104
        %v3865 = vunpack.c.h.b16 %v3104
        %v3866 = vunpack.c.l.b16 %v3105
        %v3867 = vunpack.c.h.b16 %v3105
        %v3868 = vunpack.c.l.b16 %v3106
        %v3869 = vunpack.c.h.b16 %v3106
        %v3870 = vunpack.c.l.b16 %v3107
        %v3871 = vunpack.c.h.b16 %v3107
        %v3872 = vunpack.c.l.b16 %v3108
        %v3873 = vunpack.c.h.b16 %v3108
        %v3874 = vunpack.c.l.b16 %v3109
        %v3875 = vunpack.c.h.b16 %v3109
        %v3876 = vunpack.c.l.b16 %v3110
        %v3877 = vunpack.c.h.b16 %v3110
        %v3878 = vunpack.c.l.b16 %v3111
        %v3879 = vunpack.c.h.b16 %v3111
        %v3880 = vpack.c.b16 %v3370, %v3368
        %v3881 = vpack.c.b16 %v3371, %v3369
        %v3882 = vpack.c.b16 %v3374, %v3372
        %v3883 = vpack.c.b16 %v3375, %v3373
        %v3884 = vpack.c.b16 %v3378, %v3376
        %v3885 = vpack.c.b16 %v3379, %v3377
        %v3886 = vpack.c.b16 %v3382, %v3380
        %v3887 = vpack.c.b16 %v3383, %v3381
        %v3888 = vpack.c.b16 %v3386, %v3384
        %v3889 = vpack.c.b16 %v3387, %v3385
        %v3890 = vpack.c.b16 %v3390, %v3388
        %v3891 = vpack.c.b16 %v3391, %v3389
        %v3892 = vpack.c.b16 %v3394, %v3392
        %v3893 = vpack.c.b16 %v3395, %v3393
        %v3894 = vpack.c.b16 %v3398, %v3396
        %v3895 = vpack.c.b16 %v3399, %v3397
        %v3896 = vpack.c.b16 %v3402, %v3400
        %v3897 = vpack.c.b16 %v3403, %v3401
        %v3898 = vpack.c.b16 %v3406, %v3404
        %v3899 = vpack.c.b16 %v3407, %v3405
        %v3900 = vpack.c.b16 %v3410, %v3408
        %v3901 = vpack.c.b16 %v3411, %v3409
        %v3902 = vpack.c.b16 %v3414, %v3412
        %v3903 = vpack.c.b16 %v3415, %v3413
        %v3904 = vpack.c.b16 %v3418, %v3416
        %v3905 = vpack.c.b16 %v3419, %v3417
        %v3906 = vpack.c.b16 %v3422, %v3420
        %v3907 = vpack.c.b16 %v3423, %v3421
        %v3908 = vpack.c.b16 %v3426, %v3424
        %v3909 = vpack.c.b16 %v3427, %v3425
        %v3910 = vpack.c.b16 %v3430, %v3428
        %v3911 = vpack.c.b16 %v3431, %v3429
        %v3912 = vpack.c.b16 %v3434, %v3432
        %v3913 = vpack.c.b16 %v3435, %v3433
        %v3914 = vpack.c.b16 %v3438, %v3436
        %v3915 = vpack.c.b16 %v3439, %v3437
        %v3916 = vpack.c.b16 %v3442, %v3440
        %v3917 = vpack.c.b16 %v3443, %v3441
        %v3918 = vpack.c.b16 %v3446, %v3444
        %v3919 = vpack.c.b16 %v3447, %v3445
        %v3920 = vpack.c.b16 %v3450, %v3448
        %v3921 = vpack.c.b16 %v3451, %v3449
        %v3922 = vpack.c.b16 %v3454, %v3452
        %v3923 = vpack.c.b16 %v3455, %v3453
        %v3924 = vpack.c.b16 %v3458, %v3456
        %v3925 = vpack.c.b16 %v3459, %v3457
        %v3926 = vpack.c.b16 %v3462, %v3460
        %v3927 = vpack.c.b16 %v3463, %v3461
        %v3928 = vpack.c.b16 %v3466, %v3464
        %v3929 = vpack.c.b16 %v3467, %v3465
        %v3930 = vpack.c.b16 %v3470, %v3468
        %v3931 = vpack.c.b16 %v3471, %v3469
        %v3932 = vpack.c.b16 %v3474, %v3472
        %v3933 = vpack.c.b16 %v3475, %v3473
        %v3934 = vpack.c.b16 %v3478, %v3476
        %v3935 = vpack.c.b16 %v3479, %v3477
        %v3936 = vpack.c.b16 %v3482, %v3480
        %v3937 = vpack.c.b16 %v3483, %v3481
        %v3938 = vpack.c.b16 %v3486, %v3484
        %v3939 = vpack.c.b16 %v3487, %v3485
        %v3940 = vpack.c.b16 %v3490, %v3488
        %v3941 = vpack.c.b16 %v3491, %v3489
        %v3942 = vpack.c.b16 %v3494, %v3492
        %v3943 = vpack.c.b16 %v3495, %v3493
        %v3944 = vpack.c.b16 %v3498, %v3496
        %v3945 = vpack.c.b16 %v3499, %v3497
        %v3946 = vpack.c.b16 %v3502, %v3500
        %v3947 = vpack.c.b16 %v3503, %v3501
        %v3948 = vpack.c.b16 %v3506, %v3504
        %v3949 = vpack.c.b16 %v3507, %v3505
        %v3950 = vpack.c.b16 %v3510, %v3508
        %v3951 = vpack.c.b16 %v3511, %v3509
        %v3952 = vpack.c.b16 %v3514, %v3512
        %v3953 = vpack.c.b16 %v3515, %v3513
        %v3954 = vpack.c.b16 %v3518, %v3516
        %v3955 = vpack.c.b16 %v3519, %v3517
        %v3956 = vpack.c.b16 %v3522, %v3520
        %v3957 = vpack.c.b16 %v3523, %v3521
        %v3958 = vpack.c.b16 %v3526, %v3524
        %v3959 = vpack.c.b16 %v3527, %v3525
        %v3960 = vpack.c.b16 %v3530, %v3528
        %v3961 = vpack.c.b16 %v3531, %v3529
        %v3962 = vpack.c.b16 %v3534, %v3532
        %v3963 = vpack.c.b16 %v3535, %v3533
        %v3964 = vpack.c.b16 %v3538, %v3536
        %v3965 = vpack.c.b16 %v3539, %v3537
        %v3966 = vpack.c.b16 %v3542, %v3540
        %v3967 = vpack.c.b16 %v3543, %v3541
        %v3968 = vpack.c.b16 %v3546, %v3544
        %v3969 = vpack.c.b16 %v3547, %v3545
        %v3970 = vpack.c.b16 %v3550, %v3548
        %v3971 = vpack.c.b16 %v3551, %v3549
        %v3972 = vpack.c.b16 %v3554, %v3552
        %v3973 = vpack.c.b16 %v3555, %v3553
        %v3974 = vpack.c.b16 %v3558, %v3556
        %v3975 = vpack.c.b16 %v3559, %v3557
        %v3976 = vpack.c.b16 %v3562, %v3560
        %v3977 = vpack.c.b16 %v3563, %v3561
        %v3978 = vpack.c.b16 %v3566, %v3564
        %v3979 = vpack.c.b16 %v3567, %v3565
        %v3980 = vpack.c.b16 %v3570, %v3568
        %v3981 = vpack.c.b16 %v3571, %v3569
        %v3982 = vpack.c.b16 %v3574, %v3572
        %v3983 = vpack.c.b16 %v3575, %v3573
        %v3984 = vpack.c.b16 %v3578, %v3576
        %v3985 = vpack.c.b16 %v3579, %v3577
        %v3986 = vpack.c.b16 %v3582, %v3580
        %v3987 = vpack.c.b16 %v3583, %v3581
        %v3988 = vpack.c.b16 %v3586, %v3584
        %v3989 = vpack.c.b16 %v3587, %v3585
        %v3990 = vpack.c.b16 %v3590, %v3588
        %v3991 = vpack.c.b16 %v3591, %v3589
        %v3992 = vpack.c.b16 %v3594, %v3592
        %v3993 = vpack.c.b16 %v3595, %v3593
        %v3994 = vpack.c.b16 %v3598, %v3596
        %v3995 = vpack.c.b16 %v3599, %v3597
        %v3996 = vpack.c.b16 %v3602, %v3600
        %v3997 = vpack.c.b16 %v3603, %v3601
        %v3998 = vpack.c.b16 %v3606, %v3604
        %v3999 = vpack.c.b16 %v3607, %v3605
        %v4000 = vpack.c.b16 %v3610, %v3608
        %v4001 = vpack.c.b16 %v3611, %v3609
        %v4002 = vpack.c.b16 %v3614, %v3612
        %v4003 = vpack.c.b16 %v3615, %v3613
        %v4004 = vpack.c.b16 %v3618, %v3616
        %v4005 = vpack.c.b16 %v3619, %v3617
        %v4006 = vpack.c.b16 %v3622, %v3620
        %v4007 = vpack.c.b16 %v3623, %v3621
        %v4008 = vpack.c.b16 %v3626, %v3624
        %v4009 = vpack.c.b16 %v3627, %v3625
        %v4010 = vpack.c.b16 %v3630, %v3628
        %v4011 = vpack.c.b16 %v3631, %v3629
        %v4012 = vpack.c.b16 %v3634, %v3632
        %v4013 = vpack.c.b16 %v3635, %v3633
        %v4014 = vpack.c.b16 %v3638, %v3636
        %v4015 = vpack.c.b16 %v3639, %v3637
        %v4016 = vpack.c.b16 %v3642, %v3640
        %v4017 = vpack.c.b16 %v3643, %v3641
        %v4018 = vpack.c.b16 %v3646, %v3644
        %v4019 = vpack.c.b16 %v3647, %v3645
        %v4020 = vpack.c.b16 %v3650, %v3648
        %v4021 = vpack.c.b16 %v3651, %v3649
        %v4022 = vpack.c.b16 %v3654, %v3652
        %v4023 = vpack.c.b16 %v3655, %v3653
        %v4024 = vpack.c.b16 %v3658, %v3656
        %v4025 = vpack.c.b16 %v3659, %v3657
        %v4026 = vpack.c.b16 %v3662, %v3660
        %v4027 = vpack.c.b16 %v3663, %v3661
        %v4028 = vpack.c.b16 %v3666, %v3664
        %v4029 = vpack.c.b16 %v3667, %v3665
        %v4030 = vpack.c.b16 %v3670, %v3668
        %v4031 = vpack.c.b16 %v3671, %v3669
        %v4032 = vpack.c.b16 %v3674, %v3672
        %v4033 = vpack.c.b16 %v3675, %v3673
        %v4034 = vpack.c.b16 %v3678, %v3676
        %v4035 = vpack.c.b16 %v3679, %v3677
        %v4036 = vpack.c.b16 %v3682, %v3680
        %v4037 = vpack.c.b16 %v3683, %v3681
        %v4038 = vpack.c.b16 %v3686, %v3684
        %v4039 = vpack.c.b16 %v3687, %v3685
        %v4040 = vpack.c.b16 %v3690, %v3688
        %v4041 = vpack.c.b16 %v3691, %v3689
        %v4042 = vpack.c.b16 %v3694, %v3692
        %v4043 = vpack.c.b16 %v3695, %v3693
        %v4044 = vpack.c.b16 %v3698, %v3696
        %v4045 = vpack.c.b16 %v3699, %v3697
        %v4046 = vpack.c.b16 %v3702, %v3700
        %v4047 = vpack.c.b16 %v3703, %v3701
        %v4048 = vpack.c.b16 %v3706, %v3704
        %v4049 = vpack.c.b16 %v3707, %v3705
        %v4050 = vpack.c.b16 %v3710, %v3708
        %v4051 = vpack.c.b16 %v3711, %v3709
        %v4052 = vpack.c.b16 %v3714, %v3712
        %v4053 = vpack.c.b16 %v3715, %v3713
        %v4054 = vpack.c.b16 %v3718, %v3716
        %v4055 = vpack.c.b16 %v3719, %v3717
        %v4056 = vpack.c.b16 %v3722, %v3720
        %v4057 = vpack.c.b16 %v3723, %v3721
        %v4058 = vpack.c.b16 %v3726, %v3724
        %v4059 = vpack.c.b16 %v3727, %v3725
        %v4060 = vpack.c.b16 %v3730, %v3728
        %v4061 = vpack.c.b16 %v3731, %v3729
        %v4062 = vpack.c.b16 %v3734, %v3732
        %v4063 = vpack.c.b16 %v3735, %v3733
        %v4064 = vpack.c.b16 %v3738, %v3736
        %v4065 = vpack.c.b16 %v3739, %v3737
        %v4066 = vpack.c.b16 %v3742, %v3740
        %v4067 = vpack.c.b16 %v3743, %v3741
        %v4068 = vpack.c.b16 %v3746, %v3744
        %v4069 = vpack.c.b16 %v3747, %v3745
        %v4070 = vpack.c.b16 %v3750, %v3748
        %v4071 = vpack.c.b16 %v3751, %v3749
        %v4072 = vpack.c.b16 %v3754, %v3752
        %v4073 = vpack.c.b16 %v3755, %v3753
        %v4074 = vpack.c.b16 %v3758, %v3756
        %v4075 = vpack.c.b16 %v3759, %v3757
        %v4076 = vpack.c.b16 %v3762, %v3760
        %v4077 = vpack.c.b16 %v3763, %v3761
        %v4078 = vpack.c.b16 %v3766, %v3764
        %v4079 = vpack.c.b16 %v3767, %v3765
        %v4080 = vpack.c.b16 %v3770, %v3768
        %v4081 = vpack.c.b16 %v3771, %v3769
        %v4082 = vpack.c.b16 %v3774, %v3772
        %v4083 = vpack.c.b16 %v3775, %v3773
        %v4084 = vpack.c.b16 %v3778, %v3776
        %v4085 = vpack.c.b16 %v3779, %v3777
        %v4086 = vpack.c.b16 %v3782, %v3780
        %v4087 = vpack.c.b16 %v3783, %v3781
        %v4088 = vpack.c.b16 %v3786, %v3784
        %v4089 = vpack.c.b16 %v3787, %v3785
        %v4090 = vpack.c.b16 %v3790, %v3788
        %v4091 = vpack.c.b16 %v3791, %v3789
        %v4092 = vpack.c.b16 %v3794, %v3792
        %v4093 = vpack.c.b16 %v3795, %v3793
        %v4094 = vpack.c.b16 %v3798, %v3796
        %v4095 = vpack.c.b16 %v3799, %v3797
        %v4096 = vpack.c.b16 %v3802, %v3800
        %v4097 = vpack.c.b16 %v3803, %v3801
        %v4098 = vpack.c.b16 %v3806, %v3804
        %v4099 = vpack.c.b16 %v3807, %v3805
        %v4100 = vpack.c.b16 %v3810, %v3808
        %v4101 = vpack.c.b16 %v3811, %v3809
        %v4102 = vpack.c.b16 %v3814, %v3812
        %v4103 = vpack.c.b16 %v3815, %v3813
        %v4104 = vpack.c.b16 %v3818, %v3816
        %v4105 = vpack.c.b16 %v3819, %v3817
        %v4106 = vpack.c.b16 %v3822, %v3820
        %v4107 = vpack.c.b16 %v3823, %v3821
        %v4108 = vpack.c.b16 %v3826, %v3824
        %v4109 = vpack.c.b16 %v3827, %v3825
        %v4110 = vpack.c.b16 %v3830, %v3828
        %v4111 = vpack.c.b16 %v3831, %v3829
        %v4112 = vpack.c.b16 %v3834, %v3832
        %v4113 = vpack.c.b16 %v3835, %v3833
        %v4114 = vpack.c.b16 %v3838, %v3836
        %v4115 = vpack.c.b16 %v3839, %v3837
        %v4116 = vpack.c.b16 %v3842, %v3840
        %v4117 = vpack.c.b16 %v3843, %v3841
        %v4118 = vpack.c.b16 %v3846, %v3844
        %v4119 = vpack.c.b16 %v3847, %v3845
        %v4120 = vpack.c.b16 %v3850, %v3848
        %v4121 = vpack.c.b16 %v3851, %v3849
        %v4122 = vpack.c.b16 %v3854, %v3852
        %v4123 = vpack.c.b16 %v3855, %v3853
        %v4124 = vpack.c.b16 %v3858, %v3856
        %v4125 = vpack.c.b16 %v3859, %v3857
        %v4126 = vpack.c.b16 %v3862, %v3860
        %v4127 = vpack.c.b16 %v3863, %v3861
        %v4128 = vpack.c.b16 %v3866, %v3864
        %v4129 = vpack.c.b16 %v3867, %v3865
        %v4130 = vpack.c.b16 %v3870, %v3868
        %v4131 = vpack.c.b16 %v3871, %v3869
        %v4132 = vpack.c.b16 %v3874, %v3872
        %v4133 = vpack.c.b16 %v3875, %v3873
        %v4134 = vpack.c.b16 %v3878, %v3876
        %v4135 = vpack.c.b16 %v3879, %v3877
        %4392 = vmatpush.bf16.msra.mxu0 %v3894
        %4393 = vmatpush.bf16.msra.mxu0 %v3892
        %4394 = vmatpush.bf16.msra.mxu0 %v3890
        %4395 = vmatpush.bf16.msra.mxu0 %v3888
        %4396 = vmatpush.bf16.msra.mxu0 %v3886
        %4397 = vmatpush.bf16.msra.mxu0 %v3884
        %4398 = vmatpush.bf16.msra.mxu0 %v3882
        %4399 = vmatpush.bf16.msra.mxu0 %v3880
        %4400 = vmatmul.bf16.gmra.mxu0 %v2840
        %v4401 = vpop.f32.mrf.mxu0
        %v4402 = vadd.f32 0.0, %v4401
        %v4403 = vpop.f32.mrf.mxu0
        %4404 = vdwg.mxu0
        %4405 = vmatpush.bf16.msra.mxu0 %v3910
        %4406 = vmatpush.bf16.msra.mxu0 %v3908
        %4407 = vmatpush.bf16.msra.mxu0 %v3906
        %4408 = vmatpush.bf16.msra.mxu0 %v3904
        %4409 = vmatpush.bf16.msra.mxu0 %v3902
        %4410 = vmatpush.bf16.msra.mxu0 %v3900
        %4411 = vmatpush.bf16.msra.mxu0 %v3898
        %4412 = vmatpush.bf16.msra.mxu0 %v3896
        %4413 = vmatmul.bf16.gmra.mxu0 %v2841
        %v4414 = vpop.f32.mrf.mxu0
        %v4415 = vadd.f32 %v4402, %v4414
        %v4416 = vpop.f32.mrf.mxu0
        %4417 = vdwg.mxu0
        %4418 = vmatpush.bf16.msra.mxu0 %v3926
        %4419 = vmatpush.bf16.msra.mxu0 %v3924
        %4420 = vmatpush.bf16.msra.mxu0 %v3922
        %4421 = vmatpush.bf16.msra.mxu0 %v3920
        %4422 = vmatpush.bf16.msra.mxu0 %v3918
        %4423 = vmatpush.bf16.msra.mxu0 %v3916
        %4424 = vmatpush.bf16.msra.mxu0 %v3914
        %4425 = vmatpush.bf16.msra.mxu0 %v3912
        %4426 = vmatmul.bf16.gmra.mxu0 %v2842
        %v4427 = vpop.f32.mrf.mxu0
        %v4428 = vadd.f32 %v4415, %v4427
        %v4429 = vpop.f32.mrf.mxu0
        %4430 = vdwg.mxu0
        %4431 = vmatpush.bf16.msra.mxu0 %v3942
        %4432 = vmatpush.bf16.msra.mxu0 %v3940
        %4433 = vmatpush.bf16.msra.mxu0 %v3938
        %4434 = vmatpush.bf16.msra.mxu0 %v3936
        %4435 = vmatpush.bf16.msra.mxu0 %v3934
        %4436 = vmatpush.bf16.msra.mxu0 %v3932
        %4437 = vmatpush.bf16.msra.mxu0 %v3930
        %4438 = vmatpush.bf16.msra.mxu0 %v3928
        %4439 = vmatmul.bf16.gmra.mxu0 %v2843
        %v4440 = vpop.f32.mrf.mxu0
        %v4441 = vadd.f32 %v4428, %v4440
        %v4442 = vpop.f32.mrf.mxu0
        %4443 = vdwg.mxu0
        %4444 = vmatpush.bf16.msra.mxu0 %v3958
        %4445 = vmatpush.bf16.msra.mxu0 %v3956
        %4446 = vmatpush.bf16.msra.mxu0 %v3954
        %4447 = vmatpush.bf16.msra.mxu0 %v3952
        %4448 = vmatpush.bf16.msra.mxu0 %v3950
        %4449 = vmatpush.bf16.msra.mxu0 %v3948
        %4450 = vmatpush.bf16.msra.mxu0 %v3946
        %4451 = vmatpush.bf16.msra.mxu0 %v3944
        %4452 = vmatmul.bf16.gmra.mxu0 %v2844
        %v4453 = vpop.f32.mrf.mxu0
        %v4454 = vadd.f32 %v4441, %v4453
        %v4455 = vpop.f32.mrf.mxu0
        %4456 = vdwg.mxu0
        %4457 = vmatpush.bf16.msra.mxu0 %v3974
        %4458 = vmatpush.bf16.msra.mxu0 %v3972
        %4459 = vmatpush.bf16.msra.mxu0 %v3970
        %4460 = vmatpush.bf16.msra.mxu0 %v3968
        %4461 = vmatpush.bf16.msra.mxu0 %v3966
        %4462 = vmatpush.bf16.msra.mxu0 %v3964
        %4463 = vmatpush.bf16.msra.mxu0 %v3962
        %4464 = vmatpush.bf16.msra.mxu0 %v3960
        %4465 = vmatmul.bf16.gmra.mxu0 %v2845
        %v4466 = vpop.f32.mrf.mxu0
        %v4467 = vadd.f32 %v4454, %v4466
        %v4468 = vpop.f32.mrf.mxu0
        %4469 = vdwg.mxu0
        %4470 = vmatpush.bf16.msra.mxu0 %v3990
        %4471 = vmatpush.bf16.msra.mxu0 %v3988
        %4472 = vmatpush.bf16.msra.mxu0 %v3986
        %4473 = vmatpush.bf16.msra.mxu0 %v3984
        %4474 = vmatpush.bf16.msra.mxu0 %v3982
        %4475 = vmatpush.bf16.msra.mxu0 %v3980
        %4476 = vmatpush.bf16.msra.mxu0 %v3978
        %4477 = vmatpush.bf16.msra.mxu0 %v3976
        %4478 = vmatmul.bf16.gmra.mxu0 %v2846
        %v4479 = vpop.f32.mrf.mxu0
        %v4480 = vadd.f32 %v4467, %v4479
        %v4481 = vpop.f32.mrf.mxu0
        %4482 = vdwg.mxu0
        %4483 = vmatpush.bf16.msra.mxu0 %v4006
        %4484 = vmatpush.bf16.msra.mxu0 %v4004
        %4485 = vmatpush.bf16.msra.mxu0 %v4002
        %4486 = vmatpush.bf16.msra.mxu0 %v4000
        %4487 = vmatpush.bf16.msra.mxu0 %v3998
        %4488 = vmatpush.bf16.msra.mxu0 %v3996
        %4489 = vmatpush.bf16.msra.mxu0 %v3994
        %4490 = vmatpush.bf16.msra.mxu0 %v3992
        %4491 = vmatmul.bf16.gmra.mxu0 %v2847
        %v4492 = vpop.f32.mrf.mxu0
        %v4493 = vadd.f32 %v4480, %v4492
        %v4494 = vpop.f32.mrf.mxu0
        %4495 = vdwg.mxu0
        %4496 = vmatpush.bf16.msra.mxu0 %v4022
        %4497 = vmatpush.bf16.msra.mxu0 %v4020
        %4498 = vmatpush.bf16.msra.mxu0 %v4018
        %4499 = vmatpush.bf16.msra.mxu0 %v4016
        %4500 = vmatpush.bf16.msra.mxu0 %v4014
        %4501 = vmatpush.bf16.msra.mxu0 %v4012
        %4502 = vmatpush.bf16.msra.mxu0 %v4010
        %4503 = vmatpush.bf16.msra.mxu0 %v4008
        %4504 = vmatmul.bf16.gmra.mxu0 %v2848
        %v4505 = vpop.f32.mrf.mxu0
        %v4506 = vadd.f32 %v4493, %v4505
        %v4507 = vpop.f32.mrf.mxu0
        %4508 = vdwg.mxu0
        %4509 = vmatpush.bf16.msra.mxu0 %v4038
        %4510 = vmatpush.bf16.msra.mxu0 %v4036
        %4511 = vmatpush.bf16.msra.mxu0 %v4034
        %4512 = vmatpush.bf16.msra.mxu0 %v4032
        %4513 = vmatpush.bf16.msra.mxu0 %v4030
        %4514 = vmatpush.bf16.msra.mxu0 %v4028
        %4515 = vmatpush.bf16.msra.mxu0 %v4026
        %4516 = vmatpush.bf16.msra.mxu0 %v4024
        %4517 = vmatmul.bf16.gmra.mxu0 %v2849
        %v4518 = vpop.f32.mrf.mxu0
        %v4519 = vadd.f32 %v4506, %v4518
        %v4520 = vpop.f32.mrf.mxu0
        %4521 = vdwg.mxu0
        %4522 = vmatpush.bf16.msra.mxu0 %v4054
        %4523 = vmatpush.bf16.msra.mxu0 %v4052
        %4524 = vmatpush.bf16.msra.mxu0 %v4050
        %4525 = vmatpush.bf16.msra.mxu0 %v4048
        %4526 = vmatpush.bf16.msra.mxu0 %v4046
        %4527 = vmatpush.bf16.msra.mxu0 %v4044
        %4528 = vmatpush.bf16.msra.mxu0 %v4042
        %4529 = vmatpush.bf16.msra.mxu0 %v4040
        %4530 = vmatmul.bf16.gmra.mxu0 %v2850
        %v4531 = vpop.f32.mrf.mxu0
        %v4532 = vadd.f32 %v4519, %v4531
        %v4533 = vpop.f32.mrf.mxu0
        %4534 = vdwg.mxu0
        %4535 = vmatpush.bf16.msra.mxu0 %v4070
        %4536 = vmatpush.bf16.msra.mxu0 %v4068
        %4537 = vmatpush.bf16.msra.mxu0 %v4066
        %4538 = vmatpush.bf16.msra.mxu0 %v4064
        %4539 = vmatpush.bf16.msra.mxu0 %v4062
        %4540 = vmatpush.bf16.msra.mxu0 %v4060
        %4541 = vmatpush.bf16.msra.mxu0 %v4058
        %4542 = vmatpush.bf16.msra.mxu0 %v4056
        %4543 = vmatmul.bf16.gmra.mxu0 %v2851
        %v4544 = vpop.f32.mrf.mxu0
        %v4545 = vadd.f32 %v4532, %v4544
        %v4546 = vpop.f32.mrf.mxu0
        %4547 = vdwg.mxu0
        %4548 = vmatpush.bf16.msra.mxu0 %v4086
        %4549 = vmatpush.bf16.msra.mxu0 %v4084
        %4550 = vmatpush.bf16.msra.mxu0 %v4082
        %4551 = vmatpush.bf16.msra.mxu0 %v4080
        %4552 = vmatpush.bf16.msra.mxu0 %v4078
        %4553 = vmatpush.bf16.msra.mxu0 %v4076
        %4554 = vmatpush.bf16.msra.mxu0 %v4074
        %4555 = vmatpush.bf16.msra.mxu0 %v4072
        %4556 = vmatmul.bf16.gmra.mxu0 %v2852
        %v4557 = vpop.f32.mrf.mxu0
        %v4558 = vadd.f32 %v4545, %v4557
        %v4559 = vpop.f32.mrf.mxu0
        %4560 = vdwg.mxu0
        %4561 = vmatpush.bf16.msra.mxu0 %v4102
        %4562 = vmatpush.bf16.msra.mxu0 %v4100
        %4563 = vmatpush.bf16.msra.mxu0 %v4098
        %4564 = vmatpush.bf16.msra.mxu0 %v4096
        %4565 = vmatpush.bf16.msra.mxu0 %v4094
        %4566 = vmatpush.bf16.msra.mxu0 %v4092
        %4567 = vmatpush.bf16.msra.mxu0 %v4090
        %4568 = vmatpush.bf16.msra.mxu0 %v4088
        %4569 = vmatmul.bf16.gmra.mxu0 %v2853
        %v4570 = vpop.f32.mrf.mxu0
        %v4571 = vadd.f32 %v4558, %v4570
        %v4572 = vpop.f32.mrf.mxu0
        %4573 = vdwg.mxu0
        %4574 = vmatpush.bf16.msra.mxu0 %v4118
        %4575 = vmatpush.bf16.msra.mxu0 %v4116
        %4576 = vmatpush.bf16.msra.mxu0 %v4114
        %4577 = vmatpush.bf16.msra.mxu0 %v4112
        %4578 = vmatpush.bf16.msra.mxu0 %v4110
        %4579 = vmatpush.bf16.msra.mxu0 %v4108
        %4580 = vmatpush.bf16.msra.mxu0 %v4106
        %4581 = vmatpush.bf16.msra.mxu0 %v4104
        %4582 = vmatmul.bf16.gmra.mxu0 %v2854
        %v4583 = vpop.f32.mrf.mxu0
        %v4584 = vadd.f32 %v4571, %v4583
        %v4585 = vpop.f32.mrf.mxu0
        %4586 = vdwg.mxu0
        %4587 = vmatpush.bf16.msra.mxu0 %v4134
        %4588 = vmatpush.bf16.msra.mxu0 %v4132
        %4589 = vmatpush.bf16.msra.mxu0 %v4130
        %4590 = vmatpush.bf16.msra.mxu0 %v4128
        %4591 = vmatpush.bf16.msra.mxu0 %v4126
        %4592 = vmatpush.bf16.msra.mxu0 %v4124
        %4593 = vmatpush.bf16.msra.mxu0 %v4122
        %4594 = vmatpush.bf16.msra.mxu0 %v4120
        %4595 = vmatmul.bf16.gmra.mxu0 %v2855
        %v4596 = vpop.f32.mrf.mxu0
        %v4597 = vadd.f32 %v4584, %v4596
        %v4598 = vpop.f32.mrf.mxu0
        %4599 = vdwg.mxu0
        %4600 = vmatpush.bf16.msra.mxu0 %v3895
        %4601 = vmatpush.bf16.msra.mxu0 %v3893
        %4602 = vmatpush.bf16.msra.mxu0 %v3891
        %4603 = vmatpush.bf16.msra.mxu0 %v3889
        %4604 = vmatpush.bf16.msra.mxu0 %v3887
        %4605 = vmatpush.bf16.msra.mxu0 %v3885
        %4606 = vmatpush.bf16.msra.mxu0 %v3883
        %4607 = vmatpush.bf16.msra.mxu0 %v3881
        %4608 = vmatmul.bf16.gmra.mxu0 %v2840
        %v4609 = vpop.f32.mrf.mxu0
        %v4610 = vadd.f32 0.0, %v4609
        %v4611 = vpop.f32.mrf.mxu0
        %4612 = vdwg.mxu0
        %4613 = vmatpush.bf16.msra.mxu0 %v3911
        %4614 = vmatpush.bf16.msra.mxu0 %v3909
        %4615 = vmatpush.bf16.msra.mxu0 %v3907
        %4616 = vmatpush.bf16.msra.mxu0 %v3905
        %4617 = vmatpush.bf16.msra.mxu0 %v3903
        %4618 = vmatpush.bf16.msra.mxu0 %v3901
        %4619 = vmatpush.bf16.msra.mxu0 %v3899
        %4620 = vmatpush.bf16.msra.mxu0 %v3897
        %4621 = vmatmul.bf16.gmra.mxu0 %v2841
        %v4622 = vpop.f32.mrf.mxu0
        %v4623 = vadd.f32 %v4610, %v4622
        %v4624 = vpop.f32.mrf.mxu0
        %4625 = vdwg.mxu0
        %4626 = vmatpush.bf16.msra.mxu0 %v3927
        %4627 = vmatpush.bf16.msra.mxu0 %v3925
        %4628 = vmatpush.bf16.msra.mxu0 %v3923
        %4629 = vmatpush.bf16.msra.mxu0 %v3921
        %4630 = vmatpush.bf16.msra.mxu0 %v3919
        %4631 = vmatpush.bf16.msra.mxu0 %v3917
        %4632 = vmatpush.bf16.msra.mxu0 %v3915
        %4633 = vmatpush.bf16.msra.mxu0 %v3913
        %4634 = vmatmul.bf16.gmra.mxu0 %v2842
        %v4635 = vpop.f32.mrf.mxu0
        %v4636 = vadd.f32 %v4623, %v4635
        %v4637 = vpop.f32.mrf.mxu0
        %4638 = vdwg.mxu0
        %4639 = vmatpush.bf16.msra.mxu0 %v3943
        %4640 = vmatpush.bf16.msra.mxu0 %v3941
        %4641 = vmatpush.bf16.msra.mxu0 %v3939
        %4642 = vmatpush.bf16.msra.mxu0 %v3937
        %4643 = vmatpush.bf16.msra.mxu0 %v3935
        %4644 = vmatpush.bf16.msra.mxu0 %v3933
        %4645 = vmatpush.bf16.msra.mxu0 %v3931
        %4646 = vmatpush.bf16.msra.mxu0 %v3929
        %4647 = vmatmul.bf16.gmra.mxu0 %v2843
        %v4648 = vpop.f32.mrf.mxu0
        %v4649 = vadd.f32 %v4636, %v4648
        %v4650 = vpop.f32.mrf.mxu0
        %4651 = vdwg.mxu0
        %4652 = vmatpush.bf16.msra.mxu0 %v3959
        %4653 = vmatpush.bf16.msra.mxu0 %v3957
        %4654 = vmatpush.bf16.msra.mxu0 %v3955
        %4655 = vmatpush.bf16.msra.mxu0 %v3953
        %4656 = vmatpush.bf16.msra.mxu0 %v3951
        %4657 = vmatpush.bf16.msra.mxu0 %v3949
        %4658 = vmatpush.bf16.msra.mxu0 %v3947
        %4659 = vmatpush.bf16.msra.mxu0 %v3945
        %4660 = vmatmul.bf16.gmra.mxu0 %v2844
        %v4661 = vpop.f32.mrf.mxu0
        %v4662 = vadd.f32 %v4649, %v4661
        %v4663 = vpop.f32.mrf.mxu0
        %4664 = vdwg.mxu0
        %4665 = vmatpush.bf16.msra.mxu0 %v3975
        %4666 = vmatpush.bf16.msra.mxu0 %v3973
        %4667 = vmatpush.bf16.msra.mxu0 %v3971
        %4668 = vmatpush.bf16.msra.mxu0 %v3969
        %4669 = vmatpush.bf16.msra.mxu0 %v3967
        %4670 = vmatpush.bf16.msra.mxu0 %v3965
        %4671 = vmatpush.bf16.msra.mxu0 %v3963
        %4672 = vmatpush.bf16.msra.mxu0 %v3961
        %4673 = vmatmul.bf16.gmra.mxu0 %v2845
        %v4674 = vpop.f32.mrf.mxu0
        %v4675 = vadd.f32 %v4662, %v4674
        %v4676 = vpop.f32.mrf.mxu0
        %4677 = vdwg.mxu0
        %4678 = vmatpush.bf16.msra.mxu0 %v3991
        %4679 = vmatpush.bf16.msra.mxu0 %v3989
        %4680 = vmatpush.bf16.msra.mxu0 %v3987
        %4681 = vmatpush.bf16.msra.mxu0 %v3985
        %4682 = vmatpush.bf16.msra.mxu0 %v3983
        %4683 = vmatpush.bf16.msra.mxu0 %v3981
        %4684 = vmatpush.bf16.msra.mxu0 %v3979
        %4685 = vmatpush.bf16.msra.mxu0 %v3977
        %4686 = vmatmul.bf16.gmra.mxu0 %v2846
        %v4687 = vpop.f32.mrf.mxu0
        %v4688 = vadd.f32 %v4675, %v4687
        %v4689 = vpop.f32.mrf.mxu0
        %4690 = vdwg.mxu0
        %4691 = vmatpush.bf16.msra.mxu0 %v4007
        %4692 = vmatpush.bf16.msra.mxu0 %v4005
        %4693 = vmatpush.bf16.msra.mxu0 %v4003
        %4694 = vmatpush.bf16.msra.mxu0 %v4001
        %4695 = vmatpush.bf16.msra.mxu0 %v3999
        %4696 = vmatpush.bf16.msra.mxu0 %v3997
        %4697 = vmatpush.bf16.msra.mxu0 %v3995
        %4698 = vmatpush.bf16.msra.mxu0 %v3993
        %4699 = vmatmul.bf16.gmra.mxu0 %v2847
        %v4700 = vpop.f32.mrf.mxu0
        %v4701 = vadd.f32 %v4688, %v4700
        %v4702 = vpop.f32.mrf.mxu0
        %4703 = vdwg.mxu0
        %4704 = vmatpush.bf16.msra.mxu0 %v4023
        %4705 = vmatpush.bf16.msra.mxu0 %v4021
        %4706 = vmatpush.bf16.msra.mxu0 %v4019
        %4707 = vmatpush.bf16.msra.mxu0 %v4017
        %4708 = vmatpush.bf16.msra.mxu0 %v4015
        %4709 = vmatpush.bf16.msra.mxu0 %v4013
        %4710 = vmatpush.bf16.msra.mxu0 %v4011
        %4711 = vmatpush.bf16.msra.mxu0 %v4009
        %4712 = vmatmul.bf16.gmra.mxu0 %v2848
        %v4713 = vpop.f32.mrf.mxu0
        %v4714 = vadd.f32 %v4701, %v4713
        %v4715 = vpop.f32.mrf.mxu0
        %4716 = vdwg.mxu0
        %4717 = vmatpush.bf16.msra.mxu0 %v4039
        %4718 = vmatpush.bf16.msra.mxu0 %v4037
        %4719 = vmatpush.bf16.msra.mxu0 %v4035
        %4720 = vmatpush.bf16.msra.mxu0 %v4033
        %4721 = vmatpush.bf16.msra.mxu0 %v4031
        %4722 = vmatpush.bf16.msra.mxu0 %v4029
        %4723 = vmatpush.bf16.msra.mxu0 %v4027
        %4724 = vmatpush.bf16.msra.mxu0 %v4025
        %4725 = vmatmul.bf16.gmra.mxu0 %v2849
        %v4726 = vpop.f32.mrf.mxu0
        %v4727 = vadd.f32 %v4714, %v4726
        %v4728 = vpop.f32.mrf.mxu0
        %4729 = vdwg.mxu0
        %4730 = vmatpush.bf16.msra.mxu0 %v4055
        %4731 = vmatpush.bf16.msra.mxu0 %v4053
        %4732 = vmatpush.bf16.msra.mxu0 %v4051
        %4733 = vmatpush.bf16.msra.mxu0 %v4049
        %4734 = vmatpush.bf16.msra.mxu0 %v4047
        %4735 = vmatpush.bf16.msra.mxu0 %v4045
        %4736 = vmatpush.bf16.msra.mxu0 %v4043
        %4737 = vmatpush.bf16.msra.mxu0 %v4041
        %4738 = vmatmul.bf16.gmra.mxu0 %v2850
        %v4739 = vpop.f32.mrf.mxu0
        %v4740 = vadd.f32 %v4727, %v4739
        %v4741 = vpop.f32.mrf.mxu0
        %4742 = vdwg.mxu0
        %4743 = vmatpush.bf16.msra.mxu0 %v4071
        %4744 = vmatpush.bf16.msra.mxu0 %v4069
        %4745 = vmatpush.bf16.msra.mxu0 %v4067
        %4746 = vmatpush.bf16.msra.mxu0 %v4065
        %4747 = vmatpush.bf16.msra.mxu0 %v4063
        %4748 = vmatpush.bf16.msra.mxu0 %v4061
        %4749 = vmatpush.bf16.msra.mxu0 %v4059
        %4750 = vmatpush.bf16.msra.mxu0 %v4057
        %4751 = vmatmul.bf16.gmra.mxu0 %v2851
        %v4752 = vpop.f32.mrf.mxu0
        %v4753 = vadd.f32 %v4740, %v4752
        %v4754 = vpop.f32.mrf.mxu0
        %4755 = vdwg.mxu0
        %4756 = vmatpush.bf16.msra.mxu0 %v4087
        %4757 = vmatpush.bf16.msra.mxu0 %v4085
        %4758 = vmatpush.bf16.msra.mxu0 %v4083
        %4759 = vmatpush.bf16.msra.mxu0 %v4081
        %4760 = vmatpush.bf16.msra.mxu0 %v4079
        %4761 = vmatpush.bf16.msra.mxu0 %v4077
        %4762 = vmatpush.bf16.msra.mxu0 %v4075
        %4763 = vmatpush.bf16.msra.mxu0 %v4073
        %4764 = vmatmul.bf16.gmra.mxu0 %v2852
        %v4765 = vpop.f32.mrf.mxu0
        %v4766 = vadd.f32 %v4753, %v4765
        %v4767 = vpop.f32.mrf.mxu0
        %4768 = vdwg.mxu0
        %4769 = vmatpush.bf16.msra.mxu0 %v4103
        %4770 = vmatpush.bf16.msra.mxu0 %v4101
        %4771 = vmatpush.bf16.msra.mxu0 %v4099
        %4772 = vmatpush.bf16.msra.mxu0 %v4097
        %4773 = vmatpush.bf16.msra.mxu0 %v4095
        %4774 = vmatpush.bf16.msra.mxu0 %v4093
        %4775 = vmatpush.bf16.msra.mxu0 %v4091
        %4776 = vmatpush.bf16.msra.mxu0 %v4089
        %4777 = vmatmul.bf16.gmra.mxu0 %v2853
        %v4778 = vpop.f32.mrf.mxu0
        %v4779 = vadd.f32 %v4766, %v4778
        %v4780 = vpop.f32.mrf.mxu0
        %4781 = vdwg.mxu0
        %4782 = vmatpush.bf16.msra.mxu0 %v4119
        %4783 = vmatpush.bf16.msra.mxu0 %v4117
        %4784 = vmatpush.bf16.msra.mxu0 %v4115
        %4785 = vmatpush.bf16.msra.mxu0 %v4113
        %4786 = vmatpush.bf16.msra.mxu0 %v4111
        %4787 = vmatpush.bf16.msra.mxu0 %v4109
        %4788 = vmatpush.bf16.msra.mxu0 %v4107
        %4789 = vmatpush.bf16.msra.mxu0 %v4105
        %4790 = vmatmul.bf16.gmra.mxu0 %v2854
        %v4791 = vpop.f32.mrf.mxu0
        %v4792 = vadd.f32 %v4779, %v4791
        %v4793 = vpop.f32.mrf.mxu0
        %4794 = vdwg.mxu0
        %4795 = vmatpush.bf16.msra.mxu0 %v4135
        %4796 = vmatpush.bf16.msra.mxu0 %v4133
        %4797 = vmatpush.bf16.msra.mxu0 %v4131
        %4798 = vmatpush.bf16.msra.mxu0 %v4129
        %4799 = vmatpush.bf16.msra.mxu0 %v4127
        %4800 = vmatpush.bf16.msra.mxu0 %v4125
        %4801 = vmatpush.bf16.msra.mxu0 %v4123
        %4802 = vmatpush.bf16.msra.mxu0 %v4121
        %4803 = vmatmul.bf16.gmra.mxu0 %v2855
        %v4804 = vpop.f32.mrf.mxu0
        %v4805 = vadd.f32 %v4792, %v4804
        %v4806 = vpop.f32.mrf.mxu0
        %4807 = vdwg.mxu0
        %v4808 = vld [vmem:[%s4] sm:$0x3]
        %v4810 = vperm.slane %v4808, 0
        %v4811 = vperm.slane %v4808, 1
        %v4814 = vmul.f32 %v4597, %v4810
        %v4815 = vmul.f32 %v4805, %v4811
        %v4816 = vld [vmem:[%s5] sm:$0x3]
        %v4818 = vperm.slane %v4816, 0
        %v4819 = vperm.slane %v4816, 1
        %v4822 = vadd.f32 %v4814, %v4818
        %v4823 = vadd.f32 %v4815, %v4819
        %v4824 = vmax.f32 %v4822, 0.0
        %v4825 = vmax.f32 %v4823, 0.0
        %v4826 = vpack.c.bf16 %v4824, %v4824
        %v4827 = vpack.c.bf16 %v4825, %v4825
        %v4828 = vld [vmem:[%s6] sm:$0xf]
        %v4829 = vld [vmem:[%s6 + $0x4] sm:$0xf]
        %v4830 = vld [vmem:[%s6 + $0x8] sm:$0xf]
        %v4831 = vld [vmem:[%s6 + $0xc] sm:$0xf]
        %v4832 = vld [vmem:[%s6 + $0x10] sm:$0xf]
        %v4833 = vld [vmem:[%s6 + $0x14] sm:$0xf]
        %v4834 = vld [vmem:[%s6 + $0x18] sm:$0xf]
        %v4835 = vld [vmem:[%s6 + $0x1c] sm:$0xf]
        %v4836 = vld [vmem:[%s6 + $0x20] sm:$0xf]
        %v4837 = vld [vmem:[%s6 + $0x24] sm:$0xf]
        %v4838 = vld [vmem:[%s6 + $0x28] sm:$0xf]
        %v4839 = vld [vmem:[%s6 + $0x2c] sm:$0xf]
        %v4840 = vld [vmem:[%s6 + $0x30] sm:$0xf]
        %v4841 = vld [vmem:[%s6 + $0x34] sm:$0xf]
        %v4842 = vld [vmem:[%s6 + $0x38] sm:$0xf]
        %v4843 = vld [vmem:[%s6 + $0x3c] sm:$0xf]
        %v4844 = vld [vmem:[%s6 + $0x40] sm:$0xf]
        %v4845 = vld [vmem:[%s6 + $0x44] sm:$0xf]
        %v4846 = vld [vmem:[%s6 + $0x48] sm:$0xf]
        %v4847 = vld [vmem:[%s6 + $0x4c] sm:$0xf]
        %v4848 = vld [vmem:[%s6 + $0x50] sm:$0xf]
        %v4849 = vld [vmem:[%s6 + $0x54] sm:$0xf]
        %v4850 = vld [vmem:[%s6 + $0x58] sm:$0xf]
        %v4851 = vld [vmem:[%s6 + $0x5c] sm:$0xf]
        %v4852 = vld [vmem:[%s6 + $0x60] sm:$0xf]
        %v4853 = vld [vmem:[%s6 + $0x64] sm:$0xf]
        %v4854 = vld [vmem:[%s6 + $0x68] sm:$0xf]
        %v4855 = vld [vmem:[%s6 + $0x6c] sm:$0xf]
        %v4856 = vld [vmem:[%s6 + $0x70] sm:$0xf]
        %v4857 = vld [vmem:[%s6 + $0x74] sm:$0xf]
        %v4858 = vld [vmem:[%s6 + $0x78] sm:$0xf]
        %v4859 = vld [vmem:[%s6 + $0x7c] sm:$0xf]
        %v4892 = vunpack.c.l.b16 %v4828
        %v4893 = vunpack.c.l.b16 %v4829
        %v4894 = vunpack.c.l.b16 %v4830
        %v4895 = vunpack.c.l.b16 %v4831
        %v4896 = vunpack.c.l.b16 %v4832
        %v4897 = vunpack.c.l.b16 %v4833
        %v4898 = vunpack.c.l.b16 %v4834
        %v4899 = vunpack.c.l.b16 %v4835
        %v4900 = vunpack.c.l.b16 %v4836
        %v4901 = vunpack.c.l.b16 %v4837
        %v4902 = vunpack.c.l.b16 %v4838
        %v4903 = vunpack.c.l.b16 %v4839
        %v4904 = vunpack.c.l.b16 %v4840
        %v4905 = vunpack.c.l.b16 %v4841
        %v4906 = vunpack.c.l.b16 %v4842
        %v4907 = vunpack.c.l.b16 %v4843
        %v4908 = vunpack.c.l.b16 %v4844
        %v4909 = vunpack.c.l.b16 %v4845
        %v4910 = vunpack.c.l.b16 %v4846
        %v4911 = vunpack.c.l.b16 %v4847
        %v4912 = vunpack.c.l.b16 %v4848
        %v4913 = vunpack.c.l.b16 %v4849
        %v4914 = vunpack.c.l.b16 %v4850
        %v4915 = vunpack.c.l.b16 %v4851
        %v4916 = vunpack.c.l.b16 %v4852
        %v4917 = vunpack.c.l.b16 %v4853
        %v4918 = vunpack.c.l.b16 %v4854
        %v4919 = vunpack.c.l.b16 %v4855
        %v4920 = vunpack.c.l.b16 %v4856
        %v4921 = vunpack.c.l.b16 %v4857
        %v4922 = vunpack.c.l.b16 %v4858
        %v4923 = vunpack.c.l.b16 %v4859
        %v4924 = vpack.c.b16 %v4893, %v4892
        %v4925 = vpack.c.b16 %v4895, %v4894
        %v4926 = vpack.c.b16 %v4897, %v4896
        %v4927 = vpack.c.b16 %v4899, %v4898
        %v4928 = vpack.c.b16 %v4901, %v4900
        %v4929 = vpack.c.b16 %v4903, %v4902
        %v4930 = vpack.c.b16 %v4905, %v4904
        %v4931 = vpack.c.b16 %v4907, %v4906
        %v4932 = vpack.c.b16 %v4909, %v4908
        %v4933 = vpack.c.b16 %v4911, %v4910
        %v4934 = vpack.c.b16 %v4913, %v4912
        %v4935 = vpack.c.b16 %v4915, %v4914
        %v4936 = vpack.c.b16 %v4917, %v4916
        %v4937 = vpack.c.b16 %v4919, %v4918
        %v4938 = vpack.c.b16 %v4921, %v4920
        %v4939 = vpack.c.b16 %v4923, %v4922
        %4956 = vmatpush.bf16.msra.mxu0 %v4931
        %4957 = vmatpush.bf16.msra.mxu0 %v4930
        %4958 = vmatpush.bf16.msra.mxu0 %v4929
        %4959 = vmatpush.bf16.msra.mxu0 %v4928
        %4960 = vmatpush.bf16.msra.mxu0 %v4927
        %4961 = vmatpush.bf16.msra.mxu0 %v4926
        %4962 = vmatpush.bf16.msra.mxu0 %v4925
        %4963 = vmatpush.bf16.msra.mxu0 %v4924
        %4964 = vmatmul.bf16.gmra.mxu0 %v4826
        %v4965 = vpop.f32.mrf.mxu0
        %v4966 = vadd.f32 0.0, %v4965
        %v4967 = vpop.f32.mrf.mxu0
        %4968 = vdwg.mxu0
        %4969 = vmatpush.bf16.msra.mxu0 %v4939
        %4970 = vmatpush.bf16.msra.mxu0 %v4938
        %4971 = vmatpush.bf16.msra.mxu0 %v4937
        %4972 = vmatpush.bf16.msra.mxu0 %v4936
        %4973 = vmatpush.bf16.msra.mxu0 %v4935
        %4974 = vmatpush.bf16.msra.mxu0 %v4934
        %4975 = vmatpush.bf16.msra.mxu0 %v4933
        %4976 = vmatpush.bf16.msra.mxu0 %v4932
        %4977 = vmatmul.bf16.gmra.mxu0 %v4827
        %v4978 = vpop.f32.mrf.mxu0
        %v4979 = vadd.f32 %v4966, %v4978
        %v4980 = vpop.f32.mrf.mxu0
        %4981 = vdwg.mxu0
        %v4982 = vld [vmem:[%s7] sm:$0x1]
        %v4984 = vperm.slane %v4982, 0
        %v4986 = vmul.f32 %v4979, %v4984
        %v4987 = vld [vmem:[%s8] sm:$0x1]
        %v4989 = vperm.slane %v4987, 0
        %v4991 = vadd.f32 %v4986, %v4989
        %v4992 = vmax.f32 %v4991, 0.0
        %v4993 = vld [vmem:[%s9] sm:$0xff]
        %v4994 = vld [vmem:[%s9 + $0x8] sm:$0xff]
        %v4995 = vld [vmem:[%s9 + $0x10] sm:$0xff]
        %v4996 = vld [vmem:[%s9 + $0x18] sm:$0xff]
        %v4997 = vld [vmem:[%s9 + $0x20] sm:$0xff]
        %v4998 = vld [vmem:[%s9 + $0x28] sm:$0xff]
        %v4999 = vld [vmem:[%s9 + $0x30] sm:$0xff]
        %v5000 = vld [vmem:[%s9 + $0x38] sm:$0xff]
        %v5001 = vld [vmem:[%s10] sm:$0x1]
        %v5003 = vperm.slane %v5001, 0
        %vm5005 = vcmask 523264
        %v5007 = vsel %vm5005, %v4992, 0
        %5009 = vmatpush.msra.mxu0 0.0
        %5010 = vmatpush.msra.mxu0 0.0
        %5011 = vmatpush.msra.mxu0 0.0
        %5012 = vmatpush.msra.mxu0 0.0
        %5013 = vmatpush.msra.mxu0 0.0
        %5014 = vmatpush.msra.mxu0 0.0
        %5015 = vmatpush.msra.mxu0 0.0
        %5016 = vmatpush.msra.mxu0 0.0
        %5017 = vmatpush.msra.mxu0 %v5000
        %5018 = vmatpush.msra.mxu0 %v4999
        %5019 = vmatpush.msra.mxu0 %v4998
        %5020 = vmatpush.msra.mxu0 %v4997
        %5021 = vmatpush.msra.mxu0 %v4996
        %5022 = vmatpush.msra.mxu0 %v4995
        %5023 = vmatpush.msra.mxu0 %v4994
        %5024 = vmatpush.msra.mxu0 %v4993
        %5025 = vmatmul.f32.gmra.mxu0 %v5007
        %v5026 = vpop.f32.mrf.mxu0
        %v5027 = vadd.f32 %v5003, %v5026
        %5028 = vdwg.mxu0
        %v5029 = vsub.f32 0.0, %v5027
        %v5030 = vmul.f32 %v5029, 1.442695
        %v5031 = vpow.pop %v5030
        %v5032 = vadd.f32 %v5031, 1.0
        %v5033 = vrcp.pop %v5032
        %v5034 = vmul.f32 %v5032, %v5033
        %v5035 = vsub.f32 1.0, %v5034
        %v5036 = vmul.f32 %v5033, %v5035
        %v5037 = vadd.f32 %v5033, %v5036
        %vm5038 = vweird.f32 %v5032
        %vm5039 = vweird.f32 %v5033
        %vm5040 = vmor %vm5038, %vm5039
        %v5041 = vsel %vm5040, %v5033, %v5037
        %v5042 = vand.u32 2147483647, %v5032
        %vm5043 = vcmp.eq.f32.partialorder %v5042, 8.507059e+37
        %v5044 = vand.u32 %v5032, 2147483648
        %v5045 = vor.u32 1.1754944e-38, %v5044
        %v5046 = vsel %vm5043, %v5045, %v5041
        %v5047 = vmul.f32 9.0, %v5046
        %v5048 = vadd.f32 %v5047, 1.0
        %v5049 = vpack.c.bf16 %v2261, %v2245
        %v5050 = vpack.c.bf16 %v2262, %v2246
        %v5051 = vpack.c.bf16 %v2263, %v2247
        %v5052 = vpack.c.bf16 %v2264, %v2248
        %v5053 = vpack.c.bf16 %v2265, %v2249
        %v5054 = vpack.c.bf16 %v2266, %v2250
        %v5055 = vpack.c.bf16 %v2267, %v2251
        %v5056 = vpack.c.bf16 %v2268, %v2252
        %v5057 = vpack.c.bf16 %v2269, %v2253
        %v5058 = vpack.c.bf16 %v2270, %v2254
        %v5059 = vpack.c.bf16 %v2271, %v2255
        %v5060 = vpack.c.bf16 %v2272, %v2256
        %v5061 = vpack.c.bf16 %v2273, %v2257
        %v5062 = vpack.c.bf16 %v2274, %v2258
        %v5063 = vpack.c.bf16 %v2275, %v2259
        %v5064 = vpack.c.bf16 %v2276, %v2260
        %v5065 = vpack.c.bf16 %v2293, %v2277
        %v5066 = vpack.c.bf16 %v2294, %v2278
        %v5067 = vpack.c.bf16 %v2295, %v2279
        %v5068 = vpack.c.bf16 %v2296, %v2280
        %v5069 = vpack.c.bf16 %v2297, %v2281
        %v5070 = vpack.c.bf16 %v2298, %v2282
        %v5071 = vpack.c.bf16 %v2299, %v2283
        %v5072 = vpack.c.bf16 %v2300, %v2284
        %v5073 = vpack.c.bf16 %v2301, %v2285
        %v5074 = vpack.c.bf16 %v2302, %v2286
        %v5075 = vpack.c.bf16 %v2303, %v2287
        %v5076 = vpack.c.bf16 %v2304, %v2288
        %v5077 = vpack.c.bf16 %v2305, %v2289
        %v5078 = vpack.c.bf16 %v2306, %v2290
        %v5079 = vpack.c.bf16 %v2307, %v2291
        %v5080 = vpack.c.bf16 %v2308, %v2292
        %v5081 = vpack.c.bf16 %v2325, %v2309
        %v5082 = vpack.c.bf16 %v2326, %v2310
        %v5083 = vpack.c.bf16 %v2327, %v2311
        %v5084 = vpack.c.bf16 %v2328, %v2312
        %v5085 = vpack.c.bf16 %v2329, %v2313
        %v5086 = vpack.c.bf16 %v2330, %v2314
        %v5087 = vpack.c.bf16 %v2331, %v2315
        %v5088 = vpack.c.bf16 %v2332, %v2316
        %v5089 = vpack.c.bf16 %v2333, %v2317
        %v5090 = vpack.c.bf16 %v2334, %v2318
        %v5091 = vpack.c.bf16 %v2335, %v2319
        %v5092 = vpack.c.bf16 %v2336, %v2320
        %v5093 = vpack.c.bf16 %v2337, %v2321
        %v5094 = vpack.c.bf16 %v2338, %v2322
        %v5095 = vpack.c.bf16 %v2339, %v2323
        %v5096 = vpack.c.bf16 %v2340, %v2324
        %v5097 = vpack.c.bf16 %v2357, %v2341
        %v5098 = vpack.c.bf16 %v2358, %v2342
        %v5099 = vpack.c.bf16 %v2359, %v2343
        %v5100 = vpack.c.bf16 %v2360, %v2344
        %v5101 = vpack.c.bf16 %v2361, %v2345
        %v5102 = vpack.c.bf16 %v2362, %v2346
        %v5103 = vpack.c.bf16 %v2363, %v2347
        %v5104 = vpack.c.bf16 %v2364, %v2348
        %v5105 = vpack.c.bf16 %v2365, %v2349
        %v5106 = vpack.c.bf16 %v2366, %v2350
        %v5107 = vpack.c.bf16 %v2367, %v2351
        %v5108 = vpack.c.bf16 %v2368, %v2352
        %v5109 = vpack.c.bf16 %v2369, %v2353
        %v5110 = vpack.c.bf16 %v2370, %v2354
        %v5111 = vpack.c.bf16 %v2371, %v2355
        %v5112 = vpack.c.bf16 %v2372, %v2356
        %v5113 = vpack.c.bf16 %v2389, %v2373
        %v5114 = vpack.c.bf16 %v2390, %v2374
        %v5115 = vpack.c.bf16 %v2391, %v2375
        %v5116 = vpack.c.bf16 %v2392, %v2376
        %v5117 = vpack.c.bf16 %v2393, %v2377
        %v5118 = vpack.c.bf16 %v2394, %v2378
        %v5119 = vpack.c.bf16 %v2395, %v2379
        %v5120 = vpack.c.bf16 %v2396, %v2380
        %v5121 = vpack.c.bf16 %v2397, %v2381
        %v5122 = vpack.c.bf16 %v2398, %v2382
        %v5123 = vpack.c.bf16 %v2399, %v2383
        %v5124 = vpack.c.bf16 %v2400, %v2384
        %v5125 = vpack.c.bf16 %v2401, %v2385
        %v5126 = vpack.c.bf16 %v2402, %v2386
        %v5127 = vpack.c.bf16 %v2403, %v2387
        %v5128 = vpack.c.bf16 %v2404, %v2388
        %v5129 = vpack.c.bf16 %v2421, %v2405
        %v5130 = vpack.c.bf16 %v2422, %v2406
        %v5131 = vpack.c.bf16 %v2423, %v2407
        %v5132 = vpack.c.bf16 %v2424, %v2408
        %v5133 = vpack.c.bf16 %v2425, %v2409
        %v5134 = vpack.c.bf16 %v2426, %v2410
        %v5135 = vpack.c.bf16 %v2427, %v2411
        %v5136 = vpack.c.bf16 %v2428, %v2412
        %v5137 = vpack.c.bf16 %v2429, %v2413
        %v5138 = vpack.c.bf16 %v2430, %v2414
        %v5139 = vpack.c.bf16 %v2431, %v2415
        %v5140 = vpack.c.bf16 %v2432, %v2416
        %v5141 = vpack.c.bf16 %v2433, %v2417
        %v5142 = vpack.c.bf16 %v2434, %v2418
        %v5143 = vpack.c.bf16 %v2435, %v2419
        %v5144 = vpack.c.bf16 %v2436, %v2420
        %v5145 = vpack.c.bf16 %v2453, %v2437
        %v5146 = vpack.c.bf16 %v2454, %v2438
        %v5147 = vpack.c.bf16 %v2455, %v2439
        %v5148 = vpack.c.bf16 %v2456, %v2440
        %v5149 = vpack.c.bf16 %v2457, %v2441
        %v5150 = vpack.c.bf16 %v2458, %v2442
        %v5151 = vpack.c.bf16 %v2459, %v2443
        %v5152 = vpack.c.bf16 %v2460, %v2444
        %v5153 = vpack.c.bf16 %v2461, %v2445
        %v5154 = vpack.c.bf16 %v2462, %v2446
        %v5155 = vpack.c.bf16 %v2463, %v2447
        %v5156 = vpack.c.bf16 %v2464, %v2448
        %v5157 = vpack.c.bf16 %v2465, %v2449
        %v5158 = vpack.c.bf16 %v2466, %v2450
        %v5159 = vpack.c.bf16 %v2467, %v2451
        %v5160 = vpack.c.bf16 %v2468, %v2452
        %v5161 = vpack.c.bf16 %v2485, %v2469
        %v5162 = vpack.c.bf16 %v2486, %v2470
        %v5163 = vpack.c.bf16 %v2487, %v2471
        %v5164 = vpack.c.bf16 %v2488, %v2472
        %v5165 = vpack.c.bf16 %v2489, %v2473
        %v5166 = vpack.c.bf16 %v2490, %v2474
        %v5167 = vpack.c.bf16 %v2491, %v2475
        %v5168 = vpack.c.bf16 %v2492, %v2476
        %v5169 = vpack.c.bf16 %v2493, %v2477
        %v5170 = vpack.c.bf16 %v2494, %v2478
        %v5171 = vpack.c.bf16 %v2495, %v2479
        %v5172 = vpack.c.bf16 %v2496, %v2480
        %v5173 = vpack.c.bf16 %v2497, %v2481
        %v5174 = vpack.c.bf16 %v2498, %v2482
        %v5175 = vpack.c.bf16 %v2499, %v2483
        %v5176 = vpack.c.bf16 %v2500, %v2484
        %v5177 = vld [vmem:[%s11] sm:$0xff]
        %v5178 = vld [vmem:[%s11 + $0x8] sm:$0xff]
        %v5179 = vld [vmem:[%s11 + $0x10] sm:$0xff]
        %v5180 = vld [vmem:[%s11 + $0x18] sm:$0xff]
        %v5181 = vld [vmem:[%s11 + $0x20] sm:$0xff]
        %v5182 = vld [vmem:[%s11 + $0x28] sm:$0xff]
        %v5183 = vld [vmem:[%s11 + $0x30] sm:$0xff]
        %v5184 = vld [vmem:[%s11 + $0x38] sm:$0xff]
        %v5185 = vld [vmem:[%s11 + $0x40] sm:$0xff]
        %v5186 = vld [vmem:[%s11 + $0x48] sm:$0xff]
        %v5187 = vld [vmem:[%s11 + $0x50] sm:$0xff]
        %v5188 = vld [vmem:[%s11 + $0x58] sm:$0xff]
        %v5189 = vld [vmem:[%s11 + $0x60] sm:$0xff]
        %v5190 = vld [vmem:[%s11 + $0x68] sm:$0xff]
        %v5191 = vld [vmem:[%s11 + $0x70] sm:$0xff]
        %v5192 = vld [vmem:[%s11 + $0x78] sm:$0xff]
        %v5193 = vld [vmem:[%s11 + $0x80] sm:$0xff]
        %v5194 = vld [vmem:[%s11 + $0x88] sm:$0xff]
        %v5195 = vld [vmem:[%s11 + $0x90] sm:$0xff]
        %v5196 = vld [vmem:[%s11 + $0x98] sm:$0xff]
        %v5197 = vld [vmem:[%s11 + $0xa0] sm:$0xff]
        %v5198 = vld [vmem:[%s11 + $0xa8] sm:$0xff]
        %v5199 = vld [vmem:[%s11 + $0xb0] sm:$0xff]
        %v5200 = vld [vmem:[%s11 + $0xb8] sm:$0xff]
        %v5201 = vld [vmem:[%s11 + $0xc0] sm:$0xff]
        %v5202 = vld [vmem:[%s11 + $0xc8] sm:$0xff]
        %v5203 = vld [vmem:[%s11 + $0xd0] sm:$0xff]
        %v5204 = vld [vmem:[%s11 + $0xd8] sm:$0xff]
        %v5205 = vld [vmem:[%s11 + $0xe0] sm:$0xff]
        %v5206 = vld [vmem:[%s11 + $0xe8] sm:$0xff]
        %v5207 = vld [vmem:[%s11 + $0xf0] sm:$0xff]
        %v5208 = vld [vmem:[%s11 + $0xf8] sm:$0xff]
        %v5209 = vld [vmem:[%s11 + $0x100] sm:$0xff]
        %v5210 = vld [vmem:[%s11 + $0x108] sm:$0xff]
        %v5211 = vld [vmem:[%s11 + $0x110] sm:$0xff]
        %v5212 = vld [vmem:[%s11 + $0x118] sm:$0xff]
        %v5213 = vld [vmem:[%s11 + $0x120] sm:$0xff]
        %v5214 = vld [vmem:[%s11 + $0x128] sm:$0xff]
        %v5215 = vld [vmem:[%s11 + $0x130] sm:$0xff]
        %v5216 = vld [vmem:[%s11 + $0x138] sm:$0xff]
        %v5217 = vld [vmem:[%s11 + $0x140] sm:$0xff]
        %v5218 = vld [vmem:[%s11 + $0x148] sm:$0xff]
        %v5219 = vld [vmem:[%s11 + $0x150] sm:$0xff]
        %v5220 = vld [vmem:[%s11 + $0x158] sm:$0xff]
        %v5221 = vld [vmem:[%s11 + $0x160] sm:$0xff]
        %v5222 = vld [vmem:[%s11 + $0x168] sm:$0xff]
        %v5223 = vld [vmem:[%s11 + $0x170] sm:$0xff]
        %v5224 = vld [vmem:[%s11 + $0x178] sm:$0xff]
        %v5225 = vld [vmem:[%s11 + $0x180] sm:$0xff]
        %v5226 = vld [vmem:[%s11 + $0x188] sm:$0xff]
        %v5227 = vld [vmem:[%s11 + $0x190] sm:$0xff]
        %v5228 = vld [vmem:[%s11 + $0x198] sm:$0xff]
        %v5229 = vld [vmem:[%s11 + $0x1a0] sm:$0xff]
        %v5230 = vld [vmem:[%s11 + $0x1a8] sm:$0xff]
        %v5231 = vld [vmem:[%s11 + $0x1b0] sm:$0xff]
        %v5232 = vld [vmem:[%s11 + $0x1b8] sm:$0xff]
        %v5233 = vld [vmem:[%s11 + $0x1c0] sm:$0xff]
        %v5234 = vld [vmem:[%s11 + $0x1c8] sm:$0xff]
        %v5235 = vld [vmem:[%s11 + $0x1d0] sm:$0xff]
        %v5236 = vld [vmem:[%s11 + $0x1d8] sm:$0xff]
        %v5237 = vld [vmem:[%s11 + $0x1e0] sm:$0xff]
        %v5238 = vld [vmem:[%s11 + $0x1e8] sm:$0xff]
        %v5239 = vld [vmem:[%s11 + $0x1f0] sm:$0xff]
        %v5240 = vld [vmem:[%s11 + $0x1f8] sm:$0xff]
        %v5241 = vld [vmem:[%s11 + $0x200] sm:$0xff]
        %v5242 = vld [vmem:[%s11 + $0x208] sm:$0xff]
        %v5243 = vld [vmem:[%s11 + $0x210] sm:$0xff]
        %v5244 = vld [vmem:[%s11 + $0x218] sm:$0xff]
        %v5245 = vld [vmem:[%s11 + $0x220] sm:$0xff]
        %v5246 = vld [vmem:[%s11 + $0x228] sm:$0xff]
        %v5247 = vld [vmem:[%s11 + $0x230] sm:$0xff]
        %v5248 = vld [vmem:[%s11 + $0x238] sm:$0xff]
        %v5249 = vld [vmem:[%s11 + $0x240] sm:$0xff]
        %v5250 = vld [vmem:[%s11 + $0x248] sm:$0xff]
        %v5251 = vld [vmem:[%s11 + $0x250] sm:$0xff]
        %v5252 = vld [vmem:[%s11 + $0x258] sm:$0xff]
        %v5253 = vld [vmem:[%s11 + $0x260] sm:$0xff]
        %v5254 = vld [vmem:[%s11 + $0x268] sm:$0xff]
        %v5255 = vld [vmem:[%s11 + $0x270] sm:$0xff]
        %v5256 = vld [vmem:[%s11 + $0x278] sm:$0xff]
        %v5257 = vld [vmem:[%s11 + $0x280] sm:$0xff]
        %v5258 = vld [vmem:[%s11 + $0x288] sm:$0xff]
        %v5259 = vld [vmem:[%s11 + $0x290] sm:$0xff]
        %v5260 = vld [vmem:[%s11 + $0x298] sm:$0xff]
        %v5261 = vld [vmem:[%s11 + $0x2a0] sm:$0xff]
        %v5262 = vld [vmem:[%s11 + $0x2a8] sm:$0xff]
        %v5263 = vld [vmem:[%s11 + $0x2b0] sm:$0xff]
        %v5264 = vld [vmem:[%s11 + $0x2b8] sm:$0xff]
        %v5265 = vld [vmem:[%s11 + $0x2c0] sm:$0xff]
        %v5266 = vld [vmem:[%s11 + $0x2c8] sm:$0xff]
        %v5267 = vld [vmem:[%s11 + $0x2d0] sm:$0xff]
        %v5268 = vld [vmem:[%s11 + $0x2d8] sm:$0xff]
        %v5269 = vld [vmem:[%s11 + $0x2e0] sm:$0xff]
        %v5270 = vld [vmem:[%s11 + $0x2e8] sm:$0xff]
        %v5271 = vld [vmem:[%s11 + $0x2f0] sm:$0xff]
        %v5272 = vld [vmem:[%s11 + $0x2f8] sm:$0xff]
        %v5273 = vld [vmem:[%s11 + $0x300] sm:$0xff]
        %v5274 = vld [vmem:[%s11 + $0x308] sm:$0xff]
        %v5275 = vld [vmem:[%s11 + $0x310] sm:$0xff]
        %v5276 = vld [vmem:[%s11 + $0x318] sm:$0xff]
        %v5277 = vld [vmem:[%s11 + $0x320] sm:$0xff]
        %v5278 = vld [vmem:[%s11 + $0x328] sm:$0xff]
        %v5279 = vld [vmem:[%s11 + $0x330] sm:$0xff]
        %v5280 = vld [vmem:[%s11 + $0x338] sm:$0xff]
        %v5281 = vld [vmem:[%s11 + $0x340] sm:$0xff]
        %v5282 = vld [vmem:[%s11 + $0x348] sm:$0xff]
        %v5283 = vld [vmem:[%s11 + $0x350] sm:$0xff]
        %v5284 = vld [vmem:[%s11 + $0x358] sm:$0xff]
        %v5285 = vld [vmem:[%s11 + $0x360] sm:$0xff]
        %v5286 = vld [vmem:[%s11 + $0x368] sm:$0xff]
        %v5287 = vld [vmem:[%s11 + $0x370] sm:$0xff]
        %v5288 = vld [vmem:[%s11 + $0x378] sm:$0xff]
        %v5289 = vld [vmem:[%s11 + $0x380] sm:$0xff]
        %v5290 = vld [vmem:[%s11 + $0x388] sm:$0xff]
        %v5291 = vld [vmem:[%s11 + $0x390] sm:$0xff]
        %v5292 = vld [vmem:[%s11 + $0x398] sm:$0xff]
        %v5293 = vld [vmem:[%s11 + $0x3a0] sm:$0xff]
        %v5294 = vld [vmem:[%s11 + $0x3a8] sm:$0xff]
        %v5295 = vld [vmem:[%s11 + $0x3b0] sm:$0xff]
        %v5296 = vld [vmem:[%s11 + $0x3b8] sm:$0xff]
        %v5297 = vld [vmem:[%s11 + $0x3c0] sm:$0xff]
        %v5298 = vld [vmem:[%s11 + $0x3c8] sm:$0xff]
        %v5299 = vld [vmem:[%s11 + $0x3d0] sm:$0xff]
        %v5300 = vld [vmem:[%s11 + $0x3d8] sm:$0xff]
        %v5301 = vld [vmem:[%s11 + $0x3e0] sm:$0xff]
        %v5302 = vld [vmem:[%s11 + $0x3e8] sm:$0xff]
        %v5303 = vld [vmem:[%s11 + $0x3f0] sm:$0xff]
        %v5304 = vld [vmem:[%s11 + $0x3f8] sm:$0xff]
        %v5305 = vld [vmem:[%s11 + $0x400] sm:$0xff]
        %v5306 = vld [vmem:[%s11 + $0x408] sm:$0xff]
        %v5307 = vld [vmem:[%s11 + $0x410] sm:$0xff]
        %v5308 = vld [vmem:[%s11 + $0x418] sm:$0xff]
        %v5309 = vld [vmem:[%s11 + $0x420] sm:$0xff]
        %v5310 = vld [vmem:[%s11 + $0x428] sm:$0xff]
        %v5311 = vld [vmem:[%s11 + $0x430] sm:$0xff]
        %v5312 = vld [vmem:[%s11 + $0x438] sm:$0xff]
        %v5313 = vld [vmem:[%s11 + $0x440] sm:$0xff]
        %v5314 = vld [vmem:[%s11 + $0x448] sm:$0xff]
        %v5315 = vld [vmem:[%s11 + $0x450] sm:$0xff]
        %v5316 = vld [vmem:[%s11 + $0x458] sm:$0xff]
        %v5317 = vld [vmem:[%s11 + $0x460] sm:$0xff]
        %v5318 = vld [vmem:[%s11 + $0x468] sm:$0xff]
        %v5319 = vld [vmem:[%s11 + $0x470] sm:$0xff]
        %v5320 = vld [vmem:[%s11 + $0x478] sm:$0xff]
        %v5321 = vld [vmem:[%s11 + $0x480] sm:$0xff]
        %v5322 = vld [vmem:[%s11 + $0x488] sm:$0xff]
        %v5323 = vld [vmem:[%s11 + $0x490] sm:$0xff]
        %v5324 = vld [vmem:[%s11 + $0x498] sm:$0xff]
        %v5325 = vld [vmem:[%s11 + $0x4a0] sm:$0xff]
        %v5326 = vld [vmem:[%s11 + $0x4a8] sm:$0xff]
        %v5327 = vld [vmem:[%s11 + $0x4b0] sm:$0xff]
        %v5328 = vld [vmem:[%s11 + $0x4b8] sm:$0xff]
        %v5329 = vld [vmem:[%s11 + $0x4c0] sm:$0xff]
        %v5330 = vld [vmem:[%s11 + $0x4c8] sm:$0xff]
        %v5331 = vld [vmem:[%s11 + $0x4d0] sm:$0xff]
        %v5332 = vld [vmem:[%s11 + $0x4d8] sm:$0xff]
        %v5333 = vld [vmem:[%s11 + $0x4e0] sm:$0xff]
        %v5334 = vld [vmem:[%s11 + $0x4e8] sm:$0xff]
        %v5335 = vld [vmem:[%s11 + $0x4f0] sm:$0xff]
        %v5336 = vld [vmem:[%s11 + $0x4f8] sm:$0xff]
        %v5337 = vld [vmem:[%s11 + $0x500] sm:$0xff]
        %v5338 = vld [vmem:[%s11 + $0x508] sm:$0xff]
        %v5339 = vld [vmem:[%s11 + $0x510] sm:$0xff]
        %v5340 = vld [vmem:[%s11 + $0x518] sm:$0xff]
        %v5341 = vld [vmem:[%s11 + $0x520] sm:$0xff]
        %v5342 = vld [vmem:[%s11 + $0x528] sm:$0xff]
        %v5343 = vld [vmem:[%s11 + $0x530] sm:$0xff]
        %v5344 = vld [vmem:[%s11 + $0x538] sm:$0xff]
        %v5345 = vld [vmem:[%s11 + $0x540] sm:$0xff]
        %v5346 = vld [vmem:[%s11 + $0x548] sm:$0xff]
        %v5347 = vld [vmem:[%s11 + $0x550] sm:$0xff]
        %v5348 = vld [vmem:[%s11 + $0x558] sm:$0xff]
        %v5349 = vld [vmem:[%s11 + $0x560] sm:$0xff]
        %v5350 = vld [vmem:[%s11 + $0x568] sm:$0xff]
        %v5351 = vld [vmem:[%s11 + $0x570] sm:$0xff]
        %v5352 = vld [vmem:[%s11 + $0x578] sm:$0xff]
        %v5353 = vld [vmem:[%s11 + $0x580] sm:$0xff]
        %v5354 = vld [vmem:[%s11 + $0x588] sm:$0xff]
        %v5355 = vld [vmem:[%s11 + $0x590] sm:$0xff]
        %v5356 = vld [vmem:[%s11 + $0x598] sm:$0xff]
        %v5357 = vld [vmem:[%s11 + $0x5a0] sm:$0xff]
        %v5358 = vld [vmem:[%s11 + $0x5a8] sm:$0xff]
        %v5359 = vld [vmem:[%s11 + $0x5b0] sm:$0xff]
        %v5360 = vld [vmem:[%s11 + $0x5b8] sm:$0xff]
        %v5361 = vld [vmem:[%s11 + $0x5c0] sm:$0xff]
        %v5362 = vld [vmem:[%s11 + $0x5c8] sm:$0xff]
        %v5363 = vld [vmem:[%s11 + $0x5d0] sm:$0xff]
        %v5364 = vld [vmem:[%s11 + $0x5d8] sm:$0xff]
        %v5365 = vld [vmem:[%s11 + $0x5e0] sm:$0xff]
        %v5366 = vld [vmem:[%s11 + $0x5e8] sm:$0xff]
        %v5367 = vld [vmem:[%s11 + $0x5f0] sm:$0xff]
        %v5368 = vld [vmem:[%s11 + $0x5f8] sm:$0xff]
        %v5369 = vld [vmem:[%s11 + $0x600] sm:$0xff]
        %v5370 = vld [vmem:[%s11 + $0x608] sm:$0xff]
        %v5371 = vld [vmem:[%s11 + $0x610] sm:$0xff]
        %v5372 = vld [vmem:[%s11 + $0x618] sm:$0xff]
        %v5373 = vld [vmem:[%s11 + $0x620] sm:$0xff]
        %v5374 = vld [vmem:[%s11 + $0x628] sm:$0xff]
        %v5375 = vld [vmem:[%s11 + $0x630] sm:$0xff]
        %v5376 = vld [vmem:[%s11 + $0x638] sm:$0xff]
        %v5377 = vld [vmem:[%s11 + $0x640] sm:$0xff]
        %v5378 = vld [vmem:[%s11 + $0x648] sm:$0xff]
        %v5379 = vld [vmem:[%s11 + $0x650] sm:$0xff]
        %v5380 = vld [vmem:[%s11 + $0x658] sm:$0xff]
        %v5381 = vld [vmem:[%s11 + $0x660] sm:$0xff]
        %v5382 = vld [vmem:[%s11 + $0x668] sm:$0xff]
        %v5383 = vld [vmem:[%s11 + $0x670] sm:$0xff]
        %v5384 = vld [vmem:[%s11 + $0x678] sm:$0xff]
        %v5385 = vld [vmem:[%s11 + $0x680] sm:$0xff]
        %v5386 = vld [vmem:[%s11 + $0x688] sm:$0xff]
        %v5387 = vld [vmem:[%s11 + $0x690] sm:$0xff]
        %v5388 = vld [vmem:[%s11 + $0x698] sm:$0xff]
        %v5389 = vld [vmem:[%s11 + $0x6a0] sm:$0xff]
        %v5390 = vld [vmem:[%s11 + $0x6a8] sm:$0xff]
        %v5391 = vld [vmem:[%s11 + $0x6b0] sm:$0xff]
        %v5392 = vld [vmem:[%s11 + $0x6b8] sm:$0xff]
        %v5393 = vld [vmem:[%s11 + $0x6c0] sm:$0xff]
        %v5394 = vld [vmem:[%s11 + $0x6c8] sm:$0xff]
        %v5395 = vld [vmem:[%s11 + $0x6d0] sm:$0xff]
        %v5396 = vld [vmem:[%s11 + $0x6d8] sm:$0xff]
        %v5397 = vld [vmem:[%s11 + $0x6e0] sm:$0xff]
        %v5398 = vld [vmem:[%s11 + $0x6e8] sm:$0xff]
        %v5399 = vld [vmem:[%s11 + $0x6f0] sm:$0xff]
        %v5400 = vld [vmem:[%s11 + $0x6f8] sm:$0xff]
        %v5401 = vld [vmem:[%s11 + $0x700] sm:$0xff]
        %v5402 = vld [vmem:[%s11 + $0x708] sm:$0xff]
        %v5403 = vld [vmem:[%s11 + $0x710] sm:$0xff]
        %v5404 = vld [vmem:[%s11 + $0x718] sm:$0xff]
        %v5405 = vld [vmem:[%s11 + $0x720] sm:$0xff]
        %v5406 = vld [vmem:[%s11 + $0x728] sm:$0xff]
        %v5407 = vld [vmem:[%s11 + $0x730] sm:$0xff]
        %v5408 = vld [vmem:[%s11 + $0x738] sm:$0xff]
        %v5409 = vld [vmem:[%s11 + $0x740] sm:$0xff]
        %v5410 = vld [vmem:[%s11 + $0x748] sm:$0xff]
        %v5411 = vld [vmem:[%s11 + $0x750] sm:$0xff]
        %v5412 = vld [vmem:[%s11 + $0x758] sm:$0xff]
        %v5413 = vld [vmem:[%s11 + $0x760] sm:$0xff]
        %v5414 = vld [vmem:[%s11 + $0x768] sm:$0xff]
        %v5415 = vld [vmem:[%s11 + $0x770] sm:$0xff]
        %v5416 = vld [vmem:[%s11 + $0x778] sm:$0xff]
        %v5417 = vld [vmem:[%s11 + $0x780] sm:$0xff]
        %v5418 = vld [vmem:[%s11 + $0x788] sm:$0xff]
        %v5419 = vld [vmem:[%s11 + $0x790] sm:$0xff]
        %v5420 = vld [vmem:[%s11 + $0x798] sm:$0xff]
        %v5421 = vld [vmem:[%s11 + $0x7a0] sm:$0xff]
        %v5422 = vld [vmem:[%s11 + $0x7a8] sm:$0xff]
        %v5423 = vld [vmem:[%s11 + $0x7b0] sm:$0xff]
        %v5424 = vld [vmem:[%s11 + $0x7b8] sm:$0xff]
        %v5425 = vld [vmem:[%s11 + $0x7c0] sm:$0xff]
        %v5426 = vld [vmem:[%s11 + $0x7c8] sm:$0xff]
        %v5427 = vld [vmem:[%s11 + $0x7d0] sm:$0xff]
        %v5428 = vld [vmem:[%s11 + $0x7d8] sm:$0xff]
        %v5429 = vld [vmem:[%s11 + $0x7e0] sm:$0xff]
        %v5430 = vld [vmem:[%s11 + $0x7e8] sm:$0xff]
        %v5431 = vld [vmem:[%s11 + $0x7f0] sm:$0xff]
        %v5432 = vld [vmem:[%s11 + $0x7f8] sm:$0xff]
        %v5433 = vld [vmem:[%s12] sm:$0x3]
        %v5435 = vperm.slane %v5433, 0
        %v5436 = vperm.slane %v5433, 1
        %v5695 = vunpack.c.l.b16 %v5177
        %v5696 = vunpack.c.h.b16 %v5177
        %v5697 = vunpack.c.l.b16 %v5178
        %v5698 = vunpack.c.h.b16 %v5178
        %v5699 = vunpack.c.l.b16 %v5179
        %v5700 = vunpack.c.h.b16 %v5179
        %v5701 = vunpack.c.l.b16 %v5180
        %v5702 = vunpack.c.h.b16 %v5180
        %v5703 = vunpack.c.l.b16 %v5181
        %v5704 = vunpack.c.h.b16 %v5181
        %v5705 = vunpack.c.l.b16 %v5182
        %v5706 = vunpack.c.h.b16 %v5182
        %v5707 = vunpack.c.l.b16 %v5183
        %v5708 = vunpack.c.h.b16 %v5183
        %v5709 = vunpack.c.l.b16 %v5184
        %v5710 = vunpack.c.h.b16 %v5184
        %v5711 = vunpack.c.l.b16 %v5185
        %v5712 = vunpack.c.h.b16 %v5185
        %v5713 = vunpack.c.l.b16 %v5186
        %v5714 = vunpack.c.h.b16 %v5186
        %v5715 = vunpack.c.l.b16 %v5187
        %v5716 = vunpack.c.h.b16 %v5187
        %v5717 = vunpack.c.l.b16 %v5188
        %v5718 = vunpack.c.h.b16 %v5188
        %v5719 = vunpack.c.l.b16 %v5189
        %v5720 = vunpack.c.h.b16 %v5189
        %v5721 = vunpack.c.l.b16 %v5190
        %v5722 = vunpack.c.h.b16 %v5190
        %v5723 = vunpack.c.l.b16 %v5191
        %v5724 = vunpack.c.h.b16 %v5191
        %v5725 = vunpack.c.l.b16 %v5192
        %v5726 = vunpack.c.h.b16 %v5192
        %v5727 = vunpack.c.l.b16 %v5193
        %v5728 = vunpack.c.h.b16 %v5193
        %v5729 = vunpack.c.l.b16 %v5194
        %v5730 = vunpack.c.h.b16 %v5194
        %v5731 = vunpack.c.l.b16 %v5195
        %v5732 = vunpack.c.h.b16 %v5195
        %v5733 = vunpack.c.l.b16 %v5196
        %v5734 = vunpack.c.h.b16 %v5196
        %v5735 = vunpack.c.l.b16 %v5197
        %v5736 = vunpack.c.h.b16 %v5197
        %v5737 = vunpack.c.l.b16 %v5198
        %v5738 = vunpack.c.h.b16 %v5198
        %v5739 = vunpack.c.l.b16 %v5199
        %v5740 = vunpack.c.h.b16 %v5199
        %v5741 = vunpack.c.l.b16 %v5200
        %v5742 = vunpack.c.h.b16 %v5200
        %v5743 = vunpack.c.l.b16 %v5201
        %v5744 = vunpack.c.h.b16 %v5201
        %v5745 = vunpack.c.l.b16 %v5202
        %v5746 = vunpack.c.h.b16 %v5202
        %v5747 = vunpack.c.l.b16 %v5203
        %v5748 = vunpack.c.h.b16 %v5203
        %v5749 = vunpack.c.l.b16 %v5204
        %v5750 = vunpack.c.h.b16 %v5204
        %v5751 = vunpack.c.l.b16 %v5205
        %v5752 = vunpack.c.h.b16 %v5205
        %v5753 = vunpack.c.l.b16 %v5206
        %v5754 = vunpack.c.h.b16 %v5206
        %v5755 = vunpack.c.l.b16 %v5207
        %v5756 = vunpack.c.h.b16 %v5207
        %v5757 = vunpack.c.l.b16 %v5208
        %v5758 = vunpack.c.h.b16 %v5208
        %v5759 = vunpack.c.l.b16 %v5209
        %v5760 = vunpack.c.h.b16 %v5209
        %v5761 = vunpack.c.l.b16 %v5210
        %v5762 = vunpack.c.h.b16 %v5210
        %v5763 = vunpack.c.l.b16 %v5211
        %v5764 = vunpack.c.h.b16 %v5211
        %v5765 = vunpack.c.l.b16 %v5212
        %v5766 = vunpack.c.h.b16 %v5212
        %v5767 = vunpack.c.l.b16 %v5213
        %v5768 = vunpack.c.h.b16 %v5213
        %v5769 = vunpack.c.l.b16 %v5214
        %v5770 = vunpack.c.h.b16 %v5214
        %v5771 = vunpack.c.l.b16 %v5215
        %v5772 = vunpack.c.h.b16 %v5215
        %v5773 = vunpack.c.l.b16 %v5216
        %v5774 = vunpack.c.h.b16 %v5216
        %v5775 = vunpack.c.l.b16 %v5217
        %v5776 = vunpack.c.h.b16 %v5217
        %v5777 = vunpack.c.l.b16 %v5218
        %v5778 = vunpack.c.h.b16 %v5218
        %v5779 = vunpack.c.l.b16 %v5219
        %v5780 = vunpack.c.h.b16 %v5219
        %v5781 = vunpack.c.l.b16 %v5220
        %v5782 = vunpack.c.h.b16 %v5220
        %v5783 = vunpack.c.l.b16 %v5221
        %v5784 = vunpack.c.h.b16 %v5221
        %v5785 = vunpack.c.l.b16 %v5222
        %v5786 = vunpack.c.h.b16 %v5222
        %v5787 = vunpack.c.l.b16 %v5223
        %v5788 = vunpack.c.h.b16 %v5223
        %v5789 = vunpack.c.l.b16 %v5224
        %v5790 = vunpack.c.h.b16 %v5224
        %v5791 = vunpack.c.l.b16 %v5225
        %v5792 = vunpack.c.h.b16 %v5225
        %v5793 = vunpack.c.l.b16 %v5226
        %v5794 = vunpack.c.h.b16 %v5226
        %v5795 = vunpack.c.l.b16 %v5227
        %v5796 = vunpack.c.h.b16 %v5227
        %v5797 = vunpack.c.l.b16 %v5228
        %v5798 = vunpack.c.h.b16 %v5228
        %v5799 = vunpack.c.l.b16 %v5229
        %v5800 = vunpack.c.h.b16 %v5229
        %v5801 = vunpack.c.l.b16 %v5230
        %v5802 = vunpack.c.h.b16 %v5230
        %v5803 = vunpack.c.l.b16 %v5231
        %v5804 = vunpack.c.h.b16 %v5231
        %v5805 = vunpack.c.l.b16 %v5232
        %v5806 = vunpack.c.h.b16 %v5232
        %v5807 = vunpack.c.l.b16 %v5233
        %v5808 = vunpack.c.h.b16 %v5233
        %v5809 = vunpack.c.l.b16 %v5234
        %v5810 = vunpack.c.h.b16 %v5234
        %v5811 = vunpack.c.l.b16 %v5235
        %v5812 = vunpack.c.h.b16 %v5235
        %v5813 = vunpack.c.l.b16 %v5236
        %v5814 = vunpack.c.h.b16 %v5236
        %v5815 = vunpack.c.l.b16 %v5237
        %v5816 = vunpack.c.h.b16 %v5237
        %v5817 = vunpack.c.l.b16 %v5238
        %v5818 = vunpack.c.h.b16 %v5238
        %v5819 = vunpack.c.l.b16 %v5239
        %v5820 = vunpack.c.h.b16 %v5239
        %v5821 = vunpack.c.l.b16 %v5240
        %v5822 = vunpack.c.h.b16 %v5240
        %v5823 = vunpack.c.l.b16 %v5241
        %v5824 = vunpack.c.h.b16 %v5241
        %v5825 = vunpack.c.l.b16 %v5242
        %v5826 = vunpack.c.h.b16 %v5242
        %v5827 = vunpack.c.l.b16 %v5243
        %v5828 = vunpack.c.h.b16 %v5243
        %v5829 = vunpack.c.l.b16 %v5244
        %v5830 = vunpack.c.h.b16 %v5244
        %v5831 = vunpack.c.l.b16 %v5245
        %v5832 = vunpack.c.h.b16 %v5245
        %v5833 = vunpack.c.l.b16 %v5246
        %v5834 = vunpack.c.h.b16 %v5246
        %v5835 = vunpack.c.l.b16 %v5247
        %v5836 = vunpack.c.h.b16 %v5247
        %v5837 = vunpack.c.l.b16 %v5248
        %v5838 = vunpack.c.h.b16 %v5248
        %v5839 = vunpack.c.l.b16 %v5249
        %v5840 = vunpack.c.h.b16 %v5249
        %v5841 = vunpack.c.l.b16 %v5250
        %v5842 = vunpack.c.h.b16 %v5250
        %v5843 = vunpack.c.l.b16 %v5251
        %v5844 = vunpack.c.h.b16 %v5251
        %v5845 = vunpack.c.l.b16 %v5252
        %v5846 = vunpack.c.h.b16 %v5252
        %v5847 = vunpack.c.l.b16 %v5253
        %v5848 = vunpack.c.h.b16 %v5253
        %v5849 = vunpack.c.l.b16 %v5254
        %v5850 = vunpack.c.h.b16 %v5254
        %v5851 = vunpack.c.l.b16 %v5255
        %v5852 = vunpack.c.h.b16 %v5255
        %v5853 = vunpack.c.l.b16 %v5256
        %v5854 = vunpack.c.h.b16 %v5256
        %v5855 = vunpack.c.l.b16 %v5257
        %v5856 = vunpack.c.h.b16 %v5257
        %v5857 = vunpack.c.l.b16 %v5258
        %v5858 = vunpack.c.h.b16 %v5258
        %v5859 = vunpack.c.l.b16 %v5259
        %v5860 = vunpack.c.h.b16 %v5259
        %v5861 = vunpack.c.l.b16 %v5260
        %v5862 = vunpack.c.h.b16 %v5260
        %v5863 = vunpack.c.l.b16 %v5261
        %v5864 = vunpack.c.h.b16 %v5261
        %v5865 = vunpack.c.l.b16 %v5262
        %v5866 = vunpack.c.h.b16 %v5262
        %v5867 = vunpack.c.l.b16 %v5263
        %v5868 = vunpack.c.h.b16 %v5263
        %v5869 = vunpack.c.l.b16 %v5264
        %v5870 = vunpack.c.h.b16 %v5264
        %v5871 = vunpack.c.l.b16 %v5265
        %v5872 = vunpack.c.h.b16 %v5265
        %v5873 = vunpack.c.l.b16 %v5266
        %v5874 = vunpack.c.h.b16 %v5266
        %v5875 = vunpack.c.l.b16 %v5267
        %v5876 = vunpack.c.h.b16 %v5267
        %v5877 = vunpack.c.l.b16 %v5268
        %v5878 = vunpack.c.h.b16 %v5268
        %v5879 = vunpack.c.l.b16 %v5269
        %v5880 = vunpack.c.h.b16 %v5269
        %v5881 = vunpack.c.l.b16 %v5270
        %v5882 = vunpack.c.h.b16 %v5270
        %v5883 = vunpack.c.l.b16 %v5271
        %v5884 = vunpack.c.h.b16 %v5271
        %v5885 = vunpack.c.l.b16 %v5272
        %v5886 = vunpack.c.h.b16 %v5272
        %v5887 = vunpack.c.l.b16 %v5273
        %v5888 = vunpack.c.h.b16 %v5273
        %v5889 = vunpack.c.l.b16 %v5274
        %v5890 = vunpack.c.h.b16 %v5274
        %v5891 = vunpack.c.l.b16 %v5275
        %v5892 = vunpack.c.h.b16 %v5275
        %v5893 = vunpack.c.l.b16 %v5276
        %v5894 = vunpack.c.h.b16 %v5276
        %v5895 = vunpack.c.l.b16 %v5277
        %v5896 = vunpack.c.h.b16 %v5277
        %v5897 = vunpack.c.l.b16 %v5278
        %v5898 = vunpack.c.h.b16 %v5278
        %v5899 = vunpack.c.l.b16 %v5279
        %v5900 = vunpack.c.h.b16 %v5279
        %v5901 = vunpack.c.l.b16 %v5280
        %v5902 = vunpack.c.h.b16 %v5280
        %v5903 = vunpack.c.l.b16 %v5281
        %v5904 = vunpack.c.h.b16 %v5281
        %v5905 = vunpack.c.l.b16 %v5282
        %v5906 = vunpack.c.h.b16 %v5282
        %v5907 = vunpack.c.l.b16 %v5283
        %v5908 = vunpack.c.h.b16 %v5283
        %v5909 = vunpack.c.l.b16 %v5284
        %v5910 = vunpack.c.h.b16 %v5284
        %v5911 = vunpack.c.l.b16 %v5285
        %v5912 = vunpack.c.h.b16 %v5285
        %v5913 = vunpack.c.l.b16 %v5286
        %v5914 = vunpack.c.h.b16 %v5286
        %v5915 = vunpack.c.l.b16 %v5287
        %v5916 = vunpack.c.h.b16 %v5287
        %v5917 = vunpack.c.l.b16 %v5288
        %v5918 = vunpack.c.h.b16 %v5288
        %v5919 = vunpack.c.l.b16 %v5289
        %v5920 = vunpack.c.h.b16 %v5289
        %v5921 = vunpack.c.l.b16 %v5290
        %v5922 = vunpack.c.h.b16 %v5290
        %v5923 = vunpack.c.l.b16 %v5291
        %v5924 = vunpack.c.h.b16 %v5291
        %v5925 = vunpack.c.l.b16 %v5292
        %v5926 = vunpack.c.h.b16 %v5292
        %v5927 = vunpack.c.l.b16 %v5293
        %v5928 = vunpack.c.h.b16 %v5293
        %v5929 = vunpack.c.l.b16 %v5294
        %v5930 = vunpack.c.h.b16 %v5294
        %v5931 = vunpack.c.l.b16 %v5295
        %v5932 = vunpack.c.h.b16 %v5295
        %v5933 = vunpack.c.l.b16 %v5296
        %v5934 = vunpack.c.h.b16 %v5296
        %v5935 = vunpack.c.l.b16 %v5297
        %v5936 = vunpack.c.h.b16 %v5297
        %v5937 = vunpack.c.l.b16 %v5298
        %v5938 = vunpack.c.h.b16 %v5298
        %v5939 = vunpack.c.l.b16 %v5299
        %v5940 = vunpack.c.h.b16 %v5299
        %v5941 = vunpack.c.l.b16 %v5300
        %v5942 = vunpack.c.h.b16 %v5300
        %v5943 = vunpack.c.l.b16 %v5301
        %v5944 = vunpack.c.h.b16 %v5301
        %v5945 = vunpack.c.l.b16 %v5302
        %v5946 = vunpack.c.h.b16 %v5302
        %v5947 = vunpack.c.l.b16 %v5303
        %v5948 = vunpack.c.h.b16 %v5303
        %v5949 = vunpack.c.l.b16 %v5304
        %v5950 = vunpack.c.h.b16 %v5304
        %v5951 = vunpack.c.l.b16 %v5305
        %v5952 = vunpack.c.h.b16 %v5305
        %v5953 = vunpack.c.l.b16 %v5306
        %v5954 = vunpack.c.h.b16 %v5306
        %v5955 = vunpack.c.l.b16 %v5307
        %v5956 = vunpack.c.h.b16 %v5307
        %v5957 = vunpack.c.l.b16 %v5308
        %v5958 = vunpack.c.h.b16 %v5308
        %v5959 = vunpack.c.l.b16 %v5309
        %v5960 = vunpack.c.h.b16 %v5309
        %v5961 = vunpack.c.l.b16 %v5310
        %v5962 = vunpack.c.h.b16 %v5310
        %v5963 = vunpack.c.l.b16 %v5311
        %v5964 = vunpack.c.h.b16 %v5311
        %v5965 = vunpack.c.l.b16 %v5312
        %v5966 = vunpack.c.h.b16 %v5312
        %v5967 = vunpack.c.l.b16 %v5313
        %v5968 = vunpack.c.h.b16 %v5313
        %v5969 = vunpack.c.l.b16 %v5314
        %v5970 = vunpack.c.h.b16 %v5314
        %v5971 = vunpack.c.l.b16 %v5315
        %v5972 = vunpack.c.h.b16 %v5315
        %v5973 = vunpack.c.l.b16 %v5316
        %v5974 = vunpack.c.h.b16 %v5316
        %v5975 = vunpack.c.l.b16 %v5317
        %v5976 = vunpack.c.h.b16 %v5317
        %v5977 = vunpack.c.l.b16 %v5318
        %v5978 = vunpack.c.h.b16 %v5318
        %v5979 = vunpack.c.l.b16 %v5319
        %v5980 = vunpack.c.h.b16 %v5319
        %v5981 = vunpack.c.l.b16 %v5320
        %v5982 = vunpack.c.h.b16 %v5320
        %v5983 = vunpack.c.l.b16 %v5321
        %v5984 = vunpack.c.h.b16 %v5321
        %v5985 = vunpack.c.l.b16 %v5322
        %v5986 = vunpack.c.h.b16 %v5322
        %v5987 = vunpack.c.l.b16 %v5323
        %v5988 = vunpack.c.h.b16 %v5323
        %v5989 = vunpack.c.l.b16 %v5324
        %v5990 = vunpack.c.h.b16 %v5324
        %v5991 = vunpack.c.l.b16 %v5325
        %v5992 = vunpack.c.h.b16 %v5325
        %v5993 = vunpack.c.l.b16 %v5326
        %v5994 = vunpack.c.h.b16 %v5326
        %v5995 = vunpack.c.l.b16 %v5327
        %v5996 = vunpack.c.h.b16 %v5327
        %v5997 = vunpack.c.l.b16 %v5328
        %v5998 = vunpack.c.h.b16 %v5328
        %v5999 = vunpack.c.l.b16 %v5329
        %v6000 = vunpack.c.h.b16 %v5329
        %v6001 = vunpack.c.l.b16 %v5330
        %v6002 = vunpack.c.h.b16 %v5330
        %v6003 = vunpack.c.l.b16 %v5331
        %v6004 = vunpack.c.h.b16 %v5331
        %v6005 = vunpack.c.l.b16 %v5332
        %v6006 = vunpack.c.h.b16 %v5332
        %v6007 = vunpack.c.l.b16 %v5333
        %v6008 = vunpack.c.h.b16 %v5333
        %v6009 = vunpack.c.l.b16 %v5334
        %v6010 = vunpack.c.h.b16 %v5334
        %v6011 = vunpack.c.l.b16 %v5335
        %v6012 = vunpack.c.h.b16 %v5335
        %v6013 = vunpack.c.l.b16 %v5336
        %v6014 = vunpack.c.h.b16 %v5336
        %v6015 = vunpack.c.l.b16 %v5337
        %v6016 = vunpack.c.h.b16 %v5337
        %v6017 = vunpack.c.l.b16 %v5338
        %v6018 = vunpack.c.h.b16 %v5338
        %v6019 = vunpack.c.l.b16 %v5339
        %v6020 = vunpack.c.h.b16 %v5339
        %v6021 = vunpack.c.l.b16 %v5340
        %v6022 = vunpack.c.h.b16 %v5340
        %v6023 = vunpack.c.l.b16 %v5341
        %v6024 = vunpack.c.h.b16 %v5341
        %v6025 = vunpack.c.l.b16 %v5342
        %v6026 = vunpack.c.h.b16 %v5342
        %v6027 = vunpack.c.l.b16 %v5343
        %v6028 = vunpack.c.h.b16 %v5343
        %v6029 = vunpack.c.l.b16 %v5344
        %v6030 = vunpack.c.h.b16 %v5344
        %v6031 = vunpack.c.l.b16 %v5345
        %v6032 = vunpack.c.h.b16 %v5345
        %v6033 = vunpack.c.l.b16 %v5346
        %v6034 = vunpack.c.h.b16 %v5346
        %v6035 = vunpack.c.l.b16 %v5347
        %v6036 = vunpack.c.h.b16 %v5347
        %v6037 = vunpack.c.l.b16 %v5348
        %v6038 = vunpack.c.h.b16 %v5348
        %v6039 = vunpack.c.l.b16 %v5349
        %v6040 = vunpack.c.h.b16 %v5349
        %v6041 = vunpack.c.l.b16 %v5350
        %v6042 = vunpack.c.h.b16 %v5350
        %v6043 = vunpack.c.l.b16 %v5351
        %v6044 = vunpack.c.h.b16 %v5351
        %v6045 = vunpack.c.l.b16 %v5352
        %v6046 = vunpack.c.h.b16 %v5352
        %v6047 = vunpack.c.l.b16 %v5353
        %v6048 = vunpack.c.h.b16 %v5353
        %v6049 = vunpack.c.l.b16 %v5354
        %v6050 = vunpack.c.h.b16 %v5354
        %v6051 = vunpack.c.l.b16 %v5355
        %v6052 = vunpack.c.h.b16 %v5355
        %v6053 = vunpack.c.l.b16 %v5356
        %v6054 = vunpack.c.h.b16 %v5356
        %v6055 = vunpack.c.l.b16 %v5357
        %v6056 = vunpack.c.h.b16 %v5357
        %v6057 = vunpack.c.l.b16 %v5358
        %v6058 = vunpack.c.h.b16 %v5358
        %v6059 = vunpack.c.l.b16 %v5359
        %v6060 = vunpack.c.h.b16 %v5359
        %v6061 = vunpack.c.l.b16 %v5360
        %v6062 = vunpack.c.h.b16 %v5360
        %v6063 = vunpack.c.l.b16 %v5361
        %v6064 = vunpack.c.h.b16 %v5361
        %v6065 = vunpack.c.l.b16 %v5362
        %v6066 = vunpack.c.h.b16 %v5362
        %v6067 = vunpack.c.l.b16 %v5363
        %v6068 = vunpack.c.h.b16 %v5363
        %v6069 = vunpack.c.l.b16 %v5364
        %v6070 = vunpack.c.h.b16 %v5364
        %v6071 = vunpack.c.l.b16 %v5365
        %v6072 = vunpack.c.h.b16 %v5365
        %v6073 = vunpack.c.l.b16 %v5366
        %v6074 = vunpack.c.h.b16 %v5366
        %v6075 = vunpack.c.l.b16 %v5367
        %v6076 = vunpack.c.h.b16 %v5367
        %v6077 = vunpack.c.l.b16 %v5368
        %v6078 = vunpack.c.h.b16 %v5368
        %v6079 = vunpack.c.l.b16 %v5369
        %v6080 = vunpack.c.h.b16 %v5369
        %v6081 = vunpack.c.l.b16 %v5370
        %v6082 = vunpack.c.h.b16 %v5370
        %v6083 = vunpack.c.l.b16 %v5371
        %v6084 = vunpack.c.h.b16 %v5371
        %v6085 = vunpack.c.l.b16 %v5372
        %v6086 = vunpack.c.h.b16 %v5372
        %v6087 = vunpack.c.l.b16 %v5373
        %v6088 = vunpack.c.h.b16 %v5373
        %v6089 = vunpack.c.l.b16 %v5374
        %v6090 = vunpack.c.h.b16 %v5374
        %v6091 = vunpack.c.l.b16 %v5375
        %v6092 = vunpack.c.h.b16 %v5375
        %v6093 = vunpack.c.l.b16 %v5376
        %v6094 = vunpack.c.h.b16 %v5376
        %v6095 = vunpack.c.l.b16 %v5377
        %v6096 = vunpack.c.h.b16 %v5377
        %v6097 = vunpack.c.l.b16 %v5378
        %v6098 = vunpack.c.h.b16 %v5378
        %v6099 = vunpack.c.l.b16 %v5379
        %v6100 = vunpack.c.h.b16 %v5379
        %v6101 = vunpack.c.l.b16 %v5380
        %v6102 = vunpack.c.h.b16 %v5380
        %v6103 = vunpack.c.l.b16 %v5381
        %v6104 = vunpack.c.h.b16 %v5381
        %v6105 = vunpack.c.l.b16 %v5382
        %v6106 = vunpack.c.h.b16 %v5382
        %v6107 = vunpack.c.l.b16 %v5383
        %v6108 = vunpack.c.h.b16 %v5383
        %v6109 = vunpack.c.l.b16 %v5384
        %v6110 = vunpack.c.h.b16 %v5384
        %v6111 = vunpack.c.l.b16 %v5385
        %v6112 = vunpack.c.h.b16 %v5385
        %v6113 = vunpack.c.l.b16 %v5386
        %v6114 = vunpack.c.h.b16 %v5386
        %v6115 = vunpack.c.l.b16 %v5387
        %v6116 = vunpack.c.h.b16 %v5387
        %v6117 = vunpack.c.l.b16 %v5388
        %v6118 = vunpack.c.h.b16 %v5388
        %v6119 = vunpack.c.l.b16 %v5389
        %v6120 = vunpack.c.h.b16 %v5389
        %v6121 = vunpack.c.l.b16 %v5390
        %v6122 = vunpack.c.h.b16 %v5390
        %v6123 = vunpack.c.l.b16 %v5391
        %v6124 = vunpack.c.h.b16 %v5391
        %v6125 = vunpack.c.l.b16 %v5392
        %v6126 = vunpack.c.h.b16 %v5392
        %v6127 = vunpack.c.l.b16 %v5393
        %v6128 = vunpack.c.h.b16 %v5393
        %v6129 = vunpack.c.l.b16 %v5394
        %v6130 = vunpack.c.h.b16 %v5394
        %v6131 = vunpack.c.l.b16 %v5395
        %v6132 = vunpack.c.h.b16 %v5395
        %v6133 = vunpack.c.l.b16 %v5396
        %v6134 = vunpack.c.h.b16 %v5396
        %v6135 = vunpack.c.l.b16 %v5397
        %v6136 = vunpack.c.h.b16 %v5397
        %v6137 = vunpack.c.l.b16 %v5398
        %v6138 = vunpack.c.h.b16 %v5398
        %v6139 = vunpack.c.l.b16 %v5399
        %v6140 = vunpack.c.h.b16 %v5399
        %v6141 = vunpack.c.l.b16 %v5400
        %v6142 = vunpack.c.h.b16 %v5400
        %v6143 = vunpack.c.l.b16 %v5401
        %v6144 = vunpack.c.h.b16 %v5401
        %v6145 = vunpack.c.l.b16 %v5402
        %v6146 = vunpack.c.h.b16 %v5402
        %v6147 = vunpack.c.l.b16 %v5403
        %v6148 = vunpack.c.h.b16 %v5403
        %v6149 = vunpack.c.l.b16 %v5404
        %v6150 = vunpack.c.h.b16 %v5404
        %v6151 = vunpack.c.l.b16 %v5405
        %v6152 = vunpack.c.h.b16 %v5405
        %v6153 = vunpack.c.l.b16 %v5406
        %v6154 = vunpack.c.h.b16 %v5406
        %v6155 = vunpack.c.l.b16 %v5407
        %v6156 = vunpack.c.h.b16 %v5407
        %v6157 = vunpack.c.l.b16 %v5408
        %v6158 = vunpack.c.h.b16 %v5408
        %v6159 = vunpack.c.l.b16 %v5409
        %v6160 = vunpack.c.h.b16 %v5409
        %v6161 = vunpack.c.l.b16 %v5410
        %v6162 = vunpack.c.h.b16 %v5410
        %v6163 = vunpack.c.l.b16 %v5411
        %v6164 = vunpack.c.h.b16 %v5411
        %v6165 = vunpack.c.l.b16 %v5412
        %v6166 = vunpack.c.h.b16 %v5412
        %v6167 = vunpack.c.l.b16 %v5413
        %v6168 = vunpack.c.h.b16 %v5413
        %v6169 = vunpack.c.l.b16 %v5414
        %v6170 = vunpack.c.h.b16 %v5414
        %v6171 = vunpack.c.l.b16 %v5415
        %v6172 = vunpack.c.h.b16 %v5415
        %v6173 = vunpack.c.l.b16 %v5416
        %v6174 = vunpack.c.h.b16 %v5416
        %v6175 = vunpack.c.l.b16 %v5417
        %v6176 = vunpack.c.h.b16 %v5417
        %v6177 = vunpack.c.l.b16 %v5418
        %v6178 = vunpack.c.h.b16 %v5418
        %v6179 = vunpack.c.l.b16 %v5419
        %v6180 = vunpack.c.h.b16 %v5419
        %v6181 = vunpack.c.l.b16 %v5420
        %v6182 = vunpack.c.h.b16 %v5420
        %v6183 = vunpack.c.l.b16 %v5421
        %v6184 = vunpack.c.h.b16 %v5421
        %v6185 = vunpack.c.l.b16 %v5422
        %v6186 = vunpack.c.h.b16 %v5422
        %v6187 = vunpack.c.l.b16 %v5423
        %v6188 = vunpack.c.h.b16 %v5423
        %v6189 = vunpack.c.l.b16 %v5424
        %v6190 = vunpack.c.h.b16 %v5424
        %v6191 = vunpack.c.l.b16 %v5425
        %v6192 = vunpack.c.h.b16 %v5425
        %v6193 = vunpack.c.l.b16 %v5426
        %v6194 = vunpack.c.h.b16 %v5426
        %v6195 = vunpack.c.l.b16 %v5427
        %v6196 = vunpack.c.h.b16 %v5427
        %v6197 = vunpack.c.l.b16 %v5428
        %v6198 = vunpack.c.h.b16 %v5428
        %v6199 = vunpack.c.l.b16 %v5429
        %v6200 = vunpack.c.h.b16 %v5429
        %v6201 = vunpack.c.l.b16 %v5430
        %v6202 = vunpack.c.h.b16 %v5430
        %v6203 = vunpack.c.l.b16 %v5431
        %v6204 = vunpack.c.h.b16 %v5431
        %v6205 = vunpack.c.l.b16 %v5432
        %v6206 = vunpack.c.h.b16 %v5432
        %v6207 = vpack.c.b16 %v5697, %v5695
        %v6208 = vpack.c.b16 %v5698, %v5696
        %v6209 = vpack.c.b16 %v5701, %v5699
        %v6210 = vpack.c.b16 %v5702, %v5700
        %v6211 = vpack.c.b16 %v5705, %v5703
        %v6212 = vpack.c.b16 %v5706, %v5704
        %v6213 = vpack.c.b16 %v5709, %v5707
        %v6214 = vpack.c.b16 %v5710, %v5708
        %v6215 = vpack.c.b16 %v5713, %v5711
        %v6216 = vpack.c.b16 %v5714, %v5712
        %v6217 = vpack.c.b16 %v5717, %v5715
        %v6218 = vpack.c.b16 %v5718, %v5716
        %v6219 = vpack.c.b16 %v5721, %v5719
        %v6220 = vpack.c.b16 %v5722, %v5720
        %v6221 = vpack.c.b16 %v5725, %v5723
        %v6222 = vpack.c.b16 %v5726, %v5724
        %v6223 = vpack.c.b16 %v5729, %v5727
        %v6224 = vpack.c.b16 %v5730, %v5728
        %v6225 = vpack.c.b16 %v5733, %v5731
        %v6226 = vpack.c.b16 %v5734, %v5732
        %v6227 = vpack.c.b16 %v5737, %v5735
        %v6228 = vpack.c.b16 %v5738, %v5736
        %v6229 = vpack.c.b16 %v5741, %v5739
        %v6230 = vpack.c.b16 %v5742, %v5740
        %v6231 = vpack.c.b16 %v5745, %v5743
        %v6232 = vpack.c.b16 %v5746, %v5744
        %v6233 = vpack.c.b16 %v5749, %v5747
        %v6234 = vpack.c.b16 %v5750, %v5748
        %v6235 = vpack.c.b16 %v5753, %v5751
        %v6236 = vpack.c.b16 %v5754, %v5752
        %v6237 = vpack.c.b16 %v5757, %v5755
        %v6238 = vpack.c.b16 %v5758, %v5756
        %v6239 = vpack.c.b16 %v5761, %v5759
        %v6240 = vpack.c.b16 %v5762, %v5760
        %v6241 = vpack.c.b16 %v5765, %v5763
        %v6242 = vpack.c.b16 %v5766, %v5764
        %v6243 = vpack.c.b16 %v5769, %v5767
        %v6244 = vpack.c.b16 %v5770, %v5768
        %v6245 = vpack.c.b16 %v5773, %v5771
        %v6246 = vpack.c.b16 %v5774, %v5772
        %v6247 = vpack.c.b16 %v5777, %v5775
        %v6248 = vpack.c.b16 %v5778, %v5776
        %v6249 = vpack.c.b16 %v5781, %v5779
        %v6250 = vpack.c.b16 %v5782, %v5780
        %v6251 = vpack.c.b16 %v5785, %v5783
        %v6252 = vpack.c.b16 %v5786, %v5784
        %v6253 = vpack.c.b16 %v5789, %v5787
        %v6254 = vpack.c.b16 %v5790, %v5788
        %v6255 = vpack.c.b16 %v5793, %v5791
        %v6256 = vpack.c.b16 %v5794, %v5792
        %v6257 = vpack.c.b16 %v5797, %v5795
        %v6258 = vpack.c.b16 %v5798, %v5796
        %v6259 = vpack.c.b16 %v5801, %v5799
        %v6260 = vpack.c.b16 %v5802, %v5800
        %v6261 = vpack.c.b16 %v5805, %v5803
        %v6262 = vpack.c.b16 %v5806, %v5804
        %v6263 = vpack.c.b16 %v5809, %v5807
        %v6264 = vpack.c.b16 %v5810, %v5808
        %v6265 = vpack.c.b16 %v5813, %v5811
        %v6266 = vpack.c.b16 %v5814, %v5812
        %v6267 = vpack.c.b16 %v5817, %v5815
        %v6268 = vpack.c.b16 %v5818, %v5816
        %v6269 = vpack.c.b16 %v5821, %v5819
        %v6270 = vpack.c.b16 %v5822, %v5820
        %v6271 = vpack.c.b16 %v5825, %v5823
        %v6272 = vpack.c.b16 %v5826, %v5824
        %v6273 = vpack.c.b16 %v5829, %v5827
        %v6274 = vpack.c.b16 %v5830, %v5828
        %v6275 = vpack.c.b16 %v5833, %v5831
        %v6276 = vpack.c.b16 %v5834, %v5832
        %v6277 = vpack.c.b16 %v5837, %v5835
        %v6278 = vpack.c.b16 %v5838, %v5836
        %v6279 = vpack.c.b16 %v5841, %v5839
        %v6280 = vpack.c.b16 %v5842, %v5840
        %v6281 = vpack.c.b16 %v5845, %v5843
        %v6282 = vpack.c.b16 %v5846, %v5844
        %v6283 = vpack.c.b16 %v5849, %v5847
        %v6284 = vpack.c.b16 %v5850, %v5848
        %v6285 = vpack.c.b16 %v5853, %v5851
        %v6286 = vpack.c.b16 %v5854, %v5852
        %v6287 = vpack.c.b16 %v5857, %v5855
        %v6288 = vpack.c.b16 %v5858, %v5856
        %v6289 = vpack.c.b16 %v5861, %v5859
        %v6290 = vpack.c.b16 %v5862, %v5860
        %v6291 = vpack.c.b16 %v5865, %v5863
        %v6292 = vpack.c.b16 %v5866, %v5864
        %v6293 = vpack.c.b16 %v5869, %v5867
        %v6294 = vpack.c.b16 %v5870, %v5868
        %v6295 = vpack.c.b16 %v5873, %v5871
        %v6296 = vpack.c.b16 %v5874, %v5872
        %v6297 = vpack.c.b16 %v5877, %v5875
        %v6298 = vpack.c.b16 %v5878, %v5876
        %v6299 = vpack.c.b16 %v5881, %v5879
        %v6300 = vpack.c.b16 %v5882, %v5880
        %v6301 = vpack.c.b16 %v5885, %v5883
        %v6302 = vpack.c.b16 %v5886, %v5884
        %v6303 = vpack.c.b16 %v5889, %v5887
        %v6304 = vpack.c.b16 %v5890, %v5888
        %v6305 = vpack.c.b16 %v5893, %v5891
        %v6306 = vpack.c.b16 %v5894, %v5892
        %v6307 = vpack.c.b16 %v5897, %v5895
        %v6308 = vpack.c.b16 %v5898, %v5896
        %v6309 = vpack.c.b16 %v5901, %v5899
        %v6310 = vpack.c.b16 %v5902, %v5900
        %v6311 = vpack.c.b16 %v5905, %v5903
        %v6312 = vpack.c.b16 %v5906, %v5904
        %v6313 = vpack.c.b16 %v5909, %v5907
        %v6314 = vpack.c.b16 %v5910, %v5908
        %v6315 = vpack.c.b16 %v5913, %v5911
        %v6316 = vpack.c.b16 %v5914, %v5912
        %v6317 = vpack.c.b16 %v5917, %v5915
        %v6318 = vpack.c.b16 %v5918, %v5916
        %v6319 = vpack.c.b16 %v5921, %v5919
        %v6320 = vpack.c.b16 %v5922, %v5920
        %v6321 = vpack.c.b16 %v5925, %v5923
        %v6322 = vpack.c.b16 %v5926, %v5924
        %v6323 = vpack.c.b16 %v5929, %v5927
        %v6324 = vpack.c.b16 %v5930, %v5928
        %v6325 = vpack.c.b16 %v5933, %v5931
        %v6326 = vpack.c.b16 %v5934, %v5932
        %v6327 = vpack.c.b16 %v5937, %v5935
        %v6328 = vpack.c.b16 %v5938, %v5936
        %v6329 = vpack.c.b16 %v5941, %v5939
        %v6330 = vpack.c.b16 %v5942, %v5940
        %v6331 = vpack.c.b16 %v5945, %v5943
        %v6332 = vpack.c.b16 %v5946, %v5944
        %v6333 = vpack.c.b16 %v5949, %v5947
        %v6334 = vpack.c.b16 %v5950, %v5948
        %v6335 = vpack.c.b16 %v5953, %v5951
        %v6336 = vpack.c.b16 %v5954, %v5952
        %v6337 = vpack.c.b16 %v5957, %v5955
        %v6338 = vpack.c.b16 %v5958, %v5956
        %v6339 = vpack.c.b16 %v5961, %v5959
        %v6340 = vpack.c.b16 %v5962, %v5960
        %v6341 = vpack.c.b16 %v5965, %v5963
        %v6342 = vpack.c.b16 %v5966, %v5964
        %v6343 = vpack.c.b16 %v5969, %v5967
        %v6344 = vpack.c.b16 %v5970, %v5968
        %v6345 = vpack.c.b16 %v5973, %v5971
        %v6346 = vpack.c.b16 %v5974, %v5972
        %v6347 = vpack.c.b16 %v5977, %v5975
        %v6348 = vpack.c.b16 %v5978, %v5976
        %v6349 = vpack.c.b16 %v5981, %v5979
        %v6350 = vpack.c.b16 %v5982, %v5980
        %v6351 = vpack.c.b16 %v5985, %v5983
        %v6352 = vpack.c.b16 %v5986, %v5984
        %v6353 = vpack.c.b16 %v5989, %v5987
        %v6354 = vpack.c.b16 %v5990, %v5988
        %v6355 = vpack.c.b16 %v5993, %v5991
        %v6356 = vpack.c.b16 %v5994, %v5992
        %v6357 = vpack.c.b16 %v5997, %v5995
        %v6358 = vpack.c.b16 %v5998, %v5996
        %v6359 = vpack.c.b16 %v6001, %v5999
        %v6360 = vpack.c.b16 %v6002, %v6000
        %v6361 = vpack.c.b16 %v6005, %v6003
        %v6362 = vpack.c.b16 %v6006, %v6004
        %v6363 = vpack.c.b16 %v6009, %v6007
        %v6364 = vpack.c.b16 %v6010, %v6008
        %v6365 = vpack.c.b16 %v6013, %v6011
        %v6366 = vpack.c.b16 %v6014, %v6012
        %v6367 = vpack.c.b16 %v6017, %v6015
        %v6368 = vpack.c.b16 %v6018, %v6016
        %v6369 = vpack.c.b16 %v6021, %v6019
        %v6370 = vpack.c.b16 %v6022, %v6020
        %v6371 = vpack.c.b16 %v6025, %v6023
        %v6372 = vpack.c.b16 %v6026, %v6024
        %v6373 = vpack.c.b16 %v6029, %v6027
        %v6374 = vpack.c.b16 %v6030, %v6028
        %v6375 = vpack.c.b16 %v6033, %v6031
        %v6376 = vpack.c.b16 %v6034, %v6032
        %v6377 = vpack.c.b16 %v6037, %v6035
        %v6378 = vpack.c.b16 %v6038, %v6036
        %v6379 = vpack.c.b16 %v6041, %v6039
        %v6380 = vpack.c.b16 %v6042, %v6040
        %v6381 = vpack.c.b16 %v6045, %v6043
        %v6382 = vpack.c.b16 %v6046, %v6044
        %v6383 = vpack.c.b16 %v6049, %v6047
        %v6384 = vpack.c.b16 %v6050, %v6048
        %v6385 = vpack.c.b16 %v6053, %v6051
        %v6386 = vpack.c.b16 %v6054, %v6052
        %v6387 = vpack.c.b16 %v6057, %v6055
        %v6388 = vpack.c.b16 %v6058, %v6056
        %v6389 = vpack.c.b16 %v6061, %v6059
        %v6390 = vpack.c.b16 %v6062, %v6060
        %v6391 = vpack.c.b16 %v6065, %v6063
        %v6392 = vpack.c.b16 %v6066, %v6064
        %v6393 = vpack.c.b16 %v6069, %v6067
        %v6394 = vpack.c.b16 %v6070, %v6068
        %v6395 = vpack.c.b16 %v6073, %v6071
        %v6396 = vpack.c.b16 %v6074, %v6072
        %v6397 = vpack.c.b16 %v6077, %v6075
        %v6398 = vpack.c.b16 %v6078, %v6076
        %v6399 = vpack.c.b16 %v6081, %v6079
        %v6400 = vpack.c.b16 %v6082, %v6080
        %v6401 = vpack.c.b16 %v6085, %v6083
        %v6402 = vpack.c.b16 %v6086, %v6084
        %v6403 = vpack.c.b16 %v6089, %v6087
        %v6404 = vpack.c.b16 %v6090, %v6088
        %v6405 = vpack.c.b16 %v6093, %v6091
        %v6406 = vpack.c.b16 %v6094, %v6092
        %v6407 = vpack.c.b16 %v6097, %v6095
        %v6408 = vpack.c.b16 %v6098, %v6096
        %v6409 = vpack.c.b16 %v6101, %v6099
        %v6410 = vpack.c.b16 %v6102, %v6100
        %v6411 = vpack.c.b16 %v6105, %v6103
        %v6412 = vpack.c.b16 %v6106, %v6104
        %v6413 = vpack.c.b16 %v6109, %v6107
        %v6414 = vpack.c.b16 %v6110, %v6108
        %v6415 = vpack.c.b16 %v6113, %v6111
        %v6416 = vpack.c.b16 %v6114, %v6112
        %v6417 = vpack.c.b16 %v6117, %v6115
        %v6418 = vpack.c.b16 %v6118, %v6116
        %v6419 = vpack.c.b16 %v6121, %v6119
        %v6420 = vpack.c.b16 %v6122, %v6120
        %v6421 = vpack.c.b16 %v6125, %v6123
        %v6422 = vpack.c.b16 %v6126, %v6124
        %v6423 = vpack.c.b16 %v6129, %v6127
        %v6424 = vpack.c.b16 %v6130, %v6128
        %v6425 = vpack.c.b16 %v6133, %v6131
        %v6426 = vpack.c.b16 %v6134, %v6132
        %v6427 = vpack.c.b16 %v6137, %v6135
        %v6428 = vpack.c.b16 %v6138, %v6136
        %v6429 = vpack.c.b16 %v6141, %v6139
        %v6430 = vpack.c.b16 %v6142, %v6140
        %v6431 = vpack.c.b16 %v6145, %v6143
        %v6432 = vpack.c.b16 %v6146, %v6144
        %v6433 = vpack.c.b16 %v6149, %v6147
        %v6434 = vpack.c.b16 %v6150, %v6148
        %v6435 = vpack.c.b16 %v6153, %v6151
        %v6436 = vpack.c.b16 %v6154, %v6152
        %v6437 = vpack.c.b16 %v6157, %v6155
        %v6438 = vpack.c.b16 %v6158, %v6156
        %v6439 = vpack.c.b16 %v6161, %v6159
        %v6440 = vpack.c.b16 %v6162, %v6160
        %v6441 = vpack.c.b16 %v6165, %v6163
        %v6442 = vpack.c.b16 %v6166, %v6164
        %v6443 = vpack.c.b16 %v6169, %v6167
        %v6444 = vpack.c.b16 %v6170, %v6168
        %v6445 = vpack.c.b16 %v6173, %v6171
        %v6446 = vpack.c.b16 %v6174, %v6172
        %v6447 = vpack.c.b16 %v6177, %v6175
        %v6448 = vpack.c.b16 %v6178, %v6176
        %v6449 = vpack.c.b16 %v6181, %v6179
        %v6450 = vpack.c.b16 %v6182, %v6180
        %v6451 = vpack.c.b16 %v6185, %v6183
        %v6452 = vpack.c.b16 %v6186, %v6184
        %v6453 = vpack.c.b16 %v6189, %v6187
        %v6454 = vpack.c.b16 %v6190, %v6188
        %v6455 = vpack.c.b16 %v6193, %v6191
        %v6456 = vpack.c.b16 %v6194, %v6192
        %v6457 = vpack.c.b16 %v6197, %v6195
        %v6458 = vpack.c.b16 %v6198, %v6196
        %v6459 = vpack.c.b16 %v6201, %v6199
        %v6460 = vpack.c.b16 %v6202, %v6200
        %v6461 = vpack.c.b16 %v6205, %v6203
        %v6462 = vpack.c.b16 %v6206, %v6204
        %6719 = vmatpush.bf16.msra.mxu0 %v6221
        %6720 = vmatpush.bf16.msra.mxu0 %v6219
        %6721 = vmatpush.bf16.msra.mxu0 %v6217
        %6722 = vmatpush.bf16.msra.mxu0 %v6215
        %6723 = vmatpush.bf16.msra.mxu0 %v6213
        %6724 = vmatpush.bf16.msra.mxu0 %v6211
        %6725 = vmatpush.bf16.msra.mxu0 %v6209
        %6726 = vmatpush.bf16.msra.mxu0 %v6207
        %6727 = vmatmul.bf16.gmra.mxu0 %v5049
        %v6728 = vpop.f32.mrf.mxu0
        %v6729 = vadd.f32 %v5435, %v6728
        %v6730 = vpop.f32.mrf.mxu0
        %v6731 = vadd.f32 %v5435, %v6730
        %6732 = vmatmul.bf16.gmra.mxu0 %v5065
        %v6733 = vpop.f32.mrf.mxu0
        %v6734 = vadd.f32 %v5435, %v6733
        %v6735 = vpop.f32.mrf.mxu0
        %v6736 = vadd.f32 %v5435, %v6735
        %6737 = vmatmul.bf16.gmra.mxu0 %v5081
        %v6738 = vpop.f32.mrf.mxu0
        %v6739 = vadd.f32 %v5435, %v6738
        %v6740 = vpop.f32.mrf.mxu0
        %v6741 = vadd.f32 %v5435, %v6740
        %6742 = vmatmul.bf16.gmra.mxu0 %v5097
        %v6743 = vpop.f32.mrf.mxu0
        %v6744 = vadd.f32 %v5435, %v6743
        %v6745 = vpop.f32.mrf.mxu0
        %v6746 = vadd.f32 %v5435, %v6745
        %6747 = vmatmul.bf16.gmra.mxu0 %v5113
        %v6748 = vpop.f32.mrf.mxu0
        %v6749 = vadd.f32 %v5435, %v6748
        %v6750 = vpop.f32.mrf.mxu0
        %v6751 = vadd.f32 %v5435, %v6750
        %6752 = vmatmul.bf16.gmra.mxu0 %v5129
        %v6753 = vpop.f32.mrf.mxu0
        %v6754 = vadd.f32 %v5435, %v6753
        %v6755 = vpop.f32.mrf.mxu0
        %v6756 = vadd.f32 %v5435, %v6755
        %6757 = vmatmul.bf16.gmra.mxu0 %v5145
        %v6758 = vpop.f32.mrf.mxu0
        %v6759 = vadd.f32 %v5435, %v6758
        %v6760 = vpop.f32.mrf.mxu0
        %v6761 = vadd.f32 %v5435, %v6760
        %6762 = vmatmul.bf16.gmra.mxu0 %v5161
        %v6763 = vpop.f32.mrf.mxu0
        %v6764 = vadd.f32 %v5435, %v6763
        %v6765 = vpop.f32.mrf.mxu0
        %v6766 = vadd.f32 %v5435, %v6765
        %6767 = vdwg.mxu0
        %6768 = vmatpush.bf16.msra.mxu0 %v6237
        %6769 = vmatpush.bf16.msra.mxu0 %v6235
        %6770 = vmatpush.bf16.msra.mxu0 %v6233
        %6771 = vmatpush.bf16.msra.mxu0 %v6231
        %6772 = vmatpush.bf16.msra.mxu0 %v6229
        %6773 = vmatpush.bf16.msra.mxu0 %v6227
        %6774 = vmatpush.bf16.msra.mxu0 %v6225
        %6775 = vmatpush.bf16.msra.mxu0 %v6223
        %6776 = vmatmul.bf16.gmra.mxu0 %v5050
        %v6777 = vpop.f32.mrf.mxu0
        %v6778 = vadd.f32 %v6729, %v6777
        %v6779 = vpop.f32.mrf.mxu0
        %v6780 = vadd.f32 %v6731, %v6779
        %6781 = vmatmul.bf16.gmra.mxu0 %v5066
        %v6782 = vpop.f32.mrf.mxu0
        %v6783 = vadd.f32 %v6734, %v6782
        %v6784 = vpop.f32.mrf.mxu0
        %v6785 = vadd.f32 %v6736, %v6784
        %6786 = vmatmul.bf16.gmra.mxu0 %v5082
        %v6787 = vpop.f32.mrf.mxu0
        %v6788 = vadd.f32 %v6739, %v6787
        %v6789 = vpop.f32.mrf.mxu0
        %v6790 = vadd.f32 %v6741, %v6789
        %6791 = vmatmul.bf16.gmra.mxu0 %v5098
        %v6792 = vpop.f32.mrf.mxu0
        %v6793 = vadd.f32 %v6744, %v6792
        %v6794 = vpop.f32.mrf.mxu0
        %v6795 = vadd.f32 %v6746, %v6794
        %6796 = vmatmul.bf16.gmra.mxu0 %v5114
        %v6797 = vpop.f32.mrf.mxu0
        %v6798 = vadd.f32 %v6749, %v6797
        %v6799 = vpop.f32.mrf.mxu0
        %v6800 = vadd.f32 %v6751, %v6799
        %6801 = vmatmul.bf16.gmra.mxu0 %v5130
        %v6802 = vpop.f32.mrf.mxu0
        %v6803 = vadd.f32 %v6754, %v6802
        %v6804 = vpop.f32.mrf.mxu0
        %v6805 = vadd.f32 %v6756, %v6804
        %6806 = vmatmul.bf16.gmra.mxu0 %v5146
        %v6807 = vpop.f32.mrf.mxu0
        %v6808 = vadd.f32 %v6759, %v6807
        %v6809 = vpop.f32.mrf.mxu0
        %v6810 = vadd.f32 %v6761, %v6809
        %6811 = vmatmul.bf16.gmra.mxu0 %v5162
        %v6812 = vpop.f32.mrf.mxu0
        %v6813 = vadd.f32 %v6764, %v6812
        %v6814 = vpop.f32.mrf.mxu0
        %v6815 = vadd.f32 %v6766, %v6814
        %6816 = vdwg.mxu0
        %6817 = vmatpush.bf16.msra.mxu0 %v6253
        %6818 = vmatpush.bf16.msra.mxu0 %v6251
        %6819 = vmatpush.bf16.msra.mxu0 %v6249
        %6820 = vmatpush.bf16.msra.mxu0 %v6247
        %6821 = vmatpush.bf16.msra.mxu0 %v6245
        %6822 = vmatpush.bf16.msra.mxu0 %v6243
        %6823 = vmatpush.bf16.msra.mxu0 %v6241
        %6824 = vmatpush.bf16.msra.mxu0 %v6239
        %6825 = vmatmul.bf16.gmra.mxu0 %v5051
        %v6826 = vpop.f32.mrf.mxu0
        %v6827 = vadd.f32 %v6778, %v6826
        %v6828 = vpop.f32.mrf.mxu0
        %v6829 = vadd.f32 %v6780, %v6828
        %6830 = vmatmul.bf16.gmra.mxu0 %v5067
        %v6831 = vpop.f32.mrf.mxu0
        %v6832 = vadd.f32 %v6783, %v6831
        %v6833 = vpop.f32.mrf.mxu0
        %v6834 = vadd.f32 %v6785, %v6833
        %6835 = vmatmul.bf16.gmra.mxu0 %v5083
        %v6836 = vpop.f32.mrf.mxu0
        %v6837 = vadd.f32 %v6788, %v6836
        %v6838 = vpop.f32.mrf.mxu0
        %v6839 = vadd.f32 %v6790, %v6838
        %6840 = vmatmul.bf16.gmra.mxu0 %v5099
        %v6841 = vpop.f32.mrf.mxu0
        %v6842 = vadd.f32 %v6793, %v6841
        %v6843 = vpop.f32.mrf.mxu0
        %v6844 = vadd.f32 %v6795, %v6843
        %6845 = vmatmul.bf16.gmra.mxu0 %v5115
        %v6846 = vpop.f32.mrf.mxu0
        %v6847 = vadd.f32 %v6798, %v6846
        %v6848 = vpop.f32.mrf.mxu0
        %v6849 = vadd.f32 %v6800, %v6848
        %6850 = vmatmul.bf16.gmra.mxu0 %v5131
        %v6851 = vpop.f32.mrf.mxu0
        %v6852 = vadd.f32 %v6803, %v6851
        %v6853 = vpop.f32.mrf.mxu0
        %v6854 = vadd.f32 %v6805, %v6853
        %6855 = vmatmul.bf16.gmra.mxu0 %v5147
        %v6856 = vpop.f32.mrf.mxu0
        %v6857 = vadd.f32 %v6808, %v6856
        %v6858 = vpop.f32.mrf.mxu0
        %v6859 = vadd.f32 %v6810, %v6858
        %6860 = vmatmul.bf16.gmra.mxu0 %v5163
        %v6861 = vpop.f32.mrf.mxu0
        %v6862 = vadd.f32 %v6813, %v6861
        %v6863 = vpop.f32.mrf.mxu0
        %v6864 = vadd.f32 %v6815, %v6863
        %6865 = vdwg.mxu0
        %6866 = vmatpush.bf16.msra.mxu0 %v6269
        %6867 = vmatpush.bf16.msra.mxu0 %v6267
        %6868 = vmatpush.bf16.msra.mxu0 %v6265
        %6869 = vmatpush.bf16.msra.mxu0 %v6263
        %6870 = vmatpush.bf16.msra.mxu0 %v6261
        %6871 = vmatpush.bf16.msra.mxu0 %v6259
        %6872 = vmatpush.bf16.msra.mxu0 %v6257
        %6873 = vmatpush.bf16.msra.mxu0 %v6255
        %6874 = vmatmul.bf16.gmra.mxu0 %v5052
        %v6875 = vpop.f32.mrf.mxu0
        %v6876 = vadd.f32 %v6827, %v6875
        %v6877 = vpop.f32.mrf.mxu0
        %v6878 = vadd.f32 %v6829, %v6877
        %6879 = vmatmul.bf16.gmra.mxu0 %v5068
        %v6880 = vpop.f32.mrf.mxu0
        %v6881 = vadd.f32 %v6832, %v6880
        %v6882 = vpop.f32.mrf.mxu0
        %v6883 = vadd.f32 %v6834, %v6882
        %6884 = vmatmul.bf16.gmra.mxu0 %v5084
        %v6885 = vpop.f32.mrf.mxu0
        %v6886 = vadd.f32 %v6837, %v6885
        %v6887 = vpop.f32.mrf.mxu0
        %v6888 = vadd.f32 %v6839, %v6887
        %6889 = vmatmul.bf16.gmra.mxu0 %v5100
        %v6890 = vpop.f32.mrf.mxu0
        %v6891 = vadd.f32 %v6842, %v6890
        %v6892 = vpop.f32.mrf.mxu0
        %v6893 = vadd.f32 %v6844, %v6892
        %6894 = vmatmul.bf16.gmra.mxu0 %v5116
        %v6895 = vpop.f32.mrf.mxu0
        %v6896 = vadd.f32 %v6847, %v6895
        %v6897 = vpop.f32.mrf.mxu0
        %v6898 = vadd.f32 %v6849, %v6897
        %6899 = vmatmul.bf16.gmra.mxu0 %v5132
        %v6900 = vpop.f32.mrf.mxu0
        %v6901 = vadd.f32 %v6852, %v6900
        %v6902 = vpop.f32.mrf.mxu0
        %v6903 = vadd.f32 %v6854, %v6902
        %6904 = vmatmul.bf16.gmra.mxu0 %v5148
        %v6905 = vpop.f32.mrf.mxu0
        %v6906 = vadd.f32 %v6857, %v6905
        %v6907 = vpop.f32.mrf.mxu0
        %v6908 = vadd.f32 %v6859, %v6907
        %6909 = vmatmul.bf16.gmra.mxu0 %v5164
        %v6910 = vpop.f32.mrf.mxu0
        %v6911 = vadd.f32 %v6862, %v6910
        %v6912 = vpop.f32.mrf.mxu0
        %v6913 = vadd.f32 %v6864, %v6912
        %6914 = vdwg.mxu0
        %6915 = vmatpush.bf16.msra.mxu0 %v6285
        %6916 = vmatpush.bf16.msra.mxu0 %v6283
        %6917 = vmatpush.bf16.msra.mxu0 %v6281
        %6918 = vmatpush.bf16.msra.mxu0 %v6279
        %6919 = vmatpush.bf16.msra.mxu0 %v6277
        %6920 = vmatpush.bf16.msra.mxu0 %v6275
        %6921 = vmatpush.bf16.msra.mxu0 %v6273
        %6922 = vmatpush.bf16.msra.mxu0 %v6271
        %6923 = vmatmul.bf16.gmra.mxu0 %v5053
        %v6924 = vpop.f32.mrf.mxu0
        %v6925 = vadd.f32 %v6876, %v6924
        %v6926 = vpop.f32.mrf.mxu0
        %v6927 = vadd.f32 %v6878, %v6926
        %6928 = vmatmul.bf16.gmra.mxu0 %v5069
        %v6929 = vpop.f32.mrf.mxu0
        %v6930 = vadd.f32 %v6881, %v6929
        %v6931 = vpop.f32.mrf.mxu0
        %v6932 = vadd.f32 %v6883, %v6931
        %6933 = vmatmul.bf16.gmra.mxu0 %v5085
        %v6934 = vpop.f32.mrf.mxu0
        %v6935 = vadd.f32 %v6886, %v6934
        %v6936 = vpop.f32.mrf.mxu0
        %v6937 = vadd.f32 %v6888, %v6936
        %6938 = vmatmul.bf16.gmra.mxu0 %v5101
        %v6939 = vpop.f32.mrf.mxu0
        %v6940 = vadd.f32 %v6891, %v6939
        %v6941 = vpop.f32.mrf.mxu0
        %v6942 = vadd.f32 %v6893, %v6941
        %6943 = vmatmul.bf16.gmra.mxu0 %v5117
        %v6944 = vpop.f32.mrf.mxu0
        %v6945 = vadd.f32 %v6896, %v6944
        %v6946 = vpop.f32.mrf.mxu0
        %v6947 = vadd.f32 %v6898, %v6946
        %6948 = vmatmul.bf16.gmra.mxu0 %v5133
        %v6949 = vpop.f32.mrf.mxu0
        %v6950 = vadd.f32 %v6901, %v6949
        %v6951 = vpop.f32.mrf.mxu0
        %v6952 = vadd.f32 %v6903, %v6951
        %6953 = vmatmul.bf16.gmra.mxu0 %v5149
        %v6954 = vpop.f32.mrf.mxu0
        %v6955 = vadd.f32 %v6906, %v6954
        %v6956 = vpop.f32.mrf.mxu0
        %v6957 = vadd.f32 %v6908, %v6956
        %6958 = vmatmul.bf16.gmra.mxu0 %v5165
        %v6959 = vpop.f32.mrf.mxu0
        %v6960 = vadd.f32 %v6911, %v6959
        %v6961 = vpop.f32.mrf.mxu0
        %v6962 = vadd.f32 %v6913, %v6961
        %6963 = vdwg.mxu0
        %6964 = vmatpush.bf16.msra.mxu0 %v6301
        %6965 = vmatpush.bf16.msra.mxu0 %v6299
        %6966 = vmatpush.bf16.msra.mxu0 %v6297
        %6967 = vmatpush.bf16.msra.mxu0 %v6295
        %6968 = vmatpush.bf16.msra.mxu0 %v6293
        %6969 = vmatpush.bf16.msra.mxu0 %v6291
        %6970 = vmatpush.bf16.msra.mxu0 %v6289
        %6971 = vmatpush.bf16.msra.mxu0 %v6287
        %6972 = vmatmul.bf16.gmra.mxu0 %v5054
        %v6973 = vpop.f32.mrf.mxu0
        %v6974 = vadd.f32 %v6925, %v6973
        %v6975 = vpop.f32.mrf.mxu0
        %v6976 = vadd.f32 %v6927, %v6975
        %6977 = vmatmul.bf16.gmra.mxu0 %v5070
        %v6978 = vpop.f32.mrf.mxu0
        %v6979 = vadd.f32 %v6930, %v6978
        %v6980 = vpop.f32.mrf.mxu0
        %v6981 = vadd.f32 %v6932, %v6980
        %6982 = vmatmul.bf16.gmra.mxu0 %v5086
        %v6983 = vpop.f32.mrf.mxu0
        %v6984 = vadd.f32 %v6935, %v6983
        %v6985 = vpop.f32.mrf.mxu0
        %v6986 = vadd.f32 %v6937, %v6985
        %6987 = vmatmul.bf16.gmra.mxu0 %v5102
        %v6988 = vpop.f32.mrf.mxu0
        %v6989 = vadd.f32 %v6940, %v6988
        %v6990 = vpop.f32.mrf.mxu0
        %v6991 = vadd.f32 %v6942, %v6990
        %6992 = vmatmul.bf16.gmra.mxu0 %v5118
        %v6993 = vpop.f32.mrf.mxu0
        %v6994 = vadd.f32 %v6945, %v6993
        %v6995 = vpop.f32.mrf.mxu0
        %v6996 = vadd.f32 %v6947, %v6995
        %6997 = vmatmul.bf16.gmra.mxu0 %v5134
        %v6998 = vpop.f32.mrf.mxu0
        %v6999 = vadd.f32 %v6950, %v6998
        %v7000 = vpop.f32.mrf.mxu0
        %v7001 = vadd.f32 %v6952, %v7000
        %7002 = vmatmul.bf16.gmra.mxu0 %v5150
        %v7003 = vpop.f32.mrf.mxu0
        %v7004 = vadd.f32 %v6955, %v7003
        %v7005 = vpop.f32.mrf.mxu0
        %v7006 = vadd.f32 %v6957, %v7005
        %7007 = vmatmul.bf16.gmra.mxu0 %v5166
        %v7008 = vpop.f32.mrf.mxu0
        %v7009 = vadd.f32 %v6960, %v7008
        %v7010 = vpop.f32.mrf.mxu0
        %v7011 = vadd.f32 %v6962, %v7010
        %7012 = vdwg.mxu0
        %7013 = vmatpush.bf16.msra.mxu0 %v6317
        %7014 = vmatpush.bf16.msra.mxu0 %v6315
        %7015 = vmatpush.bf16.msra.mxu0 %v6313
        %7016 = vmatpush.bf16.msra.mxu0 %v6311
        %7017 = vmatpush.bf16.msra.mxu0 %v6309
        %7018 = vmatpush.bf16.msra.mxu0 %v6307
        %7019 = vmatpush.bf16.msra.mxu0 %v6305
        %7020 = vmatpush.bf16.msra.mxu0 %v6303
        %7021 = vmatmul.bf16.gmra.mxu0 %v5055
        %v7022 = vpop.f32.mrf.mxu0
        %v7023 = vadd.f32 %v6974, %v7022
        %v7024 = vpop.f32.mrf.mxu0
        %v7025 = vadd.f32 %v6976, %v7024
        %7026 = vmatmul.bf16.gmra.mxu0 %v5071
        %v7027 = vpop.f32.mrf.mxu0
        %v7028 = vadd.f32 %v6979, %v7027
        %v7029 = vpop.f32.mrf.mxu0
        %v7030 = vadd.f32 %v6981, %v7029
        %7031 = vmatmul.bf16.gmra.mxu0 %v5087
        %v7032 = vpop.f32.mrf.mxu0
        %v7033 = vadd.f32 %v6984, %v7032
        %v7034 = vpop.f32.mrf.mxu0
        %v7035 = vadd.f32 %v6986, %v7034
        %7036 = vmatmul.bf16.gmra.mxu0 %v5103
        %v7037 = vpop.f32.mrf.mxu0
        %v7038 = vadd.f32 %v6989, %v7037
        %v7039 = vpop.f32.mrf.mxu0
        %v7040 = vadd.f32 %v6991, %v7039
        %7041 = vmatmul.bf16.gmra.mxu0 %v5119
        %v7042 = vpop.f32.mrf.mxu0
        %v7043 = vadd.f32 %v6994, %v7042
        %v7044 = vpop.f32.mrf.mxu0
        %v7045 = vadd.f32 %v6996, %v7044
        %7046 = vmatmul.bf16.gmra.mxu0 %v5135
        %v7047 = vpop.f32.mrf.mxu0
        %v7048 = vadd.f32 %v6999, %v7047
        %v7049 = vpop.f32.mrf.mxu0
        %v7050 = vadd.f32 %v7001, %v7049
        %7051 = vmatmul.bf16.gmra.mxu0 %v5151
        %v7052 = vpop.f32.mrf.mxu0
        %v7053 = vadd.f32 %v7004, %v7052
        %v7054 = vpop.f32.mrf.mxu0
        %v7055 = vadd.f32 %v7006, %v7054
        %7056 = vmatmul.bf16.gmra.mxu0 %v5167
        %v7057 = vpop.f32.mrf.mxu0
        %v7058 = vadd.f32 %v7009, %v7057
        %v7059 = vpop.f32.mrf.mxu0
        %v7060 = vadd.f32 %v7011, %v7059
        %7061 = vdwg.mxu0
        %7062 = vmatpush.bf16.msra.mxu0 %v6333
        %7063 = vmatpush.bf16.msra.mxu0 %v6331
        %7064 = vmatpush.bf16.msra.mxu0 %v6329
        %7065 = vmatpush.bf16.msra.mxu0 %v6327
        %7066 = vmatpush.bf16.msra.mxu0 %v6325
        %7067 = vmatpush.bf16.msra.mxu0 %v6323
        %7068 = vmatpush.bf16.msra.mxu0 %v6321
        %7069 = vmatpush.bf16.msra.mxu0 %v6319
        %7070 = vmatmul.bf16.gmra.mxu0 %v5056
        %v7071 = vpop.f32.mrf.mxu0
        %v7072 = vadd.f32 %v7023, %v7071
        %v7073 = vpop.f32.mrf.mxu0
        %v7074 = vadd.f32 %v7025, %v7073
        %7075 = vmatmul.bf16.gmra.mxu0 %v5072
        %v7076 = vpop.f32.mrf.mxu0
        %v7077 = vadd.f32 %v7028, %v7076
        %v7078 = vpop.f32.mrf.mxu0
        %v7079 = vadd.f32 %v7030, %v7078
        %7080 = vmatmul.bf16.gmra.mxu0 %v5088
        %v7081 = vpop.f32.mrf.mxu0
        %v7082 = vadd.f32 %v7033, %v7081
        %v7083 = vpop.f32.mrf.mxu0
        %v7084 = vadd.f32 %v7035, %v7083
        %7085 = vmatmul.bf16.gmra.mxu0 %v5104
        %v7086 = vpop.f32.mrf.mxu0
        %v7087 = vadd.f32 %v7038, %v7086
        %v7088 = vpop.f32.mrf.mxu0
        %v7089 = vadd.f32 %v7040, %v7088
        %7090 = vmatmul.bf16.gmra.mxu0 %v5120
        %v7091 = vpop.f32.mrf.mxu0
        %v7092 = vadd.f32 %v7043, %v7091
        %v7093 = vpop.f32.mrf.mxu0
        %v7094 = vadd.f32 %v7045, %v7093
        %7095 = vmatmul.bf16.gmra.mxu0 %v5136
        %v7096 = vpop.f32.mrf.mxu0
        %v7097 = vadd.f32 %v7048, %v7096
        %v7098 = vpop.f32.mrf.mxu0
        %v7099 = vadd.f32 %v7050, %v7098
        %7100 = vmatmul.bf16.gmra.mxu0 %v5152
        %v7101 = vpop.f32.mrf.mxu0
        %v7102 = vadd.f32 %v7053, %v7101
        %v7103 = vpop.f32.mrf.mxu0
        %v7104 = vadd.f32 %v7055, %v7103
        %7105 = vmatmul.bf16.gmra.mxu0 %v5168
        %v7106 = vpop.f32.mrf.mxu0
        %v7107 = vadd.f32 %v7058, %v7106
        %v7108 = vpop.f32.mrf.mxu0
        %v7109 = vadd.f32 %v7060, %v7108
        %7110 = vdwg.mxu0
        %7111 = vmatpush.bf16.msra.mxu0 %v6349
        %7112 = vmatpush.bf16.msra.mxu0 %v6347
        %7113 = vmatpush.bf16.msra.mxu0 %v6345
        %7114 = vmatpush.bf16.msra.mxu0 %v6343
        %7115 = vmatpush.bf16.msra.mxu0 %v6341
        %7116 = vmatpush.bf16.msra.mxu0 %v6339
        %7117 = vmatpush.bf16.msra.mxu0 %v6337
        %7118 = vmatpush.bf16.msra.mxu0 %v6335
        %7119 = vmatmul.bf16.gmra.mxu0 %v5057
        %v7120 = vpop.f32.mrf.mxu0
        %v7121 = vadd.f32 %v7072, %v7120
        %v7122 = vpop.f32.mrf.mxu0
        %v7123 = vadd.f32 %v7074, %v7122
        %7124 = vmatmul.bf16.gmra.mxu0 %v5073
        %v7125 = vpop.f32.mrf.mxu0
        %v7126 = vadd.f32 %v7077, %v7125
        %v7127 = vpop.f32.mrf.mxu0
        %v7128 = vadd.f32 %v7079, %v7127
        %7129 = vmatmul.bf16.gmra.mxu0 %v5089
        %v7130 = vpop.f32.mrf.mxu0
        %v7131 = vadd.f32 %v7082, %v7130
        %v7132 = vpop.f32.mrf.mxu0
        %v7133 = vadd.f32 %v7084, %v7132
        %7134 = vmatmul.bf16.gmra.mxu0 %v5105
        %v7135 = vpop.f32.mrf.mxu0
        %v7136 = vadd.f32 %v7087, %v7135
        %v7137 = vpop.f32.mrf.mxu0
        %v7138 = vadd.f32 %v7089, %v7137
        %7139 = vmatmul.bf16.gmra.mxu0 %v5121
        %v7140 = vpop.f32.mrf.mxu0
        %v7141 = vadd.f32 %v7092, %v7140
        %v7142 = vpop.f32.mrf.mxu0
        %v7143 = vadd.f32 %v7094, %v7142
        %7144 = vmatmul.bf16.gmra.mxu0 %v5137
        %v7145 = vpop.f32.mrf.mxu0
        %v7146 = vadd.f32 %v7097, %v7145
        %v7147 = vpop.f32.mrf.mxu0
        %v7148 = vadd.f32 %v7099, %v7147
        %7149 = vmatmul.bf16.gmra.mxu0 %v5153
        %v7150 = vpop.f32.mrf.mxu0
        %v7151 = vadd.f32 %v7102, %v7150
        %v7152 = vpop.f32.mrf.mxu0
        %v7153 = vadd.f32 %v7104, %v7152
        %7154 = vmatmul.bf16.gmra.mxu0 %v5169
        %v7155 = vpop.f32.mrf.mxu0
        %v7156 = vadd.f32 %v7107, %v7155
        %v7157 = vpop.f32.mrf.mxu0
        %v7158 = vadd.f32 %v7109, %v7157
        %7159 = vdwg.mxu0
        %7160 = vmatpush.bf16.msra.mxu0 %v6365
        %7161 = vmatpush.bf16.msra.mxu0 %v6363
        %7162 = vmatpush.bf16.msra.mxu0 %v6361
        %7163 = vmatpush.bf16.msra.mxu0 %v6359
        %7164 = vmatpush.bf16.msra.mxu0 %v6357
        %7165 = vmatpush.bf16.msra.mxu0 %v6355
        %7166 = vmatpush.bf16.msra.mxu0 %v6353
        %7167 = vmatpush.bf16.msra.mxu0 %v6351
        %7168 = vmatmul.bf16.gmra.mxu0 %v5058
        %v7169 = vpop.f32.mrf.mxu0
        %v7170 = vadd.f32 %v7121, %v7169
        %v7171 = vpop.f32.mrf.mxu0
        %v7172 = vadd.f32 %v7123, %v7171
        %7173 = vmatmul.bf16.gmra.mxu0 %v5074
        %v7174 = vpop.f32.mrf.mxu0
        %v7175 = vadd.f32 %v7126, %v7174
        %v7176 = vpop.f32.mrf.mxu0
        %v7177 = vadd.f32 %v7128, %v7176
        %7178 = vmatmul.bf16.gmra.mxu0 %v5090
        %v7179 = vpop.f32.mrf.mxu0
        %v7180 = vadd.f32 %v7131, %v7179
        %v7181 = vpop.f32.mrf.mxu0
        %v7182 = vadd.f32 %v7133, %v7181
        %7183 = vmatmul.bf16.gmra.mxu0 %v5106
        %v7184 = vpop.f32.mrf.mxu0
        %v7185 = vadd.f32 %v7136, %v7184
        %v7186 = vpop.f32.mrf.mxu0
        %v7187 = vadd.f32 %v7138, %v7186
        %7188 = vmatmul.bf16.gmra.mxu0 %v5122
        %v7189 = vpop.f32.mrf.mxu0
        %v7190 = vadd.f32 %v7141, %v7189
        %v7191 = vpop.f32.mrf.mxu0
        %v7192 = vadd.f32 %v7143, %v7191
        %7193 = vmatmul.bf16.gmra.mxu0 %v5138
        %v7194 = vpop.f32.mrf.mxu0
        %v7195 = vadd.f32 %v7146, %v7194
        %v7196 = vpop.f32.mrf.mxu0
        %v7197 = vadd.f32 %v7148, %v7196
        %7198 = vmatmul.bf16.gmra.mxu0 %v5154
        %v7199 = vpop.f32.mrf.mxu0
        %v7200 = vadd.f32 %v7151, %v7199
        %v7201 = vpop.f32.mrf.mxu0
        %v7202 = vadd.f32 %v7153, %v7201
        %7203 = vmatmul.bf16.gmra.mxu0 %v5170
        %v7204 = vpop.f32.mrf.mxu0
        %v7205 = vadd.f32 %v7156, %v7204
        %v7206 = vpop.f32.mrf.mxu0
        %v7207 = vadd.f32 %v7158, %v7206
        %7208 = vdwg.mxu0
        %7209 = vmatpush.bf16.msra.mxu0 %v6381
        %7210 = vmatpush.bf16.msra.mxu0 %v6379
        %7211 = vmatpush.bf16.msra.mxu0 %v6377
        %7212 = vmatpush.bf16.msra.mxu0 %v6375
        %7213 = vmatpush.bf16.msra.mxu0 %v6373
        %7214 = vmatpush.bf16.msra.mxu0 %v6371
        %7215 = vmatpush.bf16.msra.mxu0 %v6369
        %7216 = vmatpush.bf16.msra.mxu0 %v6367
        %7217 = vmatmul.bf16.gmra.mxu0 %v5059
        %v7218 = vpop.f32.mrf.mxu0
        %v7219 = vadd.f32 %v7170, %v7218
        %v7220 = vpop.f32.mrf.mxu0
        %v7221 = vadd.f32 %v7172, %v7220
        %7222 = vmatmul.bf16.gmra.mxu0 %v5075
        %v7223 = vpop.f32.mrf.mxu0
        %v7224 = vadd.f32 %v7175, %v7223
        %v7225 = vpop.f32.mrf.mxu0
        %v7226 = vadd.f32 %v7177, %v7225
        %7227 = vmatmul.bf16.gmra.mxu0 %v5091
        %v7228 = vpop.f32.mrf.mxu0
        %v7229 = vadd.f32 %v7180, %v7228
        %v7230 = vpop.f32.mrf.mxu0
        %v7231 = vadd.f32 %v7182, %v7230
        %7232 = vmatmul.bf16.gmra.mxu0 %v5107
        %v7233 = vpop.f32.mrf.mxu0
        %v7234 = vadd.f32 %v7185, %v7233
        %v7235 = vpop.f32.mrf.mxu0
        %v7236 = vadd.f32 %v7187, %v7235
        %7237 = vmatmul.bf16.gmra.mxu0 %v5123
        %v7238 = vpop.f32.mrf.mxu0
        %v7239 = vadd.f32 %v7190, %v7238
        %v7240 = vpop.f32.mrf.mxu0
        %v7241 = vadd.f32 %v7192, %v7240
        %7242 = vmatmul.bf16.gmra.mxu0 %v5139
        %v7243 = vpop.f32.mrf.mxu0
        %v7244 = vadd.f32 %v7195, %v7243
        %v7245 = vpop.f32.mrf.mxu0
        %v7246 = vadd.f32 %v7197, %v7245
        %7247 = vmatmul.bf16.gmra.mxu0 %v5155
        %v7248 = vpop.f32.mrf.mxu0
        %v7249 = vadd.f32 %v7200, %v7248
        %v7250 = vpop.f32.mrf.mxu0
        %v7251 = vadd.f32 %v7202, %v7250
        %7252 = vmatmul.bf16.gmra.mxu0 %v5171
        %v7253 = vpop.f32.mrf.mxu0
        %v7254 = vadd.f32 %v7205, %v7253
        %v7255 = vpop.f32.mrf.mxu0
        %v7256 = vadd.f32 %v7207, %v7255
        %7257 = vdwg.mxu0
        %7258 = vmatpush.bf16.msra.mxu0 %v6397
        %7259 = vmatpush.bf16.msra.mxu0 %v6395
        %7260 = vmatpush.bf16.msra.mxu0 %v6393
        %7261 = vmatpush.bf16.msra.mxu0 %v6391
        %7262 = vmatpush.bf16.msra.mxu0 %v6389
        %7263 = vmatpush.bf16.msra.mxu0 %v6387
        %7264 = vmatpush.bf16.msra.mxu0 %v6385
        %7265 = vmatpush.bf16.msra.mxu0 %v6383
        %7266 = vmatmul.bf16.gmra.mxu0 %v5060
        %v7267 = vpop.f32.mrf.mxu0
        %v7268 = vadd.f32 %v7219, %v7267
        %v7269 = vpop.f32.mrf.mxu0
        %v7270 = vadd.f32 %v7221, %v7269
        %7271 = vmatmul.bf16.gmra.mxu0 %v5076
        %v7272 = vpop.f32.mrf.mxu0
        %v7273 = vadd.f32 %v7224, %v7272
        %v7274 = vpop.f32.mrf.mxu0
        %v7275 = vadd.f32 %v7226, %v7274
        %7276 = vmatmul.bf16.gmra.mxu0 %v5092
        %v7277 = vpop.f32.mrf.mxu0
        %v7278 = vadd.f32 %v7229, %v7277
        %v7279 = vpop.f32.mrf.mxu0
        %v7280 = vadd.f32 %v7231, %v7279
        %7281 = vmatmul.bf16.gmra.mxu0 %v5108
        %v7282 = vpop.f32.mrf.mxu0
        %v7283 = vadd.f32 %v7234, %v7282
        %v7284 = vpop.f32.mrf.mxu0
        %v7285 = vadd.f32 %v7236, %v7284
        %7286 = vmatmul.bf16.gmra.mxu0 %v5124
        %v7287 = vpop.f32.mrf.mxu0
        %v7288 = vadd.f32 %v7239, %v7287
        %v7289 = vpop.f32.mrf.mxu0
        %v7290 = vadd.f32 %v7241, %v7289
        %7291 = vmatmul.bf16.gmra.mxu0 %v5140
        %v7292 = vpop.f32.mrf.mxu0
        %v7293 = vadd.f32 %v7244, %v7292
        %v7294 = vpop.f32.mrf.mxu0
        %v7295 = vadd.f32 %v7246, %v7294
        %7296 = vmatmul.bf16.gmra.mxu0 %v5156
        %v7297 = vpop.f32.mrf.mxu0
        %v7298 = vadd.f32 %v7249, %v7297
        %v7299 = vpop.f32.mrf.mxu0
        %v7300 = vadd.f32 %v7251, %v7299
        %7301 = vmatmul.bf16.gmra.mxu0 %v5172
        %v7302 = vpop.f32.mrf.mxu0
        %v7303 = vadd.f32 %v7254, %v7302
        %v7304 = vpop.f32.mrf.mxu0
        %v7305 = vadd.f32 %v7256, %v7304
        %7306 = vdwg.mxu0
        %7307 = vmatpush.bf16.msra.mxu0 %v6413
        %7308 = vmatpush.bf16.msra.mxu0 %v6411
        %7309 = vmatpush.bf16.msra.mxu0 %v6409
        %7310 = vmatpush.bf16.msra.mxu0 %v6407
        %7311 = vmatpush.bf16.msra.mxu0 %v6405
        %7312 = vmatpush.bf16.msra.mxu0 %v6403
        %7313 = vmatpush.bf16.msra.mxu0 %v6401
        %7314 = vmatpush.bf16.msra.mxu0 %v6399
        %7315 = vmatmul.bf16.gmra.mxu0 %v5061
        %v7316 = vpop.f32.mrf.mxu0
        %v7317 = vadd.f32 %v7268, %v7316
        %v7318 = vpop.f32.mrf.mxu0
        %v7319 = vadd.f32 %v7270, %v7318
        %7320 = vmatmul.bf16.gmra.mxu0 %v5077
        %v7321 = vpop.f32.mrf.mxu0
        %v7322 = vadd.f32 %v7273, %v7321
        %v7323 = vpop.f32.mrf.mxu0
        %v7324 = vadd.f32 %v7275, %v7323
        %7325 = vmatmul.bf16.gmra.mxu0 %v5093
        %v7326 = vpop.f32.mrf.mxu0
        %v7327 = vadd.f32 %v7278, %v7326
        %v7328 = vpop.f32.mrf.mxu0
        %v7329 = vadd.f32 %v7280, %v7328
        %7330 = vmatmul.bf16.gmra.mxu0 %v5109
        %v7331 = vpop.f32.mrf.mxu0
        %v7332 = vadd.f32 %v7283, %v7331
        %v7333 = vpop.f32.mrf.mxu0
        %v7334 = vadd.f32 %v7285, %v7333
        %7335 = vmatmul.bf16.gmra.mxu0 %v5125
        %v7336 = vpop.f32.mrf.mxu0
        %v7337 = vadd.f32 %v7288, %v7336
        %v7338 = vpop.f32.mrf.mxu0
        %v7339 = vadd.f32 %v7290, %v7338
        %7340 = vmatmul.bf16.gmra.mxu0 %v5141
        %v7341 = vpop.f32.mrf.mxu0
        %v7342 = vadd.f32 %v7293, %v7341
        %v7343 = vpop.f32.mrf.mxu0
        %v7344 = vadd.f32 %v7295, %v7343
        %7345 = vmatmul.bf16.gmra.mxu0 %v5157
        %v7346 = vpop.f32.mrf.mxu0
        %v7347 = vadd.f32 %v7298, %v7346
        %v7348 = vpop.f32.mrf.mxu0
        %v7349 = vadd.f32 %v7300, %v7348
        %7350 = vmatmul.bf16.gmra.mxu0 %v5173
        %v7351 = vpop.f32.mrf.mxu0
        %v7352 = vadd.f32 %v7303, %v7351
        %v7353 = vpop.f32.mrf.mxu0
        %v7354 = vadd.f32 %v7305, %v7353
        %7355 = vdwg.mxu0
        %7356 = vmatpush.bf16.msra.mxu0 %v6429
        %7357 = vmatpush.bf16.msra.mxu0 %v6427
        %7358 = vmatpush.bf16.msra.mxu0 %v6425
        %7359 = vmatpush.bf16.msra.mxu0 %v6423
        %7360 = vmatpush.bf16.msra.mxu0 %v6421
        %7361 = vmatpush.bf16.msra.mxu0 %v6419
        %7362 = vmatpush.bf16.msra.mxu0 %v6417
        %7363 = vmatpush.bf16.msra.mxu0 %v6415
        %7364 = vmatmul.bf16.gmra.mxu0 %v5062
        %v7365 = vpop.f32.mrf.mxu0
        %v7366 = vadd.f32 %v7317, %v7365
        %v7367 = vpop.f32.mrf.mxu0
        %v7368 = vadd.f32 %v7319, %v7367
        %7369 = vmatmul.bf16.gmra.mxu0 %v5078
        %v7370 = vpop.f32.mrf.mxu0
        %v7371 = vadd.f32 %v7322, %v7370
        %v7372 = vpop.f32.mrf.mxu0
        %v7373 = vadd.f32 %v7324, %v7372
        %7374 = vmatmul.bf16.gmra.mxu0 %v5094
        %v7375 = vpop.f32.mrf.mxu0
        %v7376 = vadd.f32 %v7327, %v7375
        %v7377 = vpop.f32.mrf.mxu0
        %v7378 = vadd.f32 %v7329, %v7377
        %7379 = vmatmul.bf16.gmra.mxu0 %v5110
        %v7380 = vpop.f32.mrf.mxu0
        %v7381 = vadd.f32 %v7332, %v7380
        %v7382 = vpop.f32.mrf.mxu0
        %v7383 = vadd.f32 %v7334, %v7382
        %7384 = vmatmul.bf16.gmra.mxu0 %v5126
        %v7385 = vpop.f32.mrf.mxu0
        %v7386 = vadd.f32 %v7337, %v7385
        %v7387 = vpop.f32.mrf.mxu0
        %v7388 = vadd.f32 %v7339, %v7387
        %7389 = vmatmul.bf16.gmra.mxu0 %v5142
        %v7390 = vpop.f32.mrf.mxu0
        %v7391 = vadd.f32 %v7342, %v7390
        %v7392 = vpop.f32.mrf.mxu0
        %v7393 = vadd.f32 %v7344, %v7392
        %7394 = vmatmul.bf16.gmra.mxu0 %v5158
        %v7395 = vpop.f32.mrf.mxu0
        %v7396 = vadd.f32 %v7347, %v7395
        %v7397 = vpop.f32.mrf.mxu0
        %v7398 = vadd.f32 %v7349, %v7397
        %7399 = vmatmul.bf16.gmra.mxu0 %v5174
        %v7400 = vpop.f32.mrf.mxu0
        %v7401 = vadd.f32 %v7352, %v7400
        %v7402 = vpop.f32.mrf.mxu0
        %v7403 = vadd.f32 %v7354, %v7402
        %7404 = vdwg.mxu0
        %7405 = vmatpush.bf16.msra.mxu0 %v6445
        %7406 = vmatpush.bf16.msra.mxu0 %v6443
        %7407 = vmatpush.bf16.msra.mxu0 %v6441
        %7408 = vmatpush.bf16.msra.mxu0 %v6439
        %7409 = vmatpush.bf16.msra.mxu0 %v6437
        %7410 = vmatpush.bf16.msra.mxu0 %v6435
        %7411 = vmatpush.bf16.msra.mxu0 %v6433
        %7412 = vmatpush.bf16.msra.mxu0 %v6431
        %7413 = vmatmul.bf16.gmra.mxu0 %v5063
        %v7414 = vpop.f32.mrf.mxu0
        %v7415 = vadd.f32 %v7366, %v7414
        %v7416 = vpop.f32.mrf.mxu0
        %v7417 = vadd.f32 %v7368, %v7416
        %7418 = vmatmul.bf16.gmra.mxu0 %v5079
        %v7419 = vpop.f32.mrf.mxu0
        %v7420 = vadd.f32 %v7371, %v7419
        %v7421 = vpop.f32.mrf.mxu0
        %v7422 = vadd.f32 %v7373, %v7421
        %7423 = vmatmul.bf16.gmra.mxu0 %v5095
        %v7424 = vpop.f32.mrf.mxu0
        %v7425 = vadd.f32 %v7376, %v7424
        %v7426 = vpop.f32.mrf.mxu0
        %v7427 = vadd.f32 %v7378, %v7426
        %7428 = vmatmul.bf16.gmra.mxu0 %v5111
        %v7429 = vpop.f32.mrf.mxu0
        %v7430 = vadd.f32 %v7381, %v7429
        %v7431 = vpop.f32.mrf.mxu0
        %v7432 = vadd.f32 %v7383, %v7431
        %7433 = vmatmul.bf16.gmra.mxu0 %v5127
        %v7434 = vpop.f32.mrf.mxu0
        %v7435 = vadd.f32 %v7386, %v7434
        %v7436 = vpop.f32.mrf.mxu0
        %v7437 = vadd.f32 %v7388, %v7436
        %7438 = vmatmul.bf16.gmra.mxu0 %v5143
        %v7439 = vpop.f32.mrf.mxu0
        %v7440 = vadd.f32 %v7391, %v7439
        %v7441 = vpop.f32.mrf.mxu0
        %v7442 = vadd.f32 %v7393, %v7441
        %7443 = vmatmul.bf16.gmra.mxu0 %v5159
        %v7444 = vpop.f32.mrf.mxu0
        %v7445 = vadd.f32 %v7396, %v7444
        %v7446 = vpop.f32.mrf.mxu0
        %v7447 = vadd.f32 %v7398, %v7446
        %7448 = vmatmul.bf16.gmra.mxu0 %v5175
        %v7449 = vpop.f32.mrf.mxu0
        %v7450 = vadd.f32 %v7401, %v7449
        %v7451 = vpop.f32.mrf.mxu0
        %v7452 = vadd.f32 %v7403, %v7451
        %7453 = vdwg.mxu0
        %7454 = vmatpush.bf16.msra.mxu0 %v6461
        %7455 = vmatpush.bf16.msra.mxu0 %v6459
        %7456 = vmatpush.bf16.msra.mxu0 %v6457
        %7457 = vmatpush.bf16.msra.mxu0 %v6455
        %7458 = vmatpush.bf16.msra.mxu0 %v6453
        %7459 = vmatpush.bf16.msra.mxu0 %v6451
        %7460 = vmatpush.bf16.msra.mxu0 %v6449
        %7461 = vmatpush.bf16.msra.mxu0 %v6447
        %7462 = vmatmul.bf16.gmra.mxu0 %v5064
        %v7463 = vpop.f32.mrf.mxu0
        %v7464 = vadd.f32 %v7415, %v7463
        %v7465 = vpop.f32.mrf.mxu0
        %v7466 = vadd.f32 %v7417, %v7465
        %7467 = vmatmul.bf16.gmra.mxu0 %v5080
        %v7468 = vpop.f32.mrf.mxu0
        %v7469 = vadd.f32 %v7420, %v7468
        %v7470 = vpop.f32.mrf.mxu0
        %v7471 = vadd.f32 %v7422, %v7470
        %7472 = vmatmul.bf16.gmra.mxu0 %v5096
        %v7473 = vpop.f32.mrf.mxu0
        %v7474 = vadd.f32 %v7425, %v7473
        %v7475 = vpop.f32.mrf.mxu0
        %v7476 = vadd.f32 %v7427, %v7475
        %7477 = vmatmul.bf16.gmra.mxu0 %v5112
        %v7478 = vpop.f32.mrf.mxu0
        %v7479 = vadd.f32 %v7430, %v7478
        %v7480 = vpop.f32.mrf.mxu0
        %v7481 = vadd.f32 %v7432, %v7480
        %7482 = vmatmul.bf16.gmra.mxu0 %v5128
        %v7483 = vpop.f32.mrf.mxu0
        %v7484 = vadd.f32 %v7435, %v7483
        %v7485 = vpop.f32.mrf.mxu0
        %v7486 = vadd.f32 %v7437, %v7485
        %7487 = vmatmul.bf16.gmra.mxu0 %v5144
        %v7488 = vpop.f32.mrf.mxu0
        %v7489 = vadd.f32 %v7440, %v7488
        %v7490 = vpop.f32.mrf.mxu0
        %v7491 = vadd.f32 %v7442, %v7490
        %7492 = vmatmul.bf16.gmra.mxu0 %v5160
        %v7493 = vpop.f32.mrf.mxu0
        %v7494 = vadd.f32 %v7445, %v7493
        %v7495 = vpop.f32.mrf.mxu0
        %v7496 = vadd.f32 %v7447, %v7495
        %7497 = vmatmul.bf16.gmra.mxu0 %v5176
        %v7498 = vpop.f32.mrf.mxu0
        %v7499 = vadd.f32 %v7450, %v7498
        %v7500 = vpop.f32.mrf.mxu0
        %v7501 = vadd.f32 %v7452, %v7500
        %7502 = vdwg.mxu0
        %7503 = vmatpush.bf16.msra.mxu0 %v6222
        %7504 = vmatpush.bf16.msra.mxu0 %v6220
        %7505 = vmatpush.bf16.msra.mxu0 %v6218
        %7506 = vmatpush.bf16.msra.mxu0 %v6216
        %7507 = vmatpush.bf16.msra.mxu0 %v6214
        %7508 = vmatpush.bf16.msra.mxu0 %v6212
        %7509 = vmatpush.bf16.msra.mxu0 %v6210
        %7510 = vmatpush.bf16.msra.mxu0 %v6208
        %7511 = vmatmul.bf16.gmra.mxu0 %v5049
        %v7512 = vpop.f32.mrf.mxu0
        %v7513 = vadd.f32 %v5436, %v7512
        %v7514 = vpop.f32.mrf.mxu0
        %v7515 = vadd.f32 %v5436, %v7514
        %7516 = vmatmul.bf16.gmra.mxu0 %v5065
        %v7517 = vpop.f32.mrf.mxu0
        %v7518 = vadd.f32 %v5436, %v7517
        %v7519 = vpop.f32.mrf.mxu0
        %v7520 = vadd.f32 %v5436, %v7519
        %7521 = vmatmul.bf16.gmra.mxu0 %v5081
        %v7522 = vpop.f32.mrf.mxu0
        %v7523 = vadd.f32 %v5436, %v7522
        %v7524 = vpop.f32.mrf.mxu0
        %v7525 = vadd.f32 %v5436, %v7524
        %7526 = vmatmul.bf16.gmra.mxu0 %v5097
        %v7527 = vpop.f32.mrf.mxu0
        %v7528 = vadd.f32 %v5436, %v7527
        %v7529 = vpop.f32.mrf.mxu0
        %v7530 = vadd.f32 %v5436, %v7529
        %7531 = vmatmul.bf16.gmra.mxu0 %v5113
        %v7532 = vpop.f32.mrf.mxu0
        %v7533 = vadd.f32 %v5436, %v7532
        %v7534 = vpop.f32.mrf.mxu0
        %v7535 = vadd.f32 %v5436, %v7534
        %7536 = vmatmul.bf16.gmra.mxu0 %v5129
        %v7537 = vpop.f32.mrf.mxu0
        %v7538 = vadd.f32 %v5436, %v7537
        %v7539 = vpop.f32.mrf.mxu0
        %v7540 = vadd.f32 %v5436, %v7539
        %7541 = vmatmul.bf16.gmra.mxu0 %v5145
        %v7542 = vpop.f32.mrf.mxu0
        %v7543 = vadd.f32 %v5436, %v7542
        %v7544 = vpop.f32.mrf.mxu0
        %v7545 = vadd.f32 %v5436, %v7544
        %7546 = vmatmul.bf16.gmra.mxu0 %v5161
        %v7547 = vpop.f32.mrf.mxu0
        %v7548 = vadd.f32 %v5436, %v7547
        %v7549 = vpop.f32.mrf.mxu0
        %v7550 = vadd.f32 %v5436, %v7549
        %7551 = vdwg.mxu0
        %7552 = vmatpush.bf16.msra.mxu0 %v6238
        %7553 = vmatpush.bf16.msra.mxu0 %v6236
        %7554 = vmatpush.bf16.msra.mxu0 %v6234
        %7555 = vmatpush.bf16.msra.mxu0 %v6232
        %7556 = vmatpush.bf16.msra.mxu0 %v6230
        %7557 = vmatpush.bf16.msra.mxu0 %v6228
        %7558 = vmatpush.bf16.msra.mxu0 %v6226
        %7559 = vmatpush.bf16.msra.mxu0 %v6224
        %7560 = vmatmul.bf16.gmra.mxu0 %v5050
        %v7561 = vpop.f32.mrf.mxu0
        %v7562 = vadd.f32 %v7513, %v7561
        %v7563 = vpop.f32.mrf.mxu0
        %v7564 = vadd.f32 %v7515, %v7563
        %7565 = vmatmul.bf16.gmra.mxu0 %v5066
        %v7566 = vpop.f32.mrf.mxu0
        %v7567 = vadd.f32 %v7518, %v7566
        %v7568 = vpop.f32.mrf.mxu0
        %v7569 = vadd.f32 %v7520, %v7568
        %7570 = vmatmul.bf16.gmra.mxu0 %v5082
        %v7571 = vpop.f32.mrf.mxu0
        %v7572 = vadd.f32 %v7523, %v7571
        %v7573 = vpop.f32.mrf.mxu0
        %v7574 = vadd.f32 %v7525, %v7573
        %7575 = vmatmul.bf16.gmra.mxu0 %v5098
        %v7576 = vpop.f32.mrf.mxu0
        %v7577 = vadd.f32 %v7528, %v7576
        %v7578 = vpop.f32.mrf.mxu0
        %v7579 = vadd.f32 %v7530, %v7578
        %7580 = vmatmul.bf16.gmra.mxu0 %v5114
        %v7581 = vpop.f32.mrf.mxu0
        %v7582 = vadd.f32 %v7533, %v7581
        %v7583 = vpop.f32.mrf.mxu0
        %v7584 = vadd.f32 %v7535, %v7583
        %7585 = vmatmul.bf16.gmra.mxu0 %v5130
        %v7586 = vpop.f32.mrf.mxu0
        %v7587 = vadd.f32 %v7538, %v7586
        %v7588 = vpop.f32.mrf.mxu0
        %v7589 = vadd.f32 %v7540, %v7588
        %7590 = vmatmul.bf16.gmra.mxu0 %v5146
        %v7591 = vpop.f32.mrf.mxu0
        %v7592 = vadd.f32 %v7543, %v7591
        %v7593 = vpop.f32.mrf.mxu0
        %v7594 = vadd.f32 %v7545, %v7593
        %7595 = vmatmul.bf16.gmra.mxu0 %v5162
        %v7596 = vpop.f32.mrf.mxu0
        %v7597 = vadd.f32 %v7548, %v7596
        %v7598 = vpop.f32.mrf.mxu0
        %v7599 = vadd.f32 %v7550, %v7598
        %7600 = vdwg.mxu0
        %7601 = vmatpush.bf16.msra.mxu0 %v6254
        %7602 = vmatpush.bf16.msra.mxu0 %v6252
        %7603 = vmatpush.bf16.msra.mxu0 %v6250
        %7604 = vmatpush.bf16.msra.mxu0 %v6248
        %7605 = vmatpush.bf16.msra.mxu0 %v6246
        %7606 = vmatpush.bf16.msra.mxu0 %v6244
        %7607 = vmatpush.bf16.msra.mxu0 %v6242
        %7608 = vmatpush.bf16.msra.mxu0 %v6240
        %7609 = vmatmul.bf16.gmra.mxu0 %v5051
        %v7610 = vpop.f32.mrf.mxu0
        %v7611 = vadd.f32 %v7562, %v7610
        %v7612 = vpop.f32.mrf.mxu0
        %v7613 = vadd.f32 %v7564, %v7612
        %7614 = vmatmul.bf16.gmra.mxu0 %v5067
        %v7615 = vpop.f32.mrf.mxu0
        %v7616 = vadd.f32 %v7567, %v7615
        %v7617 = vpop.f32.mrf.mxu0
        %v7618 = vadd.f32 %v7569, %v7617
        %7619 = vmatmul.bf16.gmra.mxu0 %v5083
        %v7620 = vpop.f32.mrf.mxu0
        %v7621 = vadd.f32 %v7572, %v7620
        %v7622 = vpop.f32.mrf.mxu0
        %v7623 = vadd.f32 %v7574, %v7622
        %7624 = vmatmul.bf16.gmra.mxu0 %v5099
        %v7625 = vpop.f32.mrf.mxu0
        %v7626 = vadd.f32 %v7577, %v7625
        %v7627 = vpop.f32.mrf.mxu0
        %v7628 = vadd.f32 %v7579, %v7627
        %7629 = vmatmul.bf16.gmra.mxu0 %v5115
        %v7630 = vpop.f32.mrf.mxu0
        %v7631 = vadd.f32 %v7582, %v7630
        %v7632 = vpop.f32.mrf.mxu0
        %v7633 = vadd.f32 %v7584, %v7632
        %7634 = vmatmul.bf16.gmra.mxu0 %v5131
        %v7635 = vpop.f32.mrf.mxu0
        %v7636 = vadd.f32 %v7587, %v7635
        %v7637 = vpop.f32.mrf.mxu0
        %v7638 = vadd.f32 %v7589, %v7637
        %7639 = vmatmul.bf16.gmra.mxu0 %v5147
        %v7640 = vpop.f32.mrf.mxu0
        %v7641 = vadd.f32 %v7592, %v7640
        %v7642 = vpop.f32.mrf.mxu0
        %v7643 = vadd.f32 %v7594, %v7642
        %7644 = vmatmul.bf16.gmra.mxu0 %v5163
        %v7645 = vpop.f32.mrf.mxu0
        %v7646 = vadd.f32 %v7597, %v7645
        %v7647 = vpop.f32.mrf.mxu0
        %v7648 = vadd.f32 %v7599, %v7647
        %7649 = vdwg.mxu0
        %7650 = vmatpush.bf16.msra.mxu0 %v6270
        %7651 = vmatpush.bf16.msra.mxu0 %v6268
        %7652 = vmatpush.bf16.msra.mxu0 %v6266
        %7653 = vmatpush.bf16.msra.mxu0 %v6264
        %7654 = vmatpush.bf16.msra.mxu0 %v6262
        %7655 = vmatpush.bf16.msra.mxu0 %v6260
        %7656 = vmatpush.bf16.msra.mxu0 %v6258
        %7657 = vmatpush.bf16.msra.mxu0 %v6256
        %7658 = vmatmul.bf16.gmra.mxu0 %v5052
        %v7659 = vpop.f32.mrf.mxu0
        %v7660 = vadd.f32 %v7611, %v7659
        %v7661 = vpop.f32.mrf.mxu0
        %v7662 = vadd.f32 %v7613, %v7661
        %7663 = vmatmul.bf16.gmra.mxu0 %v5068
        %v7664 = vpop.f32.mrf.mxu0
        %v7665 = vadd.f32 %v7616, %v7664
        %v7666 = vpop.f32.mrf.mxu0
        %v7667 = vadd.f32 %v7618, %v7666
        %7668 = vmatmul.bf16.gmra.mxu0 %v5084
        %v7669 = vpop.f32.mrf.mxu0
        %v7670 = vadd.f32 %v7621, %v7669
        %v7671 = vpop.f32.mrf.mxu0
        %v7672 = vadd.f32 %v7623, %v7671
        %7673 = vmatmul.bf16.gmra.mxu0 %v5100
        %v7674 = vpop.f32.mrf.mxu0
        %v7675 = vadd.f32 %v7626, %v7674
        %v7676 = vpop.f32.mrf.mxu0
        %v7677 = vadd.f32 %v7628, %v7676
        %7678 = vmatmul.bf16.gmra.mxu0 %v5116
        %v7679 = vpop.f32.mrf.mxu0
        %v7680 = vadd.f32 %v7631, %v7679
        %v7681 = vpop.f32.mrf.mxu0
        %v7682 = vadd.f32 %v7633, %v7681
        %7683 = vmatmul.bf16.gmra.mxu0 %v5132
        %v7684 = vpop.f32.mrf.mxu0
        %v7685 = vadd.f32 %v7636, %v7684
        %v7686 = vpop.f32.mrf.mxu0
        %v7687 = vadd.f32 %v7638, %v7686
        %7688 = vmatmul.bf16.gmra.mxu0 %v5148
        %v7689 = vpop.f32.mrf.mxu0
        %v7690 = vadd.f32 %v7641, %v7689
        %v7691 = vpop.f32.mrf.mxu0
        %v7692 = vadd.f32 %v7643, %v7691
        %7693 = vmatmul.bf16.gmra.mxu0 %v5164
        %v7694 = vpop.f32.mrf.mxu0
        %v7695 = vadd.f32 %v7646, %v7694
        %v7696 = vpop.f32.mrf.mxu0
        %v7697 = vadd.f32 %v7648, %v7696
        %7698 = vdwg.mxu0
        %7699 = vmatpush.bf16.msra.mxu0 %v6286
        %7700 = vmatpush.bf16.msra.mxu0 %v6284
        %7701 = vmatpush.bf16.msra.mxu0 %v6282
        %7702 = vmatpush.bf16.msra.mxu0 %v6280
        %7703 = vmatpush.bf16.msra.mxu0 %v6278
        %7704 = vmatpush.bf16.msra.mxu0 %v6276
        %7705 = vmatpush.bf16.msra.mxu0 %v6274
        %7706 = vmatpush.bf16.msra.mxu0 %v6272
        %7707 = vmatmul.bf16.gmra.mxu0 %v5053
        %v7708 = vpop.f32.mrf.mxu0
        %v7709 = vadd.f32 %v7660, %v7708
        %v7710 = vpop.f32.mrf.mxu0
        %v7711 = vadd.f32 %v7662, %v7710
        %7712 = vmatmul.bf16.gmra.mxu0 %v5069
        %v7713 = vpop.f32.mrf.mxu0
        %v7714 = vadd.f32 %v7665, %v7713
        %v7715 = vpop.f32.mrf.mxu0
        %v7716 = vadd.f32 %v7667, %v7715
        %7717 = vmatmul.bf16.gmra.mxu0 %v5085
        %v7718 = vpop.f32.mrf.mxu0
        %v7719 = vadd.f32 %v7670, %v7718
        %v7720 = vpop.f32.mrf.mxu0
        %v7721 = vadd.f32 %v7672, %v7720
        %7722 = vmatmul.bf16.gmra.mxu0 %v5101
        %v7723 = vpop.f32.mrf.mxu0
        %v7724 = vadd.f32 %v7675, %v7723
        %v7725 = vpop.f32.mrf.mxu0
        %v7726 = vadd.f32 %v7677, %v7725
        %7727 = vmatmul.bf16.gmra.mxu0 %v5117
        %v7728 = vpop.f32.mrf.mxu0
        %v7729 = vadd.f32 %v7680, %v7728
        %v7730 = vpop.f32.mrf.mxu0
        %v7731 = vadd.f32 %v7682, %v7730
        %7732 = vmatmul.bf16.gmra.mxu0 %v5133
        %v7733 = vpop.f32.mrf.mxu0
        %v7734 = vadd.f32 %v7685, %v7733
        %v7735 = vpop.f32.mrf.mxu0
        %v7736 = vadd.f32 %v7687, %v7735
        %7737 = vmatmul.bf16.gmra.mxu0 %v5149
        %v7738 = vpop.f32.mrf.mxu0
        %v7739 = vadd.f32 %v7690, %v7738
        %v7740 = vpop.f32.mrf.mxu0
        %v7741 = vadd.f32 %v7692, %v7740
        %7742 = vmatmul.bf16.gmra.mxu0 %v5165
        %v7743 = vpop.f32.mrf.mxu0
        %v7744 = vadd.f32 %v7695, %v7743
        %v7745 = vpop.f32.mrf.mxu0
        %v7746 = vadd.f32 %v7697, %v7745
        %7747 = vdwg.mxu0
        %7748 = vmatpush.bf16.msra.mxu0 %v6302
        %7749 = vmatpush.bf16.msra.mxu0 %v6300
        %7750 = vmatpush.bf16.msra.mxu0 %v6298
        %7751 = vmatpush.bf16.msra.mxu0 %v6296
        %7752 = vmatpush.bf16.msra.mxu0 %v6294
        %7753 = vmatpush.bf16.msra.mxu0 %v6292
        %7754 = vmatpush.bf16.msra.mxu0 %v6290
        %7755 = vmatpush.bf16.msra.mxu0 %v6288
        %7756 = vmatmul.bf16.gmra.mxu0 %v5054
        %v7757 = vpop.f32.mrf.mxu0
        %v7758 = vadd.f32 %v7709, %v7757
        %v7759 = vpop.f32.mrf.mxu0
        %v7760 = vadd.f32 %v7711, %v7759
        %7761 = vmatmul.bf16.gmra.mxu0 %v5070
        %v7762 = vpop.f32.mrf.mxu0
        %v7763 = vadd.f32 %v7714, %v7762
        %v7764 = vpop.f32.mrf.mxu0
        %v7765 = vadd.f32 %v7716, %v7764
        %7766 = vmatmul.bf16.gmra.mxu0 %v5086
        %v7767 = vpop.f32.mrf.mxu0
        %v7768 = vadd.f32 %v7719, %v7767
        %v7769 = vpop.f32.mrf.mxu0
        %v7770 = vadd.f32 %v7721, %v7769
        %7771 = vmatmul.bf16.gmra.mxu0 %v5102
        %v7772 = vpop.f32.mrf.mxu0
        %v7773 = vadd.f32 %v7724, %v7772
        %v7774 = vpop.f32.mrf.mxu0
        %v7775 = vadd.f32 %v7726, %v7774
        %7776 = vmatmul.bf16.gmra.mxu0 %v5118
        %v7777 = vpop.f32.mrf.mxu0
        %v7778 = vadd.f32 %v7729, %v7777
        %v7779 = vpop.f32.mrf.mxu0
        %v7780 = vadd.f32 %v7731, %v7779
        %7781 = vmatmul.bf16.gmra.mxu0 %v5134
        %v7782 = vpop.f32.mrf.mxu0
        %v7783 = vadd.f32 %v7734, %v7782
        %v7784 = vpop.f32.mrf.mxu0
        %v7785 = vadd.f32 %v7736, %v7784
        %7786 = vmatmul.bf16.gmra.mxu0 %v5150
        %v7787 = vpop.f32.mrf.mxu0
        %v7788 = vadd.f32 %v7739, %v7787
        %v7789 = vpop.f32.mrf.mxu0
        %v7790 = vadd.f32 %v7741, %v7789
        %7791 = vmatmul.bf16.gmra.mxu0 %v5166
        %v7792 = vpop.f32.mrf.mxu0
        %v7793 = vadd.f32 %v7744, %v7792
        %v7794 = vpop.f32.mrf.mxu0
        %v7795 = vadd.f32 %v7746, %v7794
        %7796 = vdwg.mxu0
        %7797 = vmatpush.bf16.msra.mxu0 %v6318
        %7798 = vmatpush.bf16.msra.mxu0 %v6316
        %7799 = vmatpush.bf16.msra.mxu0 %v6314
        %7800 = vmatpush.bf16.msra.mxu0 %v6312
        %7801 = vmatpush.bf16.msra.mxu0 %v6310
        %7802 = vmatpush.bf16.msra.mxu0 %v6308
        %7803 = vmatpush.bf16.msra.mxu0 %v6306
        %7804 = vmatpush.bf16.msra.mxu0 %v6304
        %7805 = vmatmul.bf16.gmra.mxu0 %v5055
        %v7806 = vpop.f32.mrf.mxu0
        %v7807 = vadd.f32 %v7758, %v7806
        %v7808 = vpop.f32.mrf.mxu0
        %v7809 = vadd.f32 %v7760, %v7808
        %7810 = vmatmul.bf16.gmra.mxu0 %v5071
        %v7811 = vpop.f32.mrf.mxu0
        %v7812 = vadd.f32 %v7763, %v7811
        %v7813 = vpop.f32.mrf.mxu0
        %v7814 = vadd.f32 %v7765, %v7813
        %7815 = vmatmul.bf16.gmra.mxu0 %v5087
        %v7816 = vpop.f32.mrf.mxu0
        %v7817 = vadd.f32 %v7768, %v7816
        %v7818 = vpop.f32.mrf.mxu0
        %v7819 = vadd.f32 %v7770, %v7818
        %7820 = vmatmul.bf16.gmra.mxu0 %v5103
        %v7821 = vpop.f32.mrf.mxu0
        %v7822 = vadd.f32 %v7773, %v7821
        %v7823 = vpop.f32.mrf.mxu0
        %v7824 = vadd.f32 %v7775, %v7823
        %7825 = vmatmul.bf16.gmra.mxu0 %v5119
        %v7826 = vpop.f32.mrf.mxu0
        %v7827 = vadd.f32 %v7778, %v7826
        %v7828 = vpop.f32.mrf.mxu0
        %v7829 = vadd.f32 %v7780, %v7828
        %7830 = vmatmul.bf16.gmra.mxu0 %v5135
        %v7831 = vpop.f32.mrf.mxu0
        %v7832 = vadd.f32 %v7783, %v7831
        %v7833 = vpop.f32.mrf.mxu0
        %v7834 = vadd.f32 %v7785, %v7833
        %7835 = vmatmul.bf16.gmra.mxu0 %v5151
        %v7836 = vpop.f32.mrf.mxu0
        %v7837 = vadd.f32 %v7788, %v7836
        %v7838 = vpop.f32.mrf.mxu0
        %v7839 = vadd.f32 %v7790, %v7838
        %7840 = vmatmul.bf16.gmra.mxu0 %v5167
        %v7841 = vpop.f32.mrf.mxu0
        %v7842 = vadd.f32 %v7793, %v7841
        %v7843 = vpop.f32.mrf.mxu0
        %v7844 = vadd.f32 %v7795, %v7843
        %7845 = vdwg.mxu0
        %7846 = vmatpush.bf16.msra.mxu0 %v6334
        %7847 = vmatpush.bf16.msra.mxu0 %v6332
        %7848 = vmatpush.bf16.msra.mxu0 %v6330
        %7849 = vmatpush.bf16.msra.mxu0 %v6328
        %7850 = vmatpush.bf16.msra.mxu0 %v6326
        %7851 = vmatpush.bf16.msra.mxu0 %v6324
        %7852 = vmatpush.bf16.msra.mxu0 %v6322
        %7853 = vmatpush.bf16.msra.mxu0 %v6320
        %7854 = vmatmul.bf16.gmra.mxu0 %v5056
        %v7855 = vpop.f32.mrf.mxu0
        %v7856 = vadd.f32 %v7807, %v7855
        %v7857 = vpop.f32.mrf.mxu0
        %v7858 = vadd.f32 %v7809, %v7857
        %7859 = vmatmul.bf16.gmra.mxu0 %v5072
        %v7860 = vpop.f32.mrf.mxu0
        %v7861 = vadd.f32 %v7812, %v7860
        %v7862 = vpop.f32.mrf.mxu0
        %v7863 = vadd.f32 %v7814, %v7862
        %7864 = vmatmul.bf16.gmra.mxu0 %v5088
        %v7865 = vpop.f32.mrf.mxu0
        %v7866 = vadd.f32 %v7817, %v7865
        %v7867 = vpop.f32.mrf.mxu0
        %v7868 = vadd.f32 %v7819, %v7867
        %7869 = vmatmul.bf16.gmra.mxu0 %v5104
        %v7870 = vpop.f32.mrf.mxu0
        %v7871 = vadd.f32 %v7822, %v7870
        %v7872 = vpop.f32.mrf.mxu0
        %v7873 = vadd.f32 %v7824, %v7872
        %7874 = vmatmul.bf16.gmra.mxu0 %v5120
        %v7875 = vpop.f32.mrf.mxu0
        %v7876 = vadd.f32 %v7827, %v7875
        %v7877 = vpop.f32.mrf.mxu0
        %v7878 = vadd.f32 %v7829, %v7877
        %7879 = vmatmul.bf16.gmra.mxu0 %v5136
        %v7880 = vpop.f32.mrf.mxu0
        %v7881 = vadd.f32 %v7832, %v7880
        %v7882 = vpop.f32.mrf.mxu0
        %v7883 = vadd.f32 %v7834, %v7882
        %7884 = vmatmul.bf16.gmra.mxu0 %v5152
        %v7885 = vpop.f32.mrf.mxu0
        %v7886 = vadd.f32 %v7837, %v7885
        %v7887 = vpop.f32.mrf.mxu0
        %v7888 = vadd.f32 %v7839, %v7887
        %7889 = vmatmul.bf16.gmra.mxu0 %v5168
        %v7890 = vpop.f32.mrf.mxu0
        %v7891 = vadd.f32 %v7842, %v7890
        %v7892 = vpop.f32.mrf.mxu0
        %v7893 = vadd.f32 %v7844, %v7892
        %7894 = vdwg.mxu0
        %7895 = vmatpush.bf16.msra.mxu0 %v6350
        %7896 = vmatpush.bf16.msra.mxu0 %v6348
        %7897 = vmatpush.bf16.msra.mxu0 %v6346
        %7898 = vmatpush.bf16.msra.mxu0 %v6344
        %7899 = vmatpush.bf16.msra.mxu0 %v6342
        %7900 = vmatpush.bf16.msra.mxu0 %v6340
        %7901 = vmatpush.bf16.msra.mxu0 %v6338
        %7902 = vmatpush.bf16.msra.mxu0 %v6336
        %7903 = vmatmul.bf16.gmra.mxu0 %v5057
        %v7904 = vpop.f32.mrf.mxu0
        %v7905 = vadd.f32 %v7856, %v7904
        %v7906 = vpop.f32.mrf.mxu0
        %v7907 = vadd.f32 %v7858, %v7906
        %7908 = vmatmul.bf16.gmra.mxu0 %v5073
        %v7909 = vpop.f32.mrf.mxu0
        %v7910 = vadd.f32 %v7861, %v7909
        %v7911 = vpop.f32.mrf.mxu0
        %v7912 = vadd.f32 %v7863, %v7911
        %7913 = vmatmul.bf16.gmra.mxu0 %v5089
        %v7914 = vpop.f32.mrf.mxu0
        %v7915 = vadd.f32 %v7866, %v7914
        %v7916 = vpop.f32.mrf.mxu0
        %v7917 = vadd.f32 %v7868, %v7916
        %7918 = vmatmul.bf16.gmra.mxu0 %v5105
        %v7919 = vpop.f32.mrf.mxu0
        %v7920 = vadd.f32 %v7871, %v7919
        %v7921 = vpop.f32.mrf.mxu0
        %v7922 = vadd.f32 %v7873, %v7921
        %7923 = vmatmul.bf16.gmra.mxu0 %v5121
        %v7924 = vpop.f32.mrf.mxu0
        %v7925 = vadd.f32 %v7876, %v7924
        %v7926 = vpop.f32.mrf.mxu0
        %v7927 = vadd.f32 %v7878, %v7926
        %7928 = vmatmul.bf16.gmra.mxu0 %v5137
        %v7929 = vpop.f32.mrf.mxu0
        %v7930 = vadd.f32 %v7881, %v7929
        %v7931 = vpop.f32.mrf.mxu0
        %v7932 = vadd.f32 %v7883, %v7931
        %7933 = vmatmul.bf16.gmra.mxu0 %v5153
        %v7934 = vpop.f32.mrf.mxu0
        %v7935 = vadd.f32 %v7886, %v7934
        %v7936 = vpop.f32.mrf.mxu0
        %v7937 = vadd.f32 %v7888, %v7936
        %7938 = vmatmul.bf16.gmra.mxu0 %v5169
        %v7939 = vpop.f32.mrf.mxu0
        %v7940 = vadd.f32 %v7891, %v7939
        %v7941 = vpop.f32.mrf.mxu0
        %v7942 = vadd.f32 %v7893, %v7941
        %7943 = vdwg.mxu0
        %7944 = vmatpush.bf16.msra.mxu0 %v6366
        %7945 = vmatpush.bf16.msra.mxu0 %v6364
        %7946 = vmatpush.bf16.msra.mxu0 %v6362
        %7947 = vmatpush.bf16.msra.mxu0 %v6360
        %7948 = vmatpush.bf16.msra.mxu0 %v6358
        %7949 = vmatpush.bf16.msra.mxu0 %v6356
        %7950 = vmatpush.bf16.msra.mxu0 %v6354
        %7951 = vmatpush.bf16.msra.mxu0 %v6352
        %7952 = vmatmul.bf16.gmra.mxu0 %v5058
        %v7953 = vpop.f32.mrf.mxu0
        %v7954 = vadd.f32 %v7905, %v7953
        %v7955 = vpop.f32.mrf.mxu0
        %v7956 = vadd.f32 %v7907, %v7955
        %7957 = vmatmul.bf16.gmra.mxu0 %v5074
        %v7958 = vpop.f32.mrf.mxu0
        %v7959 = vadd.f32 %v7910, %v7958
        %v7960 = vpop.f32.mrf.mxu0
        %v7961 = vadd.f32 %v7912, %v7960
        %7962 = vmatmul.bf16.gmra.mxu0 %v5090
        %v7963 = vpop.f32.mrf.mxu0
        %v7964 = vadd.f32 %v7915, %v7963
        %v7965 = vpop.f32.mrf.mxu0
        %v7966 = vadd.f32 %v7917, %v7965
        %7967 = vmatmul.bf16.gmra.mxu0 %v5106
        %v7968 = vpop.f32.mrf.mxu0
        %v7969 = vadd.f32 %v7920, %v7968
        %v7970 = vpop.f32.mrf.mxu0
        %v7971 = vadd.f32 %v7922, %v7970
        %7972 = vmatmul.bf16.gmra.mxu0 %v5122
        %v7973 = vpop.f32.mrf.mxu0
        %v7974 = vadd.f32 %v7925, %v7973
        %v7975 = vpop.f32.mrf.mxu0
        %v7976 = vadd.f32 %v7927, %v7975
        %7977 = vmatmul.bf16.gmra.mxu0 %v5138
        %v7978 = vpop.f32.mrf.mxu0
        %v7979 = vadd.f32 %v7930, %v7978
        %v7980 = vpop.f32.mrf.mxu0
        %v7981 = vadd.f32 %v7932, %v7980
        %7982 = vmatmul.bf16.gmra.mxu0 %v5154
        %v7983 = vpop.f32.mrf.mxu0
        %v7984 = vadd.f32 %v7935, %v7983
        %v7985 = vpop.f32.mrf.mxu0
        %v7986 = vadd.f32 %v7937, %v7985
        %7987 = vmatmul.bf16.gmra.mxu0 %v5170
        %v7988 = vpop.f32.mrf.mxu0
        %v7989 = vadd.f32 %v7940, %v7988
        %v7990 = vpop.f32.mrf.mxu0
        %v7991 = vadd.f32 %v7942, %v7990
        %7992 = vdwg.mxu0
        %7993 = vmatpush.bf16.msra.mxu0 %v6382
        %7994 = vmatpush.bf16.msra.mxu0 %v6380
        %7995 = vmatpush.bf16.msra.mxu0 %v6378
        %7996 = vmatpush.bf16.msra.mxu0 %v6376
        %7997 = vmatpush.bf16.msra.mxu0 %v6374
        %7998 = vmatpush.bf16.msra.mxu0 %v6372
        %7999 = vmatpush.bf16.msra.mxu0 %v6370
        %8000 = vmatpush.bf16.msra.mxu0 %v6368
        %8001 = vmatmul.bf16.gmra.mxu0 %v5059
        %v8002 = vpop.f32.mrf.mxu0
        %v8003 = vadd.f32 %v7954, %v8002
        %v8004 = vpop.f32.mrf.mxu0
        %v8005 = vadd.f32 %v7956, %v8004
        %8006 = vmatmul.bf16.gmra.mxu0 %v5075
        %v8007 = vpop.f32.mrf.mxu0
        %v8008 = vadd.f32 %v7959, %v8007
        %v8009 = vpop.f32.mrf.mxu0
        %v8010 = vadd.f32 %v7961, %v8009
        %8011 = vmatmul.bf16.gmra.mxu0 %v5091
        %v8012 = vpop.f32.mrf.mxu0
        %v8013 = vadd.f32 %v7964, %v8012
        %v8014 = vpop.f32.mrf.mxu0
        %v8015 = vadd.f32 %v7966, %v8014
        %8016 = vmatmul.bf16.gmra.mxu0 %v5107
        %v8017 = vpop.f32.mrf.mxu0
        %v8018 = vadd.f32 %v7969, %v8017
        %v8019 = vpop.f32.mrf.mxu0
        %v8020 = vadd.f32 %v7971, %v8019
        %8021 = vmatmul.bf16.gmra.mxu0 %v5123
        %v8022 = vpop.f32.mrf.mxu0
        %v8023 = vadd.f32 %v7974, %v8022
        %v8024 = vpop.f32.mrf.mxu0
        %v8025 = vadd.f32 %v7976, %v8024
        %8026 = vmatmul.bf16.gmra.mxu0 %v5139
        %v8027 = vpop.f32.mrf.mxu0
        %v8028 = vadd.f32 %v7979, %v8027
        %v8029 = vpop.f32.mrf.mxu0
        %v8030 = vadd.f32 %v7981, %v8029
        %8031 = vmatmul.bf16.gmra.mxu0 %v5155
        %v8032 = vpop.f32.mrf.mxu0
        %v8033 = vadd.f32 %v7984, %v8032
        %v8034 = vpop.f32.mrf.mxu0
        %v8035 = vadd.f32 %v7986, %v8034
        %8036 = vmatmul.bf16.gmra.mxu0 %v5171
        %v8037 = vpop.f32.mrf.mxu0
        %v8038 = vadd.f32 %v7989, %v8037
        %v8039 = vpop.f32.mrf.mxu0
        %v8040 = vadd.f32 %v7991, %v8039
        %8041 = vdwg.mxu0
        %8042 = vmatpush.bf16.msra.mxu0 %v6398
        %8043 = vmatpush.bf16.msra.mxu0 %v6396
        %8044 = vmatpush.bf16.msra.mxu0 %v6394
        %8045 = vmatpush.bf16.msra.mxu0 %v6392
        %8046 = vmatpush.bf16.msra.mxu0 %v6390
        %8047 = vmatpush.bf16.msra.mxu0 %v6388
        %8048 = vmatpush.bf16.msra.mxu0 %v6386
        %8049 = vmatpush.bf16.msra.mxu0 %v6384
        %8050 = vmatmul.bf16.gmra.mxu0 %v5060
        %v8051 = vpop.f32.mrf.mxu0
        %v8052 = vadd.f32 %v8003, %v8051
        %v8053 = vpop.f32.mrf.mxu0
        %v8054 = vadd.f32 %v8005, %v8053
        %8055 = vmatmul.bf16.gmra.mxu0 %v5076
        %v8056 = vpop.f32.mrf.mxu0
        %v8057 = vadd.f32 %v8008, %v8056
        %v8058 = vpop.f32.mrf.mxu0
        %v8059 = vadd.f32 %v8010, %v8058
        %8060 = vmatmul.bf16.gmra.mxu0 %v5092
        %v8061 = vpop.f32.mrf.mxu0
        %v8062 = vadd.f32 %v8013, %v8061
        %v8063 = vpop.f32.mrf.mxu0
        %v8064 = vadd.f32 %v8015, %v8063
        %8065 = vmatmul.bf16.gmra.mxu0 %v5108
        %v8066 = vpop.f32.mrf.mxu0
        %v8067 = vadd.f32 %v8018, %v8066
        %v8068 = vpop.f32.mrf.mxu0
        %v8069 = vadd.f32 %v8020, %v8068
        %8070 = vmatmul.bf16.gmra.mxu0 %v5124
        %v8071 = vpop.f32.mrf.mxu0
        %v8072 = vadd.f32 %v8023, %v8071
        %v8073 = vpop.f32.mrf.mxu0
        %v8074 = vadd.f32 %v8025, %v8073
        %8075 = vmatmul.bf16.gmra.mxu0 %v5140
        %v8076 = vpop.f32.mrf.mxu0
        %v8077 = vadd.f32 %v8028, %v8076
        %v8078 = vpop.f32.mrf.mxu0
        %v8079 = vadd.f32 %v8030, %v8078
        %8080 = vmatmul.bf16.gmra.mxu0 %v5156
        %v8081 = vpop.f32.mrf.mxu0
        %v8082 = vadd.f32 %v8033, %v8081
        %v8083 = vpop.f32.mrf.mxu0
        %v8084 = vadd.f32 %v8035, %v8083
        %8085 = vmatmul.bf16.gmra.mxu0 %v5172
        %v8086 = vpop.f32.mrf.mxu0
        %v8087 = vadd.f32 %v8038, %v8086
        %v8088 = vpop.f32.mrf.mxu0
        %v8089 = vadd.f32 %v8040, %v8088
        %8090 = vdwg.mxu0
        %8091 = vmatpush.bf16.msra.mxu0 %v6414
        %8092 = vmatpush.bf16.msra.mxu0 %v6412
        %8093 = vmatpush.bf16.msra.mxu0 %v6410
        %8094 = vmatpush.bf16.msra.mxu0 %v6408
        %8095 = vmatpush.bf16.msra.mxu0 %v6406
        %8096 = vmatpush.bf16.msra.mxu0 %v6404
        %8097 = vmatpush.bf16.msra.mxu0 %v6402
        %8098 = vmatpush.bf16.msra.mxu0 %v6400
        %8099 = vmatmul.bf16.gmra.mxu0 %v5061
        %v8100 = vpop.f32.mrf.mxu0
        %v8101 = vadd.f32 %v8052, %v8100
        %v8102 = vpop.f32.mrf.mxu0
        %v8103 = vadd.f32 %v8054, %v8102
        %8104 = vmatmul.bf16.gmra.mxu0 %v5077
        %v8105 = vpop.f32.mrf.mxu0
        %v8106 = vadd.f32 %v8057, %v8105
        %v8107 = vpop.f32.mrf.mxu0
        %v8108 = vadd.f32 %v8059, %v8107
        %8109 = vmatmul.bf16.gmra.mxu0 %v5093
        %v8110 = vpop.f32.mrf.mxu0
        %v8111 = vadd.f32 %v8062, %v8110
        %v8112 = vpop.f32.mrf.mxu0
        %v8113 = vadd.f32 %v8064, %v8112
        %8114 = vmatmul.bf16.gmra.mxu0 %v5109
        %v8115 = vpop.f32.mrf.mxu0
        %v8116 = vadd.f32 %v8067, %v8115
        %v8117 = vpop.f32.mrf.mxu0
        %v8118 = vadd.f32 %v8069, %v8117
        %8119 = vmatmul.bf16.gmra.mxu0 %v5125
        %v8120 = vpop.f32.mrf.mxu0
        %v8121 = vadd.f32 %v8072, %v8120
        %v8122 = vpop.f32.mrf.mxu0
        %v8123 = vadd.f32 %v8074, %v8122
        %8124 = vmatmul.bf16.gmra.mxu0 %v5141
        %v8125 = vpop.f32.mrf.mxu0
        %v8126 = vadd.f32 %v8077, %v8125
        %v8127 = vpop.f32.mrf.mxu0
        %v8128 = vadd.f32 %v8079, %v8127
        %8129 = vmatmul.bf16.gmra.mxu0 %v5157
        %v8130 = vpop.f32.mrf.mxu0
        %v8131 = vadd.f32 %v8082, %v8130
        %v8132 = vpop.f32.mrf.mxu0
        %v8133 = vadd.f32 %v8084, %v8132
        %8134 = vmatmul.bf16.gmra.mxu0 %v5173
        %v8135 = vpop.f32.mrf.mxu0
        %v8136 = vadd.f32 %v8087, %v8135
        %v8137 = vpop.f32.mrf.mxu0
        %v8138 = vadd.f32 %v8089, %v8137
        %8139 = vdwg.mxu0
        %8140 = vmatpush.bf16.msra.mxu0 %v6430
        %8141 = vmatpush.bf16.msra.mxu0 %v6428
        %8142 = vmatpush.bf16.msra.mxu0 %v6426
        %8143 = vmatpush.bf16.msra.mxu0 %v6424
        %8144 = vmatpush.bf16.msra.mxu0 %v6422
        %8145 = vmatpush.bf16.msra.mxu0 %v6420
        %8146 = vmatpush.bf16.msra.mxu0 %v6418
        %8147 = vmatpush.bf16.msra.mxu0 %v6416
        %8148 = vmatmul.bf16.gmra.mxu0 %v5062
        %v8149 = vpop.f32.mrf.mxu0
        %v8150 = vadd.f32 %v8101, %v8149
        %v8151 = vpop.f32.mrf.mxu0
        %v8152 = vadd.f32 %v8103, %v8151
        %8153 = vmatmul.bf16.gmra.mxu0 %v5078
        %v8154 = vpop.f32.mrf.mxu0
        %v8155 = vadd.f32 %v8106, %v8154
        %v8156 = vpop.f32.mrf.mxu0
        %v8157 = vadd.f32 %v8108, %v8156
        %8158 = vmatmul.bf16.gmra.mxu0 %v5094
        %v8159 = vpop.f32.mrf.mxu0
        %v8160 = vadd.f32 %v8111, %v8159
        %v8161 = vpop.f32.mrf.mxu0
        %v8162 = vadd.f32 %v8113, %v8161
        %8163 = vmatmul.bf16.gmra.mxu0 %v5110
        %v8164 = vpop.f32.mrf.mxu0
        %v8165 = vadd.f32 %v8116, %v8164
        %v8166 = vpop.f32.mrf.mxu0
        %v8167 = vadd.f32 %v8118, %v8166
        %8168 = vmatmul.bf16.gmra.mxu0 %v5126
        %v8169 = vpop.f32.mrf.mxu0
        %v8170 = vadd.f32 %v8121, %v8169
        %v8171 = vpop.f32.mrf.mxu0
        %v8172 = vadd.f32 %v8123, %v8171
        %8173 = vmatmul.bf16.gmra.mxu0 %v5142
        %v8174 = vpop.f32.mrf.mxu0
        %v8175 = vadd.f32 %v8126, %v8174
        %v8176 = vpop.f32.mrf.mxu0
        %v8177 = vadd.f32 %v8128, %v8176
        %8178 = vmatmul.bf16.gmra.mxu0 %v5158
        %v8179 = vpop.f32.mrf.mxu0
        %v8180 = vadd.f32 %v8131, %v8179
        %v8181 = vpop.f32.mrf.mxu0
        %v8182 = vadd.f32 %v8133, %v8181
        %8183 = vmatmul.bf16.gmra.mxu0 %v5174
        %v8184 = vpop.f32.mrf.mxu0
        %v8185 = vadd.f32 %v8136, %v8184
        %v8186 = vpop.f32.mrf.mxu0
        %v8187 = vadd.f32 %v8138, %v8186
        %8188 = vdwg.mxu0
        %8189 = vmatpush.bf16.msra.mxu0 %v6446
        %8190 = vmatpush.bf16.msra.mxu0 %v6444
        %8191 = vmatpush.bf16.msra.mxu0 %v6442
        %8192 = vmatpush.bf16.msra.mxu0 %v6440
        %8193 = vmatpush.bf16.msra.mxu0 %v6438
        %8194 = vmatpush.bf16.msra.mxu0 %v6436
        %8195 = vmatpush.bf16.msra.mxu0 %v6434
        %8196 = vmatpush.bf16.msra.mxu0 %v6432
        %8197 = vmatmul.bf16.gmra.mxu0 %v5063
        %v8198 = vpop.f32.mrf.mxu0
        %v8199 = vadd.f32 %v8150, %v8198
        %v8200 = vpop.f32.mrf.mxu0
        %v8201 = vadd.f32 %v8152, %v8200
        %8202 = vmatmul.bf16.gmra.mxu0 %v5079
        %v8203 = vpop.f32.mrf.mxu0
        %v8204 = vadd.f32 %v8155, %v8203
        %v8205 = vpop.f32.mrf.mxu0
        %v8206 = vadd.f32 %v8157, %v8205
        %8207 = vmatmul.bf16.gmra.mxu0 %v5095
        %v8208 = vpop.f32.mrf.mxu0
        %v8209 = vadd.f32 %v8160, %v8208
        %v8210 = vpop.f32.mrf.mxu0
        %v8211 = vadd.f32 %v8162, %v8210
        %8212 = vmatmul.bf16.gmra.mxu0 %v5111
        %v8213 = vpop.f32.mrf.mxu0
        %v8214 = vadd.f32 %v8165, %v8213
        %v8215 = vpop.f32.mrf.mxu0
        %v8216 = vadd.f32 %v8167, %v8215
        %8217 = vmatmul.bf16.gmra.mxu0 %v5127
        %v8218 = vpop.f32.mrf.mxu0
        %v8219 = vadd.f32 %v8170, %v8218
        %v8220 = vpop.f32.mrf.mxu0
        %v8221 = vadd.f32 %v8172, %v8220
        %8222 = vmatmul.bf16.gmra.mxu0 %v5143
        %v8223 = vpop.f32.mrf.mxu0
        %v8224 = vadd.f32 %v8175, %v8223
        %v8225 = vpop.f32.mrf.mxu0
        %v8226 = vadd.f32 %v8177, %v8225
        %8227 = vmatmul.bf16.gmra.mxu0 %v5159
        %v8228 = vpop.f32.mrf.mxu0
        %v8229 = vadd.f32 %v8180, %v8228
        %v8230 = vpop.f32.mrf.mxu0
        %v8231 = vadd.f32 %v8182, %v8230
        %8232 = vmatmul.bf16.gmra.mxu0 %v5175
        %v8233 = vpop.f32.mrf.mxu0
        %v8234 = vadd.f32 %v8185, %v8233
        %v8235 = vpop.f32.mrf.mxu0
        %v8236 = vadd.f32 %v8187, %v8235
        %8237 = vdwg.mxu0
        %8238 = vmatpush.bf16.msra.mxu0 %v6462
        %8239 = vmatpush.bf16.msra.mxu0 %v6460
        %8240 = vmatpush.bf16.msra.mxu0 %v6458
        %8241 = vmatpush.bf16.msra.mxu0 %v6456
        %8242 = vmatpush.bf16.msra.mxu0 %v6454
        %8243 = vmatpush.bf16.msra.mxu0 %v6452
        %8244 = vmatpush.bf16.msra.mxu0 %v6450
        %8245 = vmatpush.bf16.msra.mxu0 %v6448
        %8246 = vmatmul.bf16.gmra.mxu0 %v5064
        %v8247 = vpop.f32.mrf.mxu0
        %v8248 = vadd.f32 %v8199, %v8247
        %v8249 = vpop.f32.mrf.mxu0
        %v8250 = vadd.f32 %v8201, %v8249
        %8251 = vmatmul.bf16.gmra.mxu0 %v5080
        %v8252 = vpop.f32.mrf.mxu0
        %v8253 = vadd.f32 %v8204, %v8252
        %v8254 = vpop.f32.mrf.mxu0
        %v8255 = vadd.f32 %v8206, %v8254
        %8256 = vmatmul.bf16.gmra.mxu0 %v5096
        %v8257 = vpop.f32.mrf.mxu0
        %v8258 = vadd.f32 %v8209, %v8257
        %v8259 = vpop.f32.mrf.mxu0
        %v8260 = vadd.f32 %v8211, %v8259
        %8261 = vmatmul.bf16.gmra.mxu0 %v5112
        %v8262 = vpop.f32.mrf.mxu0
        %v8263 = vadd.f32 %v8214, %v8262
        %v8264 = vpop.f32.mrf.mxu0
        %v8265 = vadd.f32 %v8216, %v8264
        %8266 = vmatmul.bf16.gmra.mxu0 %v5128
        %v8267 = vpop.f32.mrf.mxu0
        %v8268 = vadd.f32 %v8219, %v8267
        %v8269 = vpop.f32.mrf.mxu0
        %v8270 = vadd.f32 %v8221, %v8269
        %8271 = vmatmul.bf16.gmra.mxu0 %v5144
        %v8272 = vpop.f32.mrf.mxu0
        %v8273 = vadd.f32 %v8224, %v8272
        %v8274 = vpop.f32.mrf.mxu0
        %v8275 = vadd.f32 %v8226, %v8274
        %8276 = vmatmul.bf16.gmra.mxu0 %v5160
        %v8277 = vpop.f32.mrf.mxu0
        %v8278 = vadd.f32 %v8229, %v8277
        %v8279 = vpop.f32.mrf.mxu0
        %v8280 = vadd.f32 %v8231, %v8279
        %8281 = vmatmul.bf16.gmra.mxu0 %v5176
        %v8282 = vpop.f32.mrf.mxu0
        %v8283 = vadd.f32 %v8234, %v8282
        %v8284 = vpop.f32.mrf.mxu0
        %v8285 = vadd.f32 %v8236, %v8284
        %8286 = vdwg.mxu0
        %v8287 = vld [vmem:[%s14] sm:$0xff]
        %v8288 = vld [vmem:[%s14 + $0x8] sm:$0xff]
        %v8289 = vld [vmem:[%s14 + $0x10] sm:$0xff]
        %v8290 = vld [vmem:[%s14 + $0x18] sm:$0xff]
        %v8291 = vld [vmem:[%s14 + $0x20] sm:$0xff]
        %v8292 = vld [vmem:[%s14 + $0x28] sm:$0xff]
        %v8293 = vld [vmem:[%s14 + $0x30] sm:$0xff]
        %v8294 = vld [vmem:[%s14 + $0x38] sm:$0xff]
        %v8295 = vld [vmem:[%s14 + $0x40] sm:$0xff]
        %v8296 = vld [vmem:[%s14 + $0x48] sm:$0xff]
        %v8297 = vld [vmem:[%s14 + $0x50] sm:$0xff]
        %v8298 = vld [vmem:[%s14 + $0x58] sm:$0xff]
        %v8299 = vld [vmem:[%s14 + $0x60] sm:$0xff]
        %v8300 = vld [vmem:[%s14 + $0x68] sm:$0xff]
        %v8301 = vld [vmem:[%s14 + $0x70] sm:$0xff]
        %v8302 = vld [vmem:[%s14 + $0x78] sm:$0xff]
        %vm8303 = vcmask 64512
        %v8305 = vsel %vm8303, %v8287, 0
        %v8308 = vsel %vm8303, %v8288, 0
        %v8311 = vsel %vm8303, %v8289, 0
        %v8314 = vsel %vm8303, %v8290, 0
        %v8317 = vsel %vm8303, %v8291, 0
        %v8320 = vsel %vm8303, %v8292, 0
        %v8323 = vsel %vm8303, %v8293, 0
        %v8326 = vsel %vm8303, %v8294, 0
        %v8329 = vsel %vm8303, %v8295, 0
        %v8332 = vsel %vm8303, %v8296, 0
        %v8335 = vsel %vm8303, %v8297, 0
        %v8338 = vsel %vm8303, %v8298, 0
        %v8341 = vsel %vm8303, %v8299, 0
        %v8344 = vsel %vm8303, %v8300, 0
        %v8347 = vsel %vm8303, %v8301, 0
        %v8350 = vsel %vm8303, %v8302, 0
        %8352 = vmatpush.msra.mxu0 0.0
        %8353 = vmatpush.msra.mxu0 0.0
        %8354 = vmatpush.msra.mxu0 0.0
        %8355 = vmatpush.msra.mxu0 0.0
        %8356 = vmatpush.msra.mxu0 0.0
        %8357 = vmatpush.msra.mxu0 0.0
        %8358 = vmatpush.msra.mxu0 0.0
        %8359 = vmatpush.msra.mxu0 0.0
        %8360 = vmatpush.msra.mxu0 0.0
        %8361 = vmatpush.msra.mxu0 0.0
        %8362 = vmatpush.msra.mxu0 0.0
        %8363 = vmatpush.msra.mxu0 0.0
        %8364 = vmatpush.msra.mxu0 0.0
        %8365 = vmatpush.msra.mxu0 0.0
        %8366 = vmatpush.msra.mxu0 0.0
        %8367 = vmatpush.msra.mxu0 %v5048
        %8368 = vmatmul.f32.gmra.mxu0 %v8305
        %v8369 = vpop.f32.mrf.mxu0
        %v8370 = vadd.f32 0.0, %v8369
        %8371 = vmatmul.f32.gmra.mxu0 %v8308
        %v8372 = vpop.f32.mrf.mxu0
        %v8373 = vadd.f32 0.0, %v8372
        %8374 = vmatmul.f32.gmra.mxu0 %v8311
        %v8375 = vpop.f32.mrf.mxu0
        %v8376 = vadd.f32 0.0, %v8375
        %8377 = vmatmul.f32.gmra.mxu0 %v8314
        %v8378 = vpop.f32.mrf.mxu0
        %v8379 = vadd.f32 0.0, %v8378
        %8380 = vmatmul.f32.gmra.mxu0 %v8317
        %v8381 = vpop.f32.mrf.mxu0
        %v8382 = vadd.f32 0.0, %v8381
        %8383 = vmatmul.f32.gmra.mxu0 %v8320
        %v8384 = vpop.f32.mrf.mxu0
        %v8385 = vadd.f32 0.0, %v8384
        %8386 = vmatmul.f32.gmra.mxu0 %v8323
        %v8387 = vpop.f32.mrf.mxu0
        %v8388 = vadd.f32 0.0, %v8387
        %8389 = vmatmul.f32.gmra.mxu0 %v8326
        %v8390 = vpop.f32.mrf.mxu0
        %v8391 = vadd.f32 0.0, %v8390
        %8392 = vmatmul.f32.gmra.mxu0 %v8329
        %v8393 = vpop.f32.mrf.mxu0
        %v8394 = vadd.f32 0.0, %v8393
        %8395 = vmatmul.f32.gmra.mxu0 %v8332
        %v8396 = vpop.f32.mrf.mxu0
        %v8397 = vadd.f32 0.0, %v8396
        %8398 = vmatmul.f32.gmra.mxu0 %v8335
        %v8399 = vpop.f32.mrf.mxu0
        %v8400 = vadd.f32 0.0, %v8399
        %8401 = vmatmul.f32.gmra.mxu0 %v8338
        %v8402 = vpop.f32.mrf.mxu0
        %v8403 = vadd.f32 0.0, %v8402
        %8404 = vmatmul.f32.gmra.mxu0 %v8341
        %v8405 = vpop.f32.mrf.mxu0
        %v8406 = vadd.f32 0.0, %v8405
        %8407 = vmatmul.f32.gmra.mxu0 %v8344
        %v8408 = vpop.f32.mrf.mxu0
        %v8409 = vadd.f32 0.0, %v8408
        %8410 = vmatmul.f32.gmra.mxu0 %v8347
        %v8411 = vpop.f32.mrf.mxu0
        %v8412 = vadd.f32 0.0, %v8411
        %8413 = vmatmul.f32.gmra.mxu0 %v8350
        %v8414 = vpop.f32.mrf.mxu0
        %v8415 = vadd.f32 0.0, %v8414
        %8416 = vdwg.mxu0
        %v8417 = vld [vmem:[%s13] sm:$0xff]
        %v8418 = vld [vmem:[%s13 + $0x8] sm:$0xff]
        %v8419 = vld [vmem:[%s13 + $0x10] sm:$0xff]
        %v8420 = vld [vmem:[%s13 + $0x18] sm:$0xff]
        %v8421 = vld [vmem:[%s13 + $0x20] sm:$0x3]
        %v8422 = vld [vmem:[%s13 + $0x28] sm:$0x3]
        %vm8423 = vcmask 146432
        %v8425 = vsel %vm8423, %v8370, 0
        %v8428 = vsel %vm8423, %v8373, 0
        %v8431 = vsel %vm8423, %v8376, 0
        %v8434 = vsel %vm8423, %v8379, 0
        %v8437 = vsel %vm8423, %v8382, 0
        %v8440 = vsel %vm8423, %v8385, 0
        %v8443 = vsel %vm8423, %v8388, 0
        %v8446 = vsel %vm8423, %v8391, 0
        %v8449 = vsel %vm8423, %v8394, 0
        %v8452 = vsel %vm8423, %v8397, 0
        %v8455 = vsel %vm8423, %v8400, 0
        %v8458 = vsel %vm8423, %v8403, 0
        %v8461 = vsel %vm8423, %v8406, 0
        %v8464 = vsel %vm8423, %v8409, 0
        %v8467 = vsel %vm8423, %v8412, 0
        %v8470 = vsel %vm8423, %v8415, 0
        %vm8472 = vcmask 1041408
        %v8474 = vsel %vm8472, %v8421, 0
        %v8477 = vsel %vm8472, %v8422, 0
        %8479 = vmatpush.msra.mxu0 0.0
        %8480 = vmatpush.msra.mxu0 0.0
        %8481 = vmatpush.msra.mxu0 0.0
        %8482 = vmatpush.msra.mxu0 0.0
        %8483 = vmatpush.msra.mxu0 0.0
        %8484 = vmatpush.msra.mxu0 0.0
        %8485 = vmatpush.msra.mxu0 0.0
        %8486 = vmatpush.msra.mxu0 0.0
        %8487 = vmatpush.msra.mxu0 0.0
        %8488 = vmatpush.msra.mxu0 0.0
        %8489 = vmatpush.msra.mxu0 0.0
        %8490 = vmatpush.msra.mxu0 0.0
        %8491 = vmatpush.msra.mxu0 0.0
        %8492 = vmatpush.msra.mxu0 %v8474
        %8493 = vmatpush.msra.mxu0 %v8419
        %8494 = vmatpush.msra.mxu0 %v8417
        %8495 = vmatmul.f32.gmra.mxu0 %v8425
        %v8496 = vpop.f32.mrf.mxu0
        %v8497 = vadd.f32 0.0, %v8496
        %8498 = vmatmul.f32.gmra.mxu0 %v8428
        %v8499 = vpop.f32.mrf.mxu0
        %v8500 = vadd.f32 0.0, %v8499
        %8501 = vmatmul.f32.gmra.mxu0 %v8431
        %v8502 = vpop.f32.mrf.mxu0
        %v8503 = vadd.f32 0.0, %v8502
        %8504 = vmatmul.f32.gmra.mxu0 %v8434
        %v8505 = vpop.f32.mrf.mxu0
        %v8506 = vadd.f32 0.0, %v8505
        %8507 = vmatmul.f32.gmra.mxu0 %v8437
        %v8508 = vpop.f32.mrf.mxu0
        %v8509 = vadd.f32 0.0, %v8508
        %8510 = vmatmul.f32.gmra.mxu0 %v8440
        %v8511 = vpop.f32.mrf.mxu0
        %v8512 = vadd.f32 0.0, %v8511
        %8513 = vmatmul.f32.gmra.mxu0 %v8443
        %v8514 = vpop.f32.mrf.mxu0
        %v8515 = vadd.f32 0.0, %v8514
        %8516 = vmatmul.f32.gmra.mxu0 %v8446
        %v8517 = vpop.f32.mrf.mxu0
        %v8518 = vadd.f32 0.0, %v8517
        %8519 = vmatmul.f32.gmra.mxu0 %v8449
        %v8520 = vpop.f32.mrf.mxu0
        %v8521 = vadd.f32 0.0, %v8520
        %8522 = vmatmul.f32.gmra.mxu0 %v8452
        %v8523 = vpop.f32.mrf.mxu0
        %v8524 = vadd.f32 0.0, %v8523
        %8525 = vmatmul.f32.gmra.mxu0 %v8455
        %v8526 = vpop.f32.mrf.mxu0
        %v8527 = vadd.f32 0.0, %v8526
        %8528 = vmatmul.f32.gmra.mxu0 %v8458
        %v8529 = vpop.f32.mrf.mxu0
        %v8530 = vadd.f32 0.0, %v8529
        %8531 = vmatmul.f32.gmra.mxu0 %v8461
        %v8532 = vpop.f32.mrf.mxu0
        %v8533 = vadd.f32 0.0, %v8532
        %8534 = vmatmul.f32.gmra.mxu0 %v8464
        %v8535 = vpop.f32.mrf.mxu0
        %v8536 = vadd.f32 0.0, %v8535
        %8537 = vmatmul.f32.gmra.mxu0 %v8467
        %v8538 = vpop.f32.mrf.mxu0
        %v8539 = vadd.f32 0.0, %v8538
        %8540 = vmatmul.f32.gmra.mxu0 %v8470
        %v8541 = vpop.f32.mrf.mxu0
        %v8542 = vadd.f32 0.0, %v8541
        %8543 = vdwg.mxu0
        %8544 = vmatpush.msra.mxu0 0.0
        %8545 = vmatpush.msra.mxu0 0.0
        %8546 = vmatpush.msra.mxu0 0.0
        %8547 = vmatpush.msra.mxu0 0.0
        %8548 = vmatpush.msra.mxu0 0.0
        %8549 = vmatpush.msra.mxu0 0.0
        %8550 = vmatpush.msra.mxu0 0.0
        %8551 = vmatpush.msra.mxu0 0.0
        %8552 = vmatpush.msra.mxu0 0.0
        %8553 = vmatpush.msra.mxu0 0.0
        %8554 = vmatpush.msra.mxu0 0.0
        %8555 = vmatpush.msra.mxu0 0.0
        %8556 = vmatpush.msra.mxu0 0.0
        %8557 = vmatpush.msra.mxu0 %v8477
        %8558 = vmatpush.msra.mxu0 %v8420
        %8559 = vmatpush.msra.mxu0 %v8418
        %8560 = vmatmul.f32.gmra.mxu0 %v8425
        %v8561 = vpop.f32.mrf.mxu0
        %v8562 = vadd.f32 0.0, %v8561
        %8563 = vmatmul.f32.gmra.mxu0 %v8428
        %v8564 = vpop.f32.mrf.mxu0
        %v8565 = vadd.f32 0.0, %v8564
        %8566 = vmatmul.f32.gmra.mxu0 %v8431
        %v8567 = vpop.f32.mrf.mxu0
        %v8568 = vadd.f32 0.0, %v8567
        %8569 = vmatmul.f32.gmra.mxu0 %v8434
        %v8570 = vpop.f32.mrf.mxu0
        %v8571 = vadd.f32 0.0, %v8570
        %8572 = vmatmul.f32.gmra.mxu0 %v8437
        %v8573 = vpop.f32.mrf.mxu0
        %v8574 = vadd.f32 0.0, %v8573
        %8575 = vmatmul.f32.gmra.mxu0 %v8440
        %v8576 = vpop.f32.mrf.mxu0
        %v8577 = vadd.f32 0.0, %v8576
        %8578 = vmatmul.f32.gmra.mxu0 %v8443
        %v8579 = vpop.f32.mrf.mxu0
        %v8580 = vadd.f32 0.0, %v8579
        %8581 = vmatmul.f32.gmra.mxu0 %v8446
        %v8582 = vpop.f32.mrf.mxu0
        %v8583 = vadd.f32 0.0, %v8582
        %8584 = vmatmul.f32.gmra.mxu0 %v8449
        %v8585 = vpop.f32.mrf.mxu0
        %v8586 = vadd.f32 0.0, %v8585
        %8587 = vmatmul.f32.gmra.mxu0 %v8452
        %v8588 = vpop.f32.mrf.mxu0
        %v8589 = vadd.f32 0.0, %v8588
        %8590 = vmatmul.f32.gmra.mxu0 %v8455
        %v8591 = vpop.f32.mrf.mxu0
        %v8592 = vadd.f32 0.0, %v8591
        %8593 = vmatmul.f32.gmra.mxu0 %v8458
        %v8594 = vpop.f32.mrf.mxu0
        %v8595 = vadd.f32 0.0, %v8594
        %8596 = vmatmul.f32.gmra.mxu0 %v8461
        %v8597 = vpop.f32.mrf.mxu0
        %v8598 = vadd.f32 0.0, %v8597
        %8599 = vmatmul.f32.gmra.mxu0 %v8464
        %v8600 = vpop.f32.mrf.mxu0
        %v8601 = vadd.f32 0.0, %v8600
        %8602 = vmatmul.f32.gmra.mxu0 %v8467
        %v8603 = vpop.f32.mrf.mxu0
        %v8604 = vadd.f32 0.0, %v8603
        %8605 = vmatmul.f32.gmra.mxu0 %v8470
        %v8606 = vpop.f32.mrf.mxu0
        %v8607 = vadd.f32 0.0, %v8606
        %8608 = vdwg.mxu0
        %v8609 = vmul.f32 %v7464, %v8497
        %v8610 = vmul.f32 %v8248, %v8562
        %v8611 = vmul.f32 %v7466, %v8500
        %v8612 = vmul.f32 %v8250, %v8565
        %v8613 = vmul.f32 %v7469, %v8503
        %v8614 = vmul.f32 %v8253, %v8568
        %v8615 = vmul.f32 %v7471, %v8506
        %v8616 = vmul.f32 %v8255, %v8571
        %v8617 = vmul.f32 %v7474, %v8509
        %v8618 = vmul.f32 %v8258, %v8574
        %v8619 = vmul.f32 %v7476, %v8512
        %v8620 = vmul.f32 %v8260, %v8577
        %v8621 = vmul.f32 %v7479, %v8515
        %v8622 = vmul.f32 %v8263, %v8580
        %v8623 = vmul.f32 %v7481, %v8518
        %v8624 = vmul.f32 %v8265, %v8583
        %v8625 = vmul.f32 %v7484, %v8521
        %v8626 = vmul.f32 %v8268, %v8586
        %v8627 = vmul.f32 %v7486, %v8524
        %v8628 = vmul.f32 %v8270, %v8589
        %v8629 = vmul.f32 %v7489, %v8527
        %v8630 = vmul.f32 %v8273, %v8592
        %v8631 = vmul.f32 %v7491, %v8530
        %v8632 = vmul.f32 %v8275, %v8595
        %v8633 = vmul.f32 %v7494, %v8533
        %v8634 = vmul.f32 %v8278, %v8598
        %v8635 = vmul.f32 %v7496, %v8536
        %v8636 = vmul.f32 %v8280, %v8601
        %v8637 = vmul.f32 %v7499, %v8539
        %v8638 = vmul.f32 %v8283, %v8604
        %v8639 = vmul.f32 %v7501, %v8542
        %v8640 = vmul.f32 %v8285, %v8607
        %vm8641 = vcmask 130048
        %v8642 = vsel %vm8641, %v8610, -inf
        %v8643 = vmax.f32 %v8609, %v8642
        %8644 = vmax.xlane.f32.xlu0 %v8643
        %v8645 = vpop.xlane.xlu0 %8644
        %v8646 = vsel %vm8641, %v8612, -inf
        %v8647 = vmax.f32 %v8611, %v8646
        %8648 = vmax.xlane.f32.xlu0 %v8647
        %v8649 = vpop.xlane.xlu0 %8648
        %v8650 = vsel %vm8641, %v8614, -inf
        %v8651 = vmax.f32 %v8613, %v8650
        %8652 = vmax.xlane.f32.xlu0 %v8651
        %v8653 = vpop.xlane.xlu0 %8652
        %v8654 = vsel %vm8641, %v8616, -inf
        %v8655 = vmax.f32 %v8615, %v8654
        %8656 = vmax.xlane.f32.xlu0 %v8655
        %v8657 = vpop.xlane.xlu0 %8656
        %v8658 = vsel %vm8641, %v8618, -inf
        %v8659 = vmax.f32 %v8617, %v8658
        %8660 = vmax.xlane.f32.xlu0 %v8659
        %v8661 = vpop.xlane.xlu0 %8660
        %v8662 = vsel %vm8641, %v8620, -inf
        %v8663 = vmax.f32 %v8619, %v8662
        %8664 = vmax.xlane.f32.xlu0 %v8663
        %v8665 = vpop.xlane.xlu0 %8664
        %v8666 = vsel %vm8641, %v8622, -inf
        %v8667 = vmax.f32 %v8621, %v8666
        %8668 = vmax.xlane.f32.xlu0 %v8667
        %v8669 = vpop.xlane.xlu0 %8668
        %v8670 = vsel %vm8641, %v8624, -inf
        %v8671 = vmax.f32 %v8623, %v8670
        %8672 = vmax.xlane.f32.xlu0 %v8671
        %v8673 = vpop.xlane.xlu0 %8672
        %v8674 = vsel %vm8641, %v8626, -inf
        %v8675 = vmax.f32 %v8625, %v8674
        %8676 = vmax.xlane.f32.xlu0 %v8675
        %v8677 = vpop.xlane.xlu0 %8676
        %v8678 = vsel %vm8641, %v8628, -inf
        %v8679 = vmax.f32 %v8627, %v8678
        %8680 = vmax.xlane.f32.xlu0 %v8679
        %v8681 = vpop.xlane.xlu0 %8680
        %v8682 = vsel %vm8641, %v8630, -inf
        %v8683 = vmax.f32 %v8629, %v8682
        %8684 = vmax.xlane.f32.xlu0 %v8683
        %v8685 = vpop.xlane.xlu0 %8684
        %v8686 = vsel %vm8641, %v8632, -inf
        %v8687 = vmax.f32 %v8631, %v8686
        %8688 = vmax.xlane.f32.xlu0 %v8687
        %v8689 = vpop.xlane.xlu0 %8688
        %v8690 = vsel %vm8641, %v8634, -inf
        %v8691 = vmax.f32 %v8633, %v8690
        %8692 = vmax.xlane.f32.xlu0 %v8691
        %v8693 = vpop.xlane.xlu0 %8692
        %v8694 = vsel %vm8641, %v8636, -inf
        %v8695 = vmax.f32 %v8635, %v8694
        %8696 = vmax.xlane.f32.xlu0 %v8695
        %v8697 = vpop.xlane.xlu0 %8696
        %v8698 = vsel %vm8641, %v8638, -inf
        %v8699 = vmax.f32 %v8637, %v8698
        %8700 = vmax.xlane.f32.xlu0 %v8699
        %v8701 = vpop.xlane.xlu0 %8700
        %v8702 = vsel %vm8641, %v8640, -inf
        %v8703 = vmax.f32 %v8639, %v8702
        %8704 = vmax.xlane.f32.xlu0 %v8703
        %v8705 = vpop.xlane.xlu0 %8704
        %v8706 = vmax.f32 %v8645, %v8649
        %v8707 = vrot.slane %v8706, 4
        %v8708 = vmax.f32 %v8706, %v8707
        %v8709 = vrot.slane %v8708, 2
        %v8710 = vmax.f32 %v8708, %v8709
        %v8711 = vrot.slane %v8710, 1
        %v8712 = vmax.f32 %v8710, %v8711
        %v8713 = vmax.f32 %v8653, %v8657
        %v8714 = vrot.slane %v8713, 4
        %v8715 = vmax.f32 %v8713, %v8714
        %v8716 = vrot.slane %v8715, 2
        %v8717 = vmax.f32 %v8715, %v8716
        %v8718 = vrot.slane %v8717, 1
        %v8719 = vmax.f32 %v8717, %v8718
        %v8720 = vmax.f32 %v8661, %v8665
        %v8721 = vrot.slane %v8720, 4
        %v8722 = vmax.f32 %v8720, %v8721
        %v8723 = vrot.slane %v8722, 2
        %v8724 = vmax.f32 %v8722, %v8723
        %v8725 = vrot.slane %v8724, 1
        %v8726 = vmax.f32 %v8724, %v8725
        %v8727 = vmax.f32 %v8669, %v8673
        %v8728 = vrot.slane %v8727, 4
        %v8729 = vmax.f32 %v8727, %v8728
        %v8730 = vrot.slane %v8729, 2
        %v8731 = vmax.f32 %v8729, %v8730
        %v8732 = vrot.slane %v8731, 1
        %v8733 = vmax.f32 %v8731, %v8732
        %v8734 = vmax.f32 %v8677, %v8681
        %v8735 = vrot.slane %v8734, 4
        %v8736 = vmax.f32 %v8734, %v8735
        %v8737 = vrot.slane %v8736, 2
        %v8738 = vmax.f32 %v8736, %v8737
        %v8739 = vrot.slane %v8738, 1
        %v8740 = vmax.f32 %v8738, %v8739
        %v8741 = vmax.f32 %v8685, %v8689
        %v8742 = vrot.slane %v8741, 4
        %v8743 = vmax.f32 %v8741, %v8742
        %v8744 = vrot.slane %v8743, 2
        %v8745 = vmax.f32 %v8743, %v8744
        %v8746 = vrot.slane %v8745, 1
        %v8747 = vmax.f32 %v8745, %v8746
        %v8748 = vmax.f32 %v8693, %v8697
        %v8749 = vrot.slane %v8748, 4
        %v8750 = vmax.f32 %v8748, %v8749
        %v8751 = vrot.slane %v8750, 2
        %v8752 = vmax.f32 %v8750, %v8751
        %v8753 = vrot.slane %v8752, 1
        %v8754 = vmax.f32 %v8752, %v8753
        %v8755 = vmax.f32 %v8701, %v8705
        %v8756 = vrot.slane %v8755, 4
        %v8757 = vmax.f32 %v8755, %v8756
        %v8758 = vrot.slane %v8757, 2
        %v8759 = vmax.f32 %v8757, %v8758
        %v8760 = vrot.slane %v8759, 1
        %v8761 = vmax.f32 %v8759, %v8760
        %v8762 = vsub.f32 %v8609, %v8712
        %v8763 = vsub.f32 %v8610, %v8712
        %v8764 = vsub.f32 %v8611, %v8712
        %v8765 = vsub.f32 %v8612, %v8712
        %v8766 = vsub.f32 %v8613, %v8719
        %v8767 = vsub.f32 %v8614, %v8719
        %v8768 = vsub.f32 %v8615, %v8719
        %v8769 = vsub.f32 %v8616, %v8719
        %v8770 = vsub.f32 %v8617, %v8726
        %v8771 = vsub.f32 %v8618, %v8726
        %v8772 = vsub.f32 %v8619, %v8726
        %v8773 = vsub.f32 %v8620, %v8726
        %v8774 = vsub.f32 %v8621, %v8733
        %v8775 = vsub.f32 %v8622, %v8733
        %v8776 = vsub.f32 %v8623, %v8733
        %v8777 = vsub.f32 %v8624, %v8733
        %v8778 = vsub.f32 %v8625, %v8740
        %v8779 = vsub.f32 %v8626, %v8740
        %v8780 = vsub.f32 %v8627, %v8740
        %v8781 = vsub.f32 %v8628, %v8740
        %v8782 = vsub.f32 %v8629, %v8747
        %v8783 = vsub.f32 %v8630, %v8747
        %v8784 = vsub.f32 %v8631, %v8747
        %v8785 = vsub.f32 %v8632, %v8747
        %v8786 = vsub.f32 %v8633, %v8754
        %v8787 = vsub.f32 %v8634, %v8754
        %v8788 = vsub.f32 %v8635, %v8754
        %v8789 = vsub.f32 %v8636, %v8754
        %v8790 = vsub.f32 %v8637, %v8761
        %v8791 = vsub.f32 %v8638, %v8761
        %v8792 = vsub.f32 %v8639, %v8761
        %v8793 = vsub.f32 %v8640, %v8761
        %v8794 = vmul.f32 %v8762, 1.442695
        %v8795 = vpow.pop %v8794
        %v8796 = vmul.f32 %v8763, 1.442695
        %v8797 = vpow.pop %v8796
        %v8798 = vmul.f32 %v8764, 1.442695
        %v8799 = vpow.pop %v8798
        %v8800 = vmul.f32 %v8765, 1.442695
        %v8801 = vpow.pop %v8800
        %v8802 = vmul.f32 %v8766, 1.442695
        %v8803 = vpow.pop %v8802
        %v8804 = vmul.f32 %v8767, 1.442695
        %v8805 = vpow.pop %v8804
        %v8806 = vmul.f32 %v8768, 1.442695
        %v8807 = vpow.pop %v8806
        %v8808 = vmul.f32 %v8769, 1.442695
        %v8809 = vpow.pop %v8808
        %v8810 = vmul.f32 %v8770, 1.442695
        %v8811 = vpow.pop %v8810
        %v8812 = vmul.f32 %v8771, 1.442695
        %v8813 = vpow.pop %v8812
        %v8814 = vmul.f32 %v8772, 1.442695
        %v8815 = vpow.pop %v8814
        %v8816 = vmul.f32 %v8773, 1.442695
        %v8817 = vpow.pop %v8816
        %v8818 = vmul.f32 %v8774, 1.442695
        %v8819 = vpow.pop %v8818
        %v8820 = vmul.f32 %v8775, 1.442695
        %v8821 = vpow.pop %v8820
        %v8822 = vmul.f32 %v8776, 1.442695
        %v8823 = vpow.pop %v8822
        %v8824 = vmul.f32 %v8777, 1.442695
        %v8825 = vpow.pop %v8824
        %v8826 = vmul.f32 %v8778, 1.442695
        %v8827 = vpow.pop %v8826
        %v8828 = vmul.f32 %v8779, 1.442695
        %v8829 = vpow.pop %v8828
        %v8830 = vmul.f32 %v8780, 1.442695
        %v8831 = vpow.pop %v8830
        %v8832 = vmul.f32 %v8781, 1.442695
        %v8833 = vpow.pop %v8832
        %v8834 = vmul.f32 %v8782, 1.442695
        %v8835 = vpow.pop %v8834
        %v8836 = vmul.f32 %v8783, 1.442695
        %v8837 = vpow.pop %v8836
        %v8838 = vmul.f32 %v8784, 1.442695
        %v8839 = vpow.pop %v8838
        %v8840 = vmul.f32 %v8785, 1.442695
        %v8841 = vpow.pop %v8840
        %v8842 = vmul.f32 %v8786, 1.442695
        %v8843 = vpow.pop %v8842
        %v8844 = vmul.f32 %v8787, 1.442695
        %v8845 = vpow.pop %v8844
        %v8846 = vmul.f32 %v8788, 1.442695
        %v8847 = vpow.pop %v8846
        %v8848 = vmul.f32 %v8789, 1.442695
        %v8849 = vpow.pop %v8848
        %v8850 = vmul.f32 %v8790, 1.442695
        %v8851 = vpow.pop %v8850
        %v8852 = vmul.f32 %v8791, 1.442695
        %v8853 = vpow.pop %v8852
        %v8854 = vmul.f32 %v8792, 1.442695
        %v8855 = vpow.pop %v8854
        %v8856 = vmul.f32 %v8793, 1.442695
        %v8857 = vpow.pop %v8856
        %8858 = vmatpush.msra.mxu0 %v8855
        %8859 = vmatpush.msra.mxu0 %v8851
        %8860 = vmatpush.msra.mxu0 %v8847
        %8861 = vmatpush.msra.mxu0 %v8843
        %8862 = vmatpush.msra.mxu0 %v8839
        %8863 = vmatpush.msra.mxu0 %v8835
        %8864 = vmatpush.msra.mxu0 %v8831
        %8865 = vmatpush.msra.mxu0 %v8827
        %8866 = vmatpush.msra.mxu0 %v8823
        %8867 = vmatpush.msra.mxu0 %v8819
        %8868 = vmatpush.msra.mxu0 %v8815
        %8869 = vmatpush.msra.mxu0 %v8811
        %8870 = vmatpush.msra.mxu0 %v8807
        %8871 = vmatpush.msra.mxu0 %v8803
        %8872 = vmatpush.msra.mxu0 %v8799
        %8873 = vmatpush.msra.mxu0 %v8795
        %8874 = vmatmul.f32.gmra.mxu0 %v2501
        %v8875 = vpop.f32.mrf.mxu0
        %v8876 = vadd.f32 0.0, %v8875
        %8877 = vmatmul.f32.gmra.mxu0 %v2502
        %v8878 = vpop.f32.mrf.mxu0
        %v8879 = vadd.f32 0.0, %v8878
        %8880 = vmatmul.f32.gmra.mxu0 %v2503
        %v8881 = vpop.f32.mrf.mxu0
        %v8882 = vadd.f32 0.0, %v8881
        %8883 = vdwg.mxu0
        %8884 = vmatpush.msra.mxu0 %v8857
        %8885 = vmatpush.msra.mxu0 %v8853
        %8886 = vmatpush.msra.mxu0 %v8849
        %8887 = vmatpush.msra.mxu0 %v8845
        %8888 = vmatpush.msra.mxu0 %v8841
        %8889 = vmatpush.msra.mxu0 %v8837
        %8890 = vmatpush.msra.mxu0 %v8833
        %8891 = vmatpush.msra.mxu0 %v8829
        %8892 = vmatpush.msra.mxu0 %v8825
        %8893 = vmatpush.msra.mxu0 %v8821
        %8894 = vmatpush.msra.mxu0 %v8817
        %8895 = vmatpush.msra.mxu0 %v8813
        %8896 = vmatpush.msra.mxu0 %v8809
        %8897 = vmatpush.msra.mxu0 %v8805
        %8898 = vmatpush.msra.mxu0 %v8801
        %8899 = vmatpush.msra.mxu0 %v8797
        %8900 = vmatmul.f32.gmra.mxu0 %v2501
        %v8901 = vpop.f32.mrf.mxu0
        %v8902 = vadd.f32 0.0, %v8901
        %8903 = vmatmul.f32.gmra.mxu0 %v2502
        %v8904 = vpop.f32.mrf.mxu0
        %v8905 = vadd.f32 0.0, %v8904
        %8906 = vmatmul.f32.gmra.mxu0 %v2503
        %v8907 = vpop.f32.mrf.mxu0
        %v8908 = vadd.f32 0.0, %v8907
        %8909 = vdwg.mxu0
        %v8910 = vld [vmem:[%s16] sm:$0xff]
        %v8911 = vld [vmem:[%s16 + $0x8] sm:$0xff]
        %v8912 = vld [vmem:[%s16 + $0x10] sm:$0xff]
        %v8913 = vld [vmem:[%s16 + $0x18] sm:$0xff]
        %v8914 = vld [vmem:[%s16 + $0x20] sm:$0xff]
        %v8915 = vld [vmem:[%s16 + $0x28] sm:$0xff]
        %v8916 = vld [vmem:[%s16 + $0x30] sm:$0xff]
        %v8917 = vld [vmem:[%s16 + $0x38] sm:$0xff]
        %v8918 = vld [vmem:[%s16 + $0x40] sm:$0xff]
        %v8919 = vld [vmem:[%s16 + $0x48] sm:$0xff]
        %v8920 = vld [vmem:[%s16 + $0x50] sm:$0xff]
        %v8921 = vld [vmem:[%s16 + $0x58] sm:$0xff]
        %v8922 = vld [vmem:[%s16 + $0x60] sm:$0xff]
        %v8923 = vld [vmem:[%s16 + $0x68] sm:$0xff]
        %v8924 = vld [vmem:[%s16 + $0x70] sm:$0xff]
        %v8925 = vld [vmem:[%s16 + $0x78] sm:$0xff]
        %v8926 = vld [vmem:[%s16 + $0x80] sm:$0xff]
        %v8927 = vld [vmem:[%s16 + $0x88] sm:$0xff]
        %v8929 = vsel %vm8641, %v8902, 0
        %v8932 = vsel %vm8641, %v8905, 0
        %v8935 = vsel %vm8641, %v8908, 0
        %8937 = vmatpush.msra.mxu0 %v8925
        %8938 = vmatpush.msra.mxu0 %v8924
        %8939 = vmatpush.msra.mxu0 %v8923
        %8940 = vmatpush.msra.mxu0 %v8922
        %8941 = vmatpush.msra.mxu0 %v8921
        %8942 = vmatpush.msra.mxu0 %v8920
        %8943 = vmatpush.msra.mxu0 %v8919
        %8944 = vmatpush.msra.mxu0 %v8918
        %8945 = vmatpush.msra.mxu0 %v8917
        %8946 = vmatpush.msra.mxu0 %v8916
        %8947 = vmatpush.msra.mxu0 %v8915
        %8948 = vmatpush.msra.mxu0 %v8914
        %8949 = vmatpush.msra.mxu0 %v8913
        %8950 = vmatpush.msra.mxu0 %v8912
        %8951 = vmatpush.msra.mxu0 %v8911
        %8952 = vmatpush.msra.mxu0 %v8910
        %8953 = vmatmul.f32.gmra.mxu0 %v8876
        %v8954 = vpop.f32.mrf.mxu0
        %v8955 = vadd.f32 0.0, %v8954
        %8956 = vmatmul.f32.gmra.mxu0 %v8879
        %v8957 = vpop.f32.mrf.mxu0
        %v8958 = vadd.f32 0.0, %v8957
        %8959 = vmatmul.f32.gmra.mxu0 %v8882
        %v8960 = vpop.f32.mrf.mxu0
        %v8961 = vadd.f32 0.0, %v8960
        %8962 = vdwg.mxu0
        %8963 = vmatpush.msra.mxu0 0.0
        %8964 = vmatpush.msra.mxu0 0.0
        %8965 = vmatpush.msra.mxu0 0.0
        %8966 = vmatpush.msra.mxu0 0.0
        %8967 = vmatpush.msra.mxu0 0.0
        %8968 = vmatpush.msra.mxu0 0.0
        %8969 = vmatpush.msra.mxu0 0.0
        %8970 = vmatpush.msra.mxu0 0.0
        %8971 = vmatpush.msra.mxu0 0.0
        %8972 = vmatpush.msra.mxu0 0.0
        %8973 = vmatpush.msra.mxu0 0.0
        %8974 = vmatpush.msra.mxu0 0.0
        %8975 = vmatpush.msra.mxu0 0.0
        %8976 = vmatpush.msra.mxu0 0.0
        %8977 = vmatpush.msra.mxu0 %v8927
        %8978 = vmatpush.msra.mxu0 %v8926
        %8979 = vmatmul.f32.gmra.mxu0 %v8929
        %v8980 = vpop.f32.mrf.mxu0
        %v8981 = vadd.f32 %v8955, %v8980
        %8982 = vmatmul.f32.gmra.mxu0 %v8932
        %v8983 = vpop.f32.mrf.mxu0
        %v8984 = vadd.f32 %v8958, %v8983
        %8985 = vmatmul.f32.gmra.mxu0 %v8935
        %v8986 = vpop.f32.mrf.mxu0
        %v8987 = vadd.f32 %v8961, %v8986
        %8988 = vdwg.mxu0
        %v8989 = vrcp.pop %v8981
        %v8990 = vmul.f32 %v8981, %v8989
        %v8991 = vsub.f32 1.0, %v8990
        %v8992 = vmul.f32 %v8989, %v8991
        %v8993 = vadd.f32 %v8989, %v8992
        %vm8994 = vweird.f32 %v8981
        %vm8995 = vweird.f32 %v8989
        %vm8996 = vmor %vm8994, %vm8995
        %v8997 = vsel %vm8996, %v8989, %v8993
        %v8998 = vand.u32 2147483647, %v8981
        %vm8999 = vcmp.eq.f32.partialorder %v8998, 8.507059e+37
        %v9000 = vand.u32 %v8981, 2147483648
        %v9001 = vor.u32 1.1754944e-38, %v9000
        %v9002 = vsel %vm8999, %v9001, %v8997
        %v9003 = vmul.f32 1.0, %v9002
        %v9004 = vmul.f32 %v8984, %v9003
        %9005 = vst.msk [vmem:[%s538] sm:$0xff] %vm8423, %v9004
        %v9006 = vmul.f32 %v8987, %v9003
        %s9007 = scalar_lea.vmem %s538, 8 [#allocation2]
        %9008 = vst.msk [vmem:[%s9007] sm:$0xff] %vm8423, %v9006
        %9010 = vrot.lane.b32.xlu0 %v9003, 18
        %v9011 = vpop.permute.xlu0 %9010
        %v9013 = vmul.f32 %v8981, %v9011
        %9015 = vrot.lane.b32.xlu0 %v9013, 110
        %v9016 = vpop.permute.xlu0 %9015
        %s9018 = scalar_lea.vmem %s538, 16 [#allocation2]
        %9019 = vst.msk [vmem:[%s9018] sm:$0xff] %vm8423, %v9016
        %s9020 = scalar_lea.vmem %s538, 24 [#allocation2]
        %9021 = vst.msk [vmem:[%s9020] sm:$0xff] %vm8423, %v5048
        %s9022 = sand.u32 %s398, 1
        %s9023 = sand.u32 %s398, 1
        %s9024 = smul.addr %s9023, 32
        %s9025 = scalar_lea.vmem [#allocation2], %s9024
        // Predicated region
        $region89: #{respose_net_forward.1} parent=87 // pred_check
          %p9026 = pneg %p408
        $region90: #{respose_net_forward.1} parent=87 // pred_check_branch
          %9028 = sbr.rel (%p9026) target = $region92
        $region91: #{respose_net_forward.1} parent=87 // pred_region
          %s9029 = smul.addr %s28, 8
          %s9030 = scalar_lea.vmem %s17, %s9029
          // Predicated region
          $region93: #{respose_net_forward.1} parent=91 // pred_check
            _
          $region94: #{respose_net_forward.1} parent=91 // pred_check_branch
            %9032 = sbr.rel (0) target = $region96
          $region95: #{respose_net_forward.1} parent=91 // pred_region
            // Predicated region
            $region97: #{respose_net_forward.1} parent=95 // pred_check
              _
            $region98: #{respose_net_forward.1} parent=95 // pred_check_branch
              %9034 = sbr.rel (0) target = $region100
            $region99: #{respose_net_forward.1} parent=95 // pred_region
              // Predicated region
              $region112: #{respose_net_forward.1} parent=99 // pred_check
                _
              $region113: #{respose_net_forward.1} parent=99 // pred_check_branch
                %9056 = sbr.rel (0) target = $region115
              $region114: #{respose_net_forward.1} parent=99 // pred_region
                loop: start=0, step=1, limit=1
                $region116: #{respose_net_forward.1} parent=114 // loop_pre_header
                  _
                $region117: #{respose_net_forward.1} parent=114 // loop_header
                  %s9058 = sphi 0, %s9062
                  %p9059 = scmp.ge.s32.totalorder %s9058, 1
                  %s9063 = sphi %s9025, %s9025
                  %s9064 = sphi %s9030, %s9030
                $region118: #{respose_net_forward.1} parent=114 // loop_header_branch
                  %9061 = sbr.rel (%p9059) target = $region122
                $region119: #{respose_net_forward.1} parent=114 // loop_body
                  %v9065 = vld [vmem:[%s9063] sm:$0xff]
                  %9066 = vst [vmem:[%s9064] sm:$0xff] %v9065
                  %v9067 = vld [vmem:[%s9063 + $0x8] sm:$0xff]
                  %9068 = vst [vmem:[%s9064 + $0x10] sm:$0xff] %v9067
                  %v9069 = vld [vmem:[%s9063 + $0x10] sm:$0xff]
                  %9070 = vst [vmem:[%s9064 + $0x20] sm:$0xff] %v9069
                  %v9071 = vld [vmem:[%s9063 + $0x18] sm:$0xff]
                  %9072 = vst [vmem:[%s9064 + $0x30] sm:$0xff] %v9071
                $region120: #{respose_net_forward.1} parent=114 // loop_footer
                  %s9062 = sadd.s32 1, %s9058
                $region121: #{respose_net_forward.1} parent=114 // loop_footer_branch
                  %9057 = sbr.rel target = $region117
                $region122: #{respose_net_forward.1} parent=114 // loop_exit
                  _
              $region115: #{respose_net_forward.1} parent=99 // pred_fallthru
                _
              // Predicated region
              $region123: #{respose_net_forward.1} parent=99 // pred_check
                _
              $region124: #{respose_net_forward.1} parent=99 // pred_check_branch
                %9074 = sbr.rel target = $region126
              $region125: #{respose_net_forward.1} parent=99 // pred_region
                _
              $region126: #{respose_net_forward.1} parent=99 // pred_fallthru
                _
            $region100: #{respose_net_forward.1} parent=95 // pred_fallthru
              _
            // Predicated region
            $region101: #{respose_net_forward.1} parent=95 // pred_check
              _
            $region102: #{respose_net_forward.1} parent=95 // pred_check_branch
              %9036 = sbr.rel target = $region104
            $region103: #{respose_net_forward.1} parent=95 // pred_region
              %s9038 = ssub.s32 256, 1
              loop: start=0, step=1, limit=1
              $region105: #{respose_net_forward.1} parent=103 // loop_pre_header
                _
              $region106: #{respose_net_forward.1} parent=103 // loop_header
                %s9040 = sphi 0, %s9044
                %p9041 = scmp.ge.s32.totalorder %s9040, 1
                %s9045 = sphi %s9025, %s9025
                %s9046 = sphi %s9030, %s9030
              $region107: #{respose_net_forward.1} parent=103 // loop_header_branch
                %9043 = sbr.rel (%p9041) target = $region111
              $region108: #{respose_net_forward.1} parent=103 // loop_body
                %v9047 = vld [vmem:[%s9045] sm:%s9038]
                %9048 = vst [vmem:[%s9046] sm:%s9038] %v9047
                %v9049 = vld [vmem:[%s9045 + $0x8] sm:%s9038]
                %9050 = vst [vmem:[%s9046 + $0x10] sm:%s9038] %v9049
                %v9051 = vld [vmem:[%s9045 + $0x10] sm:%s9038]
                %9052 = vst [vmem:[%s9046 + $0x20] sm:%s9038] %v9051
                %v9053 = vld [vmem:[%s9045 + $0x18] sm:%s9038]
                %9054 = vst [vmem:[%s9046 + $0x30] sm:%s9038] %v9053
              $region109: #{respose_net_forward.1} parent=103 // loop_footer
                %s9044 = sadd.s32 1, %s9040
              $region110: #{respose_net_forward.1} parent=103 // loop_footer_branch
                %9039 = sbr.rel target = $region106
              $region111: #{respose_net_forward.1} parent=103 // loop_exit
                _
            $region104: #{respose_net_forward.1} parent=95 // pred_fallthru
              _
          $region96: #{respose_net_forward.1} parent=91 // pred_fallthru
            _
          %9075 = vnop
        $region92: #{respose_net_forward.1} parent=87 // pred_fallthru
          _
      $region88: #{respose_net_forward.1} parent=5 // pred_fallthru
        _
      %p9076 = scmp.le.s32.totalorder 2, %s23
      // Predicated region
      $region127: #{respose_net_forward.1} parent=5 // pred_check
        %p9077 = pneg %p9076
      $region128: #{respose_net_forward.1} parent=5 // pred_check_branch
        %9079 = sbr.rel (%p9077) target = $region130
      $region129: #{respose_net_forward.1} parent=5 // pred_region
        %s9080 = ssub.s32 %s23, 2
        // Predicated region
        $region131: #{respose_net_forward.1} parent=129 // pred_check
          %p9081 = pneg %p414
        $region132: #{respose_net_forward.1} parent=129 // pred_check_branch
          %9083 = sbr.rel (%p9081) target = $region134
        $region133: #{respose_net_forward.1} parent=129 // pred_region
          %s9084 = sand.u32 %s399, 1
          %s9085 = sand.u32 %s399, 1
          %s9086 = smul.addr %s9085, 32
          %s9087 = scalar_lea.vmem [#allocation2], %s9086
        $region134: #{respose_net_forward.1} parent=129 // pred_fallthru
          _
      $region130: #{respose_net_forward.1} parent=5 // pred_fallthru
        _
    $region6: #{respose_net_forward.1} parent=1 // loop_footer
      %s27 = sadd.s32 1, %s23
    $region7: #{respose_net_forward.1} parent=1 // loop_footer_branch
      %22 = sbr.rel target = $region3
    $region8: #{respose_net_forward.1} parent=1 // loop_exit
      _

</llo_original>
